<compile_context>
chip_gen: v5e
topology: v5e:2x2
jax: 0.10.0
libtpu: 0.0.40
codegen_flags: <defaults>
</compile_context>

<pallas_src>
import functools

import jax
import jax.numpy as jnp
from jax.experimental import pallas as pl
from jax.experimental.pallas import tpu as pltpu


TE_EDGE = 128                # edge-row tile (sublane/lane aligned)
TP_POOL = 128                # reduction tile over nodes for the pooling kernel
NODE_PAD = 128               # pad node count to a multiple of this
EDGE_PAD = TE_EDGE           # pad edge count to a multiple of this
VMEM_LIMIT = 32 * 1024 * 1024


def _round_up(x, m):
    return ((x + m - 1) // m) * m


def _params(dim_sem):
    return pltpu.CompilerParams(dimension_semantics=dim_sem,
                                vmem_limit_bytes=VMEM_LIMIT)


# ---------------------------------------------------------------------------
# kernels
# ---------------------------------------------------------------------------

def _gcn_layer_kernel(h_ref, wn_ref, bn_ref, gdst_ref, gsrc_ref, ef_ref,
                      wc_ref, bc_ref, deg_ref,
                      enew_ref, hnew_ref,
                      uavb_sc, acc_a, acc_b, *, fout):
    # Grid: edge tiles (reduction axis, "arbitrary").
    # Step 0: fused node linear [Uh|Ah|Vh|Bh] for the whole padded node set
    # into VMEM scratch (reused by every edge tile); zero scatter accumulators.
    @pl.when(pl.program_id(0) == 0)
    def _():
        uavb_sc[...] = (
            jnp.dot(h_ref[...], wn_ref[...], preferred_element_type=jnp.float32)
            + bn_ref[...])
        acc_a[...] = jnp.zeros_like(acc_a)
        acc_b[...] = jnp.zeros_like(acc_b)

    # Per edge tile: Ce = e @ Wc + bc ; gather via bf16 one-hot incidence
    # matmuls against the resident uavb scratch ; gate with sigmoid.
    ce = (jnp.dot(ef_ref[...], wc_ref[...], preferred_element_type=jnp.float32)
          + bc_ref[...])
    gdst = gdst_ref[...].astype(jnp.float32)          # (TE, Npad) 0/1
    gsrc = gsrc_ref[...].astype(jnp.float32)
    ah_dst = jnp.dot(gdst, uavb_sc[:, fout:2 * fout],
                     preferred_element_type=jnp.float32)
    vb_src = jnp.dot(gsrc, uavb_sc[:, 2 * fout:],
                     preferred_element_type=jnp.float32)
    vh_src = vb_src[:, :fout]
    bh_src = vb_src[:, fout:]
    e_ij = ah_dst + bh_src + ce
    sigma = 1.0 / (1.0 + jnp.exp(-e_ij))
    enew_ref[...] = jnp.maximum(e_ij, 0.0)            # new edge features

    # Scatter-add to destination nodes inside the same kernel:
    # acc += Gdst^T @ msgs  (transposed-lhs MXU matmul; no HBM round trip).
    dn = (((0,), (0,)), ((), ()))
    acc_a[...] += jax.lax.dot_general(gdst, vh_src * sigma, dn,
                                      preferred_element_type=jnp.float32)
    acc_b[...] += jax.lax.dot_general(gdst, sigma, dn,
                                      preferred_element_type=jnp.float32)

    # Last step: gated mean update + relu ('mean' aggr -> 0 for deg==0 nodes).
    @pl.when(pl.program_id(0) == pl.num_programs(0) - 1)
    def _():
        h_upd = uavb_sc[:, :fout] + acc_a[...] / (acc_b[...] + 1e-16)
        h_upd = jnp.where(deg_ref[...] > 0.0, h_upd, 0.0)
        hnew_ref[...] = jnp.maximum(h_upd, 0.0)


def _mean_pool_kernel(p_ref, h_ref, o_ref):
    @pl.when(pl.program_id(0) == 0)
    def _():
        o_ref[...] = jnp.zeros_like(o_ref)
    o_ref[...] += jnp.dot(p_ref[...], h_ref[...],
                          preferred_element_type=jnp.float32)


# ---------------------------------------------------------------------------
# pallas_call wrappers
# ---------------------------------------------------------------------------

def _gcn_layer(h, w_node, b_node, e_feat, wc, bc, gdst, gsrc, deg, *, fout):
    npad, fin = h.shape
    epad, fe = e_feat.shape
    kernel = functools.partial(_gcn_layer_kernel, fout=fout)
    flops = (2 * npad * fin * 4 * fout               # fused node linear
             + 2 * epad * fe * fout                  # edge linear
             + 2 * epad * npad * 3 * fout            # one-hot gathers
             + 2 * epad * npad * 2 * fout)           # scatter-add
    bytes_acc = (2 * 2 * epad * npad                 # bf16 incidence matrices
                 + 4 * (npad * fin + fin * 4 * fout + 4 * fout
                        + epad * fe + fe * fout + fout + npad
                        + epad * fout + npad * fout))
    cost = pl.CostEstimate(flops=flops, transcendentals=epad * fout,
                           bytes_accessed=bytes_acc)
    e_new, h_new = pl.pallas_call(
        kernel,
        out_shape=(jax.ShapeDtypeStruct((epad, fout), jnp.float32),
                   jax.ShapeDtypeStruct((npad, fout), jnp.float32)),
        grid=(epad // TE_EDGE,),
        in_specs=[
            pl.BlockSpec((npad, fin), lambda e: (0, 0)),          # h (resident)
            pl.BlockSpec((fin, 4 * fout), lambda e: (0, 0)),      # W [U|A|V|B]
            pl.BlockSpec((1, 4 * fout), lambda e: (0, 0)),        # b [U|A|V|B]
            pl.BlockSpec((TE_EDGE, npad), lambda e: (e, 0)),      # dst one-hot (bf16)
            pl.BlockSpec((TE_EDGE, npad), lambda e: (e, 0)),      # src one-hot (bf16)
            pl.BlockSpec((TE_EDGE, fe), lambda e: (e, 0)),        # edge features
            pl.BlockSpec((fe, fout), lambda e: (0, 0)),           # Wc (resident)
            pl.BlockSpec((1, fout), lambda e: (0, 0)),            # bc
            pl.BlockSpec((npad, 1), lambda e: (0, 0)),            # in-degree
        ],
        out_specs=(pl.BlockSpec((TE_EDGE, fout), lambda e: (e, 0)),   # e_out
                   pl.BlockSpec((npad, fout), lambda e: (0, 0))),     # h_out (acc)
        scratch_shapes=[pltpu.VMEM((npad, 4 * fout), jnp.float32),    # [U|A|V|B]h
                        pltpu.VMEM((npad, fout), jnp.float32),        # sum Vh*sigma
                        pltpu.VMEM((npad, fout), jnp.float32)],       # sum sigma
        compiler_params=_params(("arbitrary",)),
        cost_estimate=cost,
    )(h, w_node, b_node, gdst, gsrc, e_feat, wc, bc, deg)
    return h_new, e_new


def _mean_pool(pool, h):
    g, npad = pool.shape
    f = h.shape[1]
    cost = pl.CostEstimate(flops=2 * g * npad * f, transcendentals=0,
                           bytes_accessed=4 * (g * npad + npad * f + g * f))
    return pl.pallas_call(
        _mean_pool_kernel,
        out_shape=jax.ShapeDtypeStruct((g, f), jnp.float32),
        grid=(npad // TP_POOL,),
        in_specs=[pl.BlockSpec((g, TP_POOL), lambda k: (0, k)),
                  pl.BlockSpec((TP_POOL, f), lambda k: (k, 0))],
        out_specs=pl.BlockSpec((g, f), lambda k: (0, 0)),
        compiler_params=_params(("arbitrary",)),
        cost_estimate=cost,
    )(pool, h)


# ---------------------------------------------------------------------------
# Model wrapper (parameter setup + incidence/pooling matrix glue)
# ---------------------------------------------------------------------------

class ResGatedGCN1Pallas:
    def __init__(self, in_dim=64, hidden_dims=(128, 128, 128, 128),
                 has_bn=False, normalize=False, residual=False, key=None):
        if has_bn or normalize or residual:
            # Module defaults are all False; only that path is implemented.
            raise NotImplementedError("only has_bn=normalize=residual=False")
        if key is None:
            key = jax.random.PRNGKey(0)
        self.in_dim = in_dim
        self.hidden_dims = list(hidden_dims)

        def linear_init(k, fin, fout):
            kw, kb = jax.random.split(k)
            bound = 1.0 / float(fin) ** 0.5
            w = jax.random.uniform(kw, (fin, fout), jnp.float32, -bound, bound)
            b = jax.random.uniform(kb, (1, fout), jnp.float32, -bound, bound)
            return w, b

        keys = jax.random.split(key, 2 + 5 * len(self.hidden_dims))
        emb_h_w, emb_h_b = linear_init(keys[0], in_dim, in_dim)
        emb_e_w, emb_e_b = linear_init(keys[1], 1, in_dim)

        self.layers = []
        fin = in_dim
        ki = 2
        for li, fout in enumerate(self.hidden_dims):
            wu, bu = linear_init(keys[ki + 0], fin, fout)
            wa, ba = linear_init(keys[ki + 1], fin, fout)
            wv, bv = linear_init(keys[ki + 2], fin, fout)
            wb, bb = linear_init(keys[ki + 3], fin, fout)
            wc, bc = linear_init(keys[ki + 4], fin, fout)
            ki += 5
            # Fused node weights, column order [U | A | V | B].
            w_node = jnp.concatenate([wu, wa, wv, wb], axis=1)
            b_node = jnp.concatenate([bu, ba, bv, bb], axis=1)
            if li == 0:
                # Fold embedding_h / embedding_e into the first layer's linears
                # (exact linear composition; valid since no BN / no residual):
                #   L(emb(x)) = x @ (We @ W) + (be @ W + b)
                b_node = emb_h_b @ w_node + b_node
                w_node = emb_h_w @ w_node
                bc = emb_e_b @ wc + bc
                wc = emb_e_w @ wc
            self.layers.append((w_node, b_node, wc, bc, fout))
            fin = fout

    def __call__(self, x, edge_w, edge_index, batch, num_graphs):
        n_real = x.shape[0]
        e_real = edge_index.shape[1]
        npad = _round_up(max(n_real, 1), NODE_PAD)
        epad = _round_up(max(e_real, 1), EDGE_PAD)

        src = edge_index[0].astype(jnp.int32)
        dst = edge_index[1].astype(jnp.int32)

        # Padded inputs (pad nodes/edges cannot affect real outputs: their
        # incidence rows/columns are all-zero and pad nodes have in-degree 0).
        x_p = jnp.zeros((npad, x.shape[1]), jnp.float32).at[:n_real].set(x)
        ew_p = jnp.zeros((epad, edge_w.shape[1]), jnp.float32).at[:e_real].set(edge_w)

        # 0/1 incidence matrices, built once, reused by all 4 layers (bf16 is
        # exact for 0/1 values; halves HBM bytes of the dominant operands).
        node_ids = jnp.arange(npad, dtype=jnp.int32)
        dst_p = jnp.full((epad,), -1, jnp.int32).at[:e_real].set(dst)
        src_p = jnp.full((epad,), -1, jnp.int32).at[:e_real].set(src)
        gdst01 = dst_p[:, None] == node_ids[None, :]          # (Epad, Npad)
        gsrc01 = src_p[:, None] == node_ids[None, :]          # (Epad, Npad)
        gdst = gdst01.astype(jnp.bfloat16)
        gsrc = gsrc01.astype(jnp.bfloat16)
        deg = gdst01.sum(axis=0).astype(jnp.float32)[:, None]  # (Npad, 1) in-degree

        # Per-graph mean-pool matrix.
        # TODO(synk): global_pool_1 is not defined in the provided snippet;
        # implemented here as global mean pooling over data.batch.
        one_hot = (batch[None, :] == jnp.arange(num_graphs)[:, None]).astype(jnp.float32)
        counts = jnp.maximum(one_hot.sum(axis=1, keepdims=True), 1.0)
        pool = jnp.zeros((num_graphs, npad), jnp.float32).at[:, :n_real].set(one_hot / counts)

        # Layer 1 consumes raw x / edge_w (embeddings folded into its weights).
        h = x_p
        e_feat = ew_p
        for (w_node, b_node, wc, bc, fout) in self.layers:
            h, e_feat = _gcn_layer(h, w_node, b_node, e_feat, wc, bc,
                                   gdst, gsrc, deg, fout=fout)

        # readout: per-graph mean pool
        return _mean_pool(pool, h)


# ---------------------------------------------------------------------------
# Demo
# ---------------------------------------------------------------------------

if __name__ == "__main__":
    key = jax.random.PRNGKey(0)
    k_x, k_w, k_e, k_params = jax.random.split(key, 4)

    num_graphs = 2
    nodes_per_graph = 48
    n_nodes = num_graphs * nodes_per_graph     # 96 (padded to 128 inside)
    n_edges = 160                              # padded to 256 inside
    in_dim = 64

    x = jax.random.normal(k_x, (n_nodes, in_dim), jnp.float32)
    edge_w = jax.random.uniform(k_w, (n_edges, 1), jnp.float32)

    # Random edges, each kept within its own graph.
    k_s, k_d = jax.random.split(k_e)
    graph_of_edge = jnp.arange(n_edges) % num_graphs
    src = jax.random.randint(k_s, (n_edges,), 0, nodes_per_graph) + graph_of_edge * nodes_per_graph
    dst = jax.random.randint(k_d, (n_edges,), 0, nodes_per_graph) + graph_of_edge * nodes_per_graph
    edge_index = jnp.stack([src, dst], axis=0).astype(jnp.int32)

    batch = (jnp.arange(n_nodes) // nodes_per_graph).astype(jnp.int32)

    model = ResGatedGCN1Pallas(in_dim=in_dim, hidden_dims=(128, 128, 128, 128),
                               key=k_params)

    fwd = jax.jit(lambda xx, ee, ii, bb: model(xx, ee, ii, bb, num_graphs))
    hg = fwd(x, edge_w, edge_index, batch)
    jax.block_until_ready(hg)
    assert hg.shape == (num_graphs, 128)
    assert bool(jnp.all(jnp.isfinite(hg)))
    print("KERNEL_OK")
</pallas_src>

<mosaic_0001>
module attributes {stable_mosaic.version = 11 : i64} {
  func.func @_gcn_layer_kernel(%arg0: i32, %arg1: memref<128x64xf32, #tpu.memory_space<vmem>>, %arg2: memref<64x512xf32, #tpu.memory_space<vmem>>, %arg3: memref<1x512xf32, #tpu.memory_space<vmem>>, %arg4: memref<128x128xbf16, #tpu.memory_space<vmem>>, %arg5: memref<128x128xbf16, #tpu.memory_space<vmem>>, %arg6: memref<128x1xf32, #tpu.memory_space<vmem>>, %arg7: memref<1x128xf32, #tpu.memory_space<vmem>>, %arg8: memref<1x128xf32, #tpu.memory_space<vmem>>, %arg9: memref<128x1xf32, #tpu.memory_space<vmem>>, %arg10: memref<128x128xf32, #tpu.memory_space<vmem>>, %arg11: memref<128x128xf32, #tpu.memory_space<vmem>>, %arg12: memref<128x512xf32, #tpu.memory_space<vmem>>, %arg13: memref<128x128xf32, #tpu.memory_space<vmem>>, %arg14: memref<128x128xf32, #tpu.memory_space<vmem>>) attributes {dimension_semantics = [#tpu.dimension_semantics<arbitrary>], iteration_bounds = array<i64: 2>, scalar_prefetch = 0 : i64, scratch_operands = 3 : i64, tpu.core_type = #tpu.core_type<tc>, window_params = [{pipeline_mode = #tpu.pipeline_mode<synchronous>, transform_indices = @transform_0, window_bounds = array<i64: 128, 64>}, {pipeline_mode = #tpu.pipeline_mode<synchronous>, transform_indices = @transform_1, window_bounds = array<i64: 64, 512>}, {pipeline_mode = #tpu.pipeline_mode<synchronous>, transform_indices = @transform_2, window_bounds = array<i64: 1, 512>}, {transform_indices = @transform_3, window_bounds = array<i64: 128, 128>}, {transform_indices = @transform_4, window_bounds = array<i64: 128, 128>}, {transform_indices = @transform_5, window_bounds = array<i64: 128, 1>}, {pipeline_mode = #tpu.pipeline_mode<synchronous>, transform_indices = @transform_6, window_bounds = array<i64: 1, 128>}, {pipeline_mode = #tpu.pipeline_mode<synchronous>, transform_indices = @transform_7, window_bounds = array<i64: 1, 128>}, {pipeline_mode = #tpu.pipeline_mode<synchronous>, transform_indices = @transform_8, window_bounds = array<i64: 128, 1>}, {transform_indices = @transform_9, window_bounds = array<i64: 128, 128>}, {pipeline_mode = #tpu.pipeline_mode<synchronous>, transform_indices = @transform_10, window_bounds = array<i64: 128, 128>}]} {
    %c0_i32 = arith.constant 0 : i32
    %0 = arith.cmpi eq, %arg0, %c0_i32 : i32
    %1 = arith.extui %0 : i1 to i32
    %c0_i32_0 = arith.constant 0 : i32
    %2 = arith.cmpi ne, %1, %c0_i32_0 : i32
    scf.if %2 {
      %c0_31 = arith.constant 0 : index
      %c0_32 = arith.constant 0 : index
      %43 = vector.load %arg1[%c0_31, %c0_32] : memref<128x64xf32, #tpu.memory_space<vmem>>, vector<128x64xf32>
      %c0_33 = arith.constant 0 : index
      %c0_34 = arith.constant 0 : index
      %44 = vector.load %arg2[%c0_33, %c0_34] : memref<64x512xf32, #tpu.memory_space<vmem>>, vector<64x512xf32>
      %cst_35 = arith.constant dense<0.000000e+00> : vector<128x512xf32>
      %45 = tpu.matmul %43, %44, %cst_35 {dimension_numbers = #tpu.dot_dimension_numbers<[1], [0], [0], [1], [0, 0, 1, 1], [], []>} : vector<128x64xf32>, vector<64x512xf32>, vector<128x512xf32> -> vector<128x512xf32>
      %c0_36 = arith.constant 0 : index
      %c0_37 = arith.constant 0 : index
      %46 = vector.load %arg3[%c0_36, %c0_37] : memref<1x512xf32, #tpu.memory_space<vmem>>, vector<1x512xf32>
      %47 = vector.broadcast %46 : vector<1x512xf32> to vector<128x512xf32>
      %48 = arith.addf %45, %47 : vector<128x512xf32>
      %c0_38 = arith.constant 0 : index
      %c0_39 = arith.constant 0 : index
      %49 = vector.load %arg12[%c0_38, %c0_39] : memref<128x512xf32, #tpu.memory_space<vmem>>, vector<128x512xf32>
      tpu.vector_store %arg12[%c0_38, %c0_39], %48 {strides = array<i32>} : memref<128x512xf32, #tpu.memory_space<vmem>>, vector<128x512xf32>,
      %cst_40 = arith.constant 0.000000e+00 : f32
      %50 = vector.broadcast %cst_40 : f32 to vector<128x128xf32>
      %c0_41 = arith.constant 0 : index
      %c0_42 = arith.constant 0 : index
      %51 = vector.load %arg13[%c0_41, %c0_42] : memref<128x128xf32, #tpu.memory_space<vmem>>, vector<128x128xf32>
      tpu.vector_store %arg13[%c0_41, %c0_42], %50 {strides = array<i32>} : memref<128x128xf32, #tpu.memory_space<vmem>>, vector<128x128xf32>,
      %cst_43 = arith.constant 0.000000e+00 : f32
      %52 = vector.broadcast %cst_43 : f32 to vector<128x128xf32>
      %c0_44 = arith.constant 0 : index
      %c0_45 = arith.constant 0 : index
      %53 = vector.load %arg14[%c0_44, %c0_45] : memref<128x128xf32, #tpu.memory_space<vmem>>, vector<128x128xf32>
      tpu.vector_store %arg14[%c0_44, %c0_45], %52 {strides = array<i32>} : memref<128x128xf32, #tpu.memory_space<vmem>>, vector<128x128xf32>,
    } else {
    }
    %c0 = arith.constant 0 : index
    %c0_1 = arith.constant 0 : index
    %3 = vector.load %arg6[%c0, %c0_1] : memref<128x1xf32, #tpu.memory_space<vmem>>, vector<128x1xf32>
    %c0_2 = arith.constant 0 : index
    %c0_3 = arith.constant 0 : index
    %4 = vector.load %arg7[%c0_2, %c0_3] : memref<1x128xf32, #tpu.memory_space<vmem>>, vector<1x128xf32>
    %cst = arith.constant dense<0.000000e+00> : vector<128x128xf32>
    %5 = tpu.matmul %3, %4, %cst {dimension_numbers = #tpu.dot_dimension_numbers<[1], [0], [0], [1], [0, 0, 1, 1], [], []>} : vector<128x1xf32>, vector<1x128xf32>, vector<128x128xf32> -> vector<128x128xf32>
    %c0_4 = arith.constant 0 : index
    %c0_5 = arith.constant 0 : index
    %6 = vector.load %arg8[%c0_4, %c0_5] : memref<1x128xf32, #tpu.memory_space<vmem>>, vector<1x128xf32>
    %7 = vector.broadcast %6 : vector<1x128xf32> to vector<128x128xf32>
    %8 = arith.addf %5, %7 : vector<128x128xf32>
    %c0_6 = arith.constant 0 : index
    %c0_7 = arith.constant 0 : index
    %9 = vector.load %arg4[%c0_6, %c0_7] : memref<128x128xbf16, #tpu.memory_space<vmem>>, vector<128x128xbf16>
    %10 = arith.extf %9 : vector<128x128xbf16> to vector<128x128xf32>
    %c0_8 = arith.constant 0 : index
    %c0_9 = arith.constant 0 : index
    %11 = vector.load %arg5[%c0_8, %c0_9] : memref<128x128xbf16, #tpu.memory_space<vmem>>, vector<128x128xbf16>
    %12 = arith.extf %11 : vector<128x128xbf16> to vector<128x128xf32>
    %c0_10 = arith.constant 0 : index
    %c128 = arith.constant 128 : index
    %13 = vector.load %arg12[%c0_10, %c128] : memref<128x512xf32, #tpu.memory_space<vmem>>, vector<128x128xf32>
    %cst_11 = arith.constant dense<0.000000e+00> : vector<128x128xf32>
    %14 = tpu.matmul %10, %13, %cst_11 {dimension_numbers = #tpu.dot_dimension_numbers<[1], [0], [0], [1], [0, 0, 1, 1], [], []>} : vector<128x128xf32>, vector<128x128xf32>, vector<128x128xf32> -> vector<128x128xf32>
    %c0_12 = arith.constant 0 : index
    %c256 = arith.constant 256 : index
    %15 = vector.load %arg12[%c0_12, %c256] : memref<128x512xf32, #tpu.memory_space<vmem>>, vector<128x256xf32>
    %cst_13 = arith.constant dense<0.000000e+00> : vector<128x256xf32>
    %16 = tpu.matmul %12, %15, %cst_13 {dimension_numbers = #tpu.dot_dimension_numbers<[1], [0], [0], [1], [0, 0, 1, 1], [], []>} : vector<128x128xf32>, vector<128x256xf32>, vector<128x256xf32> -> vector<128x256xf32>
    %17 = vector.extract_strided_slice %16 {offsets = [0, 0], sizes = [128, 128], strides = [1, 1]} : vector<128x256xf32> to vector<128x128xf32>
    %18 = vector.extract_strided_slice %16 {offsets = [0, 128], sizes = [128, 128], strides = [1, 1]} : vector<128x256xf32> to vector<128x128xf32>
    %19 = arith.addf %14, %18 : vector<128x128xf32>
    %20 = arith.addf %19, %8 : vector<128x128xf32>
    %cst_14 = arith.constant 0.000000e+00 : f32
    %21 = vector.broadcast %cst_14 : f32 to vector<128x128xf32>
    %22 = arith.subf %21, %20 : vector<128x128xf32>
    %23 = math.exp %22 : vector<128x128xf32>
    %cst_15 = arith.constant 1.000000e+00 : f32
    %24 = vector.broadcast %cst_15 : f32 to vector<128x128xf32>
    %25 = arith.addf %24, %23 : vector<128x128xf32>
    %cst_16 = arith.constant 1.000000e+00 : f32
    %26 = vector.broadcast %cst_16 : f32 to vector<128x128xf32>
    %27 = arith.divf %26, %25 : vector<128x128xf32>
    %cst_17 = arith.constant 0.000000e+00 : f32
    %28 = vector.broadcast %cst_17 : f32 to vector<128x128xf32>
    %29 = arith.maximumf %20, %28 : vector<128x128xf32>
    %c0_18 = arith.constant 0 : index
    %c0_19 = arith.constant 0 : index
    %30 = vector.load %arg10[%c0_18, %c0_19] : memref<128x128xf32, #tpu.memory_space<vmem>>, vector<128x128xf32>
    tpu.vector_store %arg10[%c0_18, %c0_19], %29 {strides = array<i32>} : memref<128x128xf32, #tpu.memory_space<vmem>>, vector<128x128xf32>,
    %c0_20 = arith.constant 0 : index
    %c0_21 = arith.constant 0 : index
    %31 = vector.load %arg13[%c0_20, %c0_21] : memref<128x128xf32, #tpu.memory_space<vmem>>, vector<128x128xf32>
    %32 = arith.mulf %17, %27 : vector<128x128xf32>
    %cst_22 = arith.constant dense<0.000000e+00> : vector<128x128xf32>
    %33 = tpu.matmul %10, %32, %cst_22 {dimension_numbers = #tpu.dot_dimension_numbers<[0], [0], [1], [1], [0, 1, 1, 1], [], []>} : vector<128x128xf32>, vector<128x128xf32>, vector<128x128xf32> -> vector<128x128xf32>
    %34 = arith.addf %31, %33 : vector<128x128xf32>
    %c0_23 = arith.constant 0 : index
    %c0_24 = arith.constant 0 : index
    %35 = vector.load %arg13[%c0_23, %c0_24] : memref<128x128xf32, #tpu.memory_space<vmem>>, vector<128x128xf32>
    tpu.vector_store %arg13[%c0_23, %c0_24], %34 {strides = array<i32>} : memref<128x128xf32, #tpu.memory_space<vmem>>, vector<128x128xf32>,
    %c0_25 = arith.constant 0 : index
    %c0_26 = arith.constant 0 : index
    %36 = vector.load %arg14[%c0_25, %c0_26] : memref<128x128xf32, #tpu.memory_space<vmem>>, vector<128x128xf32>
    %cst_27 = arith.constant dense<0.000000e+00> : vector<128x128xf32>
    %37 = tpu.matmul %10, %27, %cst_27 {dimension_numbers = #tpu.dot_dimension_numbers<[0], [0], [1], [1], [0, 1, 1, 1], [], []>} : vector<128x128xf32>, vector<128x128xf32>, vector<128x128xf32> -> vector<128x128xf32>
    %38 = arith.addf %36, %37 : vector<128x128xf32>
    %c0_28 = arith.constant 0 : index
    %c0_29 = arith.constant 0 : index
    %39 = vector.load %arg14[%c0_28, %c0_29] : memref<128x128xf32, #tpu.memory_space<vmem>>, vector<128x128xf32>
    tpu.vector_store %arg14[%c0_28, %c0_29], %38 {strides = array<i32>} : memref<128x128xf32, #tpu.memory_space<vmem>>, vector<128x128xf32>,
    %c1_i32 = arith.constant 1 : i32
    %40 = arith.cmpi eq, %arg0, %c1_i32 : i32
    %41 = arith.extui %40 : i1 to i32
    %c0_i32_30 = arith.constant 0 : i32
    %42 = arith.cmpi ne, %41, %c0_i32_30 : i32
    scf.if %42 {
      %c0_31 = arith.constant 0 : index
      %c0_32 = arith.constant 0 : index
      %43 = vector.load %arg12[%c0_31, %c0_32] : memref<128x512xf32, #tpu.memory_space<vmem>>, vector<128x128xf32>
      %c0_33 = arith.constant 0 : index
      %c0_34 = arith.constant 0 : index
      %44 = vector.load %arg13[%c0_33, %c0_34] : memref<128x128xf32, #tpu.memory_space<vmem>>, vector<128x128xf32>
      %c0_35 = arith.constant 0 : index
      %c0_36 = arith.constant 0 : index
      %45 = vector.load %arg14[%c0_35, %c0_36] : memref<128x128xf32, #tpu.memory_space<vmem>>, vector<128x128xf32>
      %cst_37 = arith.constant 1.000000e-16 : f32
      %46 = vector.broadcast %cst_37 : f32 to vector<128x128xf32>
      %47 = arith.addf %45, %46 : vector<128x128xf32>
      %48 = arith.divf %44, %47 : vector<128x128xf32>
      %49 = arith.addf %43, %48 : vector<128x128xf32>
      %c0_38 = arith.constant 0 : index
      %c0_39 = arith.constant 0 : index
      %50 = vector.load %arg9[%c0_38, %c0_39] : memref<128x1xf32, #tpu.memory_space<vmem>>, vector<128x1xf32>
      %cst_40 = arith.constant 0.000000e+00 : f32
      %51 = vector.broadcast %cst_40 : f32 to vector<128x1xf32>
      %52 = arith.cmpf ogt, %50, %51 : vector<128x1xf32>
      %cst_41 = arith.constant 0.000000e+00 : f32
      %53 = vector.shape_cast %52 : vector<128x1xi1> to vector<128x1xi1>
      %54 = vector.broadcast %53 : vector<128x1xi1> to vector<128x128xi1>
      %55 = vector.broadcast %cst_41 : f32 to vector<128x128xf32>
      %56 = arith.select %54, %49, %55 : vector<128x128xi1>, vector<128x128xf32>
      %cst_42 = arith.constant 0.000000e+00 : f32
      %57 = vector.broadcast %cst_42 : f32 to vector<128x128xf32>
      %58 = arith.maximumf %56, %57 : vector<128x128xf32>
      %c0_43 = arith.constant 0 : index
      %c0_44 = arith.constant 0 : index
      %59 = vector.load %arg11[%c0_43, %c0_44] : memref<128x128xf32, #tpu.memory_space<vmem>>, vector<128x128xf32>
      tpu.vector_store %arg11[%c0_43, %c0_44], %58 {strides = array<i32>} : memref<128x128xf32, #tpu.memory_space<vmem>>, vector<128x128xf32>,
    } else {
    }
    return
  }
  func.func @transform_0(%arg0: i32) -> (i32, i32) {
    %c0_i32 = arith.constant 0 : i32
    %c0_i32_0 = arith.constant 0 : i32
    %c0_i32_1 = arith.constant 0 : i32
    return %c0_i32, %c0_i32_0 : i32, i32
  }
  func.func @transform_1(%arg0: i32) -> (i32, i32) {
    %c0_i32 = arith.constant 0 : i32
    %c0_i32_0 = arith.constant 0 : i32
    %c0_i32_1 = arith.constant 0 : i32
    return %c0_i32, %c0_i32_0 : i32, i32
  }
  func.func @transform_2(%arg0: i32) -> (i32, i32) {
    %c0_i32 = arith.constant 0 : i32
    %c0_i32_0 = arith.constant 0 : i32
    %c0_i32_1 = arith.constant 0 : i32
    return %c0_i32, %c0_i32_0 : i32, i32
  }
  func.func @transform_3(%arg0: i32) -> (i32, i32) {
    %c0_i32 = arith.constant 0 : i32
    %c0_i32_0 = arith.constant 0 : i32
    return %arg0, %c0_i32 : i32, i32
  }
  func.func @transform_4(%arg0: i32) -> (i32, i32) {
    %c0_i32 = arith.constant 0 : i32
    %c0_i32_0 = arith.constant 0 : i32
    return %arg0, %c0_i32 : i32, i32
  }
  func.func @transform_5(%arg0: i32) -> (i32, i32) {
    %c0_i32 = arith.constant 0 : i32
    %c0_i32_0 = arith.constant 0 : i32
    return %arg0, %c0_i32 : i32, i32
  }
  func.func @transform_6(%arg0: i32) -> (i32, i32) {
    %c0_i32 = arith.constant 0 : i32
    %c0_i32_0 = arith.constant 0 : i32
    %c0_i32_1 = arith.constant 0 : i32
    return %c0_i32, %c0_i32_0 : i32, i32
  }
  func.func @transform_7(%arg0: i32) -> (i32, i32) {
    %c0_i32 = arith.constant 0 : i32
    %c0_i32_0 = arith.constant 0 : i32
    %c0_i32_1 = arith.constant 0 : i32
    return %c0_i32, %c0_i32_0 : i32, i32
  }
  func.func @transform_8(%arg0: i32) -> (i32, i32) {
    %c0_i32 = arith.constant 0 : i32
    %c0_i32_0 = arith.constant 0 : i32
    %c0_i32_1 = arith.constant 0 : i32
    return %c0_i32, %c0_i32_0 : i32, i32
  }
  func.func @transform_9(%arg0: i32) -> (i32, i32) {
    %c0_i32 = arith.constant 0 : i32
    %c0_i32_0 = arith.constant 0 : i32
    return %arg0, %c0_i32 : i32, i32
  }
  func.func @transform_10(%arg0: i32) -> (i32, i32) {
    %c0_i32 = arith.constant 0 : i32
    %c0_i32_0 = arith.constant 0 : i32
    %c0_i32_1 = arith.constant 0 : i32
    return %c0_i32, %c0_i32_0 : i32, i32
  }
}

module attributes {stable_mosaic.version = 11 : i64} {
  func.func @_gcn_layer_kernel(%arg0: i32, %arg1: memref<128x128xf32, #tpu.memory_space<vmem>>, %arg2: memref<128x512xf32, #tpu.memory_space<vmem>>, %arg3: memref<1x512xf32, #tpu.memory_space<vmem>>, %arg4: memref<128x128xbf16, #tpu.memory_space<vmem>>, %arg5: memref<128x128xbf16, #tpu.memory_space<vmem>>, %arg6: memref<128x128xf32, #tpu.memory_space<vmem>>, %arg7: memref<128x128xf32, #tpu.memory_space<vmem>>, %arg8: memref<1x128xf32, #tpu.memory_space<vmem>>, %arg9: memref<128x1xf32, #tpu.memory_space<vmem>>, %arg10: memref<128x128xf32, #tpu.memory_space<vmem>>, %arg11: memref<128x128xf32, #tpu.memory_space<vmem>>, %arg12: memref<128x512xf32, #tpu.memory_space<vmem>>, %arg13: memref<128x128xf32, #tpu.memory_space<vmem>>, %arg14: memref<128x128xf32, #tpu.memory_space<vmem>>) attributes {dimension_semantics = [#tpu.dimension_semantics<arbitrary>], iteration_bounds = array<i64: 2>, scalar_prefetch = 0 : i64, scratch_operands = 3 : i64, tpu.core_type = #tpu.core_type<tc>, window_params = [{pipeline_mode = #tpu.pipeline_mode<synchronous>, transform_indices = @transform_0, window_bounds = array<i64: 128, 128>}, {pipeline_mode = #tpu.pipeline_mode<synchronous>, transform_indices = @transform_1, window_bounds = array<i64: 128, 512>}, {pipeline_mode = #tpu.pipeline_mode<synchronous>, transform_indices = @transform_2, window_bounds = array<i64: 1, 512>}, {transform_indices = @transform_3, window_bounds = array<i64: 128, 128>}, {transform_indices = @transform_4, window_bounds = array<i64: 128, 128>}, {transform_indices = @transform_5, window_bounds = array<i64: 128, 128>}, {pipeline_mode = #tpu.pipeline_mode<synchronous>, transform_indices = @transform_6, window_bounds = array<i64: 128, 128>}, {pipeline_mode = #tpu.pipeline_mode<synchronous>, transform_indices = @transform_7, window_bounds = array<i64: 1, 128>}, {pipeline_mode = #tpu.pipeline_mode<synchronous>, transform_indices = @transform_8, window_bounds = array<i64: 128, 1>}, {transform_indices = @transform_9, window_bounds = array<i64: 128, 128>}, {pipeline_mode = #tpu.pipeline_mode<synchronous>, transform_indices = @transform_10, window_bounds = array<i64: 128, 128>}]} {
    %c0_i32 = arith.constant 0 : i32
    %0 = arith.cmpi eq, %arg0, %c0_i32 : i32
    %1 = arith.extui %0 : i1 to i32
    %c0_i32_0 = arith.constant 0 : i32
    %2 = arith.cmpi ne, %1, %c0_i32_0 : i32
    scf.if %2 {
      %c0_31 = arith.constant 0 : index
      %c0_32 = arith.constant 0 : index
      %43 = vector.load %arg1[%c0_31, %c0_32] : memref<128x128xf32, #tpu.memory_space<vmem>>, vector<128x128xf32>
      %c0_33 = arith.constant 0 : index
      %c0_34 = arith.constant 0 : index
      %44 = vector.load %arg2[%c0_33, %c0_34] : memref<128x512xf32, #tpu.memory_space<vmem>>, vector<128x512xf32>
      %cst_35 = arith.constant dense<0.000000e+00> : vector<128x512xf32>
      %45 = tpu.matmul %43, %44, %cst_35 {dimension_numbers = #tpu.dot_dimension_numbers<[1], [0], [0], [1], [0, 0, 1, 1], [], []>} : vector<128x128xf32>, vector<128x512xf32>, vector<128x512xf32> -> vector<128x512xf32>
      %c0_36 = arith.constant 0 : index
      %c0_37 = arith.constant 0 : index
      %46 = vector.load %arg3[%c0_36, %c0_37] : memref<1x512xf32, #tpu.memory_space<vmem>>, vector<1x512xf32>
      %47 = vector.broadcast %46 : vector<1x512xf32> to vector<128x512xf32>
      %48 = arith.addf %45, %47 : vector<128x512xf32>
      %c0_38 = arith.constant 0 : index
      %c0_39 = arith.constant 0 : index
      %49 = vector.load %arg12[%c0_38, %c0_39] : memref<128x512xf32, #tpu.memory_space<vmem>>, vector<128x512xf32>
      tpu.vector_store %arg12[%c0_38, %c0_39], %48 {strides = array<i32>} : memref<128x512xf32, #tpu.memory_space<vmem>>, vector<128x512xf32>,
      %cst_40 = arith.constant 0.000000e+00 : f32
      %50 = vector.broadcast %cst_40 : f32 to vector<128x128xf32>
      %c0_41 = arith.constant 0 : index
      %c0_42 = arith.constant 0 : index
      %51 = vector.load %arg13[%c0_41, %c0_42] : memref<128x128xf32, #tpu.memory_space<vmem>>, vector<128x128xf32>
      tpu.vector_store %arg13[%c0_41, %c0_42], %50 {strides = array<i32>} : memref<128x128xf32, #tpu.memory_space<vmem>>, vector<128x128xf32>,
      %cst_43 = arith.constant 0.000000e+00 : f32
      %52 = vector.broadcast %cst_43 : f32 to vector<128x128xf32>
      %c0_44 = arith.constant 0 : index
      %c0_45 = arith.constant 0 : index
      %53 = vector.load %arg14[%c0_44, %c0_45] : memref<128x128xf32, #tpu.memory_space<vmem>>, vector<128x128xf32>
      tpu.vector_store %arg14[%c0_44, %c0_45], %52 {strides = array<i32>} : memref<128x128xf32, #tpu.memory_space<vmem>>, vector<128x128xf32>,
    } else {
    }
    %c0 = arith.constant 0 : index
    %c0_1 = arith.constant 0 : index
    %3 = vector.load %arg6[%c0, %c0_1] : memref<128x128xf32, #tpu.memory_space<vmem>>, vector<128x128xf32>
    %c0_2 = arith.constant 0 : index
    %c0_3 = arith.constant 0 : index
    %4 = vector.load %arg7[%c0_2, %c0_3] : memref<128x128xf32, #tpu.memory_space<vmem>>, vector<128x128xf32>
    %cst = arith.constant dense<0.000000e+00> : vector<128x128xf32>
    %5 = tpu.matmul %3, %4, %cst {dimension_numbers = #tpu.dot_dimension_numbers<[1], [0], [0], [1], [0, 0, 1, 1], [], []>} : vector<128x128xf32>, vector<128x128xf32>, vector<128x128xf32> -> vector<128x128xf32>
    %c0_4 = arith.constant 0 : index
    %c0_5 = arith.constant 0 : index
    %6 = vector.load %arg8[%c0_4, %c0_5] : memref<1x128xf32, #tpu.memory_space<vmem>>, vector<1x128xf32>
    %7 = vector.broadcast %6 : vector<1x128xf32> to vector<128x128xf32>
    %8 = arith.addf %5, %7 : vector<128x128xf32>
    %c0_6 = arith.constant 0 : index
    %c0_7 = arith.constant 0 : index
    %9 = vector.load %arg4[%c0_6, %c0_7] : memref<128x128xbf16, #tpu.memory_space<vmem>>, vector<128x128xbf16>
    %10 = arith.extf %9 : vector<128x128xbf16> to vector<128x128xf32>
    %c0_8 = arith.constant 0 : index
    %c0_9 = arith.constant 0 : index
    %11 = vector.load %arg5[%c0_8, %c0_9] : memref<128x128xbf16, #tpu.memory_space<vmem>>, vector<128x128xbf16>
    %12 = arith.extf %11 : vector<128x128xbf16> to vector<128x128xf32>
    %c0_10 = arith.constant 0 : index
    %c128 = arith.constant 128 : index
    %13 = vector.load %arg12[%c0_10, %c128] : memref<128x512xf32, #tpu.memory_space<vmem>>, vector<128x128xf32>
    %cst_11 = arith.constant dense<0.000000e+00> : vector<128x128xf32>
    %14 = tpu.matmul %10, %13, %cst_11 {dimension_numbers = #tpu.dot_dimension_numbers<[1], [0], [0], [1], [0, 0, 1, 1], [], []>} : vector<128x128xf32>, vector<128x128xf32>, vector<128x128xf32> -> vector<128x128xf32>
    %c0_12 = arith.constant 0 : index
    %c256 = arith.constant 256 : index
    %15 = vector.load %arg12[%c0_12, %c256] : memref<128x512xf32, #tpu.memory_space<vmem>>, vector<128x256xf32>
    %cst_13 = arith.constant dense<0.000000e+00> : vector<128x256xf32>
    %16 = tpu.matmul %12, %15, %cst_13 {dimension_numbers = #tpu.dot_dimension_numbers<[1], [0], [0], [1], [0, 0, 1, 1], [], []>} : vector<128x128xf32>, vector<128x256xf32>, vector<128x256xf32> -> vector<128x256xf32>
    %17 = vector.extract_strided_slice %16 {offsets = [0, 0], sizes = [128, 128], strides = [1, 1]} : vector<128x256xf32> to vector<128x128xf32>
    %18 = vector.extract_strided_slice %16 {offsets = [0, 128], sizes = [128, 128], strides = [1, 1]} : vector<128x256xf32> to vector<128x128xf32>
    %19 = arith.addf %14, %18 : vector<128x128xf32>
    %20 = arith.addf %19, %8 : vector<128x128xf32>
    %cst_14 = arith.constant 0.000000e+00 : f32
    %21 = vector.broadcast %cst_14 : f32 to vector<128x128xf32>
    %22 = arith.subf %21, %20 : vector<128x128xf32>
    %23 = math.exp %22 : vector<128x128xf32>
    %cst_15 = arith.constant 1.000000e+00 : f32
    %24 = vector.broadcast %cst_15 : f32 to vector<128x128xf32>
    %25 = arith.addf %24, %23 : vector<128x128xf32>
    %cst_16 = arith.constant 1.000000e+00 : f32
    %26 = vector.broadcast %cst_16 : f32 to vector<128x128xf32>
    %27 = arith.divf %26, %25 : vector<128x128xf32>
    %cst_17 = arith.constant 0.000000e+00 : f32
    %28 = vector.broadcast %cst_17 : f32 to vector<128x128xf32>
    %29 = arith.maximumf %20, %28 : vector<128x128xf32>
    %c0_18 = arith.constant 0 : index
    %c0_19 = arith.constant 0 : index
    %30 = vector.load %arg10[%c0_18, %c0_19] : memref<128x128xf32, #tpu.memory_space<vmem>>, vector<128x128xf32>
    tpu.vector_store %arg10[%c0_18, %c0_19], %29 {strides = array<i32>} : memref<128x128xf32, #tpu.memory_space<vmem>>, vector<128x128xf32>,
    %c0_20 = arith.constant 0 : index
    %c0_21 = arith.constant 0 : index
    %31 = vector.load %arg13[%c0_20, %c0_21] : memref<128x128xf32, #tpu.memory_space<vmem>>, vector<128x128xf32>
    %32 = arith.mulf %17, %27 : vector<128x128xf32>
    %cst_22 = arith.constant dense<0.000000e+00> : vector<128x128xf32>
    %33 = tpu.matmul %10, %32, %cst_22 {dimension_numbers = #tpu.dot_dimension_numbers<[0], [0], [1], [1], [0, 1, 1, 1], [], []>} : vector<128x128xf32>, vector<128x128xf32>, vector<128x128xf32> -> vector<128x128xf32>
    %34 = arith.addf %31, %33 : vector<128x128xf32>
    %c0_23 = arith.constant 0 : index
    %c0_24 = arith.constant 0 : index
    %35 = vector.load %arg13[%c0_23, %c0_24] : memref<128x128xf32, #tpu.memory_space<vmem>>, vector<128x128xf32>
    tpu.vector_store %arg13[%c0_23, %c0_24], %34 {strides = array<i32>} : memref<128x128xf32, #tpu.memory_space<vmem>>, vector<128x128xf32>,
    %c0_25 = arith.constant 0 : index
    %c0_26 = arith.constant 0 : index
    %36 = vector.load %arg14[%c0_25, %c0_26] : memref<128x128xf32, #tpu.memory_space<vmem>>, vector<128x128xf32>
    %cst_27 = arith.constant dense<0.000000e+00> : vector<128x128xf32>
    %37 = tpu.matmul %10, %27, %cst_27 {dimension_numbers = #tpu.dot_dimension_numbers<[0], [0], [1], [1], [0, 1, 1, 1], [], []>} : vector<128x128xf32>, vector<128x128xf32>, vector<128x128xf32> -> vector<128x128xf32>
    %38 = arith.addf %36, %37 : vector<128x128xf32>
    %c0_28 = arith.constant 0 : index
    %c0_29 = arith.constant 0 : index
    %39 = vector.load %arg14[%c0_28, %c0_29] : memref<128x128xf32, #tpu.memory_space<vmem>>, vector<128x128xf32>
    tpu.vector_store %arg14[%c0_28, %c0_29], %38 {strides = array<i32>} : memref<128x128xf32, #tpu.memory_space<vmem>>, vector<128x128xf32>,
    %c1_i32 = arith.constant 1 : i32
    %40 = arith.cmpi eq, %arg0, %c1_i32 : i32
    %41 = arith.extui %40 : i1 to i32
    %c0_i32_30 = arith.constant 0 : i32
    %42 = arith.cmpi ne, %41, %c0_i32_30 : i32
    scf.if %42 {
      %c0_31 = arith.constant 0 : index
      %c0_32 = arith.constant 0 : index
      %43 = vector.load %arg12[%c0_31, %c0_32] : memref<128x512xf32, #tpu.memory_space<vmem>>, vector<128x128xf32>
      %c0_33 = arith.constant 0 : index
      %c0_34 = arith.constant 0 : index
      %44 = vector.load %arg13[%c0_33, %c0_34] : memref<128x128xf32, #tpu.memory_space<vmem>>, vector<128x128xf32>
      %c0_35 = arith.constant 0 : index
      %c0_36 = arith.constant 0 : index
      %45 = vector.load %arg14[%c0_35, %c0_36] : memref<128x128xf32, #tpu.memory_space<vmem>>, vector<128x128xf32>
      %cst_37 = arith.constant 1.000000e-16 : f32
      %46 = vector.broadcast %cst_37 : f32 to vector<128x128xf32>
      %47 = arith.addf %45, %46 : vector<128x128xf32>
      %48 = arith.divf %44, %47 : vector<128x128xf32>
      %49 = arith.addf %43, %48 : vector<128x128xf32>
      %c0_38 = arith.constant 0 : index
      %c0_39 = arith.constant 0 : index
      %50 = vector.load %arg9[%c0_38, %c0_39] : memref<128x1xf32, #tpu.memory_space<vmem>>, vector<128x1xf32>
      %cst_40 = arith.constant 0.000000e+00 : f32
      %51 = vector.broadcast %cst_40 : f32 to vector<128x1xf32>
      %52 = arith.cmpf ogt, %50, %51 : vector<128x1xf32>
      %cst_41 = arith.constant 0.000000e+00 : f32
      %53 = vector.shape_cast %52 : vector<128x1xi1> to vector<128x1xi1>
      %54 = vector.broadcast %53 : vector<128x1xi1> to vector<128x128xi1>
      %55 = vector.broadcast %cst_41 : f32 to vector<128x128xf32>
      %56 = arith.select %54, %49, %55 : vector<128x128xi1>, vector<128x128xf32>
      %cst_42 = arith.constant 0.000000e+00 : f32
      %57 = vector.broadcast %cst_42 : f32 to vector<128x128xf32>
      %58 = arith.maximumf %56, %57 : vector<128x128xf32>
      %c0_43 = arith.constant 0 : index
      %c0_44 = arith.constant 0 : index
      %59 = vector.load %arg11[%c0_43, %c0_44] : memref<128x128xf32, #tpu.memory_space<vmem>>, vector<128x128xf32>
      tpu.vector_store %arg11[%c0_43, %c0_44], %58 {strides = array<i32>} : memref<128x128xf32, #tpu.memory_space<vmem>>, vector<128x128xf32>,
    } else {
    }
    return
  }
  func.func @transform_0(%arg0: i32) -> (i32, i32) {
    %c0_i32 = arith.constant 0 : i32
    %c0_i32_0 = arith.constant 0 : i32
    %c0_i32_1 = arith.constant 0 : i32
    return %c0_i32, %c0_i32_0 : i32, i32
  }
  func.func @transform_1(%arg0: i32) -> (i32, i32) {
    %c0_i32 = arith.constant 0 : i32
    %c0_i32_0 = arith.constant 0 : i32
    %c0_i32_1 = arith.constant 0 : i32
    return %c0_i32, %c0_i32_0 : i32, i32
  }
  func.func @transform_2(%arg0: i32) -> (i32, i32) {
    %c0_i32 = arith.constant 0 : i32
    %c0_i32_0 = arith.constant 0 : i32
    %c0_i32_1 = arith.constant 0 : i32
    return %c0_i32, %c0_i32_0 : i32, i32
  }
  func.func @transform_3(%arg0: i32) -> (i32, i32) {
    %c0_i32 = arith.constant 0 : i32
    %c0_i32_0 = arith.constant 0 : i32
    return %arg0, %c0_i32 : i32, i32
  }
  func.func @transform_4(%arg0: i32) -> (i32, i32) {
    %c0_i32 = arith.constant 0 : i32
    %c0_i32_0 = arith.constant 0 : i32
    return %arg0, %c0_i32 : i32, i32
  }
  func.func @transform_5(%arg0: i32) -> (i32, i32) {
    %c0_i32 = arith.constant 0 : i32
    %c0_i32_0 = arith.constant 0 : i32
    return %arg0, %c0_i32 : i32, i32
  }
  func.func @transform_6(%arg0: i32) -> (i32, i32) {
    %c0_i32 = arith.constant 0 : i32
    %c0_i32_0 = arith.constant 0 : i32
    %c0_i32_1 = arith.constant 0 : i32
    return %c0_i32, %c0_i32_0 : i32, i32
  }
  func.func @transform_7(%arg0: i32) -> (i32, i32) {
    %c0_i32 = arith.constant 0 : i32
    %c0_i32_0 = arith.constant 0 : i32
    %c0_i32_1 = arith.constant 0 : i32
    return %c0_i32, %c0_i32_0 : i32, i32
  }
  func.func @transform_8(%arg0: i32) -> (i32, i32) {
    %c0_i32 = arith.constant 0 : i32
    %c0_i32_0 = arith.constant 0 : i32
    %c0_i32_1 = arith.constant 0 : i32
    return %c0_i32, %c0_i32_0 : i32, i32
  }
  func.func @transform_9(%arg0: i32) -> (i32, i32) {
    %c0_i32 = arith.constant 0 : i32
    %c0_i32_0 = arith.constant 0 : i32
    return %arg0, %c0_i32 : i32, i32
  }
  func.func @transform_10(%arg0: i32) -> (i32, i32) {
    %c0_i32 = arith.constant 0 : i32
    %c0_i32_0 = arith.constant 0 : i32
    %c0_i32_1 = arith.constant 0 : i32
    return %c0_i32, %c0_i32_0 : i32, i32
  }
}

module attributes {stable_mosaic.version = 11 : i64} {
  func.func @_gcn_layer_kernel(%arg0: i32, %arg1: memref<128x128xf32, #tpu.memory_space<vmem>>, %arg2: memref<128x512xf32, #tpu.memory_space<vmem>>, %arg3: memref<1x512xf32, #tpu.memory_space<vmem>>, %arg4: memref<128x128xbf16, #tpu.memory_space<vmem>>, %arg5: memref<128x128xbf16, #tpu.memory_space<vmem>>, %arg6: memref<128x128xf32, #tpu.memory_space<vmem>>, %arg7: memref<128x128xf32, #tpu.memory_space<vmem>>, %arg8: memref<1x128xf32, #tpu.memory_space<vmem>>, %arg9: memref<128x1xf32, #tpu.memory_space<vmem>>, %arg10: memref<128x128xf32, #tpu.memory_space<vmem>>, %arg11: memref<128x128xf32, #tpu.memory_space<vmem>>, %arg12: memref<128x512xf32, #tpu.memory_space<vmem>>, %arg13: memref<128x128xf32, #tpu.memory_space<vmem>>, %arg14: memref<128x128xf32, #tpu.memory_space<vmem>>) attributes {dimension_semantics = [#tpu.dimension_semantics<arbitrary>], iteration_bounds = array<i64: 2>, scalar_prefetch = 0 : i64, scratch_operands = 3 : i64, tpu.core_type = #tpu.core_type<tc>, window_params = [{pipeline_mode = #tpu.pipeline_mode<synchronous>, transform_indices = @transform_0, window_bounds = array<i64: 128, 128>}, {pipeline_mode = #tpu.pipeline_mode<synchronous>, transform_indices = @transform_1, window_bounds = array<i64: 128, 512>}, {pipeline_mode = #tpu.pipeline_mode<synchronous>, transform_indices = @transform_2, window_bounds = array<i64: 1, 512>}, {transform_indices = @transform_3, window_bounds = array<i64: 128, 128>}, {transform_indices = @transform_4, window_bounds = array<i64: 128, 128>}, {transform_indices = @transform_5, window_bounds = array<i64: 128, 128>}, {pipeline_mode = #tpu.pipeline_mode<synchronous>, transform_indices = @transform_6, window_bounds = array<i64: 128, 128>}, {pipeline_mode = #tpu.pipeline_mode<synchronous>, transform_indices = @transform_7, window_bounds = array<i64: 1, 128>}, {pipeline_mode = #tpu.pipeline_mode<synchronous>, transform_indices = @transform_8, window_bounds = array<i64: 128, 1>}, {transform_indices = @transform_9, window_bounds = array<i64: 128, 128>}, {pipeline_mode = #tpu.pipeline_mode<synchronous>, transform_indices = @transform_10, window_bounds = array<i64: 128, 128>}]} {
    %c0_i32 = arith.constant 0 : i32
    %0 = arith.cmpi eq, %arg0, %c0_i32 : i32
    %1 = arith.extui %0 : i1 to i32
    %c0_i32_0 = arith.constant 0 : i32
    %2 = arith.cmpi ne, %1, %c0_i32_0 : i32
    scf.if %2 {
      %c0_31 = arith.constant 0 : index
      %c0_32 = arith.constant 0 : index
      %43 = vector.load %arg1[%c0_31, %c0_32] : memref<128x128xf32, #tpu.memory_space<vmem>>, vector<128x128xf32>
      %c0_33 = arith.constant 0 : index
      %c0_34 = arith.constant 0 : index
      %44 = vector.load %arg2[%c0_33, %c0_34] : memref<128x512xf32, #tpu.memory_space<vmem>>, vector<128x512xf32>
      %cst_35 = arith.constant dense<0.000000e+00> : vector<128x512xf32>
      %45 = tpu.matmul %43, %44, %cst_35 {dimension_numbers = #tpu.dot_dimension_numbers<[1], [0], [0], [1], [0, 0, 1, 1], [], []>} : vector<128x128xf32>, vector<128x512xf32>, vector<128x512xf32> -> vector<128x512xf32>
      %c0_36 = arith.constant 0 : index
      %c0_37 = arith.constant 0 : index
      %46 = vector.load %arg3[%c0_36, %c0_37] : memref<1x512xf32, #tpu.memory_space<vmem>>, vector<1x512xf32>
      %47 = vector.broadcast %46 : vector<1x512xf32> to vector<128x512xf32>
      %48 = arith.addf %45, %47 : vector<128x512xf32>
      %c0_38 = arith.constant 0 : index
      %c0_39 = arith.constant 0 : index
      %49 = vector.load %arg12[%c0_38, %c0_39] : memref<128x512xf32, #tpu.memory_space<vmem>>, vector<128x512xf32>
      tpu.vector_store %arg12[%c0_38, %c0_39], %48 {strides = array<i32>} : memref<128x512xf32, #tpu.memory_space<vmem>>, vector<128x512xf32>,
      %cst_40 = arith.constant 0.000000e+00 : f32
      %50 = vector.broadcast %cst_40 : f32 to vector<128x128xf32>
      %c0_41 = arith.constant 0 : index
      %c0_42 = arith.constant 0 : index
      %51 = vector.load %arg13[%c0_41, %c0_42] : memref<128x128xf32, #tpu.memory_space<vmem>>, vector<128x128xf32>
      tpu.vector_store %arg13[%c0_41, %c0_42], %50 {strides = array<i32>} : memref<128x128xf32, #tpu.memory_space<vmem>>, vector<128x128xf32>,
      %cst_43 = arith.constant 0.000000e+00 : f32
      %52 = vector.broadcast %cst_43 : f32 to vector<128x128xf32>
      %c0_44 = arith.constant 0 : index
      %c0_45 = arith.constant 0 : index
      %53 = vector.load %arg14[%c0_44, %c0_45] : memref<128x128xf32, #tpu.memory_space<vmem>>, vector<128x128xf32>
      tpu.vector_store %arg14[%c0_44, %c0_45], %52 {strides = array<i32>} : memref<128x128xf32, #tpu.memory_space<vmem>>, vector<128x128xf32>,
    } else {
    }
    %c0 = arith.constant 0 : index
    %c0_1 = arith.constant 0 : index
    %3 = vector.load %arg6[%c0, %c0_1] : memref<128x128xf32, #tpu.memory_space<vmem>>, vector<128x128xf32>
    %c0_2 = arith.constant 0 : index
    %c0_3 = arith.constant 0 : index
    %4 = vector.load %arg7[%c0_2, %c0_3] : memref<128x128xf32, #tpu.memory_space<vmem>>, vector<128x128xf32>
    %cst = arith.constant dense<0.000000e+00> : vector<128x128xf32>
    %5 = tpu.matmul %3, %4, %cst {dimension_numbers = #tpu.dot_dimension_numbers<[1], [0], [0], [1], [0, 0, 1, 1], [], []>} : vector<128x128xf32>, vector<128x128xf32>, vector<128x128xf32> -> vector<128x128xf32>
    %c0_4 = arith.constant 0 : index
    %c0_5 = arith.constant 0 : index
    %6 = vector.load %arg8[%c0_4, %c0_5] : memref<1x128xf32, #tpu.memory_space<vmem>>, vector<1x128xf32>
    %7 = vector.broadcast %6 : vector<1x128xf32> to vector<128x128xf32>
    %8 = arith.addf %5, %7 : vector<128x128xf32>
    %c0_6 = arith.constant 0 : index
    %c0_7 = arith.constant 0 : index
    %9 = vector.load %arg4[%c0_6, %c0_7] : memref<128x128xbf16, #tpu.memory_space<vmem>>, vector<128x128xbf16>
    %10 = arith.extf %9 : vector<128x128xbf16> to vector<128x128xf32>
    %c0_8 = arith.constant 0 : index
    %c0_9 = arith.constant 0 : index
    %11 = vector.load %arg5[%c0_8, %c0_9] : memref<128x128xbf16, #tpu.memory_space<vmem>>, vector<128x128xbf16>
    %12 = arith.extf %11 : vector<128x128xbf16> to vector<128x128xf32>
    %c0_10 = arith.constant 0 : index
    %c128 = arith.constant 128 : index
    %13 = vector.load %arg12[%c0_10, %c128] : memref<128x512xf32, #tpu.memory_space<vmem>>, vector<128x128xf32>
    %cst_11 = arith.constant dense<0.000000e+00> : vector<128x128xf32>
    %14 = tpu.matmul %10, %13, %cst_11 {dimension_numbers = #tpu.dot_dimension_numbers<[1], [0], [0], [1], [0, 0, 1, 1], [], []>} : vector<128x128xf32>, vector<128x128xf32>, vector<128x128xf32> -> vector<128x128xf32>
    %c0_12 = arith.constant 0 : index
    %c256 = arith.constant 256 : index
    %15 = vector.load %arg12[%c0_12, %c256] : memref<128x512xf32, #tpu.memory_space<vmem>>, vector<128x256xf32>
    %cst_13 = arith.constant dense<0.000000e+00> : vector<128x256xf32>
    %16 = tpu.matmul %12, %15, %cst_13 {dimension_numbers = #tpu.dot_dimension_numbers<[1], [0], [0], [1], [0, 0, 1, 1], [], []>} : vector<128x128xf32>, vector<128x256xf32>, vector<128x256xf32> -> vector<128x256xf32>
    %17 = vector.extract_strided_slice %16 {offsets = [0, 0], sizes = [128, 128], strides = [1, 1]} : vector<128x256xf32> to vector<128x128xf32>
    %18 = vector.extract_strided_slice %16 {offsets = [0, 128], sizes = [128, 128], strides = [1, 1]} : vector<128x256xf32> to vector<128x128xf32>
    %19 = arith.addf %14, %18 : vector<128x128xf32>
    %20 = arith.addf %19, %8 : vector<128x128xf32>
    %cst_14 = arith.constant 0.000000e+00 : f32
    %21 = vector.broadcast %cst_14 : f32 to vector<128x128xf32>
    %22 = arith.subf %21, %20 : vector<128x128xf32>
    %23 = math.exp %22 : vector<128x128xf32>
    %cst_15 = arith.constant 1.000000e+00 : f32
    %24 = vector.broadcast %cst_15 : f32 to vector<128x128xf32>
    %25 = arith.addf %24, %23 : vector<128x128xf32>
    %cst_16 = arith.constant 1.000000e+00 : f32
    %26 = vector.broadcast %cst_16 : f32 to vector<128x128xf32>
    %27 = arith.divf %26, %25 : vector<128x128xf32>
    %cst_17 = arith.constant 0.000000e+00 : f32
    %28 = vector.broadcast %cst_17 : f32 to vector<128x128xf32>
    %29 = arith.maximumf %20, %28 : vector<128x128xf32>
    %c0_18 = arith.constant 0 : index
    %c0_19 = arith.constant 0 : index
    %30 = vector.load %arg10[%c0_18, %c0_19] : memref<128x128xf32, #tpu.memory_space<vmem>>, vector<128x128xf32>
    tpu.vector_store %arg10[%c0_18, %c0_19], %29 {strides = array<i32>} : memref<128x128xf32, #tpu.memory_space<vmem>>, vector<128x128xf32>,
    %c0_20 = arith.constant 0 : index
    %c0_21 = arith.constant 0 : index
    %31 = vector.load %arg13[%c0_20, %c0_21] : memref<128x128xf32, #tpu.memory_space<vmem>>, vector<128x128xf32>
    %32 = arith.mulf %17, %27 : vector<128x128xf32>
    %cst_22 = arith.constant dense<0.000000e+00> : vector<128x128xf32>
    %33 = tpu.matmul %10, %32, %cst_22 {dimension_numbers = #tpu.dot_dimension_numbers<[0], [0], [1], [1], [0, 1, 1, 1], [], []>} : vector<128x128xf32>, vector<128x128xf32>, vector<128x128xf32> -> vector<128x128xf32>
    %34 = arith.addf %31, %33 : vector<128x128xf32>
    %c0_23 = arith.constant 0 : index
    %c0_24 = arith.constant 0 : index
    %35 = vector.load %arg13[%c0_23, %c0_24] : memref<128x128xf32, #tpu.memory_space<vmem>>, vector<128x128xf32>
    tpu.vector_store %arg13[%c0_23, %c0_24], %34 {strides = array<i32>} : memref<128x128xf32, #tpu.memory_space<vmem>>, vector<128x128xf32>,
    %c0_25 = arith.constant 0 : index
    %c0_26 = arith.constant 0 : index
    %36 = vector.load %arg14[%c0_25, %c0_26] : memref<128x128xf32, #tpu.memory_space<vmem>>, vector<128x128xf32>
    %cst_27 = arith.constant dense<0.000000e+00> : vector<128x128xf32>
    %37 = tpu.matmul %10, %27, %cst_27 {dimension_numbers = #tpu.dot_dimension_numbers<[0], [0], [1], [1], [0, 1, 1, 1], [], []>} : vector<128x128xf32>, vector<128x128xf32>, vector<128x128xf32> -> vector<128x128xf32>
    %38 = arith.addf %36, %37 : vector<128x128xf32>
    %c0_28 = arith.constant 0 : index
    %c0_29 = arith.constant 0 : index
    %39 = vector.load %arg14[%c0_28, %c0_29] : memref<128x128xf32, #tpu.memory_space<vmem>>, vector<128x128xf32>
    tpu.vector_store %arg14[%c0_28, %c0_29], %38 {strides = array<i32>} : memref<128x128xf32, #tpu.memory_space<vmem>>, vector<128x128xf32>,
    %c1_i32 = arith.constant 1 : i32
    %40 = arith.cmpi eq, %arg0, %c1_i32 : i32
    %41 = arith.extui %40 : i1 to i32
    %c0_i32_30 = arith.constant 0 : i32
    %42 = arith.cmpi ne, %41, %c0_i32_30 : i32
    scf.if %42 {
      %c0_31 = arith.constant 0 : index
      %c0_32 = arith.constant 0 : index
      %43 = vector.load %arg12[%c0_31, %c0_32] : memref<128x512xf32, #tpu.memory_space<vmem>>, vector<128x128xf32>
      %c0_33 = arith.constant 0 : index
      %c0_34 = arith.constant 0 : index
      %44 = vector.load %arg13[%c0_33, %c0_34] : memref<128x128xf32, #tpu.memory_space<vmem>>, vector<128x128xf32>
      %c0_35 = arith.constant 0 : index
      %c0_36 = arith.constant 0 : index
      %45 = vector.load %arg14[%c0_35, %c0_36] : memref<128x128xf32, #tpu.memory_space<vmem>>, vector<128x128xf32>
      %cst_37 = arith.constant 1.000000e-16 : f32
      %46 = vector.broadcast %cst_37 : f32 to vector<128x128xf32>
      %47 = arith.addf %45, %46 : vector<128x128xf32>
      %48 = arith.divf %44, %47 : vector<128x128xf32>
      %49 = arith.addf %43, %48 : vector<128x128xf32>
      %c0_38 = arith.constant 0 : index
      %c0_39 = arith.constant 0 : index
      %50 = vector.load %arg9[%c0_38, %c0_39] : memref<128x1xf32, #tpu.memory_space<vmem>>, vector<128x1xf32>
      %cst_40 = arith.constant 0.000000e+00 : f32
      %51 = vector.broadcast %cst_40 : f32 to vector<128x1xf32>
      %52 = arith.cmpf ogt, %50, %51 : vector<128x1xf32>
      %cst_41 = arith.constant 0.000000e+00 : f32
      %53 = vector.shape_cast %52 : vector<128x1xi1> to vector<128x1xi1>
      %54 = vector.broadcast %53 : vector<128x1xi1> to vector<128x128xi1>
      %55 = vector.broadcast %cst_41 : f32 to vector<128x128xf32>
      %56 = arith.select %54, %49, %55 : vector<128x128xi1>, vector<128x128xf32>
      %cst_42 = arith.constant 0.000000e+00 : f32
      %57 = vector.broadcast %cst_42 : f32 to vector<128x128xf32>
      %58 = arith.maximumf %56, %57 : vector<128x128xf32>
      %c0_43 = arith.constant 0 : index
      %c0_44 = arith.constant 0 : index
      %59 = vector.load %arg11[%c0_43, %c0_44] : memref<128x128xf32, #tpu.memory_space<vmem>>, vector<128x128xf32>
      tpu.vector_store %arg11[%c0_43, %c0_44], %58 {strides = array<i32>} : memref<128x128xf32, #tpu.memory_space<vmem>>, vector<128x128xf32>,
    } else {
    }
    return
  }
  func.func @transform_0(%arg0: i32) -> (i32, i32) {
    %c0_i32 = arith.constant 0 : i32
    %c0_i32_0 = arith.constant 0 : i32
    %c0_i32_1 = arith.constant 0 : i32
    return %c0_i32, %c0_i32_0 : i32, i32
  }
  func.func @transform_1(%arg0: i32) -> (i32, i32) {
    %c0_i32 = arith.constant 0 : i32
    %c0_i32_0 = arith.constant 0 : i32
    %c0_i32_1 = arith.constant 0 : i32
    return %c0_i32, %c0_i32_0 : i32, i32
  }
  func.func @transform_2(%arg0: i32) -> (i32, i32) {
    %c0_i32 = arith.constant 0 : i32
    %c0_i32_0 = arith.constant 0 : i32
    %c0_i32_1 = arith.constant 0 : i32
    return %c0_i32, %c0_i32_0 : i32, i32
  }
  func.func @transform_3(%arg0: i32) -> (i32, i32) {
    %c0_i32 = arith.constant 0 : i32
    %c0_i32_0 = arith.constant 0 : i32
    return %arg0, %c0_i32 : i32, i32
  }
  func.func @transform_4(%arg0: i32) -> (i32, i32) {
    %c0_i32 = arith.constant 0 : i32
    %c0_i32_0 = arith.constant 0 : i32
    return %arg0, %c0_i32 : i32, i32
  }
  func.func @transform_5(%arg0: i32) -> (i32, i32) {
    %c0_i32 = arith.constant 0 : i32
    %c0_i32_0 = arith.constant 0 : i32
    return %arg0, %c0_i32 : i32, i32
  }
  func.func @transform_6(%arg0: i32) -> (i32, i32) {
    %c0_i32 = arith.constant 0 : i32
    %c0_i32_0 = arith.constant 0 : i32
    %c0_i32_1 = arith.constant 0 : i32
    return %c0_i32, %c0_i32_0 : i32, i32
  }
  func.func @transform_7(%arg0: i32) -> (i32, i32) {
    %c0_i32 = arith.constant 0 : i32
    %c0_i32_0 = arith.constant 0 : i32
    %c0_i32_1 = arith.constant 0 : i32
    return %c0_i32, %c0_i32_0 : i32, i32
  }
  func.func @transform_8(%arg0: i32) -> (i32, i32) {
    %c0_i32 = arith.constant 0 : i32
    %c0_i32_0 = arith.constant 0 : i32
    %c0_i32_1 = arith.constant 0 : i32
    return %c0_i32, %c0_i32_0 : i32, i32
  }
  func.func @transform_9(%arg0: i32) -> (i32, i32) {
    %c0_i32 = arith.constant 0 : i32
    %c0_i32_0 = arith.constant 0 : i32
    return %arg0, %c0_i32 : i32, i32
  }
  func.func @transform_10(%arg0: i32) -> (i32, i32) {
    %c0_i32 = arith.constant 0 : i32
    %c0_i32_0 = arith.constant 0 : i32
    %c0_i32_1 = arith.constant 0 : i32
    return %c0_i32, %c0_i32_0 : i32, i32
  }
}

module attributes {stable_mosaic.version = 11 : i64} {
  func.func @_mean_pool_kernel(%arg0: i32, %arg1: memref<2x128xf32, #tpu.memory_space<vmem>>, %arg2: memref<128x128xf32, #tpu.memory_space<vmem>>, %arg3: memref<2x128xf32, #tpu.memory_space<vmem>>) attributes {dimension_semantics = [#tpu.dimension_semantics<arbitrary>], iteration_bounds = array<i64: 1>, scalar_prefetch = 0 : i64, scratch_operands = 0 : i64, tpu.core_type = #tpu.core_type<tc>, window_params = [{transform_indices = @transform_0, window_bounds = array<i64: 2, 128>}, {transform_indices = @transform_1, window_bounds = array<i64: 128, 128>}, {pipeline_mode = #tpu.pipeline_mode<synchronous>, transform_indices = @transform_2, window_bounds = array<i64: 2, 128>}]} {
    %c0_i32 = arith.constant 0 : i32
    %0 = arith.cmpi eq, %arg0, %c0_i32 : i32
    %1 = arith.extui %0 : i1 to i32
    %c0_i32_0 = arith.constant 0 : i32
    %2 = arith.cmpi ne, %1, %c0_i32_0 : i32
    scf.if %2 {
      %cst_8 = arith.constant 0.000000e+00 : f32
      %9 = vector.broadcast %cst_8 : f32 to vector<2x128xf32>
      %c0_9 = arith.constant 0 : index
      %c0_10 = arith.constant 0 : index
      %10 = vector.load %arg3[%c0_9, %c0_10] : memref<2x128xf32, #tpu.memory_space<vmem>>, vector<2x128xf32>
      tpu.vector_store %arg3[%c0_9, %c0_10], %9 {strides = array<i32>} : memref<2x128xf32, #tpu.memory_space<vmem>>, vector<2x128xf32>,
    } else {
    }
    %c0 = arith.constant 0 : index
    %c0_1 = arith.constant 0 : index
    %3 = vector.load %arg3[%c0, %c0_1] : memref<2x128xf32, #tpu.memory_space<vmem>>, vector<2x128xf32>
    %c0_2 = arith.constant 0 : index
    %c0_3 = arith.constant 0 : index
    %4 = vector.load %arg1[%c0_2, %c0_3] : memref<2x128xf32, #tpu.memory_space<vmem>>, vector<2x128xf32>
    %c0_4 = arith.constant 0 : index
    %c0_5 = arith.constant 0 : index
    %5 = vector.load %arg2[%c0_4, %c0_5] : memref<128x128xf32, #tpu.memory_space<vmem>>, vector<128x128xf32>
    %cst = arith.constant dense<0.000000e+00> : vector<2x128xf32>
    %6 = tpu.matmul %4, %5, %cst {dimension_numbers = #tpu.dot_dimension_numbers<[1], [0], [0], [1], [0, 0, 1, 1], [], []>} : vector<2x128xf32>, vector<128x128xf32>, vector<2x128xf32> -> vector<2x128xf32>
    %7 = arith.addf %3, %6 : vector<2x128xf32>
    %c0_6 = arith.constant 0 : index
    %c0_7 = arith.constant 0 : index
    %8 = vector.load %arg3[%c0_6, %c0_7] : memref<2x128xf32, #tpu.memory_space<vmem>>, vector<2x128xf32>
    tpu.vector_store %arg3[%c0_6, %c0_7], %7 {strides = array<i32>} : memref<2x128xf32, #tpu.memory_space<vmem>>, vector<2x128xf32>,
    return
  }
  func.func @transform_0(%arg0: i32) -> (i32, i32) {
    %c0_i32 = arith.constant 0 : i32
    %c0_i32_0 = arith.constant 0 : i32
    return %c0_i32, %arg0 : i32, i32
  }
  func.func @transform_1(%arg0: i32) -> (i32, i32) {
    %c0_i32 = arith.constant 0 : i32
    %c0_i32_0 = arith.constant 0 : i32
    return %arg0, %c0_i32 : i32, i32
  }
  func.func @transform_2(%arg0: i32) -> (i32, i32) {
    %c0_i32 = arith.constant 0 : i32
    %c0_i32_0 = arith.constant 0 : i32
    %c0_i32_1 = arith.constant 0 : i32
    return %c0_i32, %c0_i32_0 : i32, i32
  }
}

</mosaic_0001>

<llo_original>
// kernel: _lambda_.9
$region0: #{_lambda_.9}
  #allocation0 [shape = 'u32[]', space=smem, size = 0x4, offset = 0x4, fixed_abs, tag = 'smem constant byte address 0x4 - core index']
  #allocation1 [shape = 'u32[72,128]{1,0:T(1,128)}', space=vmem, size = 0x9000, scoped, tag = 'internal scratch']
  %s0 = inlined_call_operand.vmem [shape: f32[2,128], index: 0, kind: input, shape index: {}]
  %s1 = inlined_call_operand.vmem [shape: f32[128,128], index: 1, kind: input, shape index: {}]
  %s2 = inlined_call_operand.hbm [shape: f32[2,128], index: 2, kind: output, shape index: {}]
  %s3 = sld [smem:[#allocation0]]
  $region22: #{_lambda_.9} parent=0
    _
  %s5 = ssub.s32 1, %s3
  %s6 = scalar_select 0, %s5, %s3
  $region1: #{_lambda_.9} parent=0
    #allocation2 [shape = 'u8[1024]{0}', space=vmem, size = 0x400, scoped, tag = 'output window, operand 0, single buffered']
    #allocation3 [shape = 's32[1]{0}', space=sflag, size = 0x4, scoped, tag = 'scoped memory for _lambda_.9']
    %7 = vsyncpa [#allocation3], 0
    // Predicated region
    $region2: #{_lambda_.9} parent=1 // pred_check
      _
    $region3: #{_lambda_.9} parent=1 // pred_check_branch
      %9 = sbr.rel (0) target = $region5
    $region4: #{_lambda_.9} parent=1 // pred_region
      _
    $region5: #{_lambda_.9} parent=1 // pred_fallthru
      _
    // Predicated region
    $region6: #{_lambda_.9} parent=1 // pred_check
      _
    $region7: #{_lambda_.9} parent=1 // pred_check_branch
      %11 = sbr.rel (0) target = $region9
    $region8: #{_lambda_.9} parent=1 // pred_region
      _
    $region9: #{_lambda_.9} parent=1 // pred_fallthru
      _
    %p12 = scmp.eq.s32.totalorder 0, 0
    // Predicated region
    $region10: #{_lambda_.9} parent=1 // pred_check
      %p13 = pneg %p12
    $region11: #{_lambda_.9} parent=1 // pred_check_branch
      %15 = sbr.rel (%p13) target = $region13
    $region12: #{_lambda_.9} parent=1 // pred_region
      %16 = vst [vmem:[#allocation2] sm:$0x3] 0.0
    $region13: #{_lambda_.9} parent=1 // pred_fallthru
      _
    %v17 = vld [vmem:[#allocation2] sm:$0x3]
    %v18 = vld [vmem:[%s0] sm:$0x3]
    %v19 = vld [vmem:[%s1] sm:$0xff]
    %v20 = vld [vmem:[%s1 + $0x8] sm:$0xff]
    %v21 = vld [vmem:[%s1 + $0x10] sm:$0xff]
    %v22 = vld [vmem:[%s1 + $0x18] sm:$0xff]
    %v23 = vld [vmem:[%s1 + $0x20] sm:$0xff]
    %v24 = vld [vmem:[%s1 + $0x28] sm:$0xff]
    %v25 = vld [vmem:[%s1 + $0x30] sm:$0xff]
    %v26 = vld [vmem:[%s1 + $0x38] sm:$0xff]
    %v27 = vld [vmem:[%s1 + $0x40] sm:$0xff]
    %v28 = vld [vmem:[%s1 + $0x48] sm:$0xff]
    %v29 = vld [vmem:[%s1 + $0x50] sm:$0xff]
    %v30 = vld [vmem:[%s1 + $0x58] sm:$0xff]
    %v31 = vld [vmem:[%s1 + $0x60] sm:$0xff]
    %v32 = vld [vmem:[%s1 + $0x68] sm:$0xff]
    %v33 = vld [vmem:[%s1 + $0x70] sm:$0xff]
    %v34 = vld [vmem:[%s1 + $0x78] sm:$0xff]
    %35 = vmatpush.msra.mxu0 %v34
    %36 = vmatpush.msra.mxu0 %v33
    %37 = vmatpush.msra.mxu0 %v32
    %38 = vmatpush.msra.mxu0 %v31
    %39 = vmatpush.msra.mxu0 %v30
    %40 = vmatpush.msra.mxu0 %v29
    %41 = vmatpush.msra.mxu0 %v28
    %42 = vmatpush.msra.mxu0 %v27
    %43 = vmatpush.msra.mxu0 %v26
    %44 = vmatpush.msra.mxu0 %v25
    %45 = vmatpush.msra.mxu0 %v24
    %46 = vmatpush.msra.mxu0 %v23
    %47 = vmatpush.msra.mxu0 %v22
    %48 = vmatpush.msra.mxu0 %v21
    %49 = vmatpush.msra.mxu0 %v20
    %50 = vmatpush.msra.mxu0 %v19
    %51 = vmatmul.f32.gmra.mxu0 %v18
    %v52 = vpop.f32.mrf.mxu0
    %v53 = vadd.f32 0.0, %v52
    %54 = vdwg.mxu0
    %v55 = vadd.f32 %v17, %v53
    %56 = vst [vmem:[#allocation2] sm:$0x3] %v55
    // Predicated region
    $region14: #{_lambda_.9} parent=1 // pred_check
      _
    $region15: #{_lambda_.9} parent=1 // pred_check_branch
      %58 = sbr.rel (0) target = $region17
    $region16: #{_lambda_.9} parent=1 // pred_region
      %60 = vsyncadd [#allocation3], 0
      %s62 = sshll.u32 [#allocation2], 4
      %s63 = int_to_ptr.vmem [resolvable:$true] %s62
      %s64 = sshll.u32 %s2, 4
      %s65 = int_to_ptr.hbm [resolvable:$true] %s64
      %67 = dma.vmem_to_hbm [thread:$0]  %s63, 32, %s65, [#allocation3]
    $region17: #{_lambda_.9} parent=1 // pred_fallthru
      _
    // Predicated region
    $region18: #{_lambda_.9} parent=1 // pred_check
      _
    $region19: #{_lambda_.9} parent=1 // pred_check_branch
      %69 = sbr.rel (0) target = $region21
    $region20: #{_lambda_.9} parent=1 // pred_region
      %71 = dma.done [#allocation3], 32
    $region21: #{_lambda_.9} parent=1 // pred_fallthru
      _
    %72 = vsyncpa [#allocation3], 1

// kernel: _lambda_.5
$region0: #{_lambda_.5}
  #allocation0 [shape = 'u32[]', space=smem, size = 0x4, offset = 0x4, fixed_abs, tag = 'smem constant byte address 0x4 - core index']
  #allocation1 [shape = 'u32[72,128]{1,0:T(1,128)}', space=vmem, size = 0x9000, scoped, tag = 'internal scratch']
  #allocation2 [shape = 'f32[128,512]{1,0:T(8,128)}', space=vmem, size = 0x40000, scoped, tag = 'scratch operand']
  #allocation3 [shape = 'f32[128,128]{1,0:T(8,128)}', space=vmem, size = 0x10000, scoped, tag = 'scratch operand']
  #allocation4 [shape = 'f32[128,128]{1,0:T(8,128)}', space=vmem, size = 0x10000, scoped, tag = 'scratch operand']
  %s0 = inlined_call_operand.vmem [shape: f32[128,64], index: 0, kind: input, shape index: {}]
  %s1 = inlined_call_operand.vmem [shape: f32[64,512], index: 1, kind: input, shape index: {}]
  %s2 = inlined_call_operand.vmem [shape: f32[1,512], index: 2, kind: input, shape index: {}]
  %s3 = inlined_call_operand.vmem [shape: bf16[256,128], index: 3, kind: input, shape index: {}]
  %s4 = inlined_call_operand.vmem [shape: bf16[256,128], index: 4, kind: input, shape index: {}]
  %s5 = inlined_call_operand.vmem [shape: f32[256,1], index: 5, kind: input, shape index: {}]
  %s6 = inlined_call_operand.vmem [shape: f32[1,128], index: 6, kind: input, shape index: {}]
  %s7 = inlined_call_operand.vmem [shape: f32[1,128], index: 7, kind: input, shape index: {}]
  %s8 = inlined_call_operand.vmem [shape: f32[128,1], index: 8, kind: input, shape index: {}]
  %s9 = inlined_call_operand.vmem [shape: f32[256,128], index: 9, kind: output, shape index: {0}]
  %s10 = inlined_call_operand.vmem [shape: f32[128,128], index: 10, kind: output, shape index: {1}]
  %11 = xla_tuple %s9, %s10
  %s12 = sld [smem:[#allocation0]]
  $region85: #{_lambda_.5} parent=0
    _
  %s14 = ssub.s32 1, %s12
  %s15 = scalar_select 0, %s14, %s12
  loop: start=0, step=1, limit=4
  $region2: #{_lambda_.5} parent=0 // loop_pre_header
    _
  $region3: #{_lambda_.5} parent=0 // loop_header
    %s17 = sphi 0, %s21
    %p18 = scmp.ge.s32.totalorder %s17, 4
    %s25 = sphi 0, %s25
    %s27 = sphi 0, %s25
    %s28 = sphi 0, %s27
    %s42 = sphi 0, %s28
    %s46 = sphi 0, %s46
    %s48 = sphi 0, %s46
    %s49 = sphi 0, %s48
    %s63 = sphi 0, %s49
    %s67 = sphi 0, %s67
    %s69 = sphi 0, %s67
    %s70 = sphi 0, %s69
    %s84 = sphi 0, %s70
    %s90 = sphi 0, %s92
    %s93 = sphi 0, %s90
    %s94 = sphi 0, %s93
    %s110 = sphi 0, %s94
    %s116 = sphi 0, %s118
    %s119 = sphi 0, %s116
    %s120 = sphi 0, %s119
    %s136 = sphi 0, %s120
    %s142 = sphi 0, %s144
    %s145 = sphi 0, %s142
    %s146 = sphi 0, %s145
    %s162 = sphi 0, %s146
    %s166 = sphi 0, %s166
    %s168 = sphi 0, %s166
    %s169 = sphi 0, %s168
    %s183 = sphi 0, %s169
    %s187 = sphi 0, %s187
    %s189 = sphi 0, %s187
    %s190 = sphi 0, %s189
    %s204 = sphi 0, %s190
    %s208 = sphi 0, %s208
    %s210 = sphi 0, %s208
    %s211 = sphi 0, %s210
    %s225 = sphi 0, %s211
    %s231 = sphi 0, %s233
    %s234 = sphi 0, %s231
    %s235 = sphi 0, %s234
    %s251 = sphi 0, %s235
    %s255 = sphi 0, %s255
    %s257 = sphi 0, %s255
    %s258 = sphi 0, %s257
    %s272 = sphi 0, %s258
  $region4: #{_lambda_.5} parent=0 // loop_header_branch
    %20 = sbr.rel (%p18) target = $region8
  $region5: #{_lambda_.5} parent=0 // loop_body
    %s22 = ssub.s32 %s17, 1
    %s23 = ssub.s32 %s17, 2
    %s24 = sadd.s32 %s17, 1
    %s26 = sadd.s32 %s25, 1
    %p29 = scmp.eq.s32.totalorder %s17, 1
    %p30 = scmp.ne.s32.totalorder %s25, %s27
    %p31 = scmp.eq.s32.totalorder %s17, 0
    %p32 = por %p30, %p31
    %p33 = scmp.ne.s32.totalorder %s25, %s27
    %p34 = scmp.eq.s32.totalorder %s22, 1
    %p35 = por %p33, %p34
    %p36 = scmp.ne.s32.totalorder %s27, %s28
    %p37 = scmp.eq.s32.totalorder %s22, 0
    %p38 = por %p36, %p37
    %p39 = scmp.ne.s32.totalorder %s27, %s28
    %p40 = scmp.eq.s32.totalorder %s23, 1
    %p41 = por %p39, %p40
    %p43 = scmp.ne.s32.totalorder %s28, %s42
    %p44 = scmp.eq.s32.totalorder %s23, 0
    %p45 = por %p43, %p44
    %s47 = sadd.s32 %s46, 1
    %p50 = scmp.eq.s32.totalorder %s17, 1
    %p51 = scmp.ne.s32.totalorder %s46, %s48
    %p52 = scmp.eq.s32.totalorder %s17, 0
    %p53 = por %p51, %p52
    %p54 = scmp.ne.s32.totalorder %s46, %s48
    %p55 = scmp.eq.s32.totalorder %s22, 1
    %p56 = por %p54, %p55
    %p57 = scmp.ne.s32.totalorder %s48, %s49
    %p58 = scmp.eq.s32.totalorder %s22, 0
    %p59 = por %p57, %p58
    %p60 = scmp.ne.s32.totalorder %s48, %s49
    %p61 = scmp.eq.s32.totalorder %s23, 1
    %p62 = por %p60, %p61
    %p64 = scmp.ne.s32.totalorder %s49, %s63
    %p65 = scmp.eq.s32.totalorder %s23, 0
    %p66 = por %p64, %p65
    %s68 = sadd.s32 %s67, 1
    %p71 = scmp.eq.s32.totalorder %s17, 1
    %p72 = scmp.ne.s32.totalorder %s67, %s69
    %p73 = scmp.eq.s32.totalorder %s17, 0
    %p74 = por %p72, %p73
    %p75 = scmp.ne.s32.totalorder %s67, %s69
    %p76 = scmp.eq.s32.totalorder %s22, 1
    %p77 = por %p75, %p76
    %p78 = scmp.ne.s32.totalorder %s69, %s70
    %p79 = scmp.eq.s32.totalorder %s22, 0
    %p80 = por %p78, %p79
    %p81 = scmp.ne.s32.totalorder %s69, %s70
    %p82 = scmp.eq.s32.totalorder %s23, 1
    %p83 = por %p81, %p82
    %p85 = scmp.ne.s32.totalorder %s70, %s84
    %p86 = scmp.eq.s32.totalorder %s23, 0
    %p87 = por %p85, %p86
    %s88 = ssub.s32 %s17, %s24
    %p89 = scmp.eq.s32.totalorder %s88, 0
    %s91 = sadd.s32 %s90, 1
    %s92 = scalar_select %p89, %s90, %s91
    %p95 = pneg %p89
    %p96 = scmp.eq.s32.totalorder %s17, 1
    %p97 = por %p95, %p96
    %p98 = scmp.ne.s32.totalorder %s90, %s93
    %p99 = scmp.eq.s32.totalorder %s17, 0
    %p100 = por %p98, %p99
    %p101 = scmp.ne.s32.totalorder %s90, %s93
    %p102 = scmp.eq.s32.totalorder %s22, 1
    %p103 = por %p101, %p102
    %p104 = scmp.ne.s32.totalorder %s93, %s94
    %p105 = scmp.eq.s32.totalorder %s22, 0
    %p106 = por %p104, %p105
    %p107 = scmp.ne.s32.totalorder %s93, %s94
    %p108 = scmp.eq.s32.totalorder %s23, 1
    %p109 = por %p107, %p108
    %p111 = scmp.ne.s32.totalorder %s94, %s110
    %p112 = scmp.eq.s32.totalorder %s23, 0
    %p113 = por %p111, %p112
    %s114 = ssub.s32 %s17, %s24
    %p115 = scmp.eq.s32.totalorder %s114, 0
    %s117 = sadd.s32 %s116, 1
    %s118 = scalar_select %p115, %s116, %s117
    %p121 = pneg %p115
    %p122 = scmp.eq.s32.totalorder %s17, 1
    %p123 = por %p121, %p122
    %p124 = scmp.ne.s32.totalorder %s116, %s119
    %p125 = scmp.eq.s32.totalorder %s17, 0
    %p126 = por %p124, %p125
    %p127 = scmp.ne.s32.totalorder %s116, %s119
    %p128 = scmp.eq.s32.totalorder %s22, 1
    %p129 = por %p127, %p128
    %p130 = scmp.ne.s32.totalorder %s119, %s120
    %p131 = scmp.eq.s32.totalorder %s22, 0
    %p132 = por %p130, %p131
    %p133 = scmp.ne.s32.totalorder %s119, %s120
    %p134 = scmp.eq.s32.totalorder %s23, 1
    %p135 = por %p133, %p134
    %p137 = scmp.ne.s32.totalorder %s120, %s136
    %p138 = scmp.eq.s32.totalorder %s23, 0
    %p139 = por %p137, %p138
    %s140 = ssub.s32 %s17, %s24
    %p141 = scmp.eq.s32.totalorder %s140, 0
    %s143 = sadd.s32 %s142, 1
    %s144 = scalar_select %p141, %s142, %s143
    %p147 = pneg %p141
    %p148 = scmp.eq.s32.totalorder %s17, 1
    %p149 = por %p147, %p148
    %p150 = scmp.ne.s32.totalorder %s142, %s145
    %p151 = scmp.eq.s32.totalorder %s17, 0
    %p152 = por %p150, %p151
    %p153 = scmp.ne.s32.totalorder %s142, %s145
    %p154 = scmp.eq.s32.totalorder %s22, 1
    %p155 = por %p153, %p154
    %p156 = scmp.ne.s32.totalorder %s145, %s146
    %p157 = scmp.eq.s32.totalorder %s22, 0
    %p158 = por %p156, %p157
    %p159 = scmp.ne.s32.totalorder %s145, %s146
    %p160 = scmp.eq.s32.totalorder %s23, 1
    %p161 = por %p159, %p160
    %p163 = scmp.ne.s32.totalorder %s146, %s162
    %p164 = scmp.eq.s32.totalorder %s23, 0
    %p165 = por %p163, %p164
    %s167 = sadd.s32 %s166, 1
    %p170 = scmp.eq.s32.totalorder %s17, 1
    %p171 = scmp.ne.s32.totalorder %s166, %s168
    %p172 = scmp.eq.s32.totalorder %s17, 0
    %p173 = por %p171, %p172
    %p174 = scmp.ne.s32.totalorder %s166, %s168
    %p175 = scmp.eq.s32.totalorder %s22, 1
    %p176 = por %p174, %p175
    %p177 = scmp.ne.s32.totalorder %s168, %s169
    %p178 = scmp.eq.s32.totalorder %s22, 0
    %p179 = por %p177, %p178
    %p180 = scmp.ne.s32.totalorder %s168, %s169
    %p181 = scmp.eq.s32.totalorder %s23, 1
    %p182 = por %p180, %p181
    %p184 = scmp.ne.s32.totalorder %s169, %s183
    %p185 = scmp.eq.s32.totalorder %s23, 0
    %p186 = por %p184, %p185
    %s188 = sadd.s32 %s187, 1
    %p191 = scmp.eq.s32.totalorder %s17, 1
    %p192 = scmp.ne.s32.totalorder %s187, %s189
    %p193 = scmp.eq.s32.totalorder %s17, 0
    %p194 = por %p192, %p193
    %p195 = scmp.ne.s32.totalorder %s187, %s189
    %p196 = scmp.eq.s32.totalorder %s22, 1
    %p197 = por %p195, %p196
    %p198 = scmp.ne.s32.totalorder %s189, %s190
    %p199 = scmp.eq.s32.totalorder %s22, 0
    %p200 = por %p198, %p199
    %p201 = scmp.ne.s32.totalorder %s189, %s190
    %p202 = scmp.eq.s32.totalorder %s23, 1
    %p203 = por %p201, %p202
    %p205 = scmp.ne.s32.totalorder %s190, %s204
    %p206 = scmp.eq.s32.totalorder %s23, 0
    %p207 = por %p205, %p206
    %s209 = sadd.s32 %s208, 1
    %p212 = scmp.eq.s32.totalorder %s17, 1
    %p213 = scmp.ne.s32.totalorder %s208, %s210
    %p214 = scmp.eq.s32.totalorder %s17, 0
    %p215 = por %p213, %p214
    %p216 = scmp.ne.s32.totalorder %s208, %s210
    %p217 = scmp.eq.s32.totalorder %s22, 1
    %p218 = por %p216, %p217
    %p219 = scmp.ne.s32.totalorder %s210, %s211
    %p220 = scmp.eq.s32.totalorder %s22, 0
    %p221 = por %p219, %p220
    %p222 = scmp.ne.s32.totalorder %s210, %s211
    %p223 = scmp.eq.s32.totalorder %s23, 1
    %p224 = por %p222, %p223
    %p226 = scmp.ne.s32.totalorder %s211, %s225
    %p227 = scmp.eq.s32.totalorder %s23, 0
    %p228 = por %p226, %p227
    %s229 = ssub.s32 %s17, %s24
    %p230 = scmp.eq.s32.totalorder %s229, 0
    %s232 = sadd.s32 %s231, 1
    %s233 = scalar_select %p230, %s231, %s232
    %p236 = pneg %p230
    %p237 = scmp.eq.s32.totalorder %s17, 1
    %p238 = por %p236, %p237
    %p239 = scmp.ne.s32.totalorder %s231, %s234
    %p240 = scmp.eq.s32.totalorder %s17, 0
    %p241 = por %p239, %p240
    %p242 = scmp.ne.s32.totalorder %s231, %s234
    %p243 = scmp.eq.s32.totalorder %s22, 1
    %p244 = por %p242, %p243
    %p245 = scmp.ne.s32.totalorder %s234, %s235
    %p246 = scmp.eq.s32.totalorder %s22, 0
    %p247 = por %p245, %p246
    %p248 = scmp.ne.s32.totalorder %s234, %s235
    %p249 = scmp.eq.s32.totalorder %s23, 1
    %p250 = por %p248, %p249
    %p252 = scmp.ne.s32.totalorder %s235, %s251
    %p253 = scmp.eq.s32.totalorder %s23, 0
    %p254 = por %p252, %p253
    %s256 = sadd.s32 %s255, 1
    %p259 = scmp.eq.s32.totalorder %s17, 1
    %p260 = scmp.ne.s32.totalorder %s255, %s257
    %p261 = scmp.eq.s32.totalorder %s17, 0
    %p262 = por %p260, %p261
    %p263 = scmp.ne.s32.totalorder %s255, %s257
    %p264 = scmp.eq.s32.totalorder %s22, 1
    %p265 = por %p263, %p264
    %p266 = scmp.ne.s32.totalorder %s257, %s258
    %p267 = scmp.eq.s32.totalorder %s22, 0
    %p268 = por %p266, %p267
    %p269 = scmp.ne.s32.totalorder %s257, %s258
    %p270 = scmp.eq.s32.totalorder %s23, 1
    %p271 = por %p269, %p270
    %p273 = scmp.ne.s32.totalorder %s258, %s272
    %p274 = scmp.eq.s32.totalorder %s23, 0
    %p275 = por %p273, %p274
    %p276 = scmp.le.s32.totalorder 1, %s17
    %p277 = scmp.lt.s32.totalorder %s17, 3
    %p278 = pnand %p276, %p277
    %p279 = pneg %p278
    // Predicated region
    $region9: #{_lambda_.5} parent=5 // pred_check
      _
    $region10: #{_lambda_.5} parent=5 // pred_check_branch
      %281 = sbr.rel (%p278) target = $region12
    $region11: #{_lambda_.5} parent=5 // pred_region
      %s282 = ssub.s32 %s17, 1
      // Predicated region
      $region13: #{_lambda_.5} parent=11 // pred_check
        %p283 = pneg %p38
      $region14: #{_lambda_.5} parent=11 // pred_check_branch
        %285 = sbr.rel (%p283) target = $region16
      $region15: #{_lambda_.5} parent=11 // pred_region
        _
      $region16: #{_lambda_.5} parent=11 // pred_fallthru
        _
      // Predicated region
      $region17: #{_lambda_.5} parent=11 // pred_check
        %p286 = pneg %p59
      $region18: #{_lambda_.5} parent=11 // pred_check_branch
        %288 = sbr.rel (%p286) target = $region20
      $region19: #{_lambda_.5} parent=11 // pred_region
        _
      $region20: #{_lambda_.5} parent=11 // pred_fallthru
        _
      // Predicated region
      $region21: #{_lambda_.5} parent=11 // pred_check
        %p289 = pneg %p80
      $region22: #{_lambda_.5} parent=11 // pred_check_branch
        %291 = sbr.rel (%p289) target = $region24
      $region23: #{_lambda_.5} parent=11 // pred_region
        _
      $region24: #{_lambda_.5} parent=11 // pred_fallthru
        _
      // Predicated region
      $region25: #{_lambda_.5} parent=11 // pred_check
        %p292 = pneg %p179
      $region26: #{_lambda_.5} parent=11 // pred_check_branch
        %294 = sbr.rel (%p292) target = $region28
      $region27: #{_lambda_.5} parent=11 // pred_region
        _
      $region28: #{_lambda_.5} parent=11 // pred_fallthru
        _
      // Predicated region
      $region29: #{_lambda_.5} parent=11 // pred_check
        %p295 = pneg %p200
      $region30: #{_lambda_.5} parent=11 // pred_check_branch
        %297 = sbr.rel (%p295) target = $region32
      $region31: #{_lambda_.5} parent=11 // pred_region
        _
      $region32: #{_lambda_.5} parent=11 // pred_fallthru
        _
      // Predicated region
      $region33: #{_lambda_.5} parent=11 // pred_check
        %p298 = pneg %p221
      $region34: #{_lambda_.5} parent=11 // pred_check_branch
        %300 = sbr.rel (%p298) target = $region36
      $region35: #{_lambda_.5} parent=11 // pred_region
        _
      $region36: #{_lambda_.5} parent=11 // pred_fallthru
        _
    $region12: #{_lambda_.5} parent=5 // pred_fallthru
      _
    %p301 = scmp.lt.s32.totalorder %s17, 2
    // Predicated region
    $region37: #{_lambda_.5} parent=5 // pred_check
      %p302 = pneg %p301
    $region38: #{_lambda_.5} parent=5 // pred_check_branch
      %304 = sbr.rel (%p302) target = $region40
    $region39: #{_lambda_.5} parent=5 // pred_region
      // Predicated region
      $region41: #{_lambda_.5} parent=39 // pred_check
        %p305 = pneg %p100
      $region42: #{_lambda_.5} parent=39 // pred_check_branch
        %307 = sbr.rel (%p305) target = $region44
      $region43: #{_lambda_.5} parent=39 // pred_region
        %s308 = smul.u32 16, %s17
        %p309 = scmp.lt.s32.totalorder %s308, 31
        %s310 = scalar_select %p309, %s308, 31
        %s311 = smul.addr %s310, 4
        %s312 = scalar_lea.vmem %s3, %s311
        %s313 = smul.u32 16, %s17
      $region44: #{_lambda_.5} parent=39 // pred_fallthru
        _
      // Predicated region
      $region45: #{_lambda_.5} parent=39 // pred_check
        %p314 = pneg %p126
      $region46: #{_lambda_.5} parent=39 // pred_check_branch
        %316 = sbr.rel (%p314) target = $region48
      $region47: #{_lambda_.5} parent=39 // pred_region
        %s317 = smul.u32 16, %s17
        %p318 = scmp.lt.s32.totalorder %s317, 31
        %s319 = scalar_select %p318, %s317, 31
        %s320 = smul.addr %s319, 4
        %s321 = scalar_lea.vmem %s4, %s320
        %s322 = smul.u32 16, %s17
      $region48: #{_lambda_.5} parent=39 // pred_fallthru
        _
      // Predicated region
      $region49: #{_lambda_.5} parent=39 // pred_check
        %p323 = pneg %p152
      $region50: #{_lambda_.5} parent=39 // pred_check_branch
        %325 = sbr.rel (%p323) target = $region52
      $region51: #{_lambda_.5} parent=39 // pred_region
        %s326 = smul.u32 16, %s17
        %p327 = scmp.lt.s32.totalorder %s326, 31
        %s328 = scalar_select %p327, %s326, 31
        %s329 = smul.addr %s328, 8
        %s330 = scalar_lea.vmem %s5, %s329
        %s331 = smul.u32 16, %s17
      $region52: #{_lambda_.5} parent=39 // pred_fallthru
        _
    $region40: #{_lambda_.5} parent=5 // pred_fallthru
      _
    %p332 = scmp.le.s32.totalorder 1, %s17
    %p333 = scmp.lt.s32.totalorder %s17, 3
    %p334 = pnand %p332, %p333
    %p335 = pneg %p334
    // Predicated region
    $region53: #{_lambda_.5} parent=5 // pred_check
      _
    $region54: #{_lambda_.5} parent=5 // pred_check_branch
      %337 = sbr.rel (%p334) target = $region56
    $region55: #{_lambda_.5} parent=5 // pred_region
      %s338 = ssub.s32 %s17, 1
      %p339 = pneg %p38
      %p340 = pneg %p35
      %p341 = pneg %p59
      %p342 = pneg %p56
      %p343 = pneg %p80
      %p344 = pneg %p77
      %s345 = smul.u32 16, %s22
      %p346 = scmp.lt.s32.totalorder %s345, 31
      %s347 = scalar_select %p346, %s345, 31
      %s348 = smul.addr %s347, 4
      %s349 = scalar_lea.vmem %s3, %s348
      %p350 = pneg %p106
      %p351 = pneg %p103
      %s352 = smul.u32 16, %s22
      %p353 = scmp.lt.s32.totalorder %s352, 31
      %s354 = scalar_select %p353, %s352, 31
      %s355 = smul.addr %s354, 4
      %s356 = scalar_lea.vmem %s4, %s355
      %p357 = pneg %p132
      %p358 = pneg %p129
      %s359 = smul.u32 16, %s22
      %p360 = scmp.lt.s32.totalorder %s359, 31
      %s361 = scalar_select %p360, %s359, 31
      %s362 = smul.addr %s361, 8
      %s363 = scalar_lea.vmem %s5, %s362
      %p364 = pneg %p158
      %p365 = pneg %p155
      %p366 = pneg %p179
      %p367 = pneg %p176
      %p368 = pneg %p200
      %p369 = pneg %p197
      %p370 = pneg %p221
      %p371 = pneg %p218
      %p372 = pneg %p247
      %p373 = pneg %p244
      %s374 = smul.u32 16, %s22
      %p375 = scmp.lt.s32.totalorder %s374, 31
      %s376 = scalar_select %p375, %s374, 31
      %s377 = smul.addr %s376, 8
      %s378 = scalar_lea.vmem %s9, %s377
      %p379 = pneg %p268
      %p380 = pneg %p265
      %s381 = smul.u32 16, %s22
      %p382 = scmp.lt.s32.totalorder %s381, 31
      %s383 = scalar_select %p382, %s381, 31
      %s384 = smul.addr %s383, 4
      %s385 = scalar_lea.vmem %s3, %s384
      %s386 = smul.u32 16, %s22
      %s387 = smul.u32 16, %s22
      %p388 = scmp.lt.s32.totalorder %s387, 31
      %s389 = scalar_select %p388, %s387, 31
      %s390 = smul.addr %s389, 4
      %s391 = scalar_lea.vmem %s4, %s390
      %s392 = smul.u32 16, %s22
      %s393 = smul.u32 16, %s22
      %p394 = scmp.lt.s32.totalorder %s393, 31
      %s395 = scalar_select %p394, %s393, 31
      %s396 = smul.addr %s395, 8
      %s397 = scalar_lea.vmem %s5, %s396
      %s398 = smul.u32 16, %s22
      %s399 = smul.u32 16, %s22
      %p400 = scmp.lt.s32.totalorder %s399, 31
      %s401 = scalar_select %p400, %s399, 31
      %s402 = smul.addr %s401, 8
      %s403 = scalar_lea.vmem %s9, %s402
      %s404 = smul.u32 16, %s22
      %p405 = scmp.eq.s32.totalorder %s22, 0
      // Predicated region
      $region57: #{_lambda_.5} parent=55 // pred_check
        %p406 = pneg %p405
      $region58: #{_lambda_.5} parent=55 // pred_check_branch
        %408 = sbr.rel (%p406) target = $region60
      $region59: #{_lambda_.5} parent=55 // pred_region
        %v409 = vld [vmem:[%s0] sm:$0xff]
        %v410 = vld [vmem:[%s0 + $0x8] sm:$0xff]
        %v411 = vld [vmem:[%s0 + $0x10] sm:$0xff]
        %v412 = vld [vmem:[%s0 + $0x18] sm:$0xff]
        %v413 = vld [vmem:[%s0 + $0x20] sm:$0xff]
        %v414 = vld [vmem:[%s0 + $0x28] sm:$0xff]
        %v415 = vld [vmem:[%s0 + $0x30] sm:$0xff]
        %v416 = vld [vmem:[%s0 + $0x38] sm:$0xff]
        %v417 = vld [vmem:[%s0 + $0x40] sm:$0xff]
        %v418 = vld [vmem:[%s0 + $0x48] sm:$0xff]
        %v419 = vld [vmem:[%s0 + $0x50] sm:$0xff]
        %v420 = vld [vmem:[%s0 + $0x58] sm:$0xff]
        %v421 = vld [vmem:[%s0 + $0x60] sm:$0xff]
        %v422 = vld [vmem:[%s0 + $0x68] sm:$0xff]
        %v423 = vld [vmem:[%s0 + $0x70] sm:$0xff]
        %v424 = vld [vmem:[%s0 + $0x78] sm:$0xff]
        %v425 = vld [vmem:[%s1] sm:$0xff]
        %v426 = vld [vmem:[%s1 + $0x8] sm:$0xff]
        %v427 = vld [vmem:[%s1 + $0x10] sm:$0xff]
        %v428 = vld [vmem:[%s1 + $0x18] sm:$0xff]
        %v429 = vld [vmem:[%s1 + $0x20] sm:$0xff]
        %v430 = vld [vmem:[%s1 + $0x28] sm:$0xff]
        %v431 = vld [vmem:[%s1 + $0x30] sm:$0xff]
        %v432 = vld [vmem:[%s1 + $0x38] sm:$0xff]
        %v433 = vld [vmem:[%s1 + $0x40] sm:$0xff]
        %v434 = vld [vmem:[%s1 + $0x48] sm:$0xff]
        %v435 = vld [vmem:[%s1 + $0x50] sm:$0xff]
        %v436 = vld [vmem:[%s1 + $0x58] sm:$0xff]
        %v437 = vld [vmem:[%s1 + $0x60] sm:$0xff]
        %v438 = vld [vmem:[%s1 + $0x68] sm:$0xff]
        %v439 = vld [vmem:[%s1 + $0x70] sm:$0xff]
        %v440 = vld [vmem:[%s1 + $0x78] sm:$0xff]
        %v441 = vld [vmem:[%s1 + $0x80] sm:$0xff]
        %v442 = vld [vmem:[%s1 + $0x88] sm:$0xff]
        %v443 = vld [vmem:[%s1 + $0x90] sm:$0xff]
        %v444 = vld [vmem:[%s1 + $0x98] sm:$0xff]
        %v445 = vld [vmem:[%s1 + $0xa0] sm:$0xff]
        %v446 = vld [vmem:[%s1 + $0xa8] sm:$0xff]
        %v447 = vld [vmem:[%s1 + $0xb0] sm:$0xff]
        %v448 = vld [vmem:[%s1 + $0xb8] sm:$0xff]
        %v449 = vld [vmem:[%s1 + $0xc0] sm:$0xff]
        %v450 = vld [vmem:[%s1 + $0xc8] sm:$0xff]
        %v451 = vld [vmem:[%s1 + $0xd0] sm:$0xff]
        %v452 = vld [vmem:[%s1 + $0xd8] sm:$0xff]
        %v453 = vld [vmem:[%s1 + $0xe0] sm:$0xff]
        %v454 = vld [vmem:[%s1 + $0xe8] sm:$0xff]
        %v455 = vld [vmem:[%s1 + $0xf0] sm:$0xff]
        %v456 = vld [vmem:[%s1 + $0xf8] sm:$0xff]
        %v457 = vld [vmem:[%s2] sm:$0xf]
        %v459 = vperm.slane %v457, 0
        %v460 = vperm.slane %v457, 1
        %v461 = vperm.slane %v457, 2
        %v462 = vperm.slane %v457, 3
        %vm467 = vcmask 523264
        %v469 = vsel %vm467, %v409, 0
        %v472 = vsel %vm467, %v410, 0
        %v475 = vsel %vm467, %v411, 0
        %v478 = vsel %vm467, %v412, 0
        %v481 = vsel %vm467, %v413, 0
        %v484 = vsel %vm467, %v414, 0
        %v487 = vsel %vm467, %v415, 0
        %v490 = vsel %vm467, %v416, 0
        %v493 = vsel %vm467, %v417, 0
        %v496 = vsel %vm467, %v418, 0
        %v499 = vsel %vm467, %v419, 0
        %v502 = vsel %vm467, %v420, 0
        %v505 = vsel %vm467, %v421, 0
        %v508 = vsel %vm467, %v422, 0
        %v511 = vsel %vm467, %v423, 0
        %v514 = vsel %vm467, %v424, 0
        %516 = vmatpush.msra.mxu0 0.0
        %517 = vmatpush.msra.mxu0 0.0
        %518 = vmatpush.msra.mxu0 0.0
        %519 = vmatpush.msra.mxu0 0.0
        %520 = vmatpush.msra.mxu0 0.0
        %521 = vmatpush.msra.mxu0 0.0
        %522 = vmatpush.msra.mxu0 0.0
        %523 = vmatpush.msra.mxu0 0.0
        %524 = vmatpush.msra.mxu0 %v453
        %525 = vmatpush.msra.mxu0 %v449
        %526 = vmatpush.msra.mxu0 %v445
        %527 = vmatpush.msra.mxu0 %v441
        %528 = vmatpush.msra.mxu0 %v437
        %529 = vmatpush.msra.mxu0 %v433
        %530 = vmatpush.msra.mxu0 %v429
        %531 = vmatpush.msra.mxu0 %v425
        %532 = vmatmul.f32.gmra.mxu0 %v469
        %v533 = vpop.f32.mrf.mxu0
        %v534 = vadd.f32 %v459, %v533
        %535 = vmatmul.f32.gmra.mxu0 %v472
        %v536 = vpop.f32.mrf.mxu0
        %v537 = vadd.f32 %v459, %v536
        %538 = vmatmul.f32.gmra.mxu0 %v475
        %v539 = vpop.f32.mrf.mxu0
        %v540 = vadd.f32 %v459, %v539
        %541 = vmatmul.f32.gmra.mxu0 %v478
        %v542 = vpop.f32.mrf.mxu0
        %v543 = vadd.f32 %v459, %v542
        %544 = vmatmul.f32.gmra.mxu0 %v481
        %v545 = vpop.f32.mrf.mxu0
        %v546 = vadd.f32 %v459, %v545
        %547 = vmatmul.f32.gmra.mxu0 %v484
        %v548 = vpop.f32.mrf.mxu0
        %v549 = vadd.f32 %v459, %v548
        %550 = vmatmul.f32.gmra.mxu0 %v487
        %v551 = vpop.f32.mrf.mxu0
        %v552 = vadd.f32 %v459, %v551
        %553 = vmatmul.f32.gmra.mxu0 %v490
        %v554 = vpop.f32.mrf.mxu0
        %v555 = vadd.f32 %v459, %v554
        %556 = vmatmul.f32.gmra.mxu0 %v493
        %v557 = vpop.f32.mrf.mxu0
        %v558 = vadd.f32 %v459, %v557
        %559 = vmatmul.f32.gmra.mxu0 %v496
        %v560 = vpop.f32.mrf.mxu0
        %v561 = vadd.f32 %v459, %v560
        %562 = vmatmul.f32.gmra.mxu0 %v499
        %v563 = vpop.f32.mrf.mxu0
        %v564 = vadd.f32 %v459, %v563
        %565 = vmatmul.f32.gmra.mxu0 %v502
        %v566 = vpop.f32.mrf.mxu0
        %v567 = vadd.f32 %v459, %v566
        %568 = vmatmul.f32.gmra.mxu0 %v505
        %v569 = vpop.f32.mrf.mxu0
        %v570 = vadd.f32 %v459, %v569
        %571 = vmatmul.f32.gmra.mxu0 %v508
        %v572 = vpop.f32.mrf.mxu0
        %v573 = vadd.f32 %v459, %v572
        %574 = vmatmul.f32.gmra.mxu0 %v511
        %v575 = vpop.f32.mrf.mxu0
        %v576 = vadd.f32 %v459, %v575
        %577 = vmatmul.f32.gmra.mxu0 %v514
        %v578 = vpop.f32.mrf.mxu0
        %v579 = vadd.f32 %v459, %v578
        %580 = vdwg.mxu0
        %581 = vmatpush.msra.mxu0 0.0
        %582 = vmatpush.msra.mxu0 0.0
        %583 = vmatpush.msra.mxu0 0.0
        %584 = vmatpush.msra.mxu0 0.0
        %585 = vmatpush.msra.mxu0 0.0
        %586 = vmatpush.msra.mxu0 0.0
        %587 = vmatpush.msra.mxu0 0.0
        %588 = vmatpush.msra.mxu0 0.0
        %589 = vmatpush.msra.mxu0 %v454
        %590 = vmatpush.msra.mxu0 %v450
        %591 = vmatpush.msra.mxu0 %v446
        %592 = vmatpush.msra.mxu0 %v442
        %593 = vmatpush.msra.mxu0 %v438
        %594 = vmatpush.msra.mxu0 %v434
        %595 = vmatpush.msra.mxu0 %v430
        %596 = vmatpush.msra.mxu0 %v426
        %597 = vmatmul.f32.gmra.mxu0 %v469
        %v598 = vpop.f32.mrf.mxu0
        %v599 = vadd.f32 %v460, %v598
        %600 = vmatmul.f32.gmra.mxu0 %v472
        %v601 = vpop.f32.mrf.mxu0
        %v602 = vadd.f32 %v460, %v601
        %603 = vmatmul.f32.gmra.mxu0 %v475
        %v604 = vpop.f32.mrf.mxu0
        %v605 = vadd.f32 %v460, %v604
        %606 = vmatmul.f32.gmra.mxu0 %v478
        %v607 = vpop.f32.mrf.mxu0
        %v608 = vadd.f32 %v460, %v607
        %609 = vmatmul.f32.gmra.mxu0 %v481
        %v610 = vpop.f32.mrf.mxu0
        %v611 = vadd.f32 %v460, %v610
        %612 = vmatmul.f32.gmra.mxu0 %v484
        %v613 = vpop.f32.mrf.mxu0
        %v614 = vadd.f32 %v460, %v613
        %615 = vmatmul.f32.gmra.mxu0 %v487
        %v616 = vpop.f32.mrf.mxu0
        %v617 = vadd.f32 %v460, %v616
        %618 = vmatmul.f32.gmra.mxu0 %v490
        %v619 = vpop.f32.mrf.mxu0
        %v620 = vadd.f32 %v460, %v619
        %621 = vmatmul.f32.gmra.mxu0 %v493
        %v622 = vpop.f32.mrf.mxu0
        %v623 = vadd.f32 %v460, %v622
        %624 = vmatmul.f32.gmra.mxu0 %v496
        %v625 = vpop.f32.mrf.mxu0
        %v626 = vadd.f32 %v460, %v625
        %627 = vmatmul.f32.gmra.mxu0 %v499
        %v628 = vpop.f32.mrf.mxu0
        %v629 = vadd.f32 %v460, %v628
        %630 = vmatmul.f32.gmra.mxu0 %v502
        %v631 = vpop.f32.mrf.mxu0
        %v632 = vadd.f32 %v460, %v631
        %633 = vmatmul.f32.gmra.mxu0 %v505
        %v634 = vpop.f32.mrf.mxu0
        %v635 = vadd.f32 %v460, %v634
        %636 = vmatmul.f32.gmra.mxu0 %v508
        %v637 = vpop.f32.mrf.mxu0
        %v638 = vadd.f32 %v460, %v637
        %639 = vmatmul.f32.gmra.mxu0 %v511
        %v640 = vpop.f32.mrf.mxu0
        %v641 = vadd.f32 %v460, %v640
        %642 = vmatmul.f32.gmra.mxu0 %v514
        %v643 = vpop.f32.mrf.mxu0
        %v644 = vadd.f32 %v460, %v643
        %645 = vdwg.mxu0
        %646 = vmatpush.msra.mxu0 0.0
        %647 = vmatpush.msra.mxu0 0.0
        %648 = vmatpush.msra.mxu0 0.0
        %649 = vmatpush.msra.mxu0 0.0
        %650 = vmatpush.msra.mxu0 0.0
        %651 = vmatpush.msra.mxu0 0.0
        %652 = vmatpush.msra.mxu0 0.0
        %653 = vmatpush.msra.mxu0 0.0
        %654 = vmatpush.msra.mxu0 %v455
        %655 = vmatpush.msra.mxu0 %v451
        %656 = vmatpush.msra.mxu0 %v447
        %657 = vmatpush.msra.mxu0 %v443
        %658 = vmatpush.msra.mxu0 %v439
        %659 = vmatpush.msra.mxu0 %v435
        %660 = vmatpush.msra.mxu0 %v431
        %661 = vmatpush.msra.mxu0 %v427
        %662 = vmatmul.f32.gmra.mxu0 %v469
        %v663 = vpop.f32.mrf.mxu0
        %v664 = vadd.f32 %v461, %v663
        %665 = vmatmul.f32.gmra.mxu0 %v472
        %v666 = vpop.f32.mrf.mxu0
        %v667 = vadd.f32 %v461, %v666
        %668 = vmatmul.f32.gmra.mxu0 %v475
        %v669 = vpop.f32.mrf.mxu0
        %v670 = vadd.f32 %v461, %v669
        %671 = vmatmul.f32.gmra.mxu0 %v478
        %v672 = vpop.f32.mrf.mxu0
        %v673 = vadd.f32 %v461, %v672
        %674 = vmatmul.f32.gmra.mxu0 %v481
        %v675 = vpop.f32.mrf.mxu0
        %v676 = vadd.f32 %v461, %v675
        %677 = vmatmul.f32.gmra.mxu0 %v484
        %v678 = vpop.f32.mrf.mxu0
        %v679 = vadd.f32 %v461, %v678
        %680 = vmatmul.f32.gmra.mxu0 %v487
        %v681 = vpop.f32.mrf.mxu0
        %v682 = vadd.f32 %v461, %v681
        %683 = vmatmul.f32.gmra.mxu0 %v490
        %v684 = vpop.f32.mrf.mxu0
        %v685 = vadd.f32 %v461, %v684
        %686 = vmatmul.f32.gmra.mxu0 %v493
        %v687 = vpop.f32.mrf.mxu0
        %v688 = vadd.f32 %v461, %v687
        %689 = vmatmul.f32.gmra.mxu0 %v496
        %v690 = vpop.f32.mrf.mxu0
        %v691 = vadd.f32 %v461, %v690
        %692 = vmatmul.f32.gmra.mxu0 %v499
        %v693 = vpop.f32.mrf.mxu0
        %v694 = vadd.f32 %v461, %v693
        %695 = vmatmul.f32.gmra.mxu0 %v502
        %v696 = vpop.f32.mrf.mxu0
        %v697 = vadd.f32 %v461, %v696
        %698 = vmatmul.f32.gmra.mxu0 %v505
        %v699 = vpop.f32.mrf.mxu0
        %v700 = vadd.f32 %v461, %v699
        %701 = vmatmul.f32.gmra.mxu0 %v508
        %v702 = vpop.f32.mrf.mxu0
        %v703 = vadd.f32 %v461, %v702
        %704 = vmatmul.f32.gmra.mxu0 %v511
        %v705 = vpop.f32.mrf.mxu0
        %v706 = vadd.f32 %v461, %v705
        %707 = vmatmul.f32.gmra.mxu0 %v514
        %v708 = vpop.f32.mrf.mxu0
        %v709 = vadd.f32 %v461, %v708
        %710 = vdwg.mxu0
        %711 = vmatpush.msra.mxu0 0.0
        %712 = vmatpush.msra.mxu0 0.0
        %713 = vmatpush.msra.mxu0 0.0
        %714 = vmatpush.msra.mxu0 0.0
        %715 = vmatpush.msra.mxu0 0.0
        %716 = vmatpush.msra.mxu0 0.0
        %717 = vmatpush.msra.mxu0 0.0
        %718 = vmatpush.msra.mxu0 0.0
        %719 = vmatpush.msra.mxu0 %v456
        %720 = vmatpush.msra.mxu0 %v452
        %721 = vmatpush.msra.mxu0 %v448
        %722 = vmatpush.msra.mxu0 %v444
        %723 = vmatpush.msra.mxu0 %v440
        %724 = vmatpush.msra.mxu0 %v436
        %725 = vmatpush.msra.mxu0 %v432
        %726 = vmatpush.msra.mxu0 %v428
        %727 = vmatmul.f32.gmra.mxu0 %v469
        %v728 = vpop.f32.mrf.mxu0
        %v729 = vadd.f32 %v462, %v728
        %730 = vmatmul.f32.gmra.mxu0 %v472
        %v731 = vpop.f32.mrf.mxu0
        %v732 = vadd.f32 %v462, %v731
        %733 = vmatmul.f32.gmra.mxu0 %v475
        %v734 = vpop.f32.mrf.mxu0
        %v735 = vadd.f32 %v462, %v734
        %736 = vmatmul.f32.gmra.mxu0 %v478
        %v737 = vpop.f32.mrf.mxu0
        %v738 = vadd.f32 %v462, %v737
        %739 = vmatmul.f32.gmra.mxu0 %v481
        %v740 = vpop.f32.mrf.mxu0
        %v741 = vadd.f32 %v462, %v740
        %742 = vmatmul.f32.gmra.mxu0 %v484
        %v743 = vpop.f32.mrf.mxu0
        %v744 = vadd.f32 %v462, %v743
        %745 = vmatmul.f32.gmra.mxu0 %v487
        %v746 = vpop.f32.mrf.mxu0
        %v747 = vadd.f32 %v462, %v746
        %748 = vmatmul.f32.gmra.mxu0 %v490
        %v749 = vpop.f32.mrf.mxu0
        %v750 = vadd.f32 %v462, %v749
        %751 = vmatmul.f32.gmra.mxu0 %v493
        %v752 = vpop.f32.mrf.mxu0
        %v753 = vadd.f32 %v462, %v752
        %754 = vmatmul.f32.gmra.mxu0 %v496
        %v755 = vpop.f32.mrf.mxu0
        %v756 = vadd.f32 %v462, %v755
        %757 = vmatmul.f32.gmra.mxu0 %v499
        %v758 = vpop.f32.mrf.mxu0
        %v759 = vadd.f32 %v462, %v758
        %760 = vmatmul.f32.gmra.mxu0 %v502
        %v761 = vpop.f32.mrf.mxu0
        %v762 = vadd.f32 %v462, %v761
        %763 = vmatmul.f32.gmra.mxu0 %v505
        %v764 = vpop.f32.mrf.mxu0
        %v765 = vadd.f32 %v462, %v764
        %766 = vmatmul.f32.gmra.mxu0 %v508
        %v767 = vpop.f32.mrf.mxu0
        %v768 = vadd.f32 %v462, %v767
        %769 = vmatmul.f32.gmra.mxu0 %v511
        %v770 = vpop.f32.mrf.mxu0
        %v771 = vadd.f32 %v462, %v770
        %772 = vmatmul.f32.gmra.mxu0 %v514
        %v773 = vpop.f32.mrf.mxu0
        %v774 = vadd.f32 %v462, %v773
        %775 = vdwg.mxu0
        %776 = vst [vmem:[#allocation2] sm:$0xff] %v534
        %777 = vst [vmem:[#allocation2 + $0x8] sm:$0xff] %v599
        %778 = vst [vmem:[#allocation2 + $0x10] sm:$0xff] %v664
        %779 = vst [vmem:[#allocation2 + $0x18] sm:$0xff] %v729
        %780 = vst [vmem:[#allocation2 + $0x20] sm:$0xff] %v537
        %781 = vst [vmem:[#allocation2 + $0x28] sm:$0xff] %v602
        %782 = vst [vmem:[#allocation2 + $0x30] sm:$0xff] %v667
        %783 = vst [vmem:[#allocation2 + $0x38] sm:$0xff] %v732
        %784 = vst [vmem:[#allocation2 + $0x40] sm:$0xff] %v540
        %785 = vst [vmem:[#allocation2 + $0x48] sm:$0xff] %v605
        %786 = vst [vmem:[#allocation2 + $0x50] sm:$0xff] %v670
        %787 = vst [vmem:[#allocation2 + $0x58] sm:$0xff] %v735
        %788 = vst [vmem:[#allocation2 + $0x60] sm:$0xff] %v543
        %789 = vst [vmem:[#allocation2 + $0x68] sm:$0xff] %v608
        %790 = vst [vmem:[#allocation2 + $0x70] sm:$0xff] %v673
        %791 = vst [vmem:[#allocation2 + $0x78] sm:$0xff] %v738
        %792 = vst [vmem:[#allocation2 + $0x80] sm:$0xff] %v546
        %793 = vst [vmem:[#allocation2 + $0x88] sm:$0xff] %v611
        %794 = vst [vmem:[#allocation2 + $0x90] sm:$0xff] %v676
        %795 = vst [vmem:[#allocation2 + $0x98] sm:$0xff] %v741
        %796 = vst [vmem:[#allocation2 + $0xa0] sm:$0xff] %v549
        %797 = vst [vmem:[#allocation2 + $0xa8] sm:$0xff] %v614
        %798 = vst [vmem:[#allocation2 + $0xb0] sm:$0xff] %v679
        %799 = vst [vmem:[#allocation2 + $0xb8] sm:$0xff] %v744
        %800 = vst [vmem:[#allocation2 + $0xc0] sm:$0xff] %v552
        %801 = vst [vmem:[#allocation2 + $0xc8] sm:$0xff] %v617
        %802 = vst [vmem:[#allocation2 + $0xd0] sm:$0xff] %v682
        %803 = vst [vmem:[#allocation2 + $0xd8] sm:$0xff] %v747
        %804 = vst [vmem:[#allocation2 + $0xe0] sm:$0xff] %v555
        %805 = vst [vmem:[#allocation2 + $0xe8] sm:$0xff] %v620
        %806 = vst [vmem:[#allocation2 + $0xf0] sm:$0xff] %v685
        %807 = vst [vmem:[#allocation2 + $0xf8] sm:$0xff] %v750
        %808 = vst [vmem:[#allocation2 + $0x100] sm:$0xff] %v558
        %809 = vst [vmem:[#allocation2 + $0x108] sm:$0xff] %v623
        %810 = vst [vmem:[#allocation2 + $0x110] sm:$0xff] %v688
        %811 = vst [vmem:[#allocation2 + $0x118] sm:$0xff] %v753
        %812 = vst [vmem:[#allocation2 + $0x120] sm:$0xff] %v561
        %813 = vst [vmem:[#allocation2 + $0x128] sm:$0xff] %v626
        %814 = vst [vmem:[#allocation2 + $0x130] sm:$0xff] %v691
        %815 = vst [vmem:[#allocation2 + $0x138] sm:$0xff] %v756
        %816 = vst [vmem:[#allocation2 + $0x140] sm:$0xff] %v564
        %817 = vst [vmem:[#allocation2 + $0x148] sm:$0xff] %v629
        %818 = vst [vmem:[#allocation2 + $0x150] sm:$0xff] %v694
        %819 = vst [vmem:[#allocation2 + $0x158] sm:$0xff] %v759
        %820 = vst [vmem:[#allocation2 + $0x160] sm:$0xff] %v567
        %821 = vst [vmem:[#allocation2 + $0x168] sm:$0xff] %v632
        %822 = vst [vmem:[#allocation2 + $0x170] sm:$0xff] %v697
        %823 = vst [vmem:[#allocation2 + $0x178] sm:$0xff] %v762
        %824 = vst [vmem:[#allocation2 + $0x180] sm:$0xff] %v570
        %825 = vst [vmem:[#allocation2 + $0x188] sm:$0xff] %v635
        %826 = vst [vmem:[#allocation2 + $0x190] sm:$0xff] %v700
        %827 = vst [vmem:[#allocation2 + $0x198] sm:$0xff] %v765
        %828 = vst [vmem:[#allocation2 + $0x1a0] sm:$0xff] %v573
        %829 = vst [vmem:[#allocation2 + $0x1a8] sm:$0xff] %v638
        %830 = vst [vmem:[#allocation2 + $0x1b0] sm:$0xff] %v703
        %831 = vst [vmem:[#allocation2 + $0x1b8] sm:$0xff] %v768
        %832 = vst [vmem:[#allocation2 + $0x1c0] sm:$0xff] %v576
        %833 = vst [vmem:[#allocation2 + $0x1c8] sm:$0xff] %v641
        %834 = vst [vmem:[#allocation2 + $0x1d0] sm:$0xff] %v706
        %835 = vst [vmem:[#allocation2 + $0x1d8] sm:$0xff] %v771
        %836 = vst [vmem:[#allocation2 + $0x1e0] sm:$0xff] %v579
        %837 = vst [vmem:[#allocation2 + $0x1e8] sm:$0xff] %v644
        %838 = vst [vmem:[#allocation2 + $0x1f0] sm:$0xff] %v709
        %839 = vst [vmem:[#allocation2 + $0x1f8] sm:$0xff] %v774
        %840 = vst [vmem:[#allocation3] sm:$0xff] 0.0
        %841 = vst [vmem:[#allocation3 + $0x8] sm:$0xff] 0.0
        %842 = vst [vmem:[#allocation3 + $0x10] sm:$0xff] 0.0
        %843 = vst [vmem:[#allocation3 + $0x18] sm:$0xff] 0.0
        %844 = vst [vmem:[#allocation3 + $0x20] sm:$0xff] 0.0
        %845 = vst [vmem:[#allocation3 + $0x28] sm:$0xff] 0.0
        %846 = vst [vmem:[#allocation3 + $0x30] sm:$0xff] 0.0
        %847 = vst [vmem:[#allocation3 + $0x38] sm:$0xff] 0.0
        %848 = vst [vmem:[#allocation3 + $0x40] sm:$0xff] 0.0
        %849 = vst [vmem:[#allocation3 + $0x48] sm:$0xff] 0.0
        %850 = vst [vmem:[#allocation3 + $0x50] sm:$0xff] 0.0
        %851 = vst [vmem:[#allocation3 + $0x58] sm:$0xff] 0.0
        %852 = vst [vmem:[#allocation3 + $0x60] sm:$0xff] 0.0
        %853 = vst [vmem:[#allocation3 + $0x68] sm:$0xff] 0.0
        %854 = vst [vmem:[#allocation3 + $0x70] sm:$0xff] 0.0
        %855 = vst [vmem:[#allocation3 + $0x78] sm:$0xff] 0.0
        %856 = vst [vmem:[#allocation4] sm:$0xff] 0.0
        %857 = vst [vmem:[#allocation4 + $0x8] sm:$0xff] 0.0
        %858 = vst [vmem:[#allocation4 + $0x10] sm:$0xff] 0.0
        %859 = vst [vmem:[#allocation4 + $0x18] sm:$0xff] 0.0
        %860 = vst [vmem:[#allocation4 + $0x20] sm:$0xff] 0.0
        %861 = vst [vmem:[#allocation4 + $0x28] sm:$0xff] 0.0
        %862 = vst [vmem:[#allocation4 + $0x30] sm:$0xff] 0.0
        %863 = vst [vmem:[#allocation4 + $0x38] sm:$0xff] 0.0
        %864 = vst [vmem:[#allocation4 + $0x40] sm:$0xff] 0.0
        %865 = vst [vmem:[#allocation4 + $0x48] sm:$0xff] 0.0
        %866 = vst [vmem:[#allocation4 + $0x50] sm:$0xff] 0.0
        %867 = vst [vmem:[#allocation4 + $0x58] sm:$0xff] 0.0
        %868 = vst [vmem:[#allocation4 + $0x60] sm:$0xff] 0.0
        %869 = vst [vmem:[#allocation4 + $0x68] sm:$0xff] 0.0
        %870 = vst [vmem:[#allocation4 + $0x70] sm:$0xff] 0.0
        %871 = vst [vmem:[#allocation4 + $0x78] sm:$0xff] 0.0
      $region60: #{_lambda_.5} parent=55 // pred_fallthru
        _
      %v872 = vld [vmem:[%s397] sm:$0xff]
      %v873 = vld [vmem:[%s397 + $0x8] sm:$0xff]
      %v874 = vld [vmem:[%s397 + $0x10] sm:$0xff]
      %v875 = vld [vmem:[%s397 + $0x18] sm:$0xff]
      %v876 = vld [vmem:[%s397 + $0x20] sm:$0xff]
      %v877 = vld [vmem:[%s397 + $0x28] sm:$0xff]
      %v878 = vld [vmem:[%s397 + $0x30] sm:$0xff]
      %v879 = vld [vmem:[%s397 + $0x38] sm:$0xff]
      %v880 = vld [vmem:[%s397 + $0x40] sm:$0xff]
      %v881 = vld [vmem:[%s397 + $0x48] sm:$0xff]
      %v882 = vld [vmem:[%s397 + $0x50] sm:$0xff]
      %v883 = vld [vmem:[%s397 + $0x58] sm:$0xff]
      %v884 = vld [vmem:[%s397 + $0x60] sm:$0xff]
      %v885 = vld [vmem:[%s397 + $0x68] sm:$0xff]
      %v886 = vld [vmem:[%s397 + $0x70] sm:$0xff]
      %v887 = vld [vmem:[%s397 + $0x78] sm:$0xff]
      %v888 = vld [vmem:[%s6] sm:$0x1]
      %v889 = vld [vmem:[%s7] sm:$0x1]
      %v891 = vperm.slane %v889, 0
      %vm893 = vcmask 7168
      %v895 = vsel %vm893, %v872, 0
      %v898 = vsel %vm893, %v873, 0
      %v901 = vsel %vm893, %v874, 0
      %v904 = vsel %vm893, %v875, 0
      %v907 = vsel %vm893, %v876, 0
      %v910 = vsel %vm893, %v877, 0
      %v913 = vsel %vm893, %v878, 0
      %v916 = vsel %vm893, %v879, 0
      %v919 = vsel %vm893, %v880, 0
      %v922 = vsel %vm893, %v881, 0
      %v925 = vsel %vm893, %v882, 0
      %v928 = vsel %vm893, %v883, 0
      %v931 = vsel %vm893, %v884, 0
      %v934 = vsel %vm893, %v885, 0
      %v937 = vsel %vm893, %v886, 0
      %v940 = vsel %vm893, %v887, 0
      %vm942 = vcmask 1040384
      %v944 = vsel %vm942, %v888, 0
      %946 = vmatpush.msra.mxu0 0.0
      %947 = vmatpush.msra.mxu0 0.0
      %948 = vmatpush.msra.mxu0 0.0
      %949 = vmatpush.msra.mxu0 0.0
      %950 = vmatpush.msra.mxu0 0.0
      %951 = vmatpush.msra.mxu0 0.0
      %952 = vmatpush.msra.mxu0 0.0
      %953 = vmatpush.msra.mxu0 0.0
      %954 = vmatpush.msra.mxu0 0.0
      %955 = vmatpush.msra.mxu0 0.0
      %956 = vmatpush.msra.mxu0 0.0
      %957 = vmatpush.msra.mxu0 0.0
      %958 = vmatpush.msra.mxu0 0.0
      %959 = vmatpush.msra.mxu0 0.0
      %960 = vmatpush.msra.mxu0 0.0
      %961 = vmatpush.msra.mxu0 %v944
      %962 = vmatmul.f32.gmra.mxu0 %v895
      %v963 = vpop.f32.mrf.mxu0
      %v964 = vadd.f32 %v891, %v963
      %965 = vmatmul.f32.gmra.mxu0 %v898
      %v966 = vpop.f32.mrf.mxu0
      %v967 = vadd.f32 %v891, %v966
      %968 = vmatmul.f32.gmra.mxu0 %v901
      %v969 = vpop.f32.mrf.mxu0
      %v970 = vadd.f32 %v891, %v969
      %971 = vmatmul.f32.gmra.mxu0 %v904
      %v972 = vpop.f32.mrf.mxu0
      %v973 = vadd.f32 %v891, %v972
      %974 = vmatmul.f32.gmra.mxu0 %v907
      %v975 = vpop.f32.mrf.mxu0
      %v976 = vadd.f32 %v891, %v975
      %977 = vmatmul.f32.gmra.mxu0 %v910
      %v978 = vpop.f32.mrf.mxu0
      %v979 = vadd.f32 %v891, %v978
      %980 = vmatmul.f32.gmra.mxu0 %v913
      %v981 = vpop.f32.mrf.mxu0
      %v982 = vadd.f32 %v891, %v981
      %983 = vmatmul.f32.gmra.mxu0 %v916
      %v984 = vpop.f32.mrf.mxu0
      %v985 = vadd.f32 %v891, %v984
      %986 = vmatmul.f32.gmra.mxu0 %v919
      %v987 = vpop.f32.mrf.mxu0
      %v988 = vadd.f32 %v891, %v987
      %989 = vmatmul.f32.gmra.mxu0 %v922
      %v990 = vpop.f32.mrf.mxu0
      %v991 = vadd.f32 %v891, %v990
      %992 = vmatmul.f32.gmra.mxu0 %v925
      %v993 = vpop.f32.mrf.mxu0
      %v994 = vadd.f32 %v891, %v993
      %995 = vmatmul.f32.gmra.mxu0 %v928
      %v996 = vpop.f32.mrf.mxu0
      %v997 = vadd.f32 %v891, %v996
      %998 = vmatmul.f32.gmra.mxu0 %v931
      %v999 = vpop.f32.mrf.mxu0
      %v1000 = vadd.f32 %v891, %v999
      %1001 = vmatmul.f32.gmra.mxu0 %v934
      %v1002 = vpop.f32.mrf.mxu0
      %v1003 = vadd.f32 %v891, %v1002
      %1004 = vmatmul.f32.gmra.mxu0 %v937
      %v1005 = vpop.f32.mrf.mxu0
      %v1006 = vadd.f32 %v891, %v1005
      %1007 = vmatmul.f32.gmra.mxu0 %v940
      %v1008 = vpop.f32.mrf.mxu0
      %v1009 = vadd.f32 %v891, %v1008
      %1010 = vdwg.mxu0
      %v1011 = vld [vmem:[%s385] sm:$0xf]
      %v1012 = vld [vmem:[%s385 + $0x4] sm:$0xf]
      %v1013 = vld [vmem:[%s385 + $0x8] sm:$0xf]
      %v1014 = vld [vmem:[%s385 + $0xc] sm:$0xf]
      %v1015 = vld [vmem:[%s385 + $0x10] sm:$0xf]
      %v1016 = vld [vmem:[%s385 + $0x14] sm:$0xf]
      %v1017 = vld [vmem:[%s385 + $0x18] sm:$0xf]
      %v1018 = vld [vmem:[%s385 + $0x1c] sm:$0xf]
      %v1019 = vld [vmem:[%s385 + $0x20] sm:$0xf]
      %v1020 = vld [vmem:[%s385 + $0x24] sm:$0xf]
      %v1021 = vld [vmem:[%s385 + $0x28] sm:$0xf]
      %v1022 = vld [vmem:[%s385 + $0x2c] sm:$0xf]
      %v1023 = vld [vmem:[%s385 + $0x30] sm:$0xf]
      %v1024 = vld [vmem:[%s385 + $0x34] sm:$0xf]
      %v1025 = vld [vmem:[%s385 + $0x38] sm:$0xf]
      %v1026 = vld [vmem:[%s385 + $0x3c] sm:$0xf]
      %v1027 = vunpack.c.l.bf16 %v1011
      %v1028 = vunpack.c.l.bf16 %v1012
      %v1029 = vunpack.c.l.bf16 %v1013
      %v1030 = vunpack.c.l.bf16 %v1014
      %v1031 = vunpack.c.l.bf16 %v1015
      %v1032 = vunpack.c.l.bf16 %v1016
      %v1033 = vunpack.c.l.bf16 %v1017
      %v1034 = vunpack.c.l.bf16 %v1018
      %v1035 = vunpack.c.l.bf16 %v1019
      %v1036 = vunpack.c.l.bf16 %v1020
      %v1037 = vunpack.c.l.bf16 %v1021
      %v1038 = vunpack.c.l.bf16 %v1022
      %v1039 = vunpack.c.l.bf16 %v1023
      %v1040 = vunpack.c.l.bf16 %v1024
      %v1041 = vunpack.c.l.bf16 %v1025
      %v1042 = vunpack.c.l.bf16 %v1026
      %v1043 = vld [vmem:[%s391] sm:$0xf]
      %v1044 = vld [vmem:[%s391 + $0x4] sm:$0xf]
      %v1045 = vld [vmem:[%s391 + $0x8] sm:$0xf]
      %v1046 = vld [vmem:[%s391 + $0xc] sm:$0xf]
      %v1047 = vld [vmem:[%s391 + $0x10] sm:$0xf]
      %v1048 = vld [vmem:[%s391 + $0x14] sm:$0xf]
      %v1049 = vld [vmem:[%s391 + $0x18] sm:$0xf]
      %v1050 = vld [vmem:[%s391 + $0x1c] sm:$0xf]
      %v1051 = vld [vmem:[%s391 + $0x20] sm:$0xf]
      %v1052 = vld [vmem:[%s391 + $0x24] sm:$0xf]
      %v1053 = vld [vmem:[%s391 + $0x28] sm:$0xf]
      %v1054 = vld [vmem:[%s391 + $0x2c] sm:$0xf]
      %v1055 = vld [vmem:[%s391 + $0x30] sm:$0xf]
      %v1056 = vld [vmem:[%s391 + $0x34] sm:$0xf]
      %v1057 = vld [vmem:[%s391 + $0x38] sm:$0xf]
      %v1058 = vld [vmem:[%s391 + $0x3c] sm:$0xf]
      %v1059 = vunpack.c.l.bf16 %v1043
      %v1060 = vunpack.c.l.bf16 %v1044
      %v1061 = vunpack.c.l.bf16 %v1045
      %v1062 = vunpack.c.l.bf16 %v1046
      %v1063 = vunpack.c.l.bf16 %v1047
      %v1064 = vunpack.c.l.bf16 %v1048
      %v1065 = vunpack.c.l.bf16 %v1049
      %v1066 = vunpack.c.l.bf16 %v1050
      %v1067 = vunpack.c.l.bf16 %v1051
      %v1068 = vunpack.c.l.bf16 %v1052
      %v1069 = vunpack.c.l.bf16 %v1053
      %v1070 = vunpack.c.l.bf16 %v1054
      %v1071 = vunpack.c.l.bf16 %v1055
      %v1072 = vunpack.c.l.bf16 %v1056
      %v1073 = vunpack.c.l.bf16 %v1057
      %v1074 = vunpack.c.l.bf16 %v1058
      %v1075 = vld [vmem:[#allocation2 + $0x8] sm:$0xff]
      %v1076 = vld [vmem:[#allocation2 + $0x28] sm:$0xff]
      %v1077 = vld [vmem:[#allocation2 + $0x48] sm:$0xff]
      %v1078 = vld [vmem:[#allocation2 + $0x68] sm:$0xff]
      %v1079 = vld [vmem:[#allocation2 + $0x88] sm:$0xff]
      %v1080 = vld [vmem:[#allocation2 + $0xa8] sm:$0xff]
      %v1081 = vld [vmem:[#allocation2 + $0xc8] sm:$0xff]
      %v1082 = vld [vmem:[#allocation2 + $0xe8] sm:$0xff]
      %v1083 = vld [vmem:[#allocation2 + $0x108] sm:$0xff]
      %v1084 = vld [vmem:[#allocation2 + $0x128] sm:$0xff]
      %v1085 = vld [vmem:[#allocation2 + $0x148] sm:$0xff]
      %v1086 = vld [vmem:[#allocation2 + $0x168] sm:$0xff]
      %v1087 = vld [vmem:[#allocation2 + $0x188] sm:$0xff]
      %v1088 = vld [vmem:[#allocation2 + $0x1a8] sm:$0xff]
      %v1089 = vld [vmem:[#allocation2 + $0x1c8] sm:$0xff]
      %v1090 = vld [vmem:[#allocation2 + $0x1e8] sm:$0xff]
      %v1091 = vld [vmem:[#allocation2 + $0x10] sm:$0xff]
      %v1092 = vld [vmem:[#allocation2 + $0x18] sm:$0xff]
      %v1093 = vld [vmem:[#allocation2 + $0x30] sm:$0xff]
      %v1094 = vld [vmem:[#allocation2 + $0x38] sm:$0xff]
      %v1095 = vld [vmem:[#allocation2 + $0x50] sm:$0xff]
      %v1096 = vld [vmem:[#allocation2 + $0x58] sm:$0xff]
      %v1097 = vld [vmem:[#allocation2 + $0x70] sm:$0xff]
      %v1098 = vld [vmem:[#allocation2 + $0x78] sm:$0xff]
      %v1099 = vld [vmem:[#allocation2 + $0x90] sm:$0xff]
      %v1100 = vld [vmem:[#allocation2 + $0x98] sm:$0xff]
      %v1101 = vld [vmem:[#allocation2 + $0xb0] sm:$0xff]
      %v1102 = vld [vmem:[#allocation2 + $0xb8] sm:$0xff]
      %v1103 = vld [vmem:[#allocation2 + $0xd0] sm:$0xff]
      %v1104 = vld [vmem:[#allocation2 + $0xd8] sm:$0xff]
      %v1105 = vld [vmem:[#allocation2 + $0xf0] sm:$0xff]
      %v1106 = vld [vmem:[#allocation2 + $0xf8] sm:$0xff]
      %v1107 = vld [vmem:[#allocation2 + $0x110] sm:$0xff]
      %v1108 = vld [vmem:[#allocation2 + $0x118] sm:$0xff]
      %v1109 = vld [vmem:[#allocation2 + $0x130] sm:$0xff]
      %v1110 = vld [vmem:[#allocation2 + $0x138] sm:$0xff]
      %v1111 = vld [vmem:[#allocation2 + $0x150] sm:$0xff]
      %v1112 = vld [vmem:[#allocation2 + $0x158] sm:$0xff]
      %v1113 = vld [vmem:[#allocation2 + $0x170] sm:$0xff]
      %v1114 = vld [vmem:[#allocation2 + $0x178] sm:$0xff]
      %v1115 = vld [vmem:[#allocation2 + $0x190] sm:$0xff]
      %v1116 = vld [vmem:[#allocation2 + $0x198] sm:$0xff]
      %v1117 = vld [vmem:[#allocation2 + $0x1b0] sm:$0xff]
      %v1118 = vld [vmem:[#allocation2 + $0x1b8] sm:$0xff]
      %v1119 = vld [vmem:[#allocation2 + $0x1d0] sm:$0xff]
      %v1120 = vld [vmem:[#allocation2 + $0x1d8] sm:$0xff]
      %v1121 = vld [vmem:[#allocation2 + $0x1f0] sm:$0xff]
      %v1122 = vld [vmem:[#allocation2 + $0x1f8] sm:$0xff]
      %1123 = vmatpush.msra.mxu0 %v1121
      %1124 = vmatpush.msra.mxu0 %v1119
      %1125 = vmatpush.msra.mxu0 %v1117
      %1126 = vmatpush.msra.mxu0 %v1115
      %1127 = vmatpush.msra.mxu0 %v1113
      %1128 = vmatpush.msra.mxu0 %v1111
      %1129 = vmatpush.msra.mxu0 %v1109
      %1130 = vmatpush.msra.mxu0 %v1107
      %1131 = vmatpush.msra.mxu0 %v1105
      %1132 = vmatpush.msra.mxu0 %v1103
      %1133 = vmatpush.msra.mxu0 %v1101
      %1134 = vmatpush.msra.mxu0 %v1099
      %1135 = vmatpush.msra.mxu0 %v1097
      %1136 = vmatpush.msra.mxu0 %v1095
      %1137 = vmatpush.msra.mxu0 %v1093
      %1138 = vmatpush.msra.mxu0 %v1091
      %1139 = vmatmul.f32.gmra.mxu0 %v1059
      %v1140 = vpop.f32.mrf.mxu0
      %v1141 = vadd.f32 0.0, %v1140
      %1142 = vmatmul.f32.gmra.mxu0 %v1060
      %v1143 = vpop.f32.mrf.mxu0
      %v1144 = vadd.f32 0.0, %v1143
      %1145 = vmatmul.f32.gmra.mxu0 %v1061
      %v1146 = vpop.f32.mrf.mxu0
      %v1147 = vadd.f32 0.0, %v1146
      %1148 = vmatmul.f32.gmra.mxu0 %v1062
      %v1149 = vpop.f32.mrf.mxu0
      %v1150 = vadd.f32 0.0, %v1149
      %1151 = vmatmul.f32.gmra.mxu0 %v1063
      %v1152 = vpop.f32.mrf.mxu0
      %v1153 = vadd.f32 0.0, %v1152
      %1154 = vmatmul.f32.gmra.mxu0 %v1064
      %v1155 = vpop.f32.mrf.mxu0
      %v1156 = vadd.f32 0.0, %v1155
      %1157 = vmatmul.f32.gmra.mxu0 %v1065
      %v1158 = vpop.f32.mrf.mxu0
      %v1159 = vadd.f32 0.0, %v1158
      %1160 = vmatmul.f32.gmra.mxu0 %v1066
      %v1161 = vpop.f32.mrf.mxu0
      %v1162 = vadd.f32 0.0, %v1161
      %1163 = vmatmul.f32.gmra.mxu0 %v1067
      %v1164 = vpop.f32.mrf.mxu0
      %v1165 = vadd.f32 0.0, %v1164
      %1166 = vmatmul.f32.gmra.mxu0 %v1068
      %v1167 = vpop.f32.mrf.mxu0
      %v1168 = vadd.f32 0.0, %v1167
      %1169 = vmatmul.f32.gmra.mxu0 %v1069
      %v1170 = vpop.f32.mrf.mxu0
      %v1171 = vadd.f32 0.0, %v1170
      %1172 = vmatmul.f32.gmra.mxu0 %v1070
      %v1173 = vpop.f32.mrf.mxu0
      %v1174 = vadd.f32 0.0, %v1173
      %1175 = vmatmul.f32.gmra.mxu0 %v1071
      %v1176 = vpop.f32.mrf.mxu0
      %v1177 = vadd.f32 0.0, %v1176
      %1178 = vmatmul.f32.gmra.mxu0 %v1072
      %v1179 = vpop.f32.mrf.mxu0
      %v1180 = vadd.f32 0.0, %v1179
      %1181 = vmatmul.f32.gmra.mxu0 %v1073
      %v1182 = vpop.f32.mrf.mxu0
      %v1183 = vadd.f32 0.0, %v1182
      %1184 = vmatmul.f32.gmra.mxu0 %v1074
      %v1185 = vpop.f32.mrf.mxu0
      %v1186 = vadd.f32 0.0, %v1185
      %1187 = vdwg.mxu0
      %1188 = vmatpush.msra.mxu0 %v1122
      %1189 = vmatpush.msra.mxu0 %v1120
      %1190 = vmatpush.msra.mxu0 %v1118
      %1191 = vmatpush.msra.mxu0 %v1116
      %1192 = vmatpush.msra.mxu0 %v1114
      %1193 = vmatpush.msra.mxu0 %v1112
      %1194 = vmatpush.msra.mxu0 %v1110
      %1195 = vmatpush.msra.mxu0 %v1108
      %1196 = vmatpush.msra.mxu0 %v1106
      %1197 = vmatpush.msra.mxu0 %v1104
      %1198 = vmatpush.msra.mxu0 %v1102
      %1199 = vmatpush.msra.mxu0 %v1100
      %1200 = vmatpush.msra.mxu0 %v1098
      %1201 = vmatpush.msra.mxu0 %v1096
      %1202 = vmatpush.msra.mxu0 %v1094
      %1203 = vmatpush.msra.mxu0 %v1092
      %1204 = vmatmul.f32.gmra.mxu0 %v1059
      %v1205 = vpop.f32.mrf.mxu0
      %v1206 = vadd.f32 0.0, %v1205
      %1207 = vmatmul.f32.gmra.mxu0 %v1060
      %v1208 = vpop.f32.mrf.mxu0
      %v1209 = vadd.f32 0.0, %v1208
      %1210 = vmatmul.f32.gmra.mxu0 %v1061
      %v1211 = vpop.f32.mrf.mxu0
      %v1212 = vadd.f32 0.0, %v1211
      %1213 = vmatmul.f32.gmra.mxu0 %v1062
      %v1214 = vpop.f32.mrf.mxu0
      %v1215 = vadd.f32 0.0, %v1214
      %1216 = vmatmul.f32.gmra.mxu0 %v1063
      %v1217 = vpop.f32.mrf.mxu0
      %v1218 = vadd.f32 0.0, %v1217
      %1219 = vmatmul.f32.gmra.mxu0 %v1064
      %v1220 = vpop.f32.mrf.mxu0
      %v1221 = vadd.f32 0.0, %v1220
      %1222 = vmatmul.f32.gmra.mxu0 %v1065
      %v1223 = vpop.f32.mrf.mxu0
      %v1224 = vadd.f32 0.0, %v1223
      %1225 = vmatmul.f32.gmra.mxu0 %v1066
      %v1226 = vpop.f32.mrf.mxu0
      %v1227 = vadd.f32 0.0, %v1226
      %1228 = vmatmul.f32.gmra.mxu0 %v1067
      %v1229 = vpop.f32.mrf.mxu0
      %v1230 = vadd.f32 0.0, %v1229
      %1231 = vmatmul.f32.gmra.mxu0 %v1068
      %v1232 = vpop.f32.mrf.mxu0
      %v1233 = vadd.f32 0.0, %v1232
      %1234 = vmatmul.f32.gmra.mxu0 %v1069
      %v1235 = vpop.f32.mrf.mxu0
      %v1236 = vadd.f32 0.0, %v1235
      %1237 = vmatmul.f32.gmra.mxu0 %v1070
      %v1238 = vpop.f32.mrf.mxu0
      %v1239 = vadd.f32 0.0, %v1238
      %1240 = vmatmul.f32.gmra.mxu0 %v1071
      %v1241 = vpop.f32.mrf.mxu0
      %v1242 = vadd.f32 0.0, %v1241
      %1243 = vmatmul.f32.gmra.mxu0 %v1072
      %v1244 = vpop.f32.mrf.mxu0
      %v1245 = vadd.f32 0.0, %v1244
      %1246 = vmatmul.f32.gmra.mxu0 %v1073
      %v1247 = vpop.f32.mrf.mxu0
      %v1248 = vadd.f32 0.0, %v1247
      %1249 = vmatmul.f32.gmra.mxu0 %v1074
      %v1250 = vpop.f32.mrf.mxu0
      %v1251 = vadd.f32 0.0, %v1250
      %1252 = vdwg.mxu0
      %1253 = vmatpush.msra.mxu0 %v1090
      %1254 = vmatpush.msra.mxu0 %v1089
      %1255 = vmatpush.msra.mxu0 %v1088
      %1256 = vmatpush.msra.mxu0 %v1087
      %1257 = vmatpush.msra.mxu0 %v1086
      %1258 = vmatpush.msra.mxu0 %v1085
      %1259 = vmatpush.msra.mxu0 %v1084
      %1260 = vmatpush.msra.mxu0 %v1083
      %1261 = vmatpush.msra.mxu0 %v1082
      %1262 = vmatpush.msra.mxu0 %v1081
      %1263 = vmatpush.msra.mxu0 %v1080
      %1264 = vmatpush.msra.mxu0 %v1079
      %1265 = vmatpush.msra.mxu0 %v1078
      %1266 = vmatpush.msra.mxu0 %v1077
      %1267 = vmatpush.msra.mxu0 %v1076
      %1268 = vmatpush.msra.mxu0 %v1075
      %1269 = vmatmul.f32.gmra.mxu0 %v1027
      %v1270 = vpop.f32.mrf.mxu0
      %v1271 = vadd.f32 %v1206, %v1270
      %1272 = vmatmul.f32.gmra.mxu0 %v1028
      %v1273 = vpop.f32.mrf.mxu0
      %v1274 = vadd.f32 %v1209, %v1273
      %1275 = vmatmul.f32.gmra.mxu0 %v1029
      %v1276 = vpop.f32.mrf.mxu0
      %v1277 = vadd.f32 %v1212, %v1276
      %1278 = vmatmul.f32.gmra.mxu0 %v1030
      %v1279 = vpop.f32.mrf.mxu0
      %v1280 = vadd.f32 %v1215, %v1279
      %1281 = vmatmul.f32.gmra.mxu0 %v1031
      %v1282 = vpop.f32.mrf.mxu0
      %v1283 = vadd.f32 %v1218, %v1282
      %1284 = vmatmul.f32.gmra.mxu0 %v1032
      %v1285 = vpop.f32.mrf.mxu0
      %v1286 = vadd.f32 %v1221, %v1285
      %1287 = vmatmul.f32.gmra.mxu0 %v1033
      %v1288 = vpop.f32.mrf.mxu0
      %v1289 = vadd.f32 %v1224, %v1288
      %1290 = vmatmul.f32.gmra.mxu0 %v1034
      %v1291 = vpop.f32.mrf.mxu0
      %v1292 = vadd.f32 %v1227, %v1291
      %1293 = vmatmul.f32.gmra.mxu0 %v1035
      %v1294 = vpop.f32.mrf.mxu0
      %v1295 = vadd.f32 %v1230, %v1294
      %1296 = vmatmul.f32.gmra.mxu0 %v1036
      %v1297 = vpop.f32.mrf.mxu0
      %v1298 = vadd.f32 %v1233, %v1297
      %1299 = vmatmul.f32.gmra.mxu0 %v1037
      %v1300 = vpop.f32.mrf.mxu0
      %v1301 = vadd.f32 %v1236, %v1300
      %1302 = vmatmul.f32.gmra.mxu0 %v1038
      %v1303 = vpop.f32.mrf.mxu0
      %v1304 = vadd.f32 %v1239, %v1303
      %1305 = vmatmul.f32.gmra.mxu0 %v1039
      %v1306 = vpop.f32.mrf.mxu0
      %v1307 = vadd.f32 %v1242, %v1306
      %1308 = vmatmul.f32.gmra.mxu0 %v1040
      %v1309 = vpop.f32.mrf.mxu0
      %v1310 = vadd.f32 %v1245, %v1309
      %1311 = vmatmul.f32.gmra.mxu0 %v1041
      %v1312 = vpop.f32.mrf.mxu0
      %v1313 = vadd.f32 %v1248, %v1312
      %1314 = vmatmul.f32.gmra.mxu0 %v1042
      %v1315 = vpop.f32.mrf.mxu0
      %v1316 = vadd.f32 %v1251, %v1315
      %1317 = vdwg.mxu0
      %v1318 = vadd.f32 %v1271, %v964
      %v1319 = vadd.f32 %v1274, %v967
      %v1320 = vadd.f32 %v1277, %v970
      %v1321 = vadd.f32 %v1280, %v973
      %v1322 = vadd.f32 %v1283, %v976
      %v1323 = vadd.f32 %v1286, %v979
      %v1324 = vadd.f32 %v1289, %v982
      %v1325 = vadd.f32 %v1292, %v985
      %v1326 = vadd.f32 %v1295, %v988
      %v1327 = vadd.f32 %v1298, %v991
      %v1328 = vadd.f32 %v1301, %v994
      %v1329 = vadd.f32 %v1304, %v997
      %v1330 = vadd.f32 %v1307, %v1000
      %v1331 = vadd.f32 %v1310, %v1003
      %v1332 = vadd.f32 %v1313, %v1006
      %v1333 = vadd.f32 %v1316, %v1009
      %v1334 = vsub.f32 0.0, %v1318
      %v1335 = vsub.f32 0.0, %v1319
      %v1336 = vsub.f32 0.0, %v1320
      %v1337 = vsub.f32 0.0, %v1321
      %v1338 = vsub.f32 0.0, %v1322
      %v1339 = vsub.f32 0.0, %v1323
      %v1340 = vsub.f32 0.0, %v1324
      %v1341 = vsub.f32 0.0, %v1325
      %v1342 = vsub.f32 0.0, %v1326
      %v1343 = vsub.f32 0.0, %v1327
      %v1344 = vsub.f32 0.0, %v1328
      %v1345 = vsub.f32 0.0, %v1329
      %v1346 = vsub.f32 0.0, %v1330
      %v1347 = vsub.f32 0.0, %v1331
      %v1348 = vsub.f32 0.0, %v1332
      %v1349 = vsub.f32 0.0, %v1333
      %v1350 = vmul.f32 %v1334, 1.442695
      %v1351 = vpow.pop %v1350
      %v1352 = vmul.f32 %v1335, 1.442695
      %v1353 = vpow.pop %v1352
      %v1354 = vmul.f32 %v1336, 1.442695
      %v1355 = vpow.pop %v1354
      %v1356 = vmul.f32 %v1337, 1.442695
      %v1357 = vpow.pop %v1356
      %v1358 = vmul.f32 %v1338, 1.442695
      %v1359 = vpow.pop %v1358
      %v1360 = vmul.f32 %v1339, 1.442695
      %v1361 = vpow.pop %v1360
      %v1362 = vmul.f32 %v1340, 1.442695
      %v1363 = vpow.pop %v1362
      %v1364 = vmul.f32 %v1341, 1.442695
      %v1365 = vpow.pop %v1364
      %v1366 = vmul.f32 %v1342, 1.442695
      %v1367 = vpow.pop %v1366
      %v1368 = vmul.f32 %v1343, 1.442695
      %v1369 = vpow.pop %v1368
      %v1370 = vmul.f32 %v1344, 1.442695
      %v1371 = vpow.pop %v1370
      %v1372 = vmul.f32 %v1345, 1.442695
      %v1373 = vpow.pop %v1372
      %v1374 = vmul.f32 %v1346, 1.442695
      %v1375 = vpow.pop %v1374
      %v1376 = vmul.f32 %v1347, 1.442695
      %v1377 = vpow.pop %v1376
      %v1378 = vmul.f32 %v1348, 1.442695
      %v1379 = vpow.pop %v1378
      %v1380 = vmul.f32 %v1349, 1.442695
      %v1381 = vpow.pop %v1380
      %v1382 = vadd.f32 %v1351, 1.0
      %v1383 = vadd.f32 %v1353, 1.0
      %v1384 = vadd.f32 %v1355, 1.0
      %v1385 = vadd.f32 %v1357, 1.0
      %v1386 = vadd.f32 %v1359, 1.0
      %v1387 = vadd.f32 %v1361, 1.0
      %v1388 = vadd.f32 %v1363, 1.0
      %v1389 = vadd.f32 %v1365, 1.0
      %v1390 = vadd.f32 %v1367, 1.0
      %v1391 = vadd.f32 %v1369, 1.0
      %v1392 = vadd.f32 %v1371, 1.0
      %v1393 = vadd.f32 %v1373, 1.0
      %v1394 = vadd.f32 %v1375, 1.0
      %v1395 = vadd.f32 %v1377, 1.0
      %v1396 = vadd.f32 %v1379, 1.0
      %v1397 = vadd.f32 %v1381, 1.0
      %v1398 = vrcp.pop %v1382
      %v1399 = vmul.f32 %v1382, %v1398
      %v1400 = vsub.f32 1.0, %v1399
      %v1401 = vmul.f32 %v1398, %v1400
      %v1402 = vadd.f32 %v1398, %v1401
      %vm1403 = vweird.f32 %v1382
      %vm1404 = vweird.f32 %v1398
      %vm1405 = vmor %vm1403, %vm1404
      %v1406 = vsel %vm1405, %v1398, %v1402
      %v1407 = vand.u32 2147483647, %v1382
      %vm1408 = vcmp.eq.f32.partialorder %v1407, 8.507059e+37
      %v1409 = vand.u32 %v1382, 2147483648
      %v1410 = vor.u32 1.1754944e-38, %v1409
      %v1411 = vsel %vm1408, %v1410, %v1406
      %v1412 = vmul.f32 1.0, %v1411
      %v1413 = vrcp.pop %v1383
      %v1414 = vmul.f32 %v1383, %v1413
      %v1415 = vsub.f32 1.0, %v1414
      %v1416 = vmul.f32 %v1413, %v1415
      %v1417 = vadd.f32 %v1413, %v1416
      %vm1418 = vweird.f32 %v1383
      %vm1419 = vweird.f32 %v1413
      %vm1420 = vmor %vm1418, %vm1419
      %v1421 = vsel %vm1420, %v1413, %v1417
      %v1422 = vand.u32 2147483647, %v1383
      %vm1423 = vcmp.eq.f32.partialorder %v1422, 8.507059e+37
      %v1424 = vand.u32 %v1383, 2147483648
      %v1425 = vor.u32 1.1754944e-38, %v1424
      %v1426 = vsel %vm1423, %v1425, %v1421
      %v1427 = vmul.f32 1.0, %v1426
      %v1428 = vrcp.pop %v1384
      %v1429 = vmul.f32 %v1384, %v1428
      %v1430 = vsub.f32 1.0, %v1429
      %v1431 = vmul.f32 %v1428, %v1430
      %v1432 = vadd.f32 %v1428, %v1431
      %vm1433 = vweird.f32 %v1384
      %vm1434 = vweird.f32 %v1428
      %vm1435 = vmor %vm1433, %vm1434
      %v1436 = vsel %vm1435, %v1428, %v1432
      %v1437 = vand.u32 2147483647, %v1384
      %vm1438 = vcmp.eq.f32.partialorder %v1437, 8.507059e+37
      %v1439 = vand.u32 %v1384, 2147483648
      %v1440 = vor.u32 1.1754944e-38, %v1439
      %v1441 = vsel %vm1438, %v1440, %v1436
      %v1442 = vmul.f32 1.0, %v1441
      %v1443 = vrcp.pop %v1385
      %v1444 = vmul.f32 %v1385, %v1443
      %v1445 = vsub.f32 1.0, %v1444
      %v1446 = vmul.f32 %v1443, %v1445
      %v1447 = vadd.f32 %v1443, %v1446
      %vm1448 = vweird.f32 %v1385
      %vm1449 = vweird.f32 %v1443
      %vm1450 = vmor %vm1448, %vm1449
      %v1451 = vsel %vm1450, %v1443, %v1447
      %v1452 = vand.u32 2147483647, %v1385
      %vm1453 = vcmp.eq.f32.partialorder %v1452, 8.507059e+37
      %v1454 = vand.u32 %v1385, 2147483648
      %v1455 = vor.u32 1.1754944e-38, %v1454
      %v1456 = vsel %vm1453, %v1455, %v1451
      %v1457 = vmul.f32 1.0, %v1456
      %v1458 = vrcp.pop %v1386
      %v1459 = vmul.f32 %v1386, %v1458
      %v1460 = vsub.f32 1.0, %v1459
      %v1461 = vmul.f32 %v1458, %v1460
      %v1462 = vadd.f32 %v1458, %v1461
      %vm1463 = vweird.f32 %v1386
      %vm1464 = vweird.f32 %v1458
      %vm1465 = vmor %vm1463, %vm1464
      %v1466 = vsel %vm1465, %v1458, %v1462
      %v1467 = vand.u32 2147483647, %v1386
      %vm1468 = vcmp.eq.f32.partialorder %v1467, 8.507059e+37
      %v1469 = vand.u32 %v1386, 2147483648
      %v1470 = vor.u32 1.1754944e-38, %v1469
      %v1471 = vsel %vm1468, %v1470, %v1466
      %v1472 = vmul.f32 1.0, %v1471
      %v1473 = vrcp.pop %v1387
      %v1474 = vmul.f32 %v1387, %v1473
      %v1475 = vsub.f32 1.0, %v1474
      %v1476 = vmul.f32 %v1473, %v1475
      %v1477 = vadd.f32 %v1473, %v1476
      %vm1478 = vweird.f32 %v1387
      %vm1479 = vweird.f32 %v1473
      %vm1480 = vmor %vm1478, %vm1479
      %v1481 = vsel %vm1480, %v1473, %v1477
      %v1482 = vand.u32 2147483647, %v1387
      %vm1483 = vcmp.eq.f32.partialorder %v1482, 8.507059e+37
      %v1484 = vand.u32 %v1387, 2147483648
      %v1485 = vor.u32 1.1754944e-38, %v1484
      %v1486 = vsel %vm1483, %v1485, %v1481
      %v1487 = vmul.f32 1.0, %v1486
      %v1488 = vrcp.pop %v1388
      %v1489 = vmul.f32 %v1388, %v1488
      %v1490 = vsub.f32 1.0, %v1489
      %v1491 = vmul.f32 %v1488, %v1490
      %v1492 = vadd.f32 %v1488, %v1491
      %vm1493 = vweird.f32 %v1388
      %vm1494 = vweird.f32 %v1488
      %vm1495 = vmor %vm1493, %vm1494
      %v1496 = vsel %vm1495, %v1488, %v1492
      %v1497 = vand.u32 2147483647, %v1388
      %vm1498 = vcmp.eq.f32.partialorder %v1497, 8.507059e+37
      %v1499 = vand.u32 %v1388, 2147483648
      %v1500 = vor.u32 1.1754944e-38, %v1499
      %v1501 = vsel %vm1498, %v1500, %v1496
      %v1502 = vmul.f32 1.0, %v1501
      %v1503 = vrcp.pop %v1389
      %v1504 = vmul.f32 %v1389, %v1503
      %v1505 = vsub.f32 1.0, %v1504
      %v1506 = vmul.f32 %v1503, %v1505
      %v1507 = vadd.f32 %v1503, %v1506
      %vm1508 = vweird.f32 %v1389
      %vm1509 = vweird.f32 %v1503
      %vm1510 = vmor %vm1508, %vm1509
      %v1511 = vsel %vm1510, %v1503, %v1507
      %v1512 = vand.u32 2147483647, %v1389
      %vm1513 = vcmp.eq.f32.partialorder %v1512, 8.507059e+37
      %v1514 = vand.u32 %v1389, 2147483648
      %v1515 = vor.u32 1.1754944e-38, %v1514
      %v1516 = vsel %vm1513, %v1515, %v1511
      %v1517 = vmul.f32 1.0, %v1516
      %v1518 = vrcp.pop %v1390
      %v1519 = vmul.f32 %v1390, %v1518
      %v1520 = vsub.f32 1.0, %v1519
      %v1521 = vmul.f32 %v1518, %v1520
      %v1522 = vadd.f32 %v1518, %v1521
      %vm1523 = vweird.f32 %v1390
      %vm1524 = vweird.f32 %v1518
      %vm1525 = vmor %vm1523, %vm1524
      %v1526 = vsel %vm1525, %v1518, %v1522
      %v1527 = vand.u32 2147483647, %v1390
      %vm1528 = vcmp.eq.f32.partialorder %v1527, 8.507059e+37
      %v1529 = vand.u32 %v1390, 2147483648
      %v1530 = vor.u32 1.1754944e-38, %v1529
      %v1531 = vsel %vm1528, %v1530, %v1526
      %v1532 = vmul.f32 1.0, %v1531
      %v1533 = vrcp.pop %v1391
      %v1534 = vmul.f32 %v1391, %v1533
      %v1535 = vsub.f32 1.0, %v1534
      %v1536 = vmul.f32 %v1533, %v1535
      %v1537 = vadd.f32 %v1533, %v1536
      %vm1538 = vweird.f32 %v1391
      %vm1539 = vweird.f32 %v1533
      %vm1540 = vmor %vm1538, %vm1539
      %v1541 = vsel %vm1540, %v1533, %v1537
      %v1542 = vand.u32 2147483647, %v1391
      %vm1543 = vcmp.eq.f32.partialorder %v1542, 8.507059e+37
      %v1544 = vand.u32 %v1391, 2147483648
      %v1545 = vor.u32 1.1754944e-38, %v1544
      %v1546 = vsel %vm1543, %v1545, %v1541
      %v1547 = vmul.f32 1.0, %v1546
      %v1548 = vrcp.pop %v1392
      %v1549 = vmul.f32 %v1392, %v1548
      %v1550 = vsub.f32 1.0, %v1549
      %v1551 = vmul.f32 %v1548, %v1550
      %v1552 = vadd.f32 %v1548, %v1551
      %vm1553 = vweird.f32 %v1392
      %vm1554 = vweird.f32 %v1548
      %vm1555 = vmor %vm1553, %vm1554
      %v1556 = vsel %vm1555, %v1548, %v1552
      %v1557 = vand.u32 2147483647, %v1392
      %vm1558 = vcmp.eq.f32.partialorder %v1557, 8.507059e+37
      %v1559 = vand.u32 %v1392, 2147483648
      %v1560 = vor.u32 1.1754944e-38, %v1559
      %v1561 = vsel %vm1558, %v1560, %v1556
      %v1562 = vmul.f32 1.0, %v1561
      %v1563 = vrcp.pop %v1393
      %v1564 = vmul.f32 %v1393, %v1563
      %v1565 = vsub.f32 1.0, %v1564
      %v1566 = vmul.f32 %v1563, %v1565
      %v1567 = vadd.f32 %v1563, %v1566
      %vm1568 = vweird.f32 %v1393
      %vm1569 = vweird.f32 %v1563
      %vm1570 = vmor %vm1568, %vm1569
      %v1571 = vsel %vm1570, %v1563, %v1567
      %v1572 = vand.u32 2147483647, %v1393
      %vm1573 = vcmp.eq.f32.partialorder %v1572, 8.507059e+37
      %v1574 = vand.u32 %v1393, 2147483648
      %v1575 = vor.u32 1.1754944e-38, %v1574
      %v1576 = vsel %vm1573, %v1575, %v1571
      %v1577 = vmul.f32 1.0, %v1576
      %v1578 = vrcp.pop %v1394
      %v1579 = vmul.f32 %v1394, %v1578
      %v1580 = vsub.f32 1.0, %v1579
      %v1581 = vmul.f32 %v1578, %v1580
      %v1582 = vadd.f32 %v1578, %v1581
      %vm1583 = vweird.f32 %v1394
      %vm1584 = vweird.f32 %v1578
      %vm1585 = vmor %vm1583, %vm1584
      %v1586 = vsel %vm1585, %v1578, %v1582
      %v1587 = vand.u32 2147483647, %v1394
      %vm1588 = vcmp.eq.f32.partialorder %v1587, 8.507059e+37
      %v1589 = vand.u32 %v1394, 2147483648
      %v1590 = vor.u32 1.1754944e-38, %v1589
      %v1591 = vsel %vm1588, %v1590, %v1586
      %v1592 = vmul.f32 1.0, %v1591
      %v1593 = vrcp.pop %v1395
      %v1594 = vmul.f32 %v1395, %v1593
      %v1595 = vsub.f32 1.0, %v1594
      %v1596 = vmul.f32 %v1593, %v1595
      %v1597 = vadd.f32 %v1593, %v1596
      %vm1598 = vweird.f32 %v1395
      %vm1599 = vweird.f32 %v1593
      %vm1600 = vmor %vm1598, %vm1599
      %v1601 = vsel %vm1600, %v1593, %v1597
      %v1602 = vand.u32 2147483647, %v1395
      %vm1603 = vcmp.eq.f32.partialorder %v1602, 8.507059e+37
      %v1604 = vand.u32 %v1395, 2147483648
      %v1605 = vor.u32 1.1754944e-38, %v1604
      %v1606 = vsel %vm1603, %v1605, %v1601
      %v1607 = vmul.f32 1.0, %v1606
      %v1608 = vrcp.pop %v1396
      %v1609 = vmul.f32 %v1396, %v1608
      %v1610 = vsub.f32 1.0, %v1609
      %v1611 = vmul.f32 %v1608, %v1610
      %v1612 = vadd.f32 %v1608, %v1611
      %vm1613 = vweird.f32 %v1396
      %vm1614 = vweird.f32 %v1608
      %vm1615 = vmor %vm1613, %vm1614
      %v1616 = vsel %vm1615, %v1608, %v1612
      %v1617 = vand.u32 2147483647, %v1396
      %vm1618 = vcmp.eq.f32.partialorder %v1617, 8.507059e+37
      %v1619 = vand.u32 %v1396, 2147483648
      %v1620 = vor.u32 1.1754944e-38, %v1619
      %v1621 = vsel %vm1618, %v1620, %v1616
      %v1622 = vmul.f32 1.0, %v1621
      %v1623 = vrcp.pop %v1397
      %v1624 = vmul.f32 %v1397, %v1623
      %v1625 = vsub.f32 1.0, %v1624
      %v1626 = vmul.f32 %v1623, %v1625
      %v1627 = vadd.f32 %v1623, %v1626
      %vm1628 = vweird.f32 %v1397
      %vm1629 = vweird.f32 %v1623
      %vm1630 = vmor %vm1628, %vm1629
      %v1631 = vsel %vm1630, %v1623, %v1627
      %v1632 = vand.u32 2147483647, %v1397
      %vm1633 = vcmp.eq.f32.partialorder %v1632, 8.507059e+37
      %v1634 = vand.u32 %v1397, 2147483648
      %v1635 = vor.u32 1.1754944e-38, %v1634
      %v1636 = vsel %vm1633, %v1635, %v1631
      %v1637 = vmul.f32 1.0, %v1636
      %v1638 = vmax.f32 %v1318, 0.0
      %v1639 = vmax.f32 %v1319, 0.0
      %v1640 = vmax.f32 %v1320, 0.0
      %v1641 = vmax.f32 %v1321, 0.0
      %v1642 = vmax.f32 %v1322, 0.0
      %v1643 = vmax.f32 %v1323, 0.0
      %v1644 = vmax.f32 %v1324, 0.0
      %v1645 = vmax.f32 %v1325, 0.0
      %v1646 = vmax.f32 %v1326, 0.0
      %v1647 = vmax.f32 %v1327, 0.0
      %v1648 = vmax.f32 %v1328, 0.0
      %v1649 = vmax.f32 %v1329, 0.0
      %v1650 = vmax.f32 %v1330, 0.0
      %v1651 = vmax.f32 %v1331, 0.0
      %v1652 = vmax.f32 %v1332, 0.0
      %v1653 = vmax.f32 %v1333, 0.0
      %1654 = vst [vmem:[%s403] sm:$0xff] %v1638
      %1655 = vst [vmem:[%s403 + $0x8] sm:$0xff] %v1639
      %1656 = vst [vmem:[%s403 + $0x10] sm:$0xff] %v1640
      %1657 = vst [vmem:[%s403 + $0x18] sm:$0xff] %v1641
      %1658 = vst [vmem:[%s403 + $0x20] sm:$0xff] %v1642
      %1659 = vst [vmem:[%s403 + $0x28] sm:$0xff] %v1643
      %1660 = vst [vmem:[%s403 + $0x30] sm:$0xff] %v1644
      %1661 = vst [vmem:[%s403 + $0x38] sm:$0xff] %v1645
      %1662 = vst [vmem:[%s403 + $0x40] sm:$0xff] %v1646
      %1663 = vst [vmem:[%s403 + $0x48] sm:$0xff] %v1647
      %1664 = vst [vmem:[%s403 + $0x50] sm:$0xff] %v1648
      %1665 = vst [vmem:[%s403 + $0x58] sm:$0xff] %v1649
      %1666 = vst [vmem:[%s403 + $0x60] sm:$0xff] %v1650
      %1667 = vst [vmem:[%s403 + $0x68] sm:$0xff] %v1651
      %1668 = vst [vmem:[%s403 + $0x70] sm:$0xff] %v1652
      %1669 = vst [vmem:[%s403 + $0x78] sm:$0xff] %v1653
      %v1670 = vld [vmem:[#allocation3] sm:$0xff]
      %v1671 = vld [vmem:[#allocation3 + $0x8] sm:$0xff]
      %v1672 = vld [vmem:[#allocation3 + $0x10] sm:$0xff]
      %v1673 = vld [vmem:[#allocation3 + $0x18] sm:$0xff]
      %v1674 = vld [vmem:[#allocation3 + $0x20] sm:$0xff]
      %v1675 = vld [vmem:[#allocation3 + $0x28] sm:$0xff]
      %v1676 = vld [vmem:[#allocation3 + $0x30] sm:$0xff]
      %v1677 = vld [vmem:[#allocation3 + $0x38] sm:$0xff]
      %v1678 = vld [vmem:[#allocation3 + $0x40] sm:$0xff]
      %v1679 = vld [vmem:[#allocation3 + $0x48] sm:$0xff]
      %v1680 = vld [vmem:[#allocation3 + $0x50] sm:$0xff]
      %v1681 = vld [vmem:[#allocation3 + $0x58] sm:$0xff]
      %v1682 = vld [vmem:[#allocation3 + $0x60] sm:$0xff]
      %v1683 = vld [vmem:[#allocation3 + $0x68] sm:$0xff]
      %v1684 = vld [vmem:[#allocation3 + $0x70] sm:$0xff]
      %v1685 = vld [vmem:[#allocation3 + $0x78] sm:$0xff]
      %v1686 = vmul.f32 %v1141, %v1412
      %v1687 = vmul.f32 %v1144, %v1427
      %v1688 = vmul.f32 %v1147, %v1442
      %v1689 = vmul.f32 %v1150, %v1457
      %v1690 = vmul.f32 %v1153, %v1472
      %v1691 = vmul.f32 %v1156, %v1487
      %v1692 = vmul.f32 %v1159, %v1502
      %v1693 = vmul.f32 %v1162, %v1517
      %v1694 = vmul.f32 %v1165, %v1532
      %v1695 = vmul.f32 %v1168, %v1547
      %v1696 = vmul.f32 %v1171, %v1562
      %v1697 = vmul.f32 %v1174, %v1577
      %v1698 = vmul.f32 %v1177, %v1592
      %v1699 = vmul.f32 %v1180, %v1607
      %v1700 = vmul.f32 %v1183, %v1622
      %v1701 = vmul.f32 %v1186, %v1637
      %1702 = vxpose.xlu0.b32.start [1/16] %v1027, 128
      %1703 = vxpose.xlu0.b32.cont [2/16] %v1028, 128
      %1704 = vxpose.xlu0.b32.cont [3/16] %v1029, 128
      %1705 = vxpose.xlu0.b32.cont [4/16] %v1030, 128
      %1706 = vxpose.xlu0.b32.cont [5/16] %v1031, 128
      %1707 = vxpose.xlu0.b32.cont [6/16] %v1032, 128
      %1708 = vxpose.xlu0.b32.cont [7/16] %v1033, 128
      %1709 = vxpose.xlu0.b32.cont [8/16] %v1034, 128
      %1710 = vxpose.xlu0.b32.cont [9/16] %v1035, 128
      %1711 = vxpose.xlu0.b32.cont [10/16] %v1036, 128
      %1712 = vxpose.xlu0.b32.cont [11/16] %v1037, 128
      %1713 = vxpose.xlu0.b32.cont [12/16] %v1038, 128
      %1714 = vxpose.xlu0.b32.cont [13/16] %v1039, 128
      %1715 = vxpose.xlu0.b32.cont [14/16] %v1040, 128
      %1716 = vxpose.xlu0.b32.cont [15/16] %v1041, 128
      %1717 = vxpose.xlu0.b32.end [16/16] %v1042, 128
      %v1718 = vpop.trf.xlu0
      %v1719 = vpop.trf.xlu0
      %v1720 = vpop.trf.xlu0
      %v1721 = vpop.trf.xlu0
      %v1722 = vpop.trf.xlu0
      %v1723 = vpop.trf.xlu0
      %v1724 = vpop.trf.xlu0
      %v1725 = vpop.trf.xlu0
      %v1726 = vpop.trf.xlu0
      %v1727 = vpop.trf.xlu0
      %v1728 = vpop.trf.xlu0
      %v1729 = vpop.trf.xlu0
      %v1730 = vpop.trf.xlu0
      %v1731 = vpop.trf.xlu0
      %v1732 = vpop.trf.xlu0
      %v1733 = vpop.trf.xlu0
      %1734 = vmatpush.msra.mxu0 %v1701
      %1735 = vmatpush.msra.mxu0 %v1700
      %1736 = vmatpush.msra.mxu0 %v1699
      %1737 = vmatpush.msra.mxu0 %v1698
      %1738 = vmatpush.msra.mxu0 %v1697
      %1739 = vmatpush.msra.mxu0 %v1696
      %1740 = vmatpush.msra.mxu0 %v1695
      %1741 = vmatpush.msra.mxu0 %v1694
      %1742 = vmatpush.msra.mxu0 %v1693
      %1743 = vmatpush.msra.mxu0 %v1692
      %1744 = vmatpush.msra.mxu0 %v1691
      %1745 = vmatpush.msra.mxu0 %v1690
      %1746 = vmatpush.msra.mxu0 %v1689
      %1747 = vmatpush.msra.mxu0 %v1688
      %1748 = vmatpush.msra.mxu0 %v1687
      %1749 = vmatpush.msra.mxu0 %v1686
      %1750 = vmatmul.f32.gmra.mxu0 %v1718
      %v1751 = vpop.f32.mrf.mxu0
      %v1752 = vadd.f32 0.0, %v1751
      %1753 = vmatmul.f32.gmra.mxu0 %v1719
      %v1754 = vpop.f32.mrf.mxu0
      %v1755 = vadd.f32 0.0, %v1754
      %1756 = vmatmul.f32.gmra.mxu0 %v1720
      %v1757 = vpop.f32.mrf.mxu0
      %v1758 = vadd.f32 0.0, %v1757
      %1759 = vmatmul.f32.gmra.mxu0 %v1721
      %v1760 = vpop.f32.mrf.mxu0
      %v1761 = vadd.f32 0.0, %v1760
      %1762 = vmatmul.f32.gmra.mxu0 %v1722
      %v1763 = vpop.f32.mrf.mxu0
      %v1764 = vadd.f32 0.0, %v1763
      %1765 = vmatmul.f32.gmra.mxu0 %v1723
      %v1766 = vpop.f32.mrf.mxu0
      %v1767 = vadd.f32 0.0, %v1766
      %1768 = vmatmul.f32.gmra.mxu0 %v1724
      %v1769 = vpop.f32.mrf.mxu0
      %v1770 = vadd.f32 0.0, %v1769
      %1771 = vmatmul.f32.gmra.mxu0 %v1725
      %v1772 = vpop.f32.mrf.mxu0
      %v1773 = vadd.f32 0.0, %v1772
      %1774 = vmatmul.f32.gmra.mxu0 %v1726
      %v1775 = vpop.f32.mrf.mxu0
      %v1776 = vadd.f32 0.0, %v1775
      %1777 = vmatmul.f32.gmra.mxu0 %v1727
      %v1778 = vpop.f32.mrf.mxu0
      %v1779 = vadd.f32 0.0, %v1778
      %1780 = vmatmul.f32.gmra.mxu0 %v1728
      %v1781 = vpop.f32.mrf.mxu0
      %v1782 = vadd.f32 0.0, %v1781
      %1783 = vmatmul.f32.gmra.mxu0 %v1729
      %v1784 = vpop.f32.mrf.mxu0
      %v1785 = vadd.f32 0.0, %v1784
      %1786 = vmatmul.f32.gmra.mxu0 %v1730
      %v1787 = vpop.f32.mrf.mxu0
      %v1788 = vadd.f32 0.0, %v1787
      %1789 = vmatmul.f32.gmra.mxu0 %v1731
      %v1790 = vpop.f32.mrf.mxu0
      %v1791 = vadd.f32 0.0, %v1790
      %1792 = vmatmul.f32.gmra.mxu0 %v1732
      %v1793 = vpop.f32.mrf.mxu0
      %v1794 = vadd.f32 0.0, %v1793
      %1795 = vmatmul.f32.gmra.mxu0 %v1733
      %v1796 = vpop.f32.mrf.mxu0
      %v1797 = vadd.f32 0.0, %v1796
      %1798 = vdwg.mxu0
      %v1799 = vadd.f32 %v1670, %v1752
      %v1800 = vadd.f32 %v1671, %v1755
      %v1801 = vadd.f32 %v1672, %v1758
      %v1802 = vadd.f32 %v1673, %v1761
      %v1803 = vadd.f32 %v1674, %v1764
      %v1804 = vadd.f32 %v1675, %v1767
      %v1805 = vadd.f32 %v1676, %v1770
      %v1806 = vadd.f32 %v1677, %v1773
      %v1807 = vadd.f32 %v1678, %v1776
      %v1808 = vadd.f32 %v1679, %v1779
      %v1809 = vadd.f32 %v1680, %v1782
      %v1810 = vadd.f32 %v1681, %v1785
      %v1811 = vadd.f32 %v1682, %v1788
      %v1812 = vadd.f32 %v1683, %v1791
      %v1813 = vadd.f32 %v1684, %v1794
      %v1814 = vadd.f32 %v1685, %v1797
      %1815 = vst [vmem:[#allocation3] sm:$0xff] %v1799
      %1816 = vst [vmem:[#allocation3 + $0x8] sm:$0xff] %v1800
      %1817 = vst [vmem:[#allocation3 + $0x10] sm:$0xff] %v1801
      %1818 = vst [vmem:[#allocation3 + $0x18] sm:$0xff] %v1802
      %1819 = vst [vmem:[#allocation3 + $0x20] sm:$0xff] %v1803
      %1820 = vst [vmem:[#allocation3 + $0x28] sm:$0xff] %v1804
      %1821 = vst [vmem:[#allocation3 + $0x30] sm:$0xff] %v1805
      %1822 = vst [vmem:[#allocation3 + $0x38] sm:$0xff] %v1806
      %1823 = vst [vmem:[#allocation3 + $0x40] sm:$0xff] %v1807
      %1824 = vst [vmem:[#allocation3 + $0x48] sm:$0xff] %v1808
      %1825 = vst [vmem:[#allocation3 + $0x50] sm:$0xff] %v1809
      %1826 = vst [vmem:[#allocation3 + $0x58] sm:$0xff] %v1810
      %1827 = vst [vmem:[#allocation3 + $0x60] sm:$0xff] %v1811
      %1828 = vst [vmem:[#allocation3 + $0x68] sm:$0xff] %v1812
      %1829 = vst [vmem:[#allocation3 + $0x70] sm:$0xff] %v1813
      %1830 = vst [vmem:[#allocation3 + $0x78] sm:$0xff] %v1814
      %v1831 = vld [vmem:[#allocation4] sm:$0xff]
      %v1832 = vld [vmem:[#allocation4 + $0x8] sm:$0xff]
      %v1833 = vld [vmem:[#allocation4 + $0x10] sm:$0xff]
      %v1834 = vld [vmem:[#allocation4 + $0x18] sm:$0xff]
      %v1835 = vld [vmem:[#allocation4 + $0x20] sm:$0xff]
      %v1836 = vld [vmem:[#allocation4 + $0x28] sm:$0xff]
      %v1837 = vld [vmem:[#allocation4 + $0x30] sm:$0xff]
      %v1838 = vld [vmem:[#allocation4 + $0x38] sm:$0xff]
      %v1839 = vld [vmem:[#allocation4 + $0x40] sm:$0xff]
      %v1840 = vld [vmem:[#allocation4 + $0x48] sm:$0xff]
      %v1841 = vld [vmem:[#allocation4 + $0x50] sm:$0xff]
      %v1842 = vld [vmem:[#allocation4 + $0x58] sm:$0xff]
      %v1843 = vld [vmem:[#allocation4 + $0x60] sm:$0xff]
      %v1844 = vld [vmem:[#allocation4 + $0x68] sm:$0xff]
      %v1845 = vld [vmem:[#allocation4 + $0x70] sm:$0xff]
      %v1846 = vld [vmem:[#allocation4 + $0x78] sm:$0xff]
      %1847 = vmatpush.msra.mxu0 %v1637
      %1848 = vmatpush.msra.mxu0 %v1622
      %1849 = vmatpush.msra.mxu0 %v1607
      %1850 = vmatpush.msra.mxu0 %v1592
      %1851 = vmatpush.msra.mxu0 %v1577
      %1852 = vmatpush.msra.mxu0 %v1562
      %1853 = vmatpush.msra.mxu0 %v1547
      %1854 = vmatpush.msra.mxu0 %v1532
      %1855 = vmatpush.msra.mxu0 %v1517
      %1856 = vmatpush.msra.mxu0 %v1502
      %1857 = vmatpush.msra.mxu0 %v1487
      %1858 = vmatpush.msra.mxu0 %v1472
      %1859 = vmatpush.msra.mxu0 %v1457
      %1860 = vmatpush.msra.mxu0 %v1442
      %1861 = vmatpush.msra.mxu0 %v1427
      %1862 = vmatpush.msra.mxu0 %v1412
      %1863 = vmatmul.f32.gmra.mxu0 %v1718
      %v1864 = vpop.f32.mrf.mxu0
      %v1865 = vadd.f32 0.0, %v1864
      %1866 = vmatmul.f32.gmra.mxu0 %v1719
      %v1867 = vpop.f32.mrf.mxu0
      %v1868 = vadd.f32 0.0, %v1867
      %1869 = vmatmul.f32.gmra.mxu0 %v1720
      %v1870 = vpop.f32.mrf.mxu0
      %v1871 = vadd.f32 0.0, %v1870
      %1872 = vmatmul.f32.gmra.mxu0 %v1721
      %v1873 = vpop.f32.mrf.mxu0
      %v1874 = vadd.f32 0.0, %v1873
      %1875 = vmatmul.f32.gmra.mxu0 %v1722
      %v1876 = vpop.f32.mrf.mxu0
      %v1877 = vadd.f32 0.0, %v1876
      %1878 = vmatmul.f32.gmra.mxu0 %v1723
      %v1879 = vpop.f32.mrf.mxu0
      %v1880 = vadd.f32 0.0, %v1879
      %1881 = vmatmul.f32.gmra.mxu0 %v1724
      %v1882 = vpop.f32.mrf.mxu0
      %v1883 = vadd.f32 0.0, %v1882
      %1884 = vmatmul.f32.gmra.mxu0 %v1725
      %v1885 = vpop.f32.mrf.mxu0
      %v1886 = vadd.f32 0.0, %v1885
      %1887 = vmatmul.f32.gmra.mxu0 %v1726
      %v1888 = vpop.f32.mrf.mxu0
      %v1889 = vadd.f32 0.0, %v1888
      %1890 = vmatmul.f32.gmra.mxu0 %v1727
      %v1891 = vpop.f32.mrf.mxu0
      %v1892 = vadd.f32 0.0, %v1891
      %1893 = vmatmul.f32.gmra.mxu0 %v1728
      %v1894 = vpop.f32.mrf.mxu0
      %v1895 = vadd.f32 0.0, %v1894
      %1896 = vmatmul.f32.gmra.mxu0 %v1729
      %v1897 = vpop.f32.mrf.mxu0
      %v1898 = vadd.f32 0.0, %v1897
      %1899 = vmatmul.f32.gmra.mxu0 %v1730
      %v1900 = vpop.f32.mrf.mxu0
      %v1901 = vadd.f32 0.0, %v1900
      %1902 = vmatmul.f32.gmra.mxu0 %v1731
      %v1903 = vpop.f32.mrf.mxu0
      %v1904 = vadd.f32 0.0, %v1903
      %1905 = vmatmul.f32.gmra.mxu0 %v1732
      %v1906 = vpop.f32.mrf.mxu0
      %v1907 = vadd.f32 0.0, %v1906
      %1908 = vmatmul.f32.gmra.mxu0 %v1733
      %v1909 = vpop.f32.mrf.mxu0
      %v1910 = vadd.f32 0.0, %v1909
      %1911 = vdwg.mxu0
      %v1912 = vadd.f32 %v1831, %v1865
      %v1913 = vadd.f32 %v1832, %v1868
      %v1914 = vadd.f32 %v1833, %v1871
      %v1915 = vadd.f32 %v1834, %v1874
      %v1916 = vadd.f32 %v1835, %v1877
      %v1917 = vadd.f32 %v1836, %v1880
      %v1918 = vadd.f32 %v1837, %v1883
      %v1919 = vadd.f32 %v1838, %v1886
      %v1920 = vadd.f32 %v1839, %v1889
      %v1921 = vadd.f32 %v1840, %v1892
      %v1922 = vadd.f32 %v1841, %v1895
      %v1923 = vadd.f32 %v1842, %v1898
      %v1924 = vadd.f32 %v1843, %v1901
      %v1925 = vadd.f32 %v1844, %v1904
      %v1926 = vadd.f32 %v1845, %v1907
      %v1927 = vadd.f32 %v1846, %v1910
      %1928 = vst [vmem:[#allocation4] sm:$0xff] %v1912
      %1929 = vst [vmem:[#allocation4 + $0x8] sm:$0xff] %v1913
      %1930 = vst [vmem:[#allocation4 + $0x10] sm:$0xff] %v1914
      %1931 = vst [vmem:[#allocation4 + $0x18] sm:$0xff] %v1915
      %1932 = vst [vmem:[#allocation4 + $0x20] sm:$0xff] %v1916
      %1933 = vst [vmem:[#allocation4 + $0x28] sm:$0xff] %v1917
      %1934 = vst [vmem:[#allocation4 + $0x30] sm:$0xff] %v1918
      %1935 = vst [vmem:[#allocation4 + $0x38] sm:$0xff] %v1919
      %1936 = vst [vmem:[#allocation4 + $0x40] sm:$0xff] %v1920
      %1937 = vst [vmem:[#allocation4 + $0x48] sm:$0xff] %v1921
      %1938 = vst [vmem:[#allocation4 + $0x50] sm:$0xff] %v1922
      %1939 = vst [vmem:[#allocation4 + $0x58] sm:$0xff] %v1923
      %1940 = vst [vmem:[#allocation4 + $0x60] sm:$0xff] %v1924
      %1941 = vst [vmem:[#allocation4 + $0x68] sm:$0xff] %v1925
      %1942 = vst [vmem:[#allocation4 + $0x70] sm:$0xff] %v1926
      %1943 = vst [vmem:[#allocation4 + $0x78] sm:$0xff] %v1927
      %p1944 = scmp.eq.s32.totalorder %s22, 1
      // Predicated region
      $region61: #{_lambda_.5} parent=55 // pred_check
        %p1945 = pneg %p1944
      $region62: #{_lambda_.5} parent=55 // pred_check_branch
        %1947 = sbr.rel (%p1945) target = $region64
      $region63: #{_lambda_.5} parent=55 // pred_region
        %v1948 = vld [vmem:[#allocation2] sm:$0xff]
        %v1949 = vld [vmem:[#allocation2 + $0x20] sm:$0xff]
        %v1950 = vld [vmem:[#allocation2 + $0x40] sm:$0xff]
        %v1951 = vld [vmem:[#allocation2 + $0x60] sm:$0xff]
        %v1952 = vld [vmem:[#allocation2 + $0x80] sm:$0xff]
        %v1953 = vld [vmem:[#allocation2 + $0xa0] sm:$0xff]
        %v1954 = vld [vmem:[#allocation2 + $0xc0] sm:$0xff]
        %v1955 = vld [vmem:[#allocation2 + $0xe0] sm:$0xff]
        %v1956 = vld [vmem:[#allocation2 + $0x100] sm:$0xff]
        %v1957 = vld [vmem:[#allocation2 + $0x120] sm:$0xff]
        %v1958 = vld [vmem:[#allocation2 + $0x140] sm:$0xff]
        %v1959 = vld [vmem:[#allocation2 + $0x160] sm:$0xff]
        %v1960 = vld [vmem:[#allocation2 + $0x180] sm:$0xff]
        %v1961 = vld [vmem:[#allocation2 + $0x1a0] sm:$0xff]
        %v1962 = vld [vmem:[#allocation2 + $0x1c0] sm:$0xff]
        %v1963 = vld [vmem:[#allocation2 + $0x1e0] sm:$0xff]
        %v1964 = vld [vmem:[#allocation3] sm:$0xff]
        %v1965 = vld [vmem:[#allocation3 + $0x8] sm:$0xff]
        %v1966 = vld [vmem:[#allocation3 + $0x10] sm:$0xff]
        %v1967 = vld [vmem:[#allocation3 + $0x18] sm:$0xff]
        %v1968 = vld [vmem:[#allocation3 + $0x20] sm:$0xff]
        %v1969 = vld [vmem:[#allocation3 + $0x28] sm:$0xff]
        %v1970 = vld [vmem:[#allocation3 + $0x30] sm:$0xff]
        %v1971 = vld [vmem:[#allocation3 + $0x38] sm:$0xff]
        %v1972 = vld [vmem:[#allocation3 + $0x40] sm:$0xff]
        %v1973 = vld [vmem:[#allocation3 + $0x48] sm:$0xff]
        %v1974 = vld [vmem:[#allocation3 + $0x50] sm:$0xff]
        %v1975 = vld [vmem:[#allocation3 + $0x58] sm:$0xff]
        %v1976 = vld [vmem:[#allocation3 + $0x60] sm:$0xff]
        %v1977 = vld [vmem:[#allocation3 + $0x68] sm:$0xff]
        %v1978 = vld [vmem:[#allocation3 + $0x70] sm:$0xff]
        %v1979 = vld [vmem:[#allocation3 + $0x78] sm:$0xff]
        %v1980 = vld [vmem:[#allocation4] sm:$0xff]
        %v1981 = vld [vmem:[#allocation4 + $0x8] sm:$0xff]
        %v1982 = vld [vmem:[#allocation4 + $0x10] sm:$0xff]
        %v1983 = vld [vmem:[#allocation4 + $0x18] sm:$0xff]
        %v1984 = vld [vmem:[#allocation4 + $0x20] sm:$0xff]
        %v1985 = vld [vmem:[#allocation4 + $0x28] sm:$0xff]
        %v1986 = vld [vmem:[#allocation4 + $0x30] sm:$0xff]
        %v1987 = vld [vmem:[#allocation4 + $0x38] sm:$0xff]
        %v1988 = vld [vmem:[#allocation4 + $0x40] sm:$0xff]
        %v1989 = vld [vmem:[#allocation4 + $0x48] sm:$0xff]
        %v1990 = vld [vmem:[#allocation4 + $0x50] sm:$0xff]
        %v1991 = vld [vmem:[#allocation4 + $0x58] sm:$0xff]
        %v1992 = vld [vmem:[#allocation4 + $0x60] sm:$0xff]
        %v1993 = vld [vmem:[#allocation4 + $0x68] sm:$0xff]
        %v1994 = vld [vmem:[#allocation4 + $0x70] sm:$0xff]
        %v1995 = vld [vmem:[#allocation4 + $0x78] sm:$0xff]
        %v1996 = vadd.f32 %v1980, 1e-16
        %v1997 = vadd.f32 %v1981, 1e-16
        %v1998 = vadd.f32 %v1982, 1e-16
        %v1999 = vadd.f32 %v1983, 1e-16
        %v2000 = vadd.f32 %v1984, 1e-16
        %v2001 = vadd.f32 %v1985, 1e-16
        %v2002 = vadd.f32 %v1986, 1e-16
        %v2003 = vadd.f32 %v1987, 1e-16
        %v2004 = vadd.f32 %v1988, 1e-16
        %v2005 = vadd.f32 %v1989, 1e-16
        %v2006 = vadd.f32 %v1990, 1e-16
        %v2007 = vadd.f32 %v1991, 1e-16
        %v2008 = vadd.f32 %v1992, 1e-16
        %v2009 = vadd.f32 %v1993, 1e-16
        %v2010 = vadd.f32 %v1994, 1e-16
        %v2011 = vadd.f32 %v1995, 1e-16
        %v2012 = vrcp.pop %v1996
        %v2013 = vmul.f32 %v1996, %v2012
        %v2014 = vsub.f32 1.0, %v2013
        %v2015 = vmul.f32 %v2012, %v2014
        %v2016 = vadd.f32 %v2012, %v2015
        %vm2017 = vweird.f32 %v1996
        %vm2018 = vweird.f32 %v2012
        %vm2019 = vmor %vm2017, %vm2018
        %v2020 = vsel %vm2019, %v2012, %v2016
        %v2021 = vand.u32 2147483647, %v1996
        %vm2022 = vcmp.eq.f32.partialorder %v2021, 8.507059e+37
        %v2023 = vand.u32 %v1996, 2147483648
        %v2024 = vor.u32 1.1754944e-38, %v2023
        %v2025 = vsel %vm2022, %v2024, %v2020
        %v2026 = vmul.f32 %v1964, %v2025
        %v2027 = vrcp.pop %v1997
        %v2028 = vmul.f32 %v1997, %v2027
        %v2029 = vsub.f32 1.0, %v2028
        %v2030 = vmul.f32 %v2027, %v2029
        %v2031 = vadd.f32 %v2027, %v2030
        %vm2032 = vweird.f32 %v1997
        %vm2033 = vweird.f32 %v2027
        %vm2034 = vmor %vm2032, %vm2033
        %v2035 = vsel %vm2034, %v2027, %v2031
        %v2036 = vand.u32 2147483647, %v1997
        %vm2037 = vcmp.eq.f32.partialorder %v2036, 8.507059e+37
        %v2038 = vand.u32 %v1997, 2147483648
        %v2039 = vor.u32 1.1754944e-38, %v2038
        %v2040 = vsel %vm2037, %v2039, %v2035
        %v2041 = vmul.f32 %v1965, %v2040
        %v2042 = vrcp.pop %v1998
        %v2043 = vmul.f32 %v1998, %v2042
        %v2044 = vsub.f32 1.0, %v2043
        %v2045 = vmul.f32 %v2042, %v2044
        %v2046 = vadd.f32 %v2042, %v2045
        %vm2047 = vweird.f32 %v1998
        %vm2048 = vweird.f32 %v2042
        %vm2049 = vmor %vm2047, %vm2048
        %v2050 = vsel %vm2049, %v2042, %v2046
        %v2051 = vand.u32 2147483647, %v1998
        %vm2052 = vcmp.eq.f32.partialorder %v2051, 8.507059e+37
        %v2053 = vand.u32 %v1998, 2147483648
        %v2054 = vor.u32 1.1754944e-38, %v2053
        %v2055 = vsel %vm2052, %v2054, %v2050
        %v2056 = vmul.f32 %v1966, %v2055
        %v2057 = vrcp.pop %v1999
        %v2058 = vmul.f32 %v1999, %v2057
        %v2059 = vsub.f32 1.0, %v2058
        %v2060 = vmul.f32 %v2057, %v2059
        %v2061 = vadd.f32 %v2057, %v2060
        %vm2062 = vweird.f32 %v1999
        %vm2063 = vweird.f32 %v2057
        %vm2064 = vmor %vm2062, %vm2063
        %v2065 = vsel %vm2064, %v2057, %v2061
        %v2066 = vand.u32 2147483647, %v1999
        %vm2067 = vcmp.eq.f32.partialorder %v2066, 8.507059e+37
        %v2068 = vand.u32 %v1999, 2147483648
        %v2069 = vor.u32 1.1754944e-38, %v2068
        %v2070 = vsel %vm2067, %v2069, %v2065
        %v2071 = vmul.f32 %v1967, %v2070
        %v2072 = vrcp.pop %v2000
        %v2073 = vmul.f32 %v2000, %v2072
        %v2074 = vsub.f32 1.0, %v2073
        %v2075 = vmul.f32 %v2072, %v2074
        %v2076 = vadd.f32 %v2072, %v2075
        %vm2077 = vweird.f32 %v2000
        %vm2078 = vweird.f32 %v2072
        %vm2079 = vmor %vm2077, %vm2078
        %v2080 = vsel %vm2079, %v2072, %v2076
        %v2081 = vand.u32 2147483647, %v2000
        %vm2082 = vcmp.eq.f32.partialorder %v2081, 8.507059e+37
        %v2083 = vand.u32 %v2000, 2147483648
        %v2084 = vor.u32 1.1754944e-38, %v2083
        %v2085 = vsel %vm2082, %v2084, %v2080
        %v2086 = vmul.f32 %v1968, %v2085
        %v2087 = vrcp.pop %v2001
        %v2088 = vmul.f32 %v2001, %v2087
        %v2089 = vsub.f32 1.0, %v2088
        %v2090 = vmul.f32 %v2087, %v2089
        %v2091 = vadd.f32 %v2087, %v2090
        %vm2092 = vweird.f32 %v2001
        %vm2093 = vweird.f32 %v2087
        %vm2094 = vmor %vm2092, %vm2093
        %v2095 = vsel %vm2094, %v2087, %v2091
        %v2096 = vand.u32 2147483647, %v2001
        %vm2097 = vcmp.eq.f32.partialorder %v2096, 8.507059e+37
        %v2098 = vand.u32 %v2001, 2147483648
        %v2099 = vor.u32 1.1754944e-38, %v2098
        %v2100 = vsel %vm2097, %v2099, %v2095
        %v2101 = vmul.f32 %v1969, %v2100
        %v2102 = vrcp.pop %v2002
        %v2103 = vmul.f32 %v2002, %v2102
        %v2104 = vsub.f32 1.0, %v2103
        %v2105 = vmul.f32 %v2102, %v2104
        %v2106 = vadd.f32 %v2102, %v2105
        %vm2107 = vweird.f32 %v2002
        %vm2108 = vweird.f32 %v2102
        %vm2109 = vmor %vm2107, %vm2108
        %v2110 = vsel %vm2109, %v2102, %v2106
        %v2111 = vand.u32 2147483647, %v2002
        %vm2112 = vcmp.eq.f32.partialorder %v2111, 8.507059e+37
        %v2113 = vand.u32 %v2002, 2147483648
        %v2114 = vor.u32 1.1754944e-38, %v2113
        %v2115 = vsel %vm2112, %v2114, %v2110
        %v2116 = vmul.f32 %v1970, %v2115
        %v2117 = vrcp.pop %v2003
        %v2118 = vmul.f32 %v2003, %v2117
        %v2119 = vsub.f32 1.0, %v2118
        %v2120 = vmul.f32 %v2117, %v2119
        %v2121 = vadd.f32 %v2117, %v2120
        %vm2122 = vweird.f32 %v2003
        %vm2123 = vweird.f32 %v2117
        %vm2124 = vmor %vm2122, %vm2123
        %v2125 = vsel %vm2124, %v2117, %v2121
        %v2126 = vand.u32 2147483647, %v2003
        %vm2127 = vcmp.eq.f32.partialorder %v2126, 8.507059e+37
        %v2128 = vand.u32 %v2003, 2147483648
        %v2129 = vor.u32 1.1754944e-38, %v2128
        %v2130 = vsel %vm2127, %v2129, %v2125
        %v2131 = vmul.f32 %v1971, %v2130
        %v2132 = vrcp.pop %v2004
        %v2133 = vmul.f32 %v2004, %v2132
        %v2134 = vsub.f32 1.0, %v2133
        %v2135 = vmul.f32 %v2132, %v2134
        %v2136 = vadd.f32 %v2132, %v2135
        %vm2137 = vweird.f32 %v2004
        %vm2138 = vweird.f32 %v2132
        %vm2139 = vmor %vm2137, %vm2138
        %v2140 = vsel %vm2139, %v2132, %v2136
        %v2141 = vand.u32 2147483647, %v2004
        %vm2142 = vcmp.eq.f32.partialorder %v2141, 8.507059e+37
        %v2143 = vand.u32 %v2004, 2147483648
        %v2144 = vor.u32 1.1754944e-38, %v2143
        %v2145 = vsel %vm2142, %v2144, %v2140
        %v2146 = vmul.f32 %v1972, %v2145
        %v2147 = vrcp.pop %v2005
        %v2148 = vmul.f32 %v2005, %v2147
        %v2149 = vsub.f32 1.0, %v2148
        %v2150 = vmul.f32 %v2147, %v2149
        %v2151 = vadd.f32 %v2147, %v2150
        %vm2152 = vweird.f32 %v2005
        %vm2153 = vweird.f32 %v2147
        %vm2154 = vmor %vm2152, %vm2153
        %v2155 = vsel %vm2154, %v2147, %v2151
        %v2156 = vand.u32 2147483647, %v2005
        %vm2157 = vcmp.eq.f32.partialorder %v2156, 8.507059e+37
        %v2158 = vand.u32 %v2005, 2147483648
        %v2159 = vor.u32 1.1754944e-38, %v2158
        %v2160 = vsel %vm2157, %v2159, %v2155
        %v2161 = vmul.f32 %v1973, %v2160
        %v2162 = vrcp.pop %v2006
        %v2163 = vmul.f32 %v2006, %v2162
        %v2164 = vsub.f32 1.0, %v2163
        %v2165 = vmul.f32 %v2162, %v2164
        %v2166 = vadd.f32 %v2162, %v2165
        %vm2167 = vweird.f32 %v2006
        %vm2168 = vweird.f32 %v2162
        %vm2169 = vmor %vm2167, %vm2168
        %v2170 = vsel %vm2169, %v2162, %v2166
        %v2171 = vand.u32 2147483647, %v2006
        %vm2172 = vcmp.eq.f32.partialorder %v2171, 8.507059e+37
        %v2173 = vand.u32 %v2006, 2147483648
        %v2174 = vor.u32 1.1754944e-38, %v2173
        %v2175 = vsel %vm2172, %v2174, %v2170
        %v2176 = vmul.f32 %v1974, %v2175
        %v2177 = vrcp.pop %v2007
        %v2178 = vmul.f32 %v2007, %v2177
        %v2179 = vsub.f32 1.0, %v2178
        %v2180 = vmul.f32 %v2177, %v2179
        %v2181 = vadd.f32 %v2177, %v2180
        %vm2182 = vweird.f32 %v2007
        %vm2183 = vweird.f32 %v2177
        %vm2184 = vmor %vm2182, %vm2183
        %v2185 = vsel %vm2184, %v2177, %v2181
        %v2186 = vand.u32 2147483647, %v2007
        %vm2187 = vcmp.eq.f32.partialorder %v2186, 8.507059e+37
        %v2188 = vand.u32 %v2007, 2147483648
        %v2189 = vor.u32 1.1754944e-38, %v2188
        %v2190 = vsel %vm2187, %v2189, %v2185
        %v2191 = vmul.f32 %v1975, %v2190
        %v2192 = vrcp.pop %v2008
        %v2193 = vmul.f32 %v2008, %v2192
        %v2194 = vsub.f32 1.0, %v2193
        %v2195 = vmul.f32 %v2192, %v2194
        %v2196 = vadd.f32 %v2192, %v2195
        %vm2197 = vweird.f32 %v2008
        %vm2198 = vweird.f32 %v2192
        %vm2199 = vmor %vm2197, %vm2198
        %v2200 = vsel %vm2199, %v2192, %v2196
        %v2201 = vand.u32 2147483647, %v2008
        %vm2202 = vcmp.eq.f32.partialorder %v2201, 8.507059e+37
        %v2203 = vand.u32 %v2008, 2147483648
        %v2204 = vor.u32 1.1754944e-38, %v2203
        %v2205 = vsel %vm2202, %v2204, %v2200
        %v2206 = vmul.f32 %v1976, %v2205
        %v2207 = vrcp.pop %v2009
        %v2208 = vmul.f32 %v2009, %v2207
        %v2209 = vsub.f32 1.0, %v2208
        %v2210 = vmul.f32 %v2207, %v2209
        %v2211 = vadd.f32 %v2207, %v2210
        %vm2212 = vweird.f32 %v2009
        %vm2213 = vweird.f32 %v2207
        %vm2214 = vmor %vm2212, %vm2213
        %v2215 = vsel %vm2214, %v2207, %v2211
        %v2216 = vand.u32 2147483647, %v2009
        %vm2217 = vcmp.eq.f32.partialorder %v2216, 8.507059e+37
        %v2218 = vand.u32 %v2009, 2147483648
        %v2219 = vor.u32 1.1754944e-38, %v2218
        %v2220 = vsel %vm2217, %v2219, %v2215
        %v2221 = vmul.f32 %v1977, %v2220
        %v2222 = vrcp.pop %v2010
        %v2223 = vmul.f32 %v2010, %v2222
        %v2224 = vsub.f32 1.0, %v2223
        %v2225 = vmul.f32 %v2222, %v2224
        %v2226 = vadd.f32 %v2222, %v2225
        %vm2227 = vweird.f32 %v2010
        %vm2228 = vweird.f32 %v2222
        %vm2229 = vmor %vm2227, %vm2228
        %v2230 = vsel %vm2229, %v2222, %v2226
        %v2231 = vand.u32 2147483647, %v2010
        %vm2232 = vcmp.eq.f32.partialorder %v2231, 8.507059e+37
        %v2233 = vand.u32 %v2010, 2147483648
        %v2234 = vor.u32 1.1754944e-38, %v2233
        %v2235 = vsel %vm2232, %v2234, %v2230
        %v2236 = vmul.f32 %v1978, %v2235
        %v2237 = vrcp.pop %v2011
        %v2238 = vmul.f32 %v2011, %v2237
        %v2239 = vsub.f32 1.0, %v2238
        %v2240 = vmul.f32 %v2237, %v2239
        %v2241 = vadd.f32 %v2237, %v2240
        %vm2242 = vweird.f32 %v2011
        %vm2243 = vweird.f32 %v2237
        %vm2244 = vmor %vm2242, %vm2243
        %v2245 = vsel %vm2244, %v2237, %v2241
        %v2246 = vand.u32 2147483647, %v2011
        %vm2247 = vcmp.eq.f32.partialorder %v2246, 8.507059e+37
        %v2248 = vand.u32 %v2011, 2147483648
        %v2249 = vor.u32 1.1754944e-38, %v2248
        %v2250 = vsel %vm2247, %v2249, %v2245
        %v2251 = vmul.f32 %v1979, %v2250
        %v2252 = vadd.f32 %v1948, %v2026
        %v2253 = vadd.f32 %v1949, %v2041
        %v2254 = vadd.f32 %v1950, %v2056
        %v2255 = vadd.f32 %v1951, %v2071
        %v2256 = vadd.f32 %v1952, %v2086
        %v2257 = vadd.f32 %v1953, %v2101
        %v2258 = vadd.f32 %v1954, %v2116
        %v2259 = vadd.f32 %v1955, %v2131
        %v2260 = vadd.f32 %v1956, %v2146
        %v2261 = vadd.f32 %v1957, %v2161
        %v2262 = vadd.f32 %v1958, %v2176
        %v2263 = vadd.f32 %v1959, %v2191
        %v2264 = vadd.f32 %v1960, %v2206
        %v2265 = vadd.f32 %v1961, %v2221
        %v2266 = vadd.f32 %v1962, %v2236
        %v2267 = vadd.f32 %v1963, %v2251
        %v2268 = vld [vmem:[%s8] sm:$0xff]
        %v2269 = vld [vmem:[%s8 + $0x8] sm:$0xff]
        %v2270 = vld [vmem:[%s8 + $0x10] sm:$0xff]
        %v2271 = vld [vmem:[%s8 + $0x18] sm:$0xff]
        %v2272 = vld [vmem:[%s8 + $0x20] sm:$0xff]
        %v2273 = vld [vmem:[%s8 + $0x28] sm:$0xff]
        %v2274 = vld [vmem:[%s8 + $0x30] sm:$0xff]
        %v2275 = vld [vmem:[%s8 + $0x38] sm:$0xff]
        %v2276 = vld [vmem:[%s8 + $0x40] sm:$0xff]
        %v2277 = vld [vmem:[%s8 + $0x48] sm:$0xff]
        %v2278 = vld [vmem:[%s8 + $0x50] sm:$0xff]
        %v2279 = vld [vmem:[%s8 + $0x58] sm:$0xff]
        %v2280 = vld [vmem:[%s8 + $0x60] sm:$0xff]
        %v2281 = vld [vmem:[%s8 + $0x68] sm:$0xff]
        %v2282 = vld [vmem:[%s8 + $0x70] sm:$0xff]
        %v2283 = vld [vmem:[%s8 + $0x78] sm:$0xff]
        %vm2284 = vcmp.gt.f32.partialorder %v2268, 0.0
        %vm2285 = vcmp.gt.f32.partialorder %v2269, 0.0
        %vm2286 = vcmp.gt.f32.partialorder %v2270, 0.0
        %vm2287 = vcmp.gt.f32.partialorder %v2271, 0.0
        %vm2288 = vcmp.gt.f32.partialorder %v2272, 0.0
        %vm2289 = vcmp.gt.f32.partialorder %v2273, 0.0
        %vm2290 = vcmp.gt.f32.partialorder %v2274, 0.0
        %vm2291 = vcmp.gt.f32.partialorder %v2275, 0.0
        %vm2292 = vcmp.gt.f32.partialorder %v2276, 0.0
        %vm2293 = vcmp.gt.f32.partialorder %v2277, 0.0
        %vm2294 = vcmp.gt.f32.partialorder %v2278, 0.0
        %vm2295 = vcmp.gt.f32.partialorder %v2279, 0.0
        %vm2296 = vcmp.gt.f32.partialorder %v2280, 0.0
        %vm2297 = vcmp.gt.f32.partialorder %v2281, 0.0
        %vm2298 = vcmp.gt.f32.partialorder %v2282, 0.0
        %vm2299 = vcmp.gt.f32.partialorder %v2283, 0.0
        %v2300 = vsel %vm2284, 1, 0
        %v2301 = vsel %vm2285, 1, 0
        %v2302 = vsel %vm2286, 1, 0
        %v2303 = vsel %vm2287, 1, 0
        %v2304 = vsel %vm2288, 1, 0
        %v2305 = vsel %vm2289, 1, 0
        %v2306 = vsel %vm2290, 1, 0
        %v2307 = vsel %vm2291, 1, 0
        %v2308 = vsel %vm2292, 1, 0
        %v2309 = vsel %vm2293, 1, 0
        %v2310 = vsel %vm2294, 1, 0
        %v2311 = vsel %vm2295, 1, 0
        %v2312 = vsel %vm2296, 1, 0
        %v2313 = vsel %vm2297, 1, 0
        %v2314 = vsel %vm2298, 1, 0
        %v2315 = vsel %vm2299, 1, 0
        %2316 = vset.pattern.permute.xlu0 0
        %2317 = vperm.xlu0 %2316, %v2300
        %v2318 = vpop.permute.xlu0 %2317
        %2319 = vset.pattern.permute.xlu0 0
        %2320 = vperm.xlu0 %2319, %v2301
        %v2321 = vpop.permute.xlu0 %2320
        %2322 = vset.pattern.permute.xlu0 0
        %2323 = vperm.xlu0 %2322, %v2302
        %v2324 = vpop.permute.xlu0 %2323
        %2325 = vset.pattern.permute.xlu0 0
        %2326 = vperm.xlu0 %2325, %v2303
        %v2327 = vpop.permute.xlu0 %2326
        %2328 = vset.pattern.permute.xlu0 0
        %2329 = vperm.xlu0 %2328, %v2304
        %v2330 = vpop.permute.xlu0 %2329
        %2331 = vset.pattern.permute.xlu0 0
        %2332 = vperm.xlu0 %2331, %v2305
        %v2333 = vpop.permute.xlu0 %2332
        %2334 = vset.pattern.permute.xlu0 0
        %2335 = vperm.xlu0 %2334, %v2306
        %v2336 = vpop.permute.xlu0 %2335
        %2337 = vset.pattern.permute.xlu0 0
        %2338 = vperm.xlu0 %2337, %v2307
        %v2339 = vpop.permute.xlu0 %2338
        %2340 = vset.pattern.permute.xlu0 0
        %2341 = vperm.xlu0 %2340, %v2308
        %v2342 = vpop.permute.xlu0 %2341
        %2343 = vset.pattern.permute.xlu0 0
        %2344 = vperm.xlu0 %2343, %v2309
        %v2345 = vpop.permute.xlu0 %2344
        %2346 = vset.pattern.permute.xlu0 0
        %2347 = vperm.xlu0 %2346, %v2310
        %v2348 = vpop.permute.xlu0 %2347
        %2349 = vset.pattern.permute.xlu0 0
        %2350 = vperm.xlu0 %2349, %v2311
        %v2351 = vpop.permute.xlu0 %2350
        %2352 = vset.pattern.permute.xlu0 0
        %2353 = vperm.xlu0 %2352, %v2312
        %v2354 = vpop.permute.xlu0 %2353
        %2355 = vset.pattern.permute.xlu0 0
        %2356 = vperm.xlu0 %2355, %v2313
        %v2357 = vpop.permute.xlu0 %2356
        %2358 = vset.pattern.permute.xlu0 0
        %2359 = vperm.xlu0 %2358, %v2314
        %v2360 = vpop.permute.xlu0 %2359
        %2361 = vset.pattern.permute.xlu0 0
        %2362 = vperm.xlu0 %2361, %v2315
        %v2363 = vpop.permute.xlu0 %2362
        %vm2364 = vcmp.eq.s32.totalorder %v2318, 1
        %vm2365 = vcmp.eq.s32.totalorder %v2321, 1
        %vm2366 = vcmp.eq.s32.totalorder %v2324, 1
        %vm2367 = vcmp.eq.s32.totalorder %v2327, 1
        %vm2368 = vcmp.eq.s32.totalorder %v2330, 1
        %vm2369 = vcmp.eq.s32.totalorder %v2333, 1
        %vm2370 = vcmp.eq.s32.totalorder %v2336, 1
        %vm2371 = vcmp.eq.s32.totalorder %v2339, 1
        %vm2372 = vcmp.eq.s32.totalorder %v2342, 1
        %vm2373 = vcmp.eq.s32.totalorder %v2345, 1
        %vm2374 = vcmp.eq.s32.totalorder %v2348, 1
        %vm2375 = vcmp.eq.s32.totalorder %v2351, 1
        %vm2376 = vcmp.eq.s32.totalorder %v2354, 1
        %vm2377 = vcmp.eq.s32.totalorder %v2357, 1
        %vm2378 = vcmp.eq.s32.totalorder %v2360, 1
        %vm2379 = vcmp.eq.s32.totalorder %v2363, 1
        %v2380 = vsel %vm2364, %v2252, 0.0
        %v2381 = vsel %vm2365, %v2253, 0.0
        %v2382 = vsel %vm2366, %v2254, 0.0
        %v2383 = vsel %vm2367, %v2255, 0.0
        %v2384 = vsel %vm2368, %v2256, 0.0
        %v2385 = vsel %vm2369, %v2257, 0.0
        %v2386 = vsel %vm2370, %v2258, 0.0
        %v2387 = vsel %vm2371, %v2259, 0.0
        %v2388 = vsel %vm2372, %v2260, 0.0
        %v2389 = vsel %vm2373, %v2261, 0.0
        %v2390 = vsel %vm2374, %v2262, 0.0
        %v2391 = vsel %vm2375, %v2263, 0.0
        %v2392 = vsel %vm2376, %v2264, 0.0
        %v2393 = vsel %vm2377, %v2265, 0.0
        %v2394 = vsel %vm2378, %v2266, 0.0
        %v2395 = vsel %vm2379, %v2267, 0.0
        %v2396 = vmax.f32 %v2380, 0.0
        %v2397 = vmax.f32 %v2381, 0.0
        %v2398 = vmax.f32 %v2382, 0.0
        %v2399 = vmax.f32 %v2383, 0.0
        %v2400 = vmax.f32 %v2384, 0.0
        %v2401 = vmax.f32 %v2385, 0.0
        %v2402 = vmax.f32 %v2386, 0.0
        %v2403 = vmax.f32 %v2387, 0.0
        %v2404 = vmax.f32 %v2388, 0.0
        %v2405 = vmax.f32 %v2389, 0.0
        %v2406 = vmax.f32 %v2390, 0.0
        %v2407 = vmax.f32 %v2391, 0.0
        %v2408 = vmax.f32 %v2392, 0.0
        %v2409 = vmax.f32 %v2393, 0.0
        %v2410 = vmax.f32 %v2394, 0.0
        %v2411 = vmax.f32 %v2395, 0.0
        %2412 = vst [vmem:[%s10] sm:$0xff] %v2396
        %2413 = vst [vmem:[%s10 + $0x8] sm:$0xff] %v2397
        %2414 = vst [vmem:[%s10 + $0x10] sm:$0xff] %v2398
        %2415 = vst [vmem:[%s10 + $0x18] sm:$0xff] %v2399
        %2416 = vst [vmem:[%s10 + $0x20] sm:$0xff] %v2400
        %2417 = vst [vmem:[%s10 + $0x28] sm:$0xff] %v2401
        %2418 = vst [vmem:[%s10 + $0x30] sm:$0xff] %v2402
        %2419 = vst [vmem:[%s10 + $0x38] sm:$0xff] %v2403
        %2420 = vst [vmem:[%s10 + $0x40] sm:$0xff] %v2404
        %2421 = vst [vmem:[%s10 + $0x48] sm:$0xff] %v2405
        %2422 = vst [vmem:[%s10 + $0x50] sm:$0xff] %v2406
        %2423 = vst [vmem:[%s10 + $0x58] sm:$0xff] %v2407
        %2424 = vst [vmem:[%s10 + $0x60] sm:$0xff] %v2408
        %2425 = vst [vmem:[%s10 + $0x68] sm:$0xff] %v2409
        %2426 = vst [vmem:[%s10 + $0x70] sm:$0xff] %v2410
        %2427 = vst [vmem:[%s10 + $0x78] sm:$0xff] %v2411
      $region64: #{_lambda_.5} parent=55 // pred_fallthru
        _
      %s2428 = smul.u32 16, %s22
      %p2429 = scmp.lt.s32.totalorder %s2428, 31
      %s2430 = scalar_select %p2429, %s2428, 31
      %s2431 = smul.addr %s2430, 8
      %s2432 = scalar_lea.vmem %s9, %s2431
      // Predicated region
      $region65: #{_lambda_.5} parent=55 // pred_check
        %p2433 = pneg %p244
      $region66: #{_lambda_.5} parent=55 // pred_check_branch
        %2435 = sbr.rel (%p2433) target = $region68
      $region67: #{_lambda_.5} parent=55 // pred_region
        %s2436 = smul.u32 16, %s22
      $region68: #{_lambda_.5} parent=55 // pred_fallthru
        _
      // Predicated region
      $region69: #{_lambda_.5} parent=55 // pred_check
        %p2437 = pneg %p265
      $region70: #{_lambda_.5} parent=55 // pred_check_branch
        %2439 = sbr.rel (%p2437) target = $region72
      $region71: #{_lambda_.5} parent=55 // pred_region
        _
      $region72: #{_lambda_.5} parent=55 // pred_fallthru
        _
      // Predicated region
      $region73: #{_lambda_.5} parent=55 // pred_check
        %p2440 = pneg %p265
      $region74: #{_lambda_.5} parent=55 // pred_check_branch
        %2442 = sbr.rel (%p2440) target = $region76
      $region75: #{_lambda_.5} parent=55 // pred_region
        _
      $region76: #{_lambda_.5} parent=55 // pred_fallthru
        _
    $region56: #{_lambda_.5} parent=5 // pred_fallthru
      _
    %p2443 = scmp.le.s32.totalorder 2, %s17
    // Predicated region
    $region77: #{_lambda_.5} parent=5 // pred_check
      %p2444 = pneg %p2443
    $region78: #{_lambda_.5} parent=5 // pred_check_branch
      %2446 = sbr.rel (%p2444) target = $region80
    $region79: #{_lambda_.5} parent=5 // pred_region
      %s2447 = ssub.s32 %s17, 2
      // Predicated region
      $region81: #{_lambda_.5} parent=79 // pred_check
        %p2448 = pneg %p250
      $region82: #{_lambda_.5} parent=79 // pred_check_branch
        %2450 = sbr.rel (%p2448) target = $region84
      $region83: #{_lambda_.5} parent=79 // pred_region
        %s2451 = smul.u32 16, %s23
        %p2452 = scmp.lt.s32.totalorder %s2451, 31
        %s2453 = scalar_select %p2452, %s2451, 31
        %s2454 = smul.addr %s2453, 8
        %s2455 = scalar_lea.vmem %s9, %s2454
      $region84: #{_lambda_.5} parent=79 // pred_fallthru
        _
    $region80: #{_lambda_.5} parent=5 // pred_fallthru
      _
  $region6: #{_lambda_.5} parent=0 // loop_footer
    %s21 = sadd.s32 1, %s17
  $region7: #{_lambda_.5} parent=0 // loop_footer_branch
    %16 = sbr.rel target = $region3
  $region8: #{_lambda_.5} parent=0 // loop_exit
    _

// kernel: _lambda_.6
$region0: #{_lambda_.6}
  #allocation0 [shape = 'u32[]', space=smem, size = 0x4, offset = 0x4, fixed_abs, tag = 'smem constant byte address 0x4 - core index']
  #allocation1 [shape = 'u32[72,128]{1,0:T(1,128)}', space=vmem, size = 0x9000, scoped, tag = 'internal scratch']
  #allocation2 [shape = 'f32[128,512]{1,0:T(8,128)}', space=vmem, size = 0x40000, scoped, tag = 'scratch operand']
  #allocation3 [shape = 'f32[128,128]{1,0:T(8,128)}', space=vmem, size = 0x10000, scoped, tag = 'scratch operand']
  #allocation4 [shape = 'f32[128,128]{1,0:T(8,128)}', space=vmem, size = 0x10000, scoped, tag = 'scratch operand']
  %s0 = inlined_call_operand.vmem [shape: f32[128,128], index: 0, kind: input, shape index: {}]
  %s1 = inlined_call_operand.vmem [shape: f32[128,512], index: 1, kind: input, shape index: {}]
  %s2 = inlined_call_operand.vmem [shape: f32[1,512], index: 2, kind: input, shape index: {}]
  %s3 = inlined_call_operand.vmem [shape: bf16[256,128], index: 3, kind: input, shape index: {}]
  %s4 = inlined_call_operand.vmem [shape: bf16[256,128], index: 4, kind: input, shape index: {}]
  %s5 = inlined_call_operand.vmem [shape: f32[256,128], index: 5, kind: input, shape index: {}]
  %s6 = inlined_call_operand.vmem [shape: f32[128,128], index: 6, kind: input, shape index: {}]
  %s7 = inlined_call_operand.vmem [shape: f32[1,128], index: 7, kind: input, shape index: {}]
  %s8 = inlined_call_operand.vmem [shape: f32[128,1], index: 8, kind: input, shape index: {}]
  %s9 = inlined_call_operand.vmem [shape: f32[256,128], index: 9, kind: output, shape index: {0}]
  %s10 = inlined_call_operand.vmem [shape: f32[128,128], index: 10, kind: output, shape index: {1}]
  %11 = xla_tuple %s9, %s10
  %s12 = sld [smem:[#allocation0]]
  $region85: #{_lambda_.6} parent=0
    _
  %s14 = ssub.s32 1, %s12
  %s15 = scalar_select 0, %s14, %s12
  loop: start=0, step=1, limit=4
  $region2: #{_lambda_.6} parent=0 // loop_pre_header
    _
  $region3: #{_lambda_.6} parent=0 // loop_header
    %s17 = sphi 0, %s21
    %p18 = scmp.ge.s32.totalorder %s17, 4
    %s25 = sphi 0, %s25
    %s27 = sphi 0, %s25
    %s28 = sphi 0, %s27
    %s42 = sphi 0, %s28
    %s46 = sphi 0, %s46
    %s48 = sphi 0, %s46
    %s49 = sphi 0, %s48
    %s63 = sphi 0, %s49
    %s67 = sphi 0, %s67
    %s69 = sphi 0, %s67
    %s70 = sphi 0, %s69
    %s84 = sphi 0, %s70
    %s90 = sphi 0, %s92
    %s93 = sphi 0, %s90
    %s94 = sphi 0, %s93
    %s110 = sphi 0, %s94
    %s116 = sphi 0, %s118
    %s119 = sphi 0, %s116
    %s120 = sphi 0, %s119
    %s136 = sphi 0, %s120
    %s142 = sphi 0, %s144
    %s145 = sphi 0, %s142
    %s146 = sphi 0, %s145
    %s162 = sphi 0, %s146
    %s166 = sphi 0, %s166
    %s168 = sphi 0, %s166
    %s169 = sphi 0, %s168
    %s183 = sphi 0, %s169
    %s187 = sphi 0, %s187
    %s189 = sphi 0, %s187
    %s190 = sphi 0, %s189
    %s204 = sphi 0, %s190
    %s208 = sphi 0, %s208
    %s210 = sphi 0, %s208
    %s211 = sphi 0, %s210
    %s225 = sphi 0, %s211
    %s231 = sphi 0, %s233
    %s234 = sphi 0, %s231
    %s235 = sphi 0, %s234
    %s251 = sphi 0, %s235
    %s255 = sphi 0, %s255
    %s257 = sphi 0, %s255
    %s258 = sphi 0, %s257
    %s272 = sphi 0, %s258
  $region4: #{_lambda_.6} parent=0 // loop_header_branch
    %20 = sbr.rel (%p18) target = $region8
  $region5: #{_lambda_.6} parent=0 // loop_body
    %s22 = ssub.s32 %s17, 1
    %s23 = ssub.s32 %s17, 2
    %s24 = sadd.s32 %s17, 1
    %s26 = sadd.s32 %s25, 1
    %p29 = scmp.eq.s32.totalorder %s17, 1
    %p30 = scmp.ne.s32.totalorder %s25, %s27
    %p31 = scmp.eq.s32.totalorder %s17, 0
    %p32 = por %p30, %p31
    %p33 = scmp.ne.s32.totalorder %s25, %s27
    %p34 = scmp.eq.s32.totalorder %s22, 1
    %p35 = por %p33, %p34
    %p36 = scmp.ne.s32.totalorder %s27, %s28
    %p37 = scmp.eq.s32.totalorder %s22, 0
    %p38 = por %p36, %p37
    %p39 = scmp.ne.s32.totalorder %s27, %s28
    %p40 = scmp.eq.s32.totalorder %s23, 1
    %p41 = por %p39, %p40
    %p43 = scmp.ne.s32.totalorder %s28, %s42
    %p44 = scmp.eq.s32.totalorder %s23, 0
    %p45 = por %p43, %p44
    %s47 = sadd.s32 %s46, 1
    %p50 = scmp.eq.s32.totalorder %s17, 1
    %p51 = scmp.ne.s32.totalorder %s46, %s48
    %p52 = scmp.eq.s32.totalorder %s17, 0
    %p53 = por %p51, %p52
    %p54 = scmp.ne.s32.totalorder %s46, %s48
    %p55 = scmp.eq.s32.totalorder %s22, 1
    %p56 = por %p54, %p55
    %p57 = scmp.ne.s32.totalorder %s48, %s49
    %p58 = scmp.eq.s32.totalorder %s22, 0
    %p59 = por %p57, %p58
    %p60 = scmp.ne.s32.totalorder %s48, %s49
    %p61 = scmp.eq.s32.totalorder %s23, 1
    %p62 = por %p60, %p61
    %p64 = scmp.ne.s32.totalorder %s49, %s63
    %p65 = scmp.eq.s32.totalorder %s23, 0
    %p66 = por %p64, %p65
    %s68 = sadd.s32 %s67, 1
    %p71 = scmp.eq.s32.totalorder %s17, 1
    %p72 = scmp.ne.s32.totalorder %s67, %s69
    %p73 = scmp.eq.s32.totalorder %s17, 0
    %p74 = por %p72, %p73
    %p75 = scmp.ne.s32.totalorder %s67, %s69
    %p76 = scmp.eq.s32.totalorder %s22, 1
    %p77 = por %p75, %p76
    %p78 = scmp.ne.s32.totalorder %s69, %s70
    %p79 = scmp.eq.s32.totalorder %s22, 0
    %p80 = por %p78, %p79
    %p81 = scmp.ne.s32.totalorder %s69, %s70
    %p82 = scmp.eq.s32.totalorder %s23, 1
    %p83 = por %p81, %p82
    %p85 = scmp.ne.s32.totalorder %s70, %s84
    %p86 = scmp.eq.s32.totalorder %s23, 0
    %p87 = por %p85, %p86
    %s88 = ssub.s32 %s17, %s24
    %p89 = scmp.eq.s32.totalorder %s88, 0
    %s91 = sadd.s32 %s90, 1
    %s92 = scalar_select %p89, %s90, %s91
    %p95 = pneg %p89
    %p96 = scmp.eq.s32.totalorder %s17, 1
    %p97 = por %p95, %p96
    %p98 = scmp.ne.s32.totalorder %s90, %s93
    %p99 = scmp.eq.s32.totalorder %s17, 0
    %p100 = por %p98, %p99
    %p101 = scmp.ne.s32.totalorder %s90, %s93
    %p102 = scmp.eq.s32.totalorder %s22, 1
    %p103 = por %p101, %p102
    %p104 = scmp.ne.s32.totalorder %s93, %s94
    %p105 = scmp.eq.s32.totalorder %s22, 0
    %p106 = por %p104, %p105
    %p107 = scmp.ne.s32.totalorder %s93, %s94
    %p108 = scmp.eq.s32.totalorder %s23, 1
    %p109 = por %p107, %p108
    %p111 = scmp.ne.s32.totalorder %s94, %s110
    %p112 = scmp.eq.s32.totalorder %s23, 0
    %p113 = por %p111, %p112
    %s114 = ssub.s32 %s17, %s24
    %p115 = scmp.eq.s32.totalorder %s114, 0
    %s117 = sadd.s32 %s116, 1
    %s118 = scalar_select %p115, %s116, %s117
    %p121 = pneg %p115
    %p122 = scmp.eq.s32.totalorder %s17, 1
    %p123 = por %p121, %p122
    %p124 = scmp.ne.s32.totalorder %s116, %s119
    %p125 = scmp.eq.s32.totalorder %s17, 0
    %p126 = por %p124, %p125
    %p127 = scmp.ne.s32.totalorder %s116, %s119
    %p128 = scmp.eq.s32.totalorder %s22, 1
    %p129 = por %p127, %p128
    %p130 = scmp.ne.s32.totalorder %s119, %s120
    %p131 = scmp.eq.s32.totalorder %s22, 0
    %p132 = por %p130, %p131
    %p133 = scmp.ne.s32.totalorder %s119, %s120
    %p134 = scmp.eq.s32.totalorder %s23, 1
    %p135 = por %p133, %p134
    %p137 = scmp.ne.s32.totalorder %s120, %s136
    %p138 = scmp.eq.s32.totalorder %s23, 0
    %p139 = por %p137, %p138
    %s140 = ssub.s32 %s17, %s24
    %p141 = scmp.eq.s32.totalorder %s140, 0
    %s143 = sadd.s32 %s142, 1
    %s144 = scalar_select %p141, %s142, %s143
    %p147 = pneg %p141
    %p148 = scmp.eq.s32.totalorder %s17, 1
    %p149 = por %p147, %p148
    %p150 = scmp.ne.s32.totalorder %s142, %s145
    %p151 = scmp.eq.s32.totalorder %s17, 0
    %p152 = por %p150, %p151
    %p153 = scmp.ne.s32.totalorder %s142, %s145
    %p154 = scmp.eq.s32.totalorder %s22, 1
    %p155 = por %p153, %p154
    %p156 = scmp.ne.s32.totalorder %s145, %s146
    %p157 = scmp.eq.s32.totalorder %s22, 0
    %p158 = por %p156, %p157
    %p159 = scmp.ne.s32.totalorder %s145, %s146
    %p160 = scmp.eq.s32.totalorder %s23, 1
    %p161 = por %p159, %p160
    %p163 = scmp.ne.s32.totalorder %s146, %s162
    %p164 = scmp.eq.s32.totalorder %s23, 0
    %p165 = por %p163, %p164
    %s167 = sadd.s32 %s166, 1
    %p170 = scmp.eq.s32.totalorder %s17, 1
    %p171 = scmp.ne.s32.totalorder %s166, %s168
    %p172 = scmp.eq.s32.totalorder %s17, 0
    %p173 = por %p171, %p172
    %p174 = scmp.ne.s32.totalorder %s166, %s168
    %p175 = scmp.eq.s32.totalorder %s22, 1
    %p176 = por %p174, %p175
    %p177 = scmp.ne.s32.totalorder %s168, %s169
    %p178 = scmp.eq.s32.totalorder %s22, 0
    %p179 = por %p177, %p178
    %p180 = scmp.ne.s32.totalorder %s168, %s169
    %p181 = scmp.eq.s32.totalorder %s23, 1
    %p182 = por %p180, %p181
    %p184 = scmp.ne.s32.totalorder %s169, %s183
    %p185 = scmp.eq.s32.totalorder %s23, 0
    %p186 = por %p184, %p185
    %s188 = sadd.s32 %s187, 1
    %p191 = scmp.eq.s32.totalorder %s17, 1
    %p192 = scmp.ne.s32.totalorder %s187, %s189
    %p193 = scmp.eq.s32.totalorder %s17, 0
    %p194 = por %p192, %p193
    %p195 = scmp.ne.s32.totalorder %s187, %s189
    %p196 = scmp.eq.s32.totalorder %s22, 1
    %p197 = por %p195, %p196
    %p198 = scmp.ne.s32.totalorder %s189, %s190
    %p199 = scmp.eq.s32.totalorder %s22, 0
    %p200 = por %p198, %p199
    %p201 = scmp.ne.s32.totalorder %s189, %s190
    %p202 = scmp.eq.s32.totalorder %s23, 1
    %p203 = por %p201, %p202
    %p205 = scmp.ne.s32.totalorder %s190, %s204
    %p206 = scmp.eq.s32.totalorder %s23, 0
    %p207 = por %p205, %p206
    %s209 = sadd.s32 %s208, 1
    %p212 = scmp.eq.s32.totalorder %s17, 1
    %p213 = scmp.ne.s32.totalorder %s208, %s210
    %p214 = scmp.eq.s32.totalorder %s17, 0
    %p215 = por %p213, %p214
    %p216 = scmp.ne.s32.totalorder %s208, %s210
    %p217 = scmp.eq.s32.totalorder %s22, 1
    %p218 = por %p216, %p217
    %p219 = scmp.ne.s32.totalorder %s210, %s211
    %p220 = scmp.eq.s32.totalorder %s22, 0
    %p221 = por %p219, %p220
    %p222 = scmp.ne.s32.totalorder %s210, %s211
    %p223 = scmp.eq.s32.totalorder %s23, 1
    %p224 = por %p222, %p223
    %p226 = scmp.ne.s32.totalorder %s211, %s225
    %p227 = scmp.eq.s32.totalorder %s23, 0
    %p228 = por %p226, %p227
    %s229 = ssub.s32 %s17, %s24
    %p230 = scmp.eq.s32.totalorder %s229, 0
    %s232 = sadd.s32 %s231, 1
    %s233 = scalar_select %p230, %s231, %s232
    %p236 = pneg %p230
    %p237 = scmp.eq.s32.totalorder %s17, 1
    %p238 = por %p236, %p237
    %p239 = scmp.ne.s32.totalorder %s231, %s234
    %p240 = scmp.eq.s32.totalorder %s17, 0
    %p241 = por %p239, %p240
    %p242 = scmp.ne.s32.totalorder %s231, %s234
    %p243 = scmp.eq.s32.totalorder %s22, 1
    %p244 = por %p242, %p243
    %p245 = scmp.ne.s32.totalorder %s234, %s235
    %p246 = scmp.eq.s32.totalorder %s22, 0
    %p247 = por %p245, %p246
    %p248 = scmp.ne.s32.totalorder %s234, %s235
    %p249 = scmp.eq.s32.totalorder %s23, 1
    %p250 = por %p248, %p249
    %p252 = scmp.ne.s32.totalorder %s235, %s251
    %p253 = scmp.eq.s32.totalorder %s23, 0
    %p254 = por %p252, %p253
    %s256 = sadd.s32 %s255, 1
    %p259 = scmp.eq.s32.totalorder %s17, 1
    %p260 = scmp.ne.s32.totalorder %s255, %s257
    %p261 = scmp.eq.s32.totalorder %s17, 0
    %p262 = por %p260, %p261
    %p263 = scmp.ne.s32.totalorder %s255, %s257
    %p264 = scmp.eq.s32.totalorder %s22, 1
    %p265 = por %p263, %p264
    %p266 = scmp.ne.s32.totalorder %s257, %s258
    %p267 = scmp.eq.s32.totalorder %s22, 0
    %p268 = por %p266, %p267
    %p269 = scmp.ne.s32.totalorder %s257, %s258
    %p270 = scmp.eq.s32.totalorder %s23, 1
    %p271 = por %p269, %p270
    %p273 = scmp.ne.s32.totalorder %s258, %s272
    %p274 = scmp.eq.s32.totalorder %s23, 0
    %p275 = por %p273, %p274
    %p276 = scmp.le.s32.totalorder 1, %s17
    %p277 = scmp.lt.s32.totalorder %s17, 3
    %p278 = pnand %p276, %p277
    %p279 = pneg %p278
    // Predicated region
    $region9: #{_lambda_.6} parent=5 // pred_check
      _
    $region10: #{_lambda_.6} parent=5 // pred_check_branch
      %281 = sbr.rel (%p278) target = $region12
    $region11: #{_lambda_.6} parent=5 // pred_region
      %s282 = ssub.s32 %s17, 1
      // Predicated region
      $region13: #{_lambda_.6} parent=11 // pred_check
        %p283 = pneg %p38
      $region14: #{_lambda_.6} parent=11 // pred_check_branch
        %285 = sbr.rel (%p283) target = $region16
      $region15: #{_lambda_.6} parent=11 // pred_region
        _
      $region16: #{_lambda_.6} parent=11 // pred_fallthru
        _
      // Predicated region
      $region17: #{_lambda_.6} parent=11 // pred_check
        %p286 = pneg %p59
      $region18: #{_lambda_.6} parent=11 // pred_check_branch
        %288 = sbr.rel (%p286) target = $region20
      $region19: #{_lambda_.6} parent=11 // pred_region
        _
      $region20: #{_lambda_.6} parent=11 // pred_fallthru
        _
      // Predicated region
      $region21: #{_lambda_.6} parent=11 // pred_check
        %p289 = pneg %p80
      $region22: #{_lambda_.6} parent=11 // pred_check_branch
        %291 = sbr.rel (%p289) target = $region24
      $region23: #{_lambda_.6} parent=11 // pred_region
        _
      $region24: #{_lambda_.6} parent=11 // pred_fallthru
        _
      // Predicated region
      $region25: #{_lambda_.6} parent=11 // pred_check
        %p292 = pneg %p179
      $region26: #{_lambda_.6} parent=11 // pred_check_branch
        %294 = sbr.rel (%p292) target = $region28
      $region27: #{_lambda_.6} parent=11 // pred_region
        _
      $region28: #{_lambda_.6} parent=11 // pred_fallthru
        _
      // Predicated region
      $region29: #{_lambda_.6} parent=11 // pred_check
        %p295 = pneg %p200
      $region30: #{_lambda_.6} parent=11 // pred_check_branch
        %297 = sbr.rel (%p295) target = $region32
      $region31: #{_lambda_.6} parent=11 // pred_region
        _
      $region32: #{_lambda_.6} parent=11 // pred_fallthru
        _
      // Predicated region
      $region33: #{_lambda_.6} parent=11 // pred_check
        %p298 = pneg %p221
      $region34: #{_lambda_.6} parent=11 // pred_check_branch
        %300 = sbr.rel (%p298) target = $region36
      $region35: #{_lambda_.6} parent=11 // pred_region
        _
      $region36: #{_lambda_.6} parent=11 // pred_fallthru
        _
    $region12: #{_lambda_.6} parent=5 // pred_fallthru
      _
    %p301 = scmp.lt.s32.totalorder %s17, 2
    // Predicated region
    $region37: #{_lambda_.6} parent=5 // pred_check
      %p302 = pneg %p301
    $region38: #{_lambda_.6} parent=5 // pred_check_branch
      %304 = sbr.rel (%p302) target = $region40
    $region39: #{_lambda_.6} parent=5 // pred_region
      // Predicated region
      $region41: #{_lambda_.6} parent=39 // pred_check
        %p305 = pneg %p100
      $region42: #{_lambda_.6} parent=39 // pred_check_branch
        %307 = sbr.rel (%p305) target = $region44
      $region43: #{_lambda_.6} parent=39 // pred_region
        %s308 = smul.u32 16, %s17
        %p309 = scmp.lt.s32.totalorder %s308, 31
        %s310 = scalar_select %p309, %s308, 31
        %s311 = smul.addr %s310, 4
        %s312 = scalar_lea.vmem %s3, %s311
        %s313 = smul.u32 16, %s17
      $region44: #{_lambda_.6} parent=39 // pred_fallthru
        _
      // Predicated region
      $region45: #{_lambda_.6} parent=39 // pred_check
        %p314 = pneg %p126
      $region46: #{_lambda_.6} parent=39 // pred_check_branch
        %316 = sbr.rel (%p314) target = $region48
      $region47: #{_lambda_.6} parent=39 // pred_region
        %s317 = smul.u32 16, %s17
        %p318 = scmp.lt.s32.totalorder %s317, 31
        %s319 = scalar_select %p318, %s317, 31
        %s320 = smul.addr %s319, 4
        %s321 = scalar_lea.vmem %s4, %s320
        %s322 = smul.u32 16, %s17
      $region48: #{_lambda_.6} parent=39 // pred_fallthru
        _
      // Predicated region
      $region49: #{_lambda_.6} parent=39 // pred_check
        %p323 = pneg %p152
      $region50: #{_lambda_.6} parent=39 // pred_check_branch
        %325 = sbr.rel (%p323) target = $region52
      $region51: #{_lambda_.6} parent=39 // pred_region
        %s326 = smul.u32 16, %s17
        %p327 = scmp.lt.s32.totalorder %s326, 31
        %s328 = scalar_select %p327, %s326, 31
        %s329 = smul.addr %s328, 8
        %s330 = scalar_lea.vmem %s5, %s329
        %s331 = smul.u32 16, %s17
      $region52: #{_lambda_.6} parent=39 // pred_fallthru
        _
    $region40: #{_lambda_.6} parent=5 // pred_fallthru
      _
    %p332 = scmp.le.s32.totalorder 1, %s17
    %p333 = scmp.lt.s32.totalorder %s17, 3
    %p334 = pnand %p332, %p333
    %p335 = pneg %p334
    // Predicated region
    $region53: #{_lambda_.6} parent=5 // pred_check
      _
    $region54: #{_lambda_.6} parent=5 // pred_check_branch
      %337 = sbr.rel (%p334) target = $region56
    $region55: #{_lambda_.6} parent=5 // pred_region
      %s338 = ssub.s32 %s17, 1
      %p339 = pneg %p38
      %p340 = pneg %p35
      %p341 = pneg %p59
      %p342 = pneg %p56
      %p343 = pneg %p80
      %p344 = pneg %p77
      %s345 = smul.u32 16, %s22
      %p346 = scmp.lt.s32.totalorder %s345, 31
      %s347 = scalar_select %p346, %s345, 31
      %s348 = smul.addr %s347, 4
      %s349 = scalar_lea.vmem %s3, %s348
      %p350 = pneg %p106
      %p351 = pneg %p103
      %s352 = smul.u32 16, %s22
      %p353 = scmp.lt.s32.totalorder %s352, 31
      %s354 = scalar_select %p353, %s352, 31
      %s355 = smul.addr %s354, 4
      %s356 = scalar_lea.vmem %s4, %s355
      %p357 = pneg %p132
      %p358 = pneg %p129
      %s359 = smul.u32 16, %s22
      %p360 = scmp.lt.s32.totalorder %s359, 31
      %s361 = scalar_select %p360, %s359, 31
      %s362 = smul.addr %s361, 8
      %s363 = scalar_lea.vmem %s5, %s362
      %p364 = pneg %p158
      %p365 = pneg %p155
      %p366 = pneg %p179
      %p367 = pneg %p176
      %p368 = pneg %p200
      %p369 = pneg %p197
      %p370 = pneg %p221
      %p371 = pneg %p218
      %p372 = pneg %p247
      %p373 = pneg %p244
      %s374 = smul.u32 16, %s22
      %p375 = scmp.lt.s32.totalorder %s374, 31
      %s376 = scalar_select %p375, %s374, 31
      %s377 = smul.addr %s376, 8
      %s378 = scalar_lea.vmem %s9, %s377
      %p379 = pneg %p268
      %p380 = pneg %p265
      %s381 = smul.u32 16, %s22
      %p382 = scmp.lt.s32.totalorder %s381, 31
      %s383 = scalar_select %p382, %s381, 31
      %s384 = smul.addr %s383, 4
      %s385 = scalar_lea.vmem %s3, %s384
      %s386 = smul.u32 16, %s22
      %s387 = smul.u32 16, %s22
      %p388 = scmp.lt.s32.totalorder %s387, 31
      %s389 = scalar_select %p388, %s387, 31
      %s390 = smul.addr %s389, 4
      %s391 = scalar_lea.vmem %s4, %s390
      %s392 = smul.u32 16, %s22
      %s393 = smul.u32 16, %s22
      %p394 = scmp.lt.s32.totalorder %s393, 31
      %s395 = scalar_select %p394, %s393, 31
      %s396 = smul.addr %s395, 8
      %s397 = scalar_lea.vmem %s5, %s396
      %s398 = smul.u32 16, %s22
      %s399 = smul.u32 16, %s22
      %p400 = scmp.lt.s32.totalorder %s399, 31
      %s401 = scalar_select %p400, %s399, 31
      %s402 = smul.addr %s401, 8
      %s403 = scalar_lea.vmem %s9, %s402
      %s404 = smul.u32 16, %s22
      %p405 = scmp.eq.s32.totalorder %s22, 0
      // Predicated region
      $region57: #{_lambda_.6} parent=55 // pred_check
        %p406 = pneg %p405
      $region58: #{_lambda_.6} parent=55 // pred_check_branch
        %408 = sbr.rel (%p406) target = $region60
      $region59: #{_lambda_.6} parent=55 // pred_region
        %v409 = vld [vmem:[%s0] sm:$0xff]
        %v410 = vld [vmem:[%s0 + $0x8] sm:$0xff]
        %v411 = vld [vmem:[%s0 + $0x10] sm:$0xff]
        %v412 = vld [vmem:[%s0 + $0x18] sm:$0xff]
        %v413 = vld [vmem:[%s0 + $0x20] sm:$0xff]
        %v414 = vld [vmem:[%s0 + $0x28] sm:$0xff]
        %v415 = vld [vmem:[%s0 + $0x30] sm:$0xff]
        %v416 = vld [vmem:[%s0 + $0x38] sm:$0xff]
        %v417 = vld [vmem:[%s0 + $0x40] sm:$0xff]
        %v418 = vld [vmem:[%s0 + $0x48] sm:$0xff]
        %v419 = vld [vmem:[%s0 + $0x50] sm:$0xff]
        %v420 = vld [vmem:[%s0 + $0x58] sm:$0xff]
        %v421 = vld [vmem:[%s0 + $0x60] sm:$0xff]
        %v422 = vld [vmem:[%s0 + $0x68] sm:$0xff]
        %v423 = vld [vmem:[%s0 + $0x70] sm:$0xff]
        %v424 = vld [vmem:[%s0 + $0x78] sm:$0xff]
        %v425 = vld [vmem:[%s1] sm:$0xff]
        %v426 = vld [vmem:[%s1 + $0x8] sm:$0xff]
        %v427 = vld [vmem:[%s1 + $0x10] sm:$0xff]
        %v428 = vld [vmem:[%s1 + $0x18] sm:$0xff]
        %v429 = vld [vmem:[%s1 + $0x20] sm:$0xff]
        %v430 = vld [vmem:[%s1 + $0x28] sm:$0xff]
        %v431 = vld [vmem:[%s1 + $0x30] sm:$0xff]
        %v432 = vld [vmem:[%s1 + $0x38] sm:$0xff]
        %v433 = vld [vmem:[%s1 + $0x40] sm:$0xff]
        %v434 = vld [vmem:[%s1 + $0x48] sm:$0xff]
        %v435 = vld [vmem:[%s1 + $0x50] sm:$0xff]
        %v436 = vld [vmem:[%s1 + $0x58] sm:$0xff]
        %v437 = vld [vmem:[%s1 + $0x60] sm:$0xff]
        %v438 = vld [vmem:[%s1 + $0x68] sm:$0xff]
        %v439 = vld [vmem:[%s1 + $0x70] sm:$0xff]
        %v440 = vld [vmem:[%s1 + $0x78] sm:$0xff]
        %v441 = vld [vmem:[%s1 + $0x80] sm:$0xff]
        %v442 = vld [vmem:[%s1 + $0x88] sm:$0xff]
        %v443 = vld [vmem:[%s1 + $0x90] sm:$0xff]
        %v444 = vld [vmem:[%s1 + $0x98] sm:$0xff]
        %v445 = vld [vmem:[%s1 + $0xa0] sm:$0xff]
        %v446 = vld [vmem:[%s1 + $0xa8] sm:$0xff]
        %v447 = vld [vmem:[%s1 + $0xb0] sm:$0xff]
        %v448 = vld [vmem:[%s1 + $0xb8] sm:$0xff]
        %v449 = vld [vmem:[%s1 + $0xc0] sm:$0xff]
        %v450 = vld [vmem:[%s1 + $0xc8] sm:$0xff]
        %v451 = vld [vmem:[%s1 + $0xd0] sm:$0xff]
        %v452 = vld [vmem:[%s1 + $0xd8] sm:$0xff]
        %v453 = vld [vmem:[%s1 + $0xe0] sm:$0xff]
        %v454 = vld [vmem:[%s1 + $0xe8] sm:$0xff]
        %v455 = vld [vmem:[%s1 + $0xf0] sm:$0xff]
        %v456 = vld [vmem:[%s1 + $0xf8] sm:$0xff]
        %v457 = vld [vmem:[%s1 + $0x100] sm:$0xff]
        %v458 = vld [vmem:[%s1 + $0x108] sm:$0xff]
        %v459 = vld [vmem:[%s1 + $0x110] sm:$0xff]
        %v460 = vld [vmem:[%s1 + $0x118] sm:$0xff]
        %v461 = vld [vmem:[%s1 + $0x120] sm:$0xff]
        %v462 = vld [vmem:[%s1 + $0x128] sm:$0xff]
        %v463 = vld [vmem:[%s1 + $0x130] sm:$0xff]
        %v464 = vld [vmem:[%s1 + $0x138] sm:$0xff]
        %v465 = vld [vmem:[%s1 + $0x140] sm:$0xff]
        %v466 = vld [vmem:[%s1 + $0x148] sm:$0xff]
        %v467 = vld [vmem:[%s1 + $0x150] sm:$0xff]
        %v468 = vld [vmem:[%s1 + $0x158] sm:$0xff]
        %v469 = vld [vmem:[%s1 + $0x160] sm:$0xff]
        %v470 = vld [vmem:[%s1 + $0x168] sm:$0xff]
        %v471 = vld [vmem:[%s1 + $0x170] sm:$0xff]
        %v472 = vld [vmem:[%s1 + $0x178] sm:$0xff]
        %v473 = vld [vmem:[%s1 + $0x180] sm:$0xff]
        %v474 = vld [vmem:[%s1 + $0x188] sm:$0xff]
        %v475 = vld [vmem:[%s1 + $0x190] sm:$0xff]
        %v476 = vld [vmem:[%s1 + $0x198] sm:$0xff]
        %v477 = vld [vmem:[%s1 + $0x1a0] sm:$0xff]
        %v478 = vld [vmem:[%s1 + $0x1a8] sm:$0xff]
        %v479 = vld [vmem:[%s1 + $0x1b0] sm:$0xff]
        %v480 = vld [vmem:[%s1 + $0x1b8] sm:$0xff]
        %v481 = vld [vmem:[%s1 + $0x1c0] sm:$0xff]
        %v482 = vld [vmem:[%s1 + $0x1c8] sm:$0xff]
        %v483 = vld [vmem:[%s1 + $0x1d0] sm:$0xff]
        %v484 = vld [vmem:[%s1 + $0x1d8] sm:$0xff]
        %v485 = vld [vmem:[%s1 + $0x1e0] sm:$0xff]
        %v486 = vld [vmem:[%s1 + $0x1e8] sm:$0xff]
        %v487 = vld [vmem:[%s1 + $0x1f0] sm:$0xff]
        %v488 = vld [vmem:[%s1 + $0x1f8] sm:$0xff]
        %v489 = vld [vmem:[%s2] sm:$0xf]
        %v491 = vperm.slane %v489, 0
        %v492 = vperm.slane %v489, 1
        %v493 = vperm.slane %v489, 2
        %v494 = vperm.slane %v489, 3
        %499 = vmatpush.msra.mxu0 %v485
        %500 = vmatpush.msra.mxu0 %v481
        %501 = vmatpush.msra.mxu0 %v477
        %502 = vmatpush.msra.mxu0 %v473
        %503 = vmatpush.msra.mxu0 %v469
        %504 = vmatpush.msra.mxu0 %v465
        %505 = vmatpush.msra.mxu0 %v461
        %506 = vmatpush.msra.mxu0 %v457
        %507 = vmatpush.msra.mxu0 %v453
        %508 = vmatpush.msra.mxu0 %v449
        %509 = vmatpush.msra.mxu0 %v445
        %510 = vmatpush.msra.mxu0 %v441
        %511 = vmatpush.msra.mxu0 %v437
        %512 = vmatpush.msra.mxu0 %v433
        %513 = vmatpush.msra.mxu0 %v429
        %514 = vmatpush.msra.mxu0 %v425
        %515 = vmatmul.f32.gmra.mxu0 %v409
        %v516 = vpop.f32.mrf.mxu0
        %v517 = vadd.f32 %v491, %v516
        %518 = vmatmul.f32.gmra.mxu0 %v410
        %v519 = vpop.f32.mrf.mxu0
        %v520 = vadd.f32 %v491, %v519
        %521 = vmatmul.f32.gmra.mxu0 %v411
        %v522 = vpop.f32.mrf.mxu0
        %v523 = vadd.f32 %v491, %v522
        %524 = vmatmul.f32.gmra.mxu0 %v412
        %v525 = vpop.f32.mrf.mxu0
        %v526 = vadd.f32 %v491, %v525
        %527 = vmatmul.f32.gmra.mxu0 %v413
        %v528 = vpop.f32.mrf.mxu0
        %v529 = vadd.f32 %v491, %v528
        %530 = vmatmul.f32.gmra.mxu0 %v414
        %v531 = vpop.f32.mrf.mxu0
        %v532 = vadd.f32 %v491, %v531
        %533 = vmatmul.f32.gmra.mxu0 %v415
        %v534 = vpop.f32.mrf.mxu0
        %v535 = vadd.f32 %v491, %v534
        %536 = vmatmul.f32.gmra.mxu0 %v416
        %v537 = vpop.f32.mrf.mxu0
        %v538 = vadd.f32 %v491, %v537
        %539 = vmatmul.f32.gmra.mxu0 %v417
        %v540 = vpop.f32.mrf.mxu0
        %v541 = vadd.f32 %v491, %v540
        %542 = vmatmul.f32.gmra.mxu0 %v418
        %v543 = vpop.f32.mrf.mxu0
        %v544 = vadd.f32 %v491, %v543
        %545 = vmatmul.f32.gmra.mxu0 %v419
        %v546 = vpop.f32.mrf.mxu0
        %v547 = vadd.f32 %v491, %v546
        %548 = vmatmul.f32.gmra.mxu0 %v420
        %v549 = vpop.f32.mrf.mxu0
        %v550 = vadd.f32 %v491, %v549
        %551 = vmatmul.f32.gmra.mxu0 %v421
        %v552 = vpop.f32.mrf.mxu0
        %v553 = vadd.f32 %v491, %v552
        %554 = vmatmul.f32.gmra.mxu0 %v422
        %v555 = vpop.f32.mrf.mxu0
        %v556 = vadd.f32 %v491, %v555
        %557 = vmatmul.f32.gmra.mxu0 %v423
        %v558 = vpop.f32.mrf.mxu0
        %v559 = vadd.f32 %v491, %v558
        %560 = vmatmul.f32.gmra.mxu0 %v424
        %v561 = vpop.f32.mrf.mxu0
        %v562 = vadd.f32 %v491, %v561
        %563 = vdwg.mxu0
        %564 = vmatpush.msra.mxu0 %v486
        %565 = vmatpush.msra.mxu0 %v482
        %566 = vmatpush.msra.mxu0 %v478
        %567 = vmatpush.msra.mxu0 %v474
        %568 = vmatpush.msra.mxu0 %v470
        %569 = vmatpush.msra.mxu0 %v466
        %570 = vmatpush.msra.mxu0 %v462
        %571 = vmatpush.msra.mxu0 %v458
        %572 = vmatpush.msra.mxu0 %v454
        %573 = vmatpush.msra.mxu0 %v450
        %574 = vmatpush.msra.mxu0 %v446
        %575 = vmatpush.msra.mxu0 %v442
        %576 = vmatpush.msra.mxu0 %v438
        %577 = vmatpush.msra.mxu0 %v434
        %578 = vmatpush.msra.mxu0 %v430
        %579 = vmatpush.msra.mxu0 %v426
        %580 = vmatmul.f32.gmra.mxu0 %v409
        %v581 = vpop.f32.mrf.mxu0
        %v582 = vadd.f32 %v492, %v581
        %583 = vmatmul.f32.gmra.mxu0 %v410
        %v584 = vpop.f32.mrf.mxu0
        %v585 = vadd.f32 %v492, %v584
        %586 = vmatmul.f32.gmra.mxu0 %v411
        %v587 = vpop.f32.mrf.mxu0
        %v588 = vadd.f32 %v492, %v587
        %589 = vmatmul.f32.gmra.mxu0 %v412
        %v590 = vpop.f32.mrf.mxu0
        %v591 = vadd.f32 %v492, %v590
        %592 = vmatmul.f32.gmra.mxu0 %v413
        %v593 = vpop.f32.mrf.mxu0
        %v594 = vadd.f32 %v492, %v593
        %595 = vmatmul.f32.gmra.mxu0 %v414
        %v596 = vpop.f32.mrf.mxu0
        %v597 = vadd.f32 %v492, %v596
        %598 = vmatmul.f32.gmra.mxu0 %v415
        %v599 = vpop.f32.mrf.mxu0
        %v600 = vadd.f32 %v492, %v599
        %601 = vmatmul.f32.gmra.mxu0 %v416
        %v602 = vpop.f32.mrf.mxu0
        %v603 = vadd.f32 %v492, %v602
        %604 = vmatmul.f32.gmra.mxu0 %v417
        %v605 = vpop.f32.mrf.mxu0
        %v606 = vadd.f32 %v492, %v605
        %607 = vmatmul.f32.gmra.mxu0 %v418
        %v608 = vpop.f32.mrf.mxu0
        %v609 = vadd.f32 %v492, %v608
        %610 = vmatmul.f32.gmra.mxu0 %v419
        %v611 = vpop.f32.mrf.mxu0
        %v612 = vadd.f32 %v492, %v611
        %613 = vmatmul.f32.gmra.mxu0 %v420
        %v614 = vpop.f32.mrf.mxu0
        %v615 = vadd.f32 %v492, %v614
        %616 = vmatmul.f32.gmra.mxu0 %v421
        %v617 = vpop.f32.mrf.mxu0
        %v618 = vadd.f32 %v492, %v617
        %619 = vmatmul.f32.gmra.mxu0 %v422
        %v620 = vpop.f32.mrf.mxu0
        %v621 = vadd.f32 %v492, %v620
        %622 = vmatmul.f32.gmra.mxu0 %v423
        %v623 = vpop.f32.mrf.mxu0
        %v624 = vadd.f32 %v492, %v623
        %625 = vmatmul.f32.gmra.mxu0 %v424
        %v626 = vpop.f32.mrf.mxu0
        %v627 = vadd.f32 %v492, %v626
        %628 = vdwg.mxu0
        %629 = vmatpush.msra.mxu0 %v487
        %630 = vmatpush.msra.mxu0 %v483
        %631 = vmatpush.msra.mxu0 %v479
        %632 = vmatpush.msra.mxu0 %v475
        %633 = vmatpush.msra.mxu0 %v471
        %634 = vmatpush.msra.mxu0 %v467
        %635 = vmatpush.msra.mxu0 %v463
        %636 = vmatpush.msra.mxu0 %v459
        %637 = vmatpush.msra.mxu0 %v455
        %638 = vmatpush.msra.mxu0 %v451
        %639 = vmatpush.msra.mxu0 %v447
        %640 = vmatpush.msra.mxu0 %v443
        %641 = vmatpush.msra.mxu0 %v439
        %642 = vmatpush.msra.mxu0 %v435
        %643 = vmatpush.msra.mxu0 %v431
        %644 = vmatpush.msra.mxu0 %v427
        %645 = vmatmul.f32.gmra.mxu0 %v409
        %v646 = vpop.f32.mrf.mxu0
        %v647 = vadd.f32 %v493, %v646
        %648 = vmatmul.f32.gmra.mxu0 %v410
        %v649 = vpop.f32.mrf.mxu0
        %v650 = vadd.f32 %v493, %v649
        %651 = vmatmul.f32.gmra.mxu0 %v411
        %v652 = vpop.f32.mrf.mxu0
        %v653 = vadd.f32 %v493, %v652
        %654 = vmatmul.f32.gmra.mxu0 %v412
        %v655 = vpop.f32.mrf.mxu0
        %v656 = vadd.f32 %v493, %v655
        %657 = vmatmul.f32.gmra.mxu0 %v413
        %v658 = vpop.f32.mrf.mxu0
        %v659 = vadd.f32 %v493, %v658
        %660 = vmatmul.f32.gmra.mxu0 %v414
        %v661 = vpop.f32.mrf.mxu0
        %v662 = vadd.f32 %v493, %v661
        %663 = vmatmul.f32.gmra.mxu0 %v415
        %v664 = vpop.f32.mrf.mxu0
        %v665 = vadd.f32 %v493, %v664
        %666 = vmatmul.f32.gmra.mxu0 %v416
        %v667 = vpop.f32.mrf.mxu0
        %v668 = vadd.f32 %v493, %v667
        %669 = vmatmul.f32.gmra.mxu0 %v417
        %v670 = vpop.f32.mrf.mxu0
        %v671 = vadd.f32 %v493, %v670
        %672 = vmatmul.f32.gmra.mxu0 %v418
        %v673 = vpop.f32.mrf.mxu0
        %v674 = vadd.f32 %v493, %v673
        %675 = vmatmul.f32.gmra.mxu0 %v419
        %v676 = vpop.f32.mrf.mxu0
        %v677 = vadd.f32 %v493, %v676
        %678 = vmatmul.f32.gmra.mxu0 %v420
        %v679 = vpop.f32.mrf.mxu0
        %v680 = vadd.f32 %v493, %v679
        %681 = vmatmul.f32.gmra.mxu0 %v421
        %v682 = vpop.f32.mrf.mxu0
        %v683 = vadd.f32 %v493, %v682
        %684 = vmatmul.f32.gmra.mxu0 %v422
        %v685 = vpop.f32.mrf.mxu0
        %v686 = vadd.f32 %v493, %v685
        %687 = vmatmul.f32.gmra.mxu0 %v423
        %v688 = vpop.f32.mrf.mxu0
        %v689 = vadd.f32 %v493, %v688
        %690 = vmatmul.f32.gmra.mxu0 %v424
        %v691 = vpop.f32.mrf.mxu0
        %v692 = vadd.f32 %v493, %v691
        %693 = vdwg.mxu0
        %694 = vmatpush.msra.mxu0 %v488
        %695 = vmatpush.msra.mxu0 %v484
        %696 = vmatpush.msra.mxu0 %v480
        %697 = vmatpush.msra.mxu0 %v476
        %698 = vmatpush.msra.mxu0 %v472
        %699 = vmatpush.msra.mxu0 %v468
        %700 = vmatpush.msra.mxu0 %v464
        %701 = vmatpush.msra.mxu0 %v460
        %702 = vmatpush.msra.mxu0 %v456
        %703 = vmatpush.msra.mxu0 %v452
        %704 = vmatpush.msra.mxu0 %v448
        %705 = vmatpush.msra.mxu0 %v444
        %706 = vmatpush.msra.mxu0 %v440
        %707 = vmatpush.msra.mxu0 %v436
        %708 = vmatpush.msra.mxu0 %v432
        %709 = vmatpush.msra.mxu0 %v428
        %710 = vmatmul.f32.gmra.mxu0 %v409
        %v711 = vpop.f32.mrf.mxu0
        %v712 = vadd.f32 %v494, %v711
        %713 = vmatmul.f32.gmra.mxu0 %v410
        %v714 = vpop.f32.mrf.mxu0
        %v715 = vadd.f32 %v494, %v714
        %716 = vmatmul.f32.gmra.mxu0 %v411
        %v717 = vpop.f32.mrf.mxu0
        %v718 = vadd.f32 %v494, %v717
        %719 = vmatmul.f32.gmra.mxu0 %v412
        %v720 = vpop.f32.mrf.mxu0
        %v721 = vadd.f32 %v494, %v720
        %722 = vmatmul.f32.gmra.mxu0 %v413
        %v723 = vpop.f32.mrf.mxu0
        %v724 = vadd.f32 %v494, %v723
        %725 = vmatmul.f32.gmra.mxu0 %v414
        %v726 = vpop.f32.mrf.mxu0
        %v727 = vadd.f32 %v494, %v726
        %728 = vmatmul.f32.gmra.mxu0 %v415
        %v729 = vpop.f32.mrf.mxu0
        %v730 = vadd.f32 %v494, %v729
        %731 = vmatmul.f32.gmra.mxu0 %v416
        %v732 = vpop.f32.mrf.mxu0
        %v733 = vadd.f32 %v494, %v732
        %734 = vmatmul.f32.gmra.mxu0 %v417
        %v735 = vpop.f32.mrf.mxu0
        %v736 = vadd.f32 %v494, %v735
        %737 = vmatmul.f32.gmra.mxu0 %v418
        %v738 = vpop.f32.mrf.mxu0
        %v739 = vadd.f32 %v494, %v738
        %740 = vmatmul.f32.gmra.mxu0 %v419
        %v741 = vpop.f32.mrf.mxu0
        %v742 = vadd.f32 %v494, %v741
        %743 = vmatmul.f32.gmra.mxu0 %v420
        %v744 = vpop.f32.mrf.mxu0
        %v745 = vadd.f32 %v494, %v744
        %746 = vmatmul.f32.gmra.mxu0 %v421
        %v747 = vpop.f32.mrf.mxu0
        %v748 = vadd.f32 %v494, %v747
        %749 = vmatmul.f32.gmra.mxu0 %v422
        %v750 = vpop.f32.mrf.mxu0
        %v751 = vadd.f32 %v494, %v750
        %752 = vmatmul.f32.gmra.mxu0 %v423
        %v753 = vpop.f32.mrf.mxu0
        %v754 = vadd.f32 %v494, %v753
        %755 = vmatmul.f32.gmra.mxu0 %v424
        %v756 = vpop.f32.mrf.mxu0
        %v757 = vadd.f32 %v494, %v756
        %758 = vdwg.mxu0
        %759 = vst [vmem:[#allocation2] sm:$0xff] %v517
        %760 = vst [vmem:[#allocation2 + $0x8] sm:$0xff] %v582
        %761 = vst [vmem:[#allocation2 + $0x10] sm:$0xff] %v647
        %762 = vst [vmem:[#allocation2 + $0x18] sm:$0xff] %v712
        %763 = vst [vmem:[#allocation2 + $0x20] sm:$0xff] %v520
        %764 = vst [vmem:[#allocation2 + $0x28] sm:$0xff] %v585
        %765 = vst [vmem:[#allocation2 + $0x30] sm:$0xff] %v650
        %766 = vst [vmem:[#allocation2 + $0x38] sm:$0xff] %v715
        %767 = vst [vmem:[#allocation2 + $0x40] sm:$0xff] %v523
        %768 = vst [vmem:[#allocation2 + $0x48] sm:$0xff] %v588
        %769 = vst [vmem:[#allocation2 + $0x50] sm:$0xff] %v653
        %770 = vst [vmem:[#allocation2 + $0x58] sm:$0xff] %v718
        %771 = vst [vmem:[#allocation2 + $0x60] sm:$0xff] %v526
        %772 = vst [vmem:[#allocation2 + $0x68] sm:$0xff] %v591
        %773 = vst [vmem:[#allocation2 + $0x70] sm:$0xff] %v656
        %774 = vst [vmem:[#allocation2 + $0x78] sm:$0xff] %v721
        %775 = vst [vmem:[#allocation2 + $0x80] sm:$0xff] %v529
        %776 = vst [vmem:[#allocation2 + $0x88] sm:$0xff] %v594
        %777 = vst [vmem:[#allocation2 + $0x90] sm:$0xff] %v659
        %778 = vst [vmem:[#allocation2 + $0x98] sm:$0xff] %v724
        %779 = vst [vmem:[#allocation2 + $0xa0] sm:$0xff] %v532
        %780 = vst [vmem:[#allocation2 + $0xa8] sm:$0xff] %v597
        %781 = vst [vmem:[#allocation2 + $0xb0] sm:$0xff] %v662
        %782 = vst [vmem:[#allocation2 + $0xb8] sm:$0xff] %v727
        %783 = vst [vmem:[#allocation2 + $0xc0] sm:$0xff] %v535
        %784 = vst [vmem:[#allocation2 + $0xc8] sm:$0xff] %v600
        %785 = vst [vmem:[#allocation2 + $0xd0] sm:$0xff] %v665
        %786 = vst [vmem:[#allocation2 + $0xd8] sm:$0xff] %v730
        %787 = vst [vmem:[#allocation2 + $0xe0] sm:$0xff] %v538
        %788 = vst [vmem:[#allocation2 + $0xe8] sm:$0xff] %v603
        %789 = vst [vmem:[#allocation2 + $0xf0] sm:$0xff] %v668
        %790 = vst [vmem:[#allocation2 + $0xf8] sm:$0xff] %v733
        %791 = vst [vmem:[#allocation2 + $0x100] sm:$0xff] %v541
        %792 = vst [vmem:[#allocation2 + $0x108] sm:$0xff] %v606
        %793 = vst [vmem:[#allocation2 + $0x110] sm:$0xff] %v671
        %794 = vst [vmem:[#allocation2 + $0x118] sm:$0xff] %v736
        %795 = vst [vmem:[#allocation2 + $0x120] sm:$0xff] %v544
        %796 = vst [vmem:[#allocation2 + $0x128] sm:$0xff] %v609
        %797 = vst [vmem:[#allocation2 + $0x130] sm:$0xff] %v674
        %798 = vst [vmem:[#allocation2 + $0x138] sm:$0xff] %v739
        %799 = vst [vmem:[#allocation2 + $0x140] sm:$0xff] %v547
        %800 = vst [vmem:[#allocation2 + $0x148] sm:$0xff] %v612
        %801 = vst [vmem:[#allocation2 + $0x150] sm:$0xff] %v677
        %802 = vst [vmem:[#allocation2 + $0x158] sm:$0xff] %v742
        %803 = vst [vmem:[#allocation2 + $0x160] sm:$0xff] %v550
        %804 = vst [vmem:[#allocation2 + $0x168] sm:$0xff] %v615
        %805 = vst [vmem:[#allocation2 + $0x170] sm:$0xff] %v680
        %806 = vst [vmem:[#allocation2 + $0x178] sm:$0xff] %v745
        %807 = vst [vmem:[#allocation2 + $0x180] sm:$0xff] %v553
        %808 = vst [vmem:[#allocation2 + $0x188] sm:$0xff] %v618
        %809 = vst [vmem:[#allocation2 + $0x190] sm:$0xff] %v683
        %810 = vst [vmem:[#allocation2 + $0x198] sm:$0xff] %v748
        %811 = vst [vmem:[#allocation2 + $0x1a0] sm:$0xff] %v556
        %812 = vst [vmem:[#allocation2 + $0x1a8] sm:$0xff] %v621
        %813 = vst [vmem:[#allocation2 + $0x1b0] sm:$0xff] %v686
        %814 = vst [vmem:[#allocation2 + $0x1b8] sm:$0xff] %v751
        %815 = vst [vmem:[#allocation2 + $0x1c0] sm:$0xff] %v559
        %816 = vst [vmem:[#allocation2 + $0x1c8] sm:$0xff] %v624
        %817 = vst [vmem:[#allocation2 + $0x1d0] sm:$0xff] %v689
        %818 = vst [vmem:[#allocation2 + $0x1d8] sm:$0xff] %v754
        %819 = vst [vmem:[#allocation2 + $0x1e0] sm:$0xff] %v562
        %820 = vst [vmem:[#allocation2 + $0x1e8] sm:$0xff] %v627
        %821 = vst [vmem:[#allocation2 + $0x1f0] sm:$0xff] %v692
        %822 = vst [vmem:[#allocation2 + $0x1f8] sm:$0xff] %v757
        %823 = vst [vmem:[#allocation3] sm:$0xff] 0.0
        %824 = vst [vmem:[#allocation3 + $0x8] sm:$0xff] 0.0
        %825 = vst [vmem:[#allocation3 + $0x10] sm:$0xff] 0.0
        %826 = vst [vmem:[#allocation3 + $0x18] sm:$0xff] 0.0
        %827 = vst [vmem:[#allocation3 + $0x20] sm:$0xff] 0.0
        %828 = vst [vmem:[#allocation3 + $0x28] sm:$0xff] 0.0
        %829 = vst [vmem:[#allocation3 + $0x30] sm:$0xff] 0.0
        %830 = vst [vmem:[#allocation3 + $0x38] sm:$0xff] 0.0
        %831 = vst [vmem:[#allocation3 + $0x40] sm:$0xff] 0.0
        %832 = vst [vmem:[#allocation3 + $0x48] sm:$0xff] 0.0
        %833 = vst [vmem:[#allocation3 + $0x50] sm:$0xff] 0.0
        %834 = vst [vmem:[#allocation3 + $0x58] sm:$0xff] 0.0
        %835 = vst [vmem:[#allocation3 + $0x60] sm:$0xff] 0.0
        %836 = vst [vmem:[#allocation3 + $0x68] sm:$0xff] 0.0
        %837 = vst [vmem:[#allocation3 + $0x70] sm:$0xff] 0.0
        %838 = vst [vmem:[#allocation3 + $0x78] sm:$0xff] 0.0
        %839 = vst [vmem:[#allocation4] sm:$0xff] 0.0
        %840 = vst [vmem:[#allocation4 + $0x8] sm:$0xff] 0.0
        %841 = vst [vmem:[#allocation4 + $0x10] sm:$0xff] 0.0
        %842 = vst [vmem:[#allocation4 + $0x18] sm:$0xff] 0.0
        %843 = vst [vmem:[#allocation4 + $0x20] sm:$0xff] 0.0
        %844 = vst [vmem:[#allocation4 + $0x28] sm:$0xff] 0.0
        %845 = vst [vmem:[#allocation4 + $0x30] sm:$0xff] 0.0
        %846 = vst [vmem:[#allocation4 + $0x38] sm:$0xff] 0.0
        %847 = vst [vmem:[#allocation4 + $0x40] sm:$0xff] 0.0
        %848 = vst [vmem:[#allocation4 + $0x48] sm:$0xff] 0.0
        %849 = vst [vmem:[#allocation4 + $0x50] sm:$0xff] 0.0
        %850 = vst [vmem:[#allocation4 + $0x58] sm:$0xff] 0.0
        %851 = vst [vmem:[#allocation4 + $0x60] sm:$0xff] 0.0
        %852 = vst [vmem:[#allocation4 + $0x68] sm:$0xff] 0.0
        %853 = vst [vmem:[#allocation4 + $0x70] sm:$0xff] 0.0
        %854 = vst [vmem:[#allocation4 + $0x78] sm:$0xff] 0.0
      $region60: #{_lambda_.6} parent=55 // pred_fallthru
        _
      %v855 = vld [vmem:[%s397] sm:$0xff]
      %v856 = vld [vmem:[%s397 + $0x8] sm:$0xff]
      %v857 = vld [vmem:[%s397 + $0x10] sm:$0xff]
      %v858 = vld [vmem:[%s397 + $0x18] sm:$0xff]
      %v859 = vld [vmem:[%s397 + $0x20] sm:$0xff]
      %v860 = vld [vmem:[%s397 + $0x28] sm:$0xff]
      %v861 = vld [vmem:[%s397 + $0x30] sm:$0xff]
      %v862 = vld [vmem:[%s397 + $0x38] sm:$0xff]
      %v863 = vld [vmem:[%s397 + $0x40] sm:$0xff]
      %v864 = vld [vmem:[%s397 + $0x48] sm:$0xff]
      %v865 = vld [vmem:[%s397 + $0x50] sm:$0xff]
      %v866 = vld [vmem:[%s397 + $0x58] sm:$0xff]
      %v867 = vld [vmem:[%s397 + $0x60] sm:$0xff]
      %v868 = vld [vmem:[%s397 + $0x68] sm:$0xff]
      %v869 = vld [vmem:[%s397 + $0x70] sm:$0xff]
      %v870 = vld [vmem:[%s397 + $0x78] sm:$0xff]
      %v871 = vld [vmem:[%s6] sm:$0xff]
      %v872 = vld [vmem:[%s6 + $0x8] sm:$0xff]
      %v873 = vld [vmem:[%s6 + $0x10] sm:$0xff]
      %v874 = vld [vmem:[%s6 + $0x18] sm:$0xff]
      %v875 = vld [vmem:[%s6 + $0x20] sm:$0xff]
      %v876 = vld [vmem:[%s6 + $0x28] sm:$0xff]
      %v877 = vld [vmem:[%s6 + $0x30] sm:$0xff]
      %v878 = vld [vmem:[%s6 + $0x38] sm:$0xff]
      %v879 = vld [vmem:[%s6 + $0x40] sm:$0xff]
      %v880 = vld [vmem:[%s6 + $0x48] sm:$0xff]
      %v881 = vld [vmem:[%s6 + $0x50] sm:$0xff]
      %v882 = vld [vmem:[%s6 + $0x58] sm:$0xff]
      %v883 = vld [vmem:[%s6 + $0x60] sm:$0xff]
      %v884 = vld [vmem:[%s6 + $0x68] sm:$0xff]
      %v885 = vld [vmem:[%s6 + $0x70] sm:$0xff]
      %v886 = vld [vmem:[%s6 + $0x78] sm:$0xff]
      %v887 = vld [vmem:[%s7] sm:$0x1]
      %v889 = vperm.slane %v887, 0
      %891 = vmatpush.msra.mxu0 %v886
      %892 = vmatpush.msra.mxu0 %v885
      %893 = vmatpush.msra.mxu0 %v884
      %894 = vmatpush.msra.mxu0 %v883
      %895 = vmatpush.msra.mxu0 %v882
      %896 = vmatpush.msra.mxu0 %v881
      %897 = vmatpush.msra.mxu0 %v880
      %898 = vmatpush.msra.mxu0 %v879
      %899 = vmatpush.msra.mxu0 %v878
      %900 = vmatpush.msra.mxu0 %v877
      %901 = vmatpush.msra.mxu0 %v876
      %902 = vmatpush.msra.mxu0 %v875
      %903 = vmatpush.msra.mxu0 %v874
      %904 = vmatpush.msra.mxu0 %v873
      %905 = vmatpush.msra.mxu0 %v872
      %906 = vmatpush.msra.mxu0 %v871
      %907 = vmatmul.f32.gmra.mxu0 %v855
      %v908 = vpop.f32.mrf.mxu0
      %v909 = vadd.f32 %v889, %v908
      %910 = vmatmul.f32.gmra.mxu0 %v856
      %v911 = vpop.f32.mrf.mxu0
      %v912 = vadd.f32 %v889, %v911
      %913 = vmatmul.f32.gmra.mxu0 %v857
      %v914 = vpop.f32.mrf.mxu0
      %v915 = vadd.f32 %v889, %v914
      %916 = vmatmul.f32.gmra.mxu0 %v858
      %v917 = vpop.f32.mrf.mxu0
      %v918 = vadd.f32 %v889, %v917
      %919 = vmatmul.f32.gmra.mxu0 %v859
      %v920 = vpop.f32.mrf.mxu0
      %v921 = vadd.f32 %v889, %v920
      %922 = vmatmul.f32.gmra.mxu0 %v860
      %v923 = vpop.f32.mrf.mxu0
      %v924 = vadd.f32 %v889, %v923
      %925 = vmatmul.f32.gmra.mxu0 %v861
      %v926 = vpop.f32.mrf.mxu0
      %v927 = vadd.f32 %v889, %v926
      %928 = vmatmul.f32.gmra.mxu0 %v862
      %v929 = vpop.f32.mrf.mxu0
      %v930 = vadd.f32 %v889, %v929
      %931 = vmatmul.f32.gmra.mxu0 %v863
      %v932 = vpop.f32.mrf.mxu0
      %v933 = vadd.f32 %v889, %v932
      %934 = vmatmul.f32.gmra.mxu0 %v864
      %v935 = vpop.f32.mrf.mxu0
      %v936 = vadd.f32 %v889, %v935
      %937 = vmatmul.f32.gmra.mxu0 %v865
      %v938 = vpop.f32.mrf.mxu0
      %v939 = vadd.f32 %v889, %v938
      %940 = vmatmul.f32.gmra.mxu0 %v866
      %v941 = vpop.f32.mrf.mxu0
      %v942 = vadd.f32 %v889, %v941
      %943 = vmatmul.f32.gmra.mxu0 %v867
      %v944 = vpop.f32.mrf.mxu0
      %v945 = vadd.f32 %v889, %v944
      %946 = vmatmul.f32.gmra.mxu0 %v868
      %v947 = vpop.f32.mrf.mxu0
      %v948 = vadd.f32 %v889, %v947
      %949 = vmatmul.f32.gmra.mxu0 %v869
      %v950 = vpop.f32.mrf.mxu0
      %v951 = vadd.f32 %v889, %v950
      %952 = vmatmul.f32.gmra.mxu0 %v870
      %v953 = vpop.f32.mrf.mxu0
      %v954 = vadd.f32 %v889, %v953
      %955 = vdwg.mxu0
      %v956 = vld [vmem:[%s385] sm:$0xf]
      %v957 = vld [vmem:[%s385 + $0x4] sm:$0xf]
      %v958 = vld [vmem:[%s385 + $0x8] sm:$0xf]
      %v959 = vld [vmem:[%s385 + $0xc] sm:$0xf]
      %v960 = vld [vmem:[%s385 + $0x10] sm:$0xf]
      %v961 = vld [vmem:[%s385 + $0x14] sm:$0xf]
      %v962 = vld [vmem:[%s385 + $0x18] sm:$0xf]
      %v963 = vld [vmem:[%s385 + $0x1c] sm:$0xf]
      %v964 = vld [vmem:[%s385 + $0x20] sm:$0xf]
      %v965 = vld [vmem:[%s385 + $0x24] sm:$0xf]
      %v966 = vld [vmem:[%s385 + $0x28] sm:$0xf]
      %v967 = vld [vmem:[%s385 + $0x2c] sm:$0xf]
      %v968 = vld [vmem:[%s385 + $0x30] sm:$0xf]
      %v969 = vld [vmem:[%s385 + $0x34] sm:$0xf]
      %v970 = vld [vmem:[%s385 + $0x38] sm:$0xf]
      %v971 = vld [vmem:[%s385 + $0x3c] sm:$0xf]
      %v972 = vunpack.c.l.bf16 %v956
      %v973 = vunpack.c.l.bf16 %v957
      %v974 = vunpack.c.l.bf16 %v958
      %v975 = vunpack.c.l.bf16 %v959
      %v976 = vunpack.c.l.bf16 %v960
      %v977 = vunpack.c.l.bf16 %v961
      %v978 = vunpack.c.l.bf16 %v962
      %v979 = vunpack.c.l.bf16 %v963
      %v980 = vunpack.c.l.bf16 %v964
      %v981 = vunpack.c.l.bf16 %v965
      %v982 = vunpack.c.l.bf16 %v966
      %v983 = vunpack.c.l.bf16 %v967
      %v984 = vunpack.c.l.bf16 %v968
      %v985 = vunpack.c.l.bf16 %v969
      %v986 = vunpack.c.l.bf16 %v970
      %v987 = vunpack.c.l.bf16 %v971
      %v988 = vld [vmem:[%s391] sm:$0xf]
      %v989 = vld [vmem:[%s391 + $0x4] sm:$0xf]
      %v990 = vld [vmem:[%s391 + $0x8] sm:$0xf]
      %v991 = vld [vmem:[%s391 + $0xc] sm:$0xf]
      %v992 = vld [vmem:[%s391 + $0x10] sm:$0xf]
      %v993 = vld [vmem:[%s391 + $0x14] sm:$0xf]
      %v994 = vld [vmem:[%s391 + $0x18] sm:$0xf]
      %v995 = vld [vmem:[%s391 + $0x1c] sm:$0xf]
      %v996 = vld [vmem:[%s391 + $0x20] sm:$0xf]
      %v997 = vld [vmem:[%s391 + $0x24] sm:$0xf]
      %v998 = vld [vmem:[%s391 + $0x28] sm:$0xf]
      %v999 = vld [vmem:[%s391 + $0x2c] sm:$0xf]
      %v1000 = vld [vmem:[%s391 + $0x30] sm:$0xf]
      %v1001 = vld [vmem:[%s391 + $0x34] sm:$0xf]
      %v1002 = vld [vmem:[%s391 + $0x38] sm:$0xf]
      %v1003 = vld [vmem:[%s391 + $0x3c] sm:$0xf]
      %v1004 = vunpack.c.l.bf16 %v988
      %v1005 = vunpack.c.l.bf16 %v989
      %v1006 = vunpack.c.l.bf16 %v990
      %v1007 = vunpack.c.l.bf16 %v991
      %v1008 = vunpack.c.l.bf16 %v992
      %v1009 = vunpack.c.l.bf16 %v993
      %v1010 = vunpack.c.l.bf16 %v994
      %v1011 = vunpack.c.l.bf16 %v995
      %v1012 = vunpack.c.l.bf16 %v996
      %v1013 = vunpack.c.l.bf16 %v997
      %v1014 = vunpack.c.l.bf16 %v998
      %v1015 = vunpack.c.l.bf16 %v999
      %v1016 = vunpack.c.l.bf16 %v1000
      %v1017 = vunpack.c.l.bf16 %v1001
      %v1018 = vunpack.c.l.bf16 %v1002
      %v1019 = vunpack.c.l.bf16 %v1003
      %v1020 = vld [vmem:[#allocation2 + $0x8] sm:$0xff]
      %v1021 = vld [vmem:[#allocation2 + $0x28] sm:$0xff]
      %v1022 = vld [vmem:[#allocation2 + $0x48] sm:$0xff]
      %v1023 = vld [vmem:[#allocation2 + $0x68] sm:$0xff]
      %v1024 = vld [vmem:[#allocation2 + $0x88] sm:$0xff]
      %v1025 = vld [vmem:[#allocation2 + $0xa8] sm:$0xff]
      %v1026 = vld [vmem:[#allocation2 + $0xc8] sm:$0xff]
      %v1027 = vld [vmem:[#allocation2 + $0xe8] sm:$0xff]
      %v1028 = vld [vmem:[#allocation2 + $0x108] sm:$0xff]
      %v1029 = vld [vmem:[#allocation2 + $0x128] sm:$0xff]
      %v1030 = vld [vmem:[#allocation2 + $0x148] sm:$0xff]
      %v1031 = vld [vmem:[#allocation2 + $0x168] sm:$0xff]
      %v1032 = vld [vmem:[#allocation2 + $0x188] sm:$0xff]
      %v1033 = vld [vmem:[#allocation2 + $0x1a8] sm:$0xff]
      %v1034 = vld [vmem:[#allocation2 + $0x1c8] sm:$0xff]
      %v1035 = vld [vmem:[#allocation2 + $0x1e8] sm:$0xff]
      %v1036 = vld [vmem:[#allocation2 + $0x10] sm:$0xff]
      %v1037 = vld [vmem:[#allocation2 + $0x18] sm:$0xff]
      %v1038 = vld [vmem:[#allocation2 + $0x30] sm:$0xff]
      %v1039 = vld [vmem:[#allocation2 + $0x38] sm:$0xff]
      %v1040 = vld [vmem:[#allocation2 + $0x50] sm:$0xff]
      %v1041 = vld [vmem:[#allocation2 + $0x58] sm:$0xff]
      %v1042 = vld [vmem:[#allocation2 + $0x70] sm:$0xff]
      %v1043 = vld [vmem:[#allocation2 + $0x78] sm:$0xff]
      %v1044 = vld [vmem:[#allocation2 + $0x90] sm:$0xff]
      %v1045 = vld [vmem:[#allocation2 + $0x98] sm:$0xff]
      %v1046 = vld [vmem:[#allocation2 + $0xb0] sm:$0xff]
      %v1047 = vld [vmem:[#allocation2 + $0xb8] sm:$0xff]
      %v1048 = vld [vmem:[#allocation2 + $0xd0] sm:$0xff]
      %v1049 = vld [vmem:[#allocation2 + $0xd8] sm:$0xff]
      %v1050 = vld [vmem:[#allocation2 + $0xf0] sm:$0xff]
      %v1051 = vld [vmem:[#allocation2 + $0xf8] sm:$0xff]
      %v1052 = vld [vmem:[#allocation2 + $0x110] sm:$0xff]
      %v1053 = vld [vmem:[#allocation2 + $0x118] sm:$0xff]
      %v1054 = vld [vmem:[#allocation2 + $0x130] sm:$0xff]
      %v1055 = vld [vmem:[#allocation2 + $0x138] sm:$0xff]
      %v1056 = vld [vmem:[#allocation2 + $0x150] sm:$0xff]
      %v1057 = vld [vmem:[#allocation2 + $0x158] sm:$0xff]
      %v1058 = vld [vmem:[#allocation2 + $0x170] sm:$0xff]
      %v1059 = vld [vmem:[#allocation2 + $0x178] sm:$0xff]
      %v1060 = vld [vmem:[#allocation2 + $0x190] sm:$0xff]
      %v1061 = vld [vmem:[#allocation2 + $0x198] sm:$0xff]
      %v1062 = vld [vmem:[#allocation2 + $0x1b0] sm:$0xff]
      %v1063 = vld [vmem:[#allocation2 + $0x1b8] sm:$0xff]
      %v1064 = vld [vmem:[#allocation2 + $0x1d0] sm:$0xff]
      %v1065 = vld [vmem:[#allocation2 + $0x1d8] sm:$0xff]
      %v1066 = vld [vmem:[#allocation2 + $0x1f0] sm:$0xff]
      %v1067 = vld [vmem:[#allocation2 + $0x1f8] sm:$0xff]
      %1068 = vmatpush.msra.mxu0 %v1066
      %1069 = vmatpush.msra.mxu0 %v1064
      %1070 = vmatpush.msra.mxu0 %v1062
      %1071 = vmatpush.msra.mxu0 %v1060
      %1072 = vmatpush.msra.mxu0 %v1058
      %1073 = vmatpush.msra.mxu0 %v1056
      %1074 = vmatpush.msra.mxu0 %v1054
      %1075 = vmatpush.msra.mxu0 %v1052
      %1076 = vmatpush.msra.mxu0 %v1050
      %1077 = vmatpush.msra.mxu0 %v1048
      %1078 = vmatpush.msra.mxu0 %v1046
      %1079 = vmatpush.msra.mxu0 %v1044
      %1080 = vmatpush.msra.mxu0 %v1042
      %1081 = vmatpush.msra.mxu0 %v1040
      %1082 = vmatpush.msra.mxu0 %v1038
      %1083 = vmatpush.msra.mxu0 %v1036
      %1084 = vmatmul.f32.gmra.mxu0 %v1004
      %v1085 = vpop.f32.mrf.mxu0
      %v1086 = vadd.f32 0.0, %v1085
      %1087 = vmatmul.f32.gmra.mxu0 %v1005
      %v1088 = vpop.f32.mrf.mxu0
      %v1089 = vadd.f32 0.0, %v1088
      %1090 = vmatmul.f32.gmra.mxu0 %v1006
      %v1091 = vpop.f32.mrf.mxu0
      %v1092 = vadd.f32 0.0, %v1091
      %1093 = vmatmul.f32.gmra.mxu0 %v1007
      %v1094 = vpop.f32.mrf.mxu0
      %v1095 = vadd.f32 0.0, %v1094
      %1096 = vmatmul.f32.gmra.mxu0 %v1008
      %v1097 = vpop.f32.mrf.mxu0
      %v1098 = vadd.f32 0.0, %v1097
      %1099 = vmatmul.f32.gmra.mxu0 %v1009
      %v1100 = vpop.f32.mrf.mxu0
      %v1101 = vadd.f32 0.0, %v1100
      %1102 = vmatmul.f32.gmra.mxu0 %v1010
      %v1103 = vpop.f32.mrf.mxu0
      %v1104 = vadd.f32 0.0, %v1103
      %1105 = vmatmul.f32.gmra.mxu0 %v1011
      %v1106 = vpop.f32.mrf.mxu0
      %v1107 = vadd.f32 0.0, %v1106
      %1108 = vmatmul.f32.gmra.mxu0 %v1012
      %v1109 = vpop.f32.mrf.mxu0
      %v1110 = vadd.f32 0.0, %v1109
      %1111 = vmatmul.f32.gmra.mxu0 %v1013
      %v1112 = vpop.f32.mrf.mxu0
      %v1113 = vadd.f32 0.0, %v1112
      %1114 = vmatmul.f32.gmra.mxu0 %v1014
      %v1115 = vpop.f32.mrf.mxu0
      %v1116 = vadd.f32 0.0, %v1115
      %1117 = vmatmul.f32.gmra.mxu0 %v1015
      %v1118 = vpop.f32.mrf.mxu0
      %v1119 = vadd.f32 0.0, %v1118
      %1120 = vmatmul.f32.gmra.mxu0 %v1016
      %v1121 = vpop.f32.mrf.mxu0
      %v1122 = vadd.f32 0.0, %v1121
      %1123 = vmatmul.f32.gmra.mxu0 %v1017
      %v1124 = vpop.f32.mrf.mxu0
      %v1125 = vadd.f32 0.0, %v1124
      %1126 = vmatmul.f32.gmra.mxu0 %v1018
      %v1127 = vpop.f32.mrf.mxu0
      %v1128 = vadd.f32 0.0, %v1127
      %1129 = vmatmul.f32.gmra.mxu0 %v1019
      %v1130 = vpop.f32.mrf.mxu0
      %v1131 = vadd.f32 0.0, %v1130
      %1132 = vdwg.mxu0
      %1133 = vmatpush.msra.mxu0 %v1067
      %1134 = vmatpush.msra.mxu0 %v1065
      %1135 = vmatpush.msra.mxu0 %v1063
      %1136 = vmatpush.msra.mxu0 %v1061
      %1137 = vmatpush.msra.mxu0 %v1059
      %1138 = vmatpush.msra.mxu0 %v1057
      %1139 = vmatpush.msra.mxu0 %v1055
      %1140 = vmatpush.msra.mxu0 %v1053
      %1141 = vmatpush.msra.mxu0 %v1051
      %1142 = vmatpush.msra.mxu0 %v1049
      %1143 = vmatpush.msra.mxu0 %v1047
      %1144 = vmatpush.msra.mxu0 %v1045
      %1145 = vmatpush.msra.mxu0 %v1043
      %1146 = vmatpush.msra.mxu0 %v1041
      %1147 = vmatpush.msra.mxu0 %v1039
      %1148 = vmatpush.msra.mxu0 %v1037
      %1149 = vmatmul.f32.gmra.mxu0 %v1004
      %v1150 = vpop.f32.mrf.mxu0
      %v1151 = vadd.f32 0.0, %v1150
      %1152 = vmatmul.f32.gmra.mxu0 %v1005
      %v1153 = vpop.f32.mrf.mxu0
      %v1154 = vadd.f32 0.0, %v1153
      %1155 = vmatmul.f32.gmra.mxu0 %v1006
      %v1156 = vpop.f32.mrf.mxu0
      %v1157 = vadd.f32 0.0, %v1156
      %1158 = vmatmul.f32.gmra.mxu0 %v1007
      %v1159 = vpop.f32.mrf.mxu0
      %v1160 = vadd.f32 0.0, %v1159
      %1161 = vmatmul.f32.gmra.mxu0 %v1008
      %v1162 = vpop.f32.mrf.mxu0
      %v1163 = vadd.f32 0.0, %v1162
      %1164 = vmatmul.f32.gmra.mxu0 %v1009
      %v1165 = vpop.f32.mrf.mxu0
      %v1166 = vadd.f32 0.0, %v1165
      %1167 = vmatmul.f32.gmra.mxu0 %v1010
      %v1168 = vpop.f32.mrf.mxu0
      %v1169 = vadd.f32 0.0, %v1168
      %1170 = vmatmul.f32.gmra.mxu0 %v1011
      %v1171 = vpop.f32.mrf.mxu0
      %v1172 = vadd.f32 0.0, %v1171
      %1173 = vmatmul.f32.gmra.mxu0 %v1012
      %v1174 = vpop.f32.mrf.mxu0
      %v1175 = vadd.f32 0.0, %v1174
      %1176 = vmatmul.f32.gmra.mxu0 %v1013
      %v1177 = vpop.f32.mrf.mxu0
      %v1178 = vadd.f32 0.0, %v1177
      %1179 = vmatmul.f32.gmra.mxu0 %v1014
      %v1180 = vpop.f32.mrf.mxu0
      %v1181 = vadd.f32 0.0, %v1180
      %1182 = vmatmul.f32.gmra.mxu0 %v1015
      %v1183 = vpop.f32.mrf.mxu0
      %v1184 = vadd.f32 0.0, %v1183
      %1185 = vmatmul.f32.gmra.mxu0 %v1016
      %v1186 = vpop.f32.mrf.mxu0
      %v1187 = vadd.f32 0.0, %v1186
      %1188 = vmatmul.f32.gmra.mxu0 %v1017
      %v1189 = vpop.f32.mrf.mxu0
      %v1190 = vadd.f32 0.0, %v1189
      %1191 = vmatmul.f32.gmra.mxu0 %v1018
      %v1192 = vpop.f32.mrf.mxu0
      %v1193 = vadd.f32 0.0, %v1192
      %1194 = vmatmul.f32.gmra.mxu0 %v1019
      %v1195 = vpop.f32.mrf.mxu0
      %v1196 = vadd.f32 0.0, %v1195
      %1197 = vdwg.mxu0
      %1198 = vmatpush.msra.mxu0 %v1035
      %1199 = vmatpush.msra.mxu0 %v1034
      %1200 = vmatpush.msra.mxu0 %v1033
      %1201 = vmatpush.msra.mxu0 %v1032
      %1202 = vmatpush.msra.mxu0 %v1031
      %1203 = vmatpush.msra.mxu0 %v1030
      %1204 = vmatpush.msra.mxu0 %v1029
      %1205 = vmatpush.msra.mxu0 %v1028
      %1206 = vmatpush.msra.mxu0 %v1027
      %1207 = vmatpush.msra.mxu0 %v1026
      %1208 = vmatpush.msra.mxu0 %v1025
      %1209 = vmatpush.msra.mxu0 %v1024
      %1210 = vmatpush.msra.mxu0 %v1023
      %1211 = vmatpush.msra.mxu0 %v1022
      %1212 = vmatpush.msra.mxu0 %v1021
      %1213 = vmatpush.msra.mxu0 %v1020
      %1214 = vmatmul.f32.gmra.mxu0 %v972
      %v1215 = vpop.f32.mrf.mxu0
      %v1216 = vadd.f32 %v1151, %v1215
      %1217 = vmatmul.f32.gmra.mxu0 %v973
      %v1218 = vpop.f32.mrf.mxu0
      %v1219 = vadd.f32 %v1154, %v1218
      %1220 = vmatmul.f32.gmra.mxu0 %v974
      %v1221 = vpop.f32.mrf.mxu0
      %v1222 = vadd.f32 %v1157, %v1221
      %1223 = vmatmul.f32.gmra.mxu0 %v975
      %v1224 = vpop.f32.mrf.mxu0
      %v1225 = vadd.f32 %v1160, %v1224
      %1226 = vmatmul.f32.gmra.mxu0 %v976
      %v1227 = vpop.f32.mrf.mxu0
      %v1228 = vadd.f32 %v1163, %v1227
      %1229 = vmatmul.f32.gmra.mxu0 %v977
      %v1230 = vpop.f32.mrf.mxu0
      %v1231 = vadd.f32 %v1166, %v1230
      %1232 = vmatmul.f32.gmra.mxu0 %v978
      %v1233 = vpop.f32.mrf.mxu0
      %v1234 = vadd.f32 %v1169, %v1233
      %1235 = vmatmul.f32.gmra.mxu0 %v979
      %v1236 = vpop.f32.mrf.mxu0
      %v1237 = vadd.f32 %v1172, %v1236
      %1238 = vmatmul.f32.gmra.mxu0 %v980
      %v1239 = vpop.f32.mrf.mxu0
      %v1240 = vadd.f32 %v1175, %v1239
      %1241 = vmatmul.f32.gmra.mxu0 %v981
      %v1242 = vpop.f32.mrf.mxu0
      %v1243 = vadd.f32 %v1178, %v1242
      %1244 = vmatmul.f32.gmra.mxu0 %v982
      %v1245 = vpop.f32.mrf.mxu0
      %v1246 = vadd.f32 %v1181, %v1245
      %1247 = vmatmul.f32.gmra.mxu0 %v983
      %v1248 = vpop.f32.mrf.mxu0
      %v1249 = vadd.f32 %v1184, %v1248
      %1250 = vmatmul.f32.gmra.mxu0 %v984
      %v1251 = vpop.f32.mrf.mxu0
      %v1252 = vadd.f32 %v1187, %v1251
      %1253 = vmatmul.f32.gmra.mxu0 %v985
      %v1254 = vpop.f32.mrf.mxu0
      %v1255 = vadd.f32 %v1190, %v1254
      %1256 = vmatmul.f32.gmra.mxu0 %v986
      %v1257 = vpop.f32.mrf.mxu0
      %v1258 = vadd.f32 %v1193, %v1257
      %1259 = vmatmul.f32.gmra.mxu0 %v987
      %v1260 = vpop.f32.mrf.mxu0
      %v1261 = vadd.f32 %v1196, %v1260
      %1262 = vdwg.mxu0
      %v1263 = vadd.f32 %v1216, %v909
      %v1264 = vadd.f32 %v1219, %v912
      %v1265 = vadd.f32 %v1222, %v915
      %v1266 = vadd.f32 %v1225, %v918
      %v1267 = vadd.f32 %v1228, %v921
      %v1268 = vadd.f32 %v1231, %v924
      %v1269 = vadd.f32 %v1234, %v927
      %v1270 = vadd.f32 %v1237, %v930
      %v1271 = vadd.f32 %v1240, %v933
      %v1272 = vadd.f32 %v1243, %v936
      %v1273 = vadd.f32 %v1246, %v939
      %v1274 = vadd.f32 %v1249, %v942
      %v1275 = vadd.f32 %v1252, %v945
      %v1276 = vadd.f32 %v1255, %v948
      %v1277 = vadd.f32 %v1258, %v951
      %v1278 = vadd.f32 %v1261, %v954
      %v1279 = vsub.f32 0.0, %v1263
      %v1280 = vsub.f32 0.0, %v1264
      %v1281 = vsub.f32 0.0, %v1265
      %v1282 = vsub.f32 0.0, %v1266
      %v1283 = vsub.f32 0.0, %v1267
      %v1284 = vsub.f32 0.0, %v1268
      %v1285 = vsub.f32 0.0, %v1269
      %v1286 = vsub.f32 0.0, %v1270
      %v1287 = vsub.f32 0.0, %v1271
      %v1288 = vsub.f32 0.0, %v1272
      %v1289 = vsub.f32 0.0, %v1273
      %v1290 = vsub.f32 0.0, %v1274
      %v1291 = vsub.f32 0.0, %v1275
      %v1292 = vsub.f32 0.0, %v1276
      %v1293 = vsub.f32 0.0, %v1277
      %v1294 = vsub.f32 0.0, %v1278
      %v1295 = vmul.f32 %v1279, 1.442695
      %v1296 = vpow.pop %v1295
      %v1297 = vmul.f32 %v1280, 1.442695
      %v1298 = vpow.pop %v1297
      %v1299 = vmul.f32 %v1281, 1.442695
      %v1300 = vpow.pop %v1299
      %v1301 = vmul.f32 %v1282, 1.442695
      %v1302 = vpow.pop %v1301
      %v1303 = vmul.f32 %v1283, 1.442695
      %v1304 = vpow.pop %v1303
      %v1305 = vmul.f32 %v1284, 1.442695
      %v1306 = vpow.pop %v1305
      %v1307 = vmul.f32 %v1285, 1.442695
      %v1308 = vpow.pop %v1307
      %v1309 = vmul.f32 %v1286, 1.442695
      %v1310 = vpow.pop %v1309
      %v1311 = vmul.f32 %v1287, 1.442695
      %v1312 = vpow.pop %v1311
      %v1313 = vmul.f32 %v1288, 1.442695
      %v1314 = vpow.pop %v1313
      %v1315 = vmul.f32 %v1289, 1.442695
      %v1316 = vpow.pop %v1315
      %v1317 = vmul.f32 %v1290, 1.442695
      %v1318 = vpow.pop %v1317
      %v1319 = vmul.f32 %v1291, 1.442695
      %v1320 = vpow.pop %v1319
      %v1321 = vmul.f32 %v1292, 1.442695
      %v1322 = vpow.pop %v1321
      %v1323 = vmul.f32 %v1293, 1.442695
      %v1324 = vpow.pop %v1323
      %v1325 = vmul.f32 %v1294, 1.442695
      %v1326 = vpow.pop %v1325
      %v1327 = vadd.f32 %v1296, 1.0
      %v1328 = vadd.f32 %v1298, 1.0
      %v1329 = vadd.f32 %v1300, 1.0
      %v1330 = vadd.f32 %v1302, 1.0
      %v1331 = vadd.f32 %v1304, 1.0
      %v1332 = vadd.f32 %v1306, 1.0
      %v1333 = vadd.f32 %v1308, 1.0
      %v1334 = vadd.f32 %v1310, 1.0
      %v1335 = vadd.f32 %v1312, 1.0
      %v1336 = vadd.f32 %v1314, 1.0
      %v1337 = vadd.f32 %v1316, 1.0
      %v1338 = vadd.f32 %v1318, 1.0
      %v1339 = vadd.f32 %v1320, 1.0
      %v1340 = vadd.f32 %v1322, 1.0
      %v1341 = vadd.f32 %v1324, 1.0
      %v1342 = vadd.f32 %v1326, 1.0
      %v1343 = vrcp.pop %v1327
      %v1344 = vmul.f32 %v1327, %v1343
      %v1345 = vsub.f32 1.0, %v1344
      %v1346 = vmul.f32 %v1343, %v1345
      %v1347 = vadd.f32 %v1343, %v1346
      %vm1348 = vweird.f32 %v1327
      %vm1349 = vweird.f32 %v1343
      %vm1350 = vmor %vm1348, %vm1349
      %v1351 = vsel %vm1350, %v1343, %v1347
      %v1352 = vand.u32 2147483647, %v1327
      %vm1353 = vcmp.eq.f32.partialorder %v1352, 8.507059e+37
      %v1354 = vand.u32 %v1327, 2147483648
      %v1355 = vor.u32 1.1754944e-38, %v1354
      %v1356 = vsel %vm1353, %v1355, %v1351
      %v1357 = vmul.f32 1.0, %v1356
      %v1358 = vrcp.pop %v1328
      %v1359 = vmul.f32 %v1328, %v1358
      %v1360 = vsub.f32 1.0, %v1359
      %v1361 = vmul.f32 %v1358, %v1360
      %v1362 = vadd.f32 %v1358, %v1361
      %vm1363 = vweird.f32 %v1328
      %vm1364 = vweird.f32 %v1358
      %vm1365 = vmor %vm1363, %vm1364
      %v1366 = vsel %vm1365, %v1358, %v1362
      %v1367 = vand.u32 2147483647, %v1328
      %vm1368 = vcmp.eq.f32.partialorder %v1367, 8.507059e+37
      %v1369 = vand.u32 %v1328, 2147483648
      %v1370 = vor.u32 1.1754944e-38, %v1369
      %v1371 = vsel %vm1368, %v1370, %v1366
      %v1372 = vmul.f32 1.0, %v1371
      %v1373 = vrcp.pop %v1329
      %v1374 = vmul.f32 %v1329, %v1373
      %v1375 = vsub.f32 1.0, %v1374
      %v1376 = vmul.f32 %v1373, %v1375
      %v1377 = vadd.f32 %v1373, %v1376
      %vm1378 = vweird.f32 %v1329
      %vm1379 = vweird.f32 %v1373
      %vm1380 = vmor %vm1378, %vm1379
      %v1381 = vsel %vm1380, %v1373, %v1377
      %v1382 = vand.u32 2147483647, %v1329
      %vm1383 = vcmp.eq.f32.partialorder %v1382, 8.507059e+37
      %v1384 = vand.u32 %v1329, 2147483648
      %v1385 = vor.u32 1.1754944e-38, %v1384
      %v1386 = vsel %vm1383, %v1385, %v1381
      %v1387 = vmul.f32 1.0, %v1386
      %v1388 = vrcp.pop %v1330
      %v1389 = vmul.f32 %v1330, %v1388
      %v1390 = vsub.f32 1.0, %v1389
      %v1391 = vmul.f32 %v1388, %v1390
      %v1392 = vadd.f32 %v1388, %v1391
      %vm1393 = vweird.f32 %v1330
      %vm1394 = vweird.f32 %v1388
      %vm1395 = vmor %vm1393, %vm1394
      %v1396 = vsel %vm1395, %v1388, %v1392
      %v1397 = vand.u32 2147483647, %v1330
      %vm1398 = vcmp.eq.f32.partialorder %v1397, 8.507059e+37
      %v1399 = vand.u32 %v1330, 2147483648
      %v1400 = vor.u32 1.1754944e-38, %v1399
      %v1401 = vsel %vm1398, %v1400, %v1396
      %v1402 = vmul.f32 1.0, %v1401
      %v1403 = vrcp.pop %v1331
      %v1404 = vmul.f32 %v1331, %v1403
      %v1405 = vsub.f32 1.0, %v1404
      %v1406 = vmul.f32 %v1403, %v1405
      %v1407 = vadd.f32 %v1403, %v1406
      %vm1408 = vweird.f32 %v1331
      %vm1409 = vweird.f32 %v1403
      %vm1410 = vmor %vm1408, %vm1409
      %v1411 = vsel %vm1410, %v1403, %v1407
      %v1412 = vand.u32 2147483647, %v1331
      %vm1413 = vcmp.eq.f32.partialorder %v1412, 8.507059e+37
      %v1414 = vand.u32 %v1331, 2147483648
      %v1415 = vor.u32 1.1754944e-38, %v1414
      %v1416 = vsel %vm1413, %v1415, %v1411
      %v1417 = vmul.f32 1.0, %v1416
      %v1418 = vrcp.pop %v1332
      %v1419 = vmul.f32 %v1332, %v1418
      %v1420 = vsub.f32 1.0, %v1419
      %v1421 = vmul.f32 %v1418, %v1420
      %v1422 = vadd.f32 %v1418, %v1421
      %vm1423 = vweird.f32 %v1332
      %vm1424 = vweird.f32 %v1418
      %vm1425 = vmor %vm1423, %vm1424
      %v1426 = vsel %vm1425, %v1418, %v1422
      %v1427 = vand.u32 2147483647, %v1332
      %vm1428 = vcmp.eq.f32.partialorder %v1427, 8.507059e+37
      %v1429 = vand.u32 %v1332, 2147483648
      %v1430 = vor.u32 1.1754944e-38, %v1429
      %v1431 = vsel %vm1428, %v1430, %v1426
      %v1432 = vmul.f32 1.0, %v1431
      %v1433 = vrcp.pop %v1333
      %v1434 = vmul.f32 %v1333, %v1433
      %v1435 = vsub.f32 1.0, %v1434
      %v1436 = vmul.f32 %v1433, %v1435
      %v1437 = vadd.f32 %v1433, %v1436
      %vm1438 = vweird.f32 %v1333
      %vm1439 = vweird.f32 %v1433
      %vm1440 = vmor %vm1438, %vm1439
      %v1441 = vsel %vm1440, %v1433, %v1437
      %v1442 = vand.u32 2147483647, %v1333
      %vm1443 = vcmp.eq.f32.partialorder %v1442, 8.507059e+37
      %v1444 = vand.u32 %v1333, 2147483648
      %v1445 = vor.u32 1.1754944e-38, %v1444
      %v1446 = vsel %vm1443, %v1445, %v1441
      %v1447 = vmul.f32 1.0, %v1446
      %v1448 = vrcp.pop %v1334
      %v1449 = vmul.f32 %v1334, %v1448
      %v1450 = vsub.f32 1.0, %v1449
      %v1451 = vmul.f32 %v1448, %v1450
      %v1452 = vadd.f32 %v1448, %v1451
      %vm1453 = vweird.f32 %v1334
      %vm1454 = vweird.f32 %v1448
      %vm1455 = vmor %vm1453, %vm1454
      %v1456 = vsel %vm1455, %v1448, %v1452
      %v1457 = vand.u32 2147483647, %v1334
      %vm1458 = vcmp.eq.f32.partialorder %v1457, 8.507059e+37
      %v1459 = vand.u32 %v1334, 2147483648
      %v1460 = vor.u32 1.1754944e-38, %v1459
      %v1461 = vsel %vm1458, %v1460, %v1456
      %v1462 = vmul.f32 1.0, %v1461
      %v1463 = vrcp.pop %v1335
      %v1464 = vmul.f32 %v1335, %v1463
      %v1465 = vsub.f32 1.0, %v1464
      %v1466 = vmul.f32 %v1463, %v1465
      %v1467 = vadd.f32 %v1463, %v1466
      %vm1468 = vweird.f32 %v1335
      %vm1469 = vweird.f32 %v1463
      %vm1470 = vmor %vm1468, %vm1469
      %v1471 = vsel %vm1470, %v1463, %v1467
      %v1472 = vand.u32 2147483647, %v1335
      %vm1473 = vcmp.eq.f32.partialorder %v1472, 8.507059e+37
      %v1474 = vand.u32 %v1335, 2147483648
      %v1475 = vor.u32 1.1754944e-38, %v1474
      %v1476 = vsel %vm1473, %v1475, %v1471
      %v1477 = vmul.f32 1.0, %v1476
      %v1478 = vrcp.pop %v1336
      %v1479 = vmul.f32 %v1336, %v1478
      %v1480 = vsub.f32 1.0, %v1479
      %v1481 = vmul.f32 %v1478, %v1480
      %v1482 = vadd.f32 %v1478, %v1481
      %vm1483 = vweird.f32 %v1336
      %vm1484 = vweird.f32 %v1478
      %vm1485 = vmor %vm1483, %vm1484
      %v1486 = vsel %vm1485, %v1478, %v1482
      %v1487 = vand.u32 2147483647, %v1336
      %vm1488 = vcmp.eq.f32.partialorder %v1487, 8.507059e+37
      %v1489 = vand.u32 %v1336, 2147483648
      %v1490 = vor.u32 1.1754944e-38, %v1489
      %v1491 = vsel %vm1488, %v1490, %v1486
      %v1492 = vmul.f32 1.0, %v1491
      %v1493 = vrcp.pop %v1337
      %v1494 = vmul.f32 %v1337, %v1493
      %v1495 = vsub.f32 1.0, %v1494
      %v1496 = vmul.f32 %v1493, %v1495
      %v1497 = vadd.f32 %v1493, %v1496
      %vm1498 = vweird.f32 %v1337
      %vm1499 = vweird.f32 %v1493
      %vm1500 = vmor %vm1498, %vm1499
      %v1501 = vsel %vm1500, %v1493, %v1497
      %v1502 = vand.u32 2147483647, %v1337
      %vm1503 = vcmp.eq.f32.partialorder %v1502, 8.507059e+37
      %v1504 = vand.u32 %v1337, 2147483648
      %v1505 = vor.u32 1.1754944e-38, %v1504
      %v1506 = vsel %vm1503, %v1505, %v1501
      %v1507 = vmul.f32 1.0, %v1506
      %v1508 = vrcp.pop %v1338
      %v1509 = vmul.f32 %v1338, %v1508
      %v1510 = vsub.f32 1.0, %v1509
      %v1511 = vmul.f32 %v1508, %v1510
      %v1512 = vadd.f32 %v1508, %v1511
      %vm1513 = vweird.f32 %v1338
      %vm1514 = vweird.f32 %v1508
      %vm1515 = vmor %vm1513, %vm1514
      %v1516 = vsel %vm1515, %v1508, %v1512
      %v1517 = vand.u32 2147483647, %v1338
      %vm1518 = vcmp.eq.f32.partialorder %v1517, 8.507059e+37
      %v1519 = vand.u32 %v1338, 2147483648
      %v1520 = vor.u32 1.1754944e-38, %v1519
      %v1521 = vsel %vm1518, %v1520, %v1516
      %v1522 = vmul.f32 1.0, %v1521
      %v1523 = vrcp.pop %v1339
      %v1524 = vmul.f32 %v1339, %v1523
      %v1525 = vsub.f32 1.0, %v1524
      %v1526 = vmul.f32 %v1523, %v1525
      %v1527 = vadd.f32 %v1523, %v1526
      %vm1528 = vweird.f32 %v1339
      %vm1529 = vweird.f32 %v1523
      %vm1530 = vmor %vm1528, %vm1529
      %v1531 = vsel %vm1530, %v1523, %v1527
      %v1532 = vand.u32 2147483647, %v1339
      %vm1533 = vcmp.eq.f32.partialorder %v1532, 8.507059e+37
      %v1534 = vand.u32 %v1339, 2147483648
      %v1535 = vor.u32 1.1754944e-38, %v1534
      %v1536 = vsel %vm1533, %v1535, %v1531
      %v1537 = vmul.f32 1.0, %v1536
      %v1538 = vrcp.pop %v1340
      %v1539 = vmul.f32 %v1340, %v1538
      %v1540 = vsub.f32 1.0, %v1539
      %v1541 = vmul.f32 %v1538, %v1540
      %v1542 = vadd.f32 %v1538, %v1541
      %vm1543 = vweird.f32 %v1340
      %vm1544 = vweird.f32 %v1538
      %vm1545 = vmor %vm1543, %vm1544
      %v1546 = vsel %vm1545, %v1538, %v1542
      %v1547 = vand.u32 2147483647, %v1340
      %vm1548 = vcmp.eq.f32.partialorder %v1547, 8.507059e+37
      %v1549 = vand.u32 %v1340, 2147483648
      %v1550 = vor.u32 1.1754944e-38, %v1549
      %v1551 = vsel %vm1548, %v1550, %v1546
      %v1552 = vmul.f32 1.0, %v1551
      %v1553 = vrcp.pop %v1341
      %v1554 = vmul.f32 %v1341, %v1553
      %v1555 = vsub.f32 1.0, %v1554
      %v1556 = vmul.f32 %v1553, %v1555
      %v1557 = vadd.f32 %v1553, %v1556
      %vm1558 = vweird.f32 %v1341
      %vm1559 = vweird.f32 %v1553
      %vm1560 = vmor %vm1558, %vm1559
      %v1561 = vsel %vm1560, %v1553, %v1557
      %v1562 = vand.u32 2147483647, %v1341
      %vm1563 = vcmp.eq.f32.partialorder %v1562, 8.507059e+37
      %v1564 = vand.u32 %v1341, 2147483648
      %v1565 = vor.u32 1.1754944e-38, %v1564
      %v1566 = vsel %vm1563, %v1565, %v1561
      %v1567 = vmul.f32 1.0, %v1566
      %v1568 = vrcp.pop %v1342
      %v1569 = vmul.f32 %v1342, %v1568
      %v1570 = vsub.f32 1.0, %v1569
      %v1571 = vmul.f32 %v1568, %v1570
      %v1572 = vadd.f32 %v1568, %v1571
      %vm1573 = vweird.f32 %v1342
      %vm1574 = vweird.f32 %v1568
      %vm1575 = vmor %vm1573, %vm1574
      %v1576 = vsel %vm1575, %v1568, %v1572
      %v1577 = vand.u32 2147483647, %v1342
      %vm1578 = vcmp.eq.f32.partialorder %v1577, 8.507059e+37
      %v1579 = vand.u32 %v1342, 2147483648
      %v1580 = vor.u32 1.1754944e-38, %v1579
      %v1581 = vsel %vm1578, %v1580, %v1576
      %v1582 = vmul.f32 1.0, %v1581
      %v1583 = vmax.f32 %v1263, 0.0
      %v1584 = vmax.f32 %v1264, 0.0
      %v1585 = vmax.f32 %v1265, 0.0
      %v1586 = vmax.f32 %v1266, 0.0
      %v1587 = vmax.f32 %v1267, 0.0
      %v1588 = vmax.f32 %v1268, 0.0
      %v1589 = vmax.f32 %v1269, 0.0
      %v1590 = vmax.f32 %v1270, 0.0
      %v1591 = vmax.f32 %v1271, 0.0
      %v1592 = vmax.f32 %v1272, 0.0
      %v1593 = vmax.f32 %v1273, 0.0
      %v1594 = vmax.f32 %v1274, 0.0
      %v1595 = vmax.f32 %v1275, 0.0
      %v1596 = vmax.f32 %v1276, 0.0
      %v1597 = vmax.f32 %v1277, 0.0
      %v1598 = vmax.f32 %v1278, 0.0
      %1599 = vst [vmem:[%s403] sm:$0xff] %v1583
      %1600 = vst [vmem:[%s403 + $0x8] sm:$0xff] %v1584
      %1601 = vst [vmem:[%s403 + $0x10] sm:$0xff] %v1585
      %1602 = vst [vmem:[%s403 + $0x18] sm:$0xff] %v1586
      %1603 = vst [vmem:[%s403 + $0x20] sm:$0xff] %v1587
      %1604 = vst [vmem:[%s403 + $0x28] sm:$0xff] %v1588
      %1605 = vst [vmem:[%s403 + $0x30] sm:$0xff] %v1589
      %1606 = vst [vmem:[%s403 + $0x38] sm:$0xff] %v1590
      %1607 = vst [vmem:[%s403 + $0x40] sm:$0xff] %v1591
      %1608 = vst [vmem:[%s403 + $0x48] sm:$0xff] %v1592
      %1609 = vst [vmem:[%s403 + $0x50] sm:$0xff] %v1593
      %1610 = vst [vmem:[%s403 + $0x58] sm:$0xff] %v1594
      %1611 = vst [vmem:[%s403 + $0x60] sm:$0xff] %v1595
      %1612 = vst [vmem:[%s403 + $0x68] sm:$0xff] %v1596
      %1613 = vst [vmem:[%s403 + $0x70] sm:$0xff] %v1597
      %1614 = vst [vmem:[%s403 + $0x78] sm:$0xff] %v1598
      %v1615 = vld [vmem:[#allocation3] sm:$0xff]
      %v1616 = vld [vmem:[#allocation3 + $0x8] sm:$0xff]
      %v1617 = vld [vmem:[#allocation3 + $0x10] sm:$0xff]
      %v1618 = vld [vmem:[#allocation3 + $0x18] sm:$0xff]
      %v1619 = vld [vmem:[#allocation3 + $0x20] sm:$0xff]
      %v1620 = vld [vmem:[#allocation3 + $0x28] sm:$0xff]
      %v1621 = vld [vmem:[#allocation3 + $0x30] sm:$0xff]
      %v1622 = vld [vmem:[#allocation3 + $0x38] sm:$0xff]
      %v1623 = vld [vmem:[#allocation3 + $0x40] sm:$0xff]
      %v1624 = vld [vmem:[#allocation3 + $0x48] sm:$0xff]
      %v1625 = vld [vmem:[#allocation3 + $0x50] sm:$0xff]
      %v1626 = vld [vmem:[#allocation3 + $0x58] sm:$0xff]
      %v1627 = vld [vmem:[#allocation3 + $0x60] sm:$0xff]
      %v1628 = vld [vmem:[#allocation3 + $0x68] sm:$0xff]
      %v1629 = vld [vmem:[#allocation3 + $0x70] sm:$0xff]
      %v1630 = vld [vmem:[#allocation3 + $0x78] sm:$0xff]
      %v1631 = vmul.f32 %v1086, %v1357
      %v1632 = vmul.f32 %v1089, %v1372
      %v1633 = vmul.f32 %v1092, %v1387
      %v1634 = vmul.f32 %v1095, %v1402
      %v1635 = vmul.f32 %v1098, %v1417
      %v1636 = vmul.f32 %v1101, %v1432
      %v1637 = vmul.f32 %v1104, %v1447
      %v1638 = vmul.f32 %v1107, %v1462
      %v1639 = vmul.f32 %v1110, %v1477
      %v1640 = vmul.f32 %v1113, %v1492
      %v1641 = vmul.f32 %v1116, %v1507
      %v1642 = vmul.f32 %v1119, %v1522
      %v1643 = vmul.f32 %v1122, %v1537
      %v1644 = vmul.f32 %v1125, %v1552
      %v1645 = vmul.f32 %v1128, %v1567
      %v1646 = vmul.f32 %v1131, %v1582
      %1647 = vxpose.xlu0.b32.start [1/16] %v972, 128
      %1648 = vxpose.xlu0.b32.cont [2/16] %v973, 128
      %1649 = vxpose.xlu0.b32.cont [3/16] %v974, 128
      %1650 = vxpose.xlu0.b32.cont [4/16] %v975, 128
      %1651 = vxpose.xlu0.b32.cont [5/16] %v976, 128
      %1652 = vxpose.xlu0.b32.cont [6/16] %v977, 128
      %1653 = vxpose.xlu0.b32.cont [7/16] %v978, 128
      %1654 = vxpose.xlu0.b32.cont [8/16] %v979, 128
      %1655 = vxpose.xlu0.b32.cont [9/16] %v980, 128
      %1656 = vxpose.xlu0.b32.cont [10/16] %v981, 128
      %1657 = vxpose.xlu0.b32.cont [11/16] %v982, 128
      %1658 = vxpose.xlu0.b32.cont [12/16] %v983, 128
      %1659 = vxpose.xlu0.b32.cont [13/16] %v984, 128
      %1660 = vxpose.xlu0.b32.cont [14/16] %v985, 128
      %1661 = vxpose.xlu0.b32.cont [15/16] %v986, 128
      %1662 = vxpose.xlu0.b32.end [16/16] %v987, 128
      %v1663 = vpop.trf.xlu0
      %v1664 = vpop.trf.xlu0
      %v1665 = vpop.trf.xlu0
      %v1666 = vpop.trf.xlu0
      %v1667 = vpop.trf.xlu0
      %v1668 = vpop.trf.xlu0
      %v1669 = vpop.trf.xlu0
      %v1670 = vpop.trf.xlu0
      %v1671 = vpop.trf.xlu0
      %v1672 = vpop.trf.xlu0
      %v1673 = vpop.trf.xlu0
      %v1674 = vpop.trf.xlu0
      %v1675 = vpop.trf.xlu0
      %v1676 = vpop.trf.xlu0
      %v1677 = vpop.trf.xlu0
      %v1678 = vpop.trf.xlu0
      %1679 = vmatpush.msra.mxu0 %v1646
      %1680 = vmatpush.msra.mxu0 %v1645
      %1681 = vmatpush.msra.mxu0 %v1644
      %1682 = vmatpush.msra.mxu0 %v1643
      %1683 = vmatpush.msra.mxu0 %v1642
      %1684 = vmatpush.msra.mxu0 %v1641
      %1685 = vmatpush.msra.mxu0 %v1640
      %1686 = vmatpush.msra.mxu0 %v1639
      %1687 = vmatpush.msra.mxu0 %v1638
      %1688 = vmatpush.msra.mxu0 %v1637
      %1689 = vmatpush.msra.mxu0 %v1636
      %1690 = vmatpush.msra.mxu0 %v1635
      %1691 = vmatpush.msra.mxu0 %v1634
      %1692 = vmatpush.msra.mxu0 %v1633
      %1693 = vmatpush.msra.mxu0 %v1632
      %1694 = vmatpush.msra.mxu0 %v1631
      %1695 = vmatmul.f32.gmra.mxu0 %v1663
      %v1696 = vpop.f32.mrf.mxu0
      %v1697 = vadd.f32 0.0, %v1696
      %1698 = vmatmul.f32.gmra.mxu0 %v1664
      %v1699 = vpop.f32.mrf.mxu0
      %v1700 = vadd.f32 0.0, %v1699
      %1701 = vmatmul.f32.gmra.mxu0 %v1665
      %v1702 = vpop.f32.mrf.mxu0
      %v1703 = vadd.f32 0.0, %v1702
      %1704 = vmatmul.f32.gmra.mxu0 %v1666
      %v1705 = vpop.f32.mrf.mxu0
      %v1706 = vadd.f32 0.0, %v1705
      %1707 = vmatmul.f32.gmra.mxu0 %v1667
      %v1708 = vpop.f32.mrf.mxu0
      %v1709 = vadd.f32 0.0, %v1708
      %1710 = vmatmul.f32.gmra.mxu0 %v1668
      %v1711 = vpop.f32.mrf.mxu0
      %v1712 = vadd.f32 0.0, %v1711
      %1713 = vmatmul.f32.gmra.mxu0 %v1669
      %v1714 = vpop.f32.mrf.mxu0
      %v1715 = vadd.f32 0.0, %v1714
      %1716 = vmatmul.f32.gmra.mxu0 %v1670
      %v1717 = vpop.f32.mrf.mxu0
      %v1718 = vadd.f32 0.0, %v1717
      %1719 = vmatmul.f32.gmra.mxu0 %v1671
      %v1720 = vpop.f32.mrf.mxu0
      %v1721 = vadd.f32 0.0, %v1720
      %1722 = vmatmul.f32.gmra.mxu0 %v1672
      %v1723 = vpop.f32.mrf.mxu0
      %v1724 = vadd.f32 0.0, %v1723
      %1725 = vmatmul.f32.gmra.mxu0 %v1673
      %v1726 = vpop.f32.mrf.mxu0
      %v1727 = vadd.f32 0.0, %v1726
      %1728 = vmatmul.f32.gmra.mxu0 %v1674
      %v1729 = vpop.f32.mrf.mxu0
      %v1730 = vadd.f32 0.0, %v1729
      %1731 = vmatmul.f32.gmra.mxu0 %v1675
      %v1732 = vpop.f32.mrf.mxu0
      %v1733 = vadd.f32 0.0, %v1732
      %1734 = vmatmul.f32.gmra.mxu0 %v1676
      %v1735 = vpop.f32.mrf.mxu0
      %v1736 = vadd.f32 0.0, %v1735
      %1737 = vmatmul.f32.gmra.mxu0 %v1677
      %v1738 = vpop.f32.mrf.mxu0
      %v1739 = vadd.f32 0.0, %v1738
      %1740 = vmatmul.f32.gmra.mxu0 %v1678
      %v1741 = vpop.f32.mrf.mxu0
      %v1742 = vadd.f32 0.0, %v1741
      %1743 = vdwg.mxu0
      %v1744 = vadd.f32 %v1615, %v1697
      %v1745 = vadd.f32 %v1616, %v1700
      %v1746 = vadd.f32 %v1617, %v1703
      %v1747 = vadd.f32 %v1618, %v1706
      %v1748 = vadd.f32 %v1619, %v1709
      %v1749 = vadd.f32 %v1620, %v1712
      %v1750 = vadd.f32 %v1621, %v1715
      %v1751 = vadd.f32 %v1622, %v1718
      %v1752 = vadd.f32 %v1623, %v1721
      %v1753 = vadd.f32 %v1624, %v1724
      %v1754 = vadd.f32 %v1625, %v1727
      %v1755 = vadd.f32 %v1626, %v1730
      %v1756 = vadd.f32 %v1627, %v1733
      %v1757 = vadd.f32 %v1628, %v1736
      %v1758 = vadd.f32 %v1629, %v1739
      %v1759 = vadd.f32 %v1630, %v1742
      %1760 = vst [vmem:[#allocation3] sm:$0xff] %v1744
      %1761 = vst [vmem:[#allocation3 + $0x8] sm:$0xff] %v1745
      %1762 = vst [vmem:[#allocation3 + $0x10] sm:$0xff] %v1746
      %1763 = vst [vmem:[#allocation3 + $0x18] sm:$0xff] %v1747
      %1764 = vst [vmem:[#allocation3 + $0x20] sm:$0xff] %v1748
      %1765 = vst [vmem:[#allocation3 + $0x28] sm:$0xff] %v1749
      %1766 = vst [vmem:[#allocation3 + $0x30] sm:$0xff] %v1750
      %1767 = vst [vmem:[#allocation3 + $0x38] sm:$0xff] %v1751
      %1768 = vst [vmem:[#allocation3 + $0x40] sm:$0xff] %v1752
      %1769 = vst [vmem:[#allocation3 + $0x48] sm:$0xff] %v1753
      %1770 = vst [vmem:[#allocation3 + $0x50] sm:$0xff] %v1754
      %1771 = vst [vmem:[#allocation3 + $0x58] sm:$0xff] %v1755
      %1772 = vst [vmem:[#allocation3 + $0x60] sm:$0xff] %v1756
      %1773 = vst [vmem:[#allocation3 + $0x68] sm:$0xff] %v1757
      %1774 = vst [vmem:[#allocation3 + $0x70] sm:$0xff] %v1758
      %1775 = vst [vmem:[#allocation3 + $0x78] sm:$0xff] %v1759
      %v1776 = vld [vmem:[#allocation4] sm:$0xff]
      %v1777 = vld [vmem:[#allocation4 + $0x8] sm:$0xff]
      %v1778 = vld [vmem:[#allocation4 + $0x10] sm:$0xff]
      %v1779 = vld [vmem:[#allocation4 + $0x18] sm:$0xff]
      %v1780 = vld [vmem:[#allocation4 + $0x20] sm:$0xff]
      %v1781 = vld [vmem:[#allocation4 + $0x28] sm:$0xff]
      %v1782 = vld [vmem:[#allocation4 + $0x30] sm:$0xff]
      %v1783 = vld [vmem:[#allocation4 + $0x38] sm:$0xff]
      %v1784 = vld [vmem:[#allocation4 + $0x40] sm:$0xff]
      %v1785 = vld [vmem:[#allocation4 + $0x48] sm:$0xff]
      %v1786 = vld [vmem:[#allocation4 + $0x50] sm:$0xff]
      %v1787 = vld [vmem:[#allocation4 + $0x58] sm:$0xff]
      %v1788 = vld [vmem:[#allocation4 + $0x60] sm:$0xff]
      %v1789 = vld [vmem:[#allocation4 + $0x68] sm:$0xff]
      %v1790 = vld [vmem:[#allocation4 + $0x70] sm:$0xff]
      %v1791 = vld [vmem:[#allocation4 + $0x78] sm:$0xff]
      %1792 = vmatpush.msra.mxu0 %v1582
      %1793 = vmatpush.msra.mxu0 %v1567
      %1794 = vmatpush.msra.mxu0 %v1552
      %1795 = vmatpush.msra.mxu0 %v1537
      %1796 = vmatpush.msra.mxu0 %v1522
      %1797 = vmatpush.msra.mxu0 %v1507
      %1798 = vmatpush.msra.mxu0 %v1492
      %1799 = vmatpush.msra.mxu0 %v1477
      %1800 = vmatpush.msra.mxu0 %v1462
      %1801 = vmatpush.msra.mxu0 %v1447
      %1802 = vmatpush.msra.mxu0 %v1432
      %1803 = vmatpush.msra.mxu0 %v1417
      %1804 = vmatpush.msra.mxu0 %v1402
      %1805 = vmatpush.msra.mxu0 %v1387
      %1806 = vmatpush.msra.mxu0 %v1372
      %1807 = vmatpush.msra.mxu0 %v1357
      %1808 = vmatmul.f32.gmra.mxu0 %v1663
      %v1809 = vpop.f32.mrf.mxu0
      %v1810 = vadd.f32 0.0, %v1809
      %1811 = vmatmul.f32.gmra.mxu0 %v1664
      %v1812 = vpop.f32.mrf.mxu0
      %v1813 = vadd.f32 0.0, %v1812
      %1814 = vmatmul.f32.gmra.mxu0 %v1665
      %v1815 = vpop.f32.mrf.mxu0
      %v1816 = vadd.f32 0.0, %v1815
      %1817 = vmatmul.f32.gmra.mxu0 %v1666
      %v1818 = vpop.f32.mrf.mxu0
      %v1819 = vadd.f32 0.0, %v1818
      %1820 = vmatmul.f32.gmra.mxu0 %v1667
      %v1821 = vpop.f32.mrf.mxu0
      %v1822 = vadd.f32 0.0, %v1821
      %1823 = vmatmul.f32.gmra.mxu0 %v1668
      %v1824 = vpop.f32.mrf.mxu0
      %v1825 = vadd.f32 0.0, %v1824
      %1826 = vmatmul.f32.gmra.mxu0 %v1669
      %v1827 = vpop.f32.mrf.mxu0
      %v1828 = vadd.f32 0.0, %v1827
      %1829 = vmatmul.f32.gmra.mxu0 %v1670
      %v1830 = vpop.f32.mrf.mxu0
      %v1831 = vadd.f32 0.0, %v1830
      %1832 = vmatmul.f32.gmra.mxu0 %v1671
      %v1833 = vpop.f32.mrf.mxu0
      %v1834 = vadd.f32 0.0, %v1833
      %1835 = vmatmul.f32.gmra.mxu0 %v1672
      %v1836 = vpop.f32.mrf.mxu0
      %v1837 = vadd.f32 0.0, %v1836
      %1838 = vmatmul.f32.gmra.mxu0 %v1673
      %v1839 = vpop.f32.mrf.mxu0
      %v1840 = vadd.f32 0.0, %v1839
      %1841 = vmatmul.f32.gmra.mxu0 %v1674
      %v1842 = vpop.f32.mrf.mxu0
      %v1843 = vadd.f32 0.0, %v1842
      %1844 = vmatmul.f32.gmra.mxu0 %v1675
      %v1845 = vpop.f32.mrf.mxu0
      %v1846 = vadd.f32 0.0, %v1845
      %1847 = vmatmul.f32.gmra.mxu0 %v1676
      %v1848 = vpop.f32.mrf.mxu0
      %v1849 = vadd.f32 0.0, %v1848
      %1850 = vmatmul.f32.gmra.mxu0 %v1677
      %v1851 = vpop.f32.mrf.mxu0
      %v1852 = vadd.f32 0.0, %v1851
      %1853 = vmatmul.f32.gmra.mxu0 %v1678
      %v1854 = vpop.f32.mrf.mxu0
      %v1855 = vadd.f32 0.0, %v1854
      %1856 = vdwg.mxu0
      %v1857 = vadd.f32 %v1776, %v1810
      %v1858 = vadd.f32 %v1777, %v1813
      %v1859 = vadd.f32 %v1778, %v1816
      %v1860 = vadd.f32 %v1779, %v1819
      %v1861 = vadd.f32 %v1780, %v1822
      %v1862 = vadd.f32 %v1781, %v1825
      %v1863 = vadd.f32 %v1782, %v1828
      %v1864 = vadd.f32 %v1783, %v1831
      %v1865 = vadd.f32 %v1784, %v1834
      %v1866 = vadd.f32 %v1785, %v1837
      %v1867 = vadd.f32 %v1786, %v1840
      %v1868 = vadd.f32 %v1787, %v1843
      %v1869 = vadd.f32 %v1788, %v1846
      %v1870 = vadd.f32 %v1789, %v1849
      %v1871 = vadd.f32 %v1790, %v1852
      %v1872 = vadd.f32 %v1791, %v1855
      %1873 = vst [vmem:[#allocation4] sm:$0xff] %v1857
      %1874 = vst [vmem:[#allocation4 + $0x8] sm:$0xff] %v1858
      %1875 = vst [vmem:[#allocation4 + $0x10] sm:$0xff] %v1859
      %1876 = vst [vmem:[#allocation4 + $0x18] sm:$0xff] %v1860
      %1877 = vst [vmem:[#allocation4 + $0x20] sm:$0xff] %v1861
      %1878 = vst [vmem:[#allocation4 + $0x28] sm:$0xff] %v1862
      %1879 = vst [vmem:[#allocation4 + $0x30] sm:$0xff] %v1863
      %1880 = vst [vmem:[#allocation4 + $0x38] sm:$0xff] %v1864
      %1881 = vst [vmem:[#allocation4 + $0x40] sm:$0xff] %v1865
      %1882 = vst [vmem:[#allocation4 + $0x48] sm:$0xff] %v1866
      %1883 = vst [vmem:[#allocation4 + $0x50] sm:$0xff] %v1867
      %1884 = vst [vmem:[#allocation4 + $0x58] sm:$0xff] %v1868
      %1885 = vst [vmem:[#allocation4 + $0x60] sm:$0xff] %v1869
      %1886 = vst [vmem:[#allocation4 + $0x68] sm:$0xff] %v1870
      %1887 = vst [vmem:[#allocation4 + $0x70] sm:$0xff] %v1871
      %1888 = vst [vmem:[#allocation4 + $0x78] sm:$0xff] %v1872
      %p1889 = scmp.eq.s32.totalorder %s22, 1
      // Predicated region
      $region61: #{_lambda_.6} parent=55 // pred_check
        %p1890 = pneg %p1889
      $region62: #{_lambda_.6} parent=55 // pred_check_branch
        %1892 = sbr.rel (%p1890) target = $region64
      $region63: #{_lambda_.6} parent=55 // pred_region
        %v1893 = vld [vmem:[#allocation2] sm:$0xff]
        %v1894 = vld [vmem:[#allocation2 + $0x20] sm:$0xff]
        %v1895 = vld [vmem:[#allocation2 + $0x40] sm:$0xff]
        %v1896 = vld [vmem:[#allocation2 + $0x60] sm:$0xff]
        %v1897 = vld [vmem:[#allocation2 + $0x80] sm:$0xff]
        %v1898 = vld [vmem:[#allocation2 + $0xa0] sm:$0xff]
        %v1899 = vld [vmem:[#allocation2 + $0xc0] sm:$0xff]
        %v1900 = vld [vmem:[#allocation2 + $0xe0] sm:$0xff]
        %v1901 = vld [vmem:[#allocation2 + $0x100] sm:$0xff]
        %v1902 = vld [vmem:[#allocation2 + $0x120] sm:$0xff]
        %v1903 = vld [vmem:[#allocation2 + $0x140] sm:$0xff]
        %v1904 = vld [vmem:[#allocation2 + $0x160] sm:$0xff]
        %v1905 = vld [vmem:[#allocation2 + $0x180] sm:$0xff]
        %v1906 = vld [vmem:[#allocation2 + $0x1a0] sm:$0xff]
        %v1907 = vld [vmem:[#allocation2 + $0x1c0] sm:$0xff]
        %v1908 = vld [vmem:[#allocation2 + $0x1e0] sm:$0xff]
        %v1909 = vld [vmem:[#allocation3] sm:$0xff]
        %v1910 = vld [vmem:[#allocation3 + $0x8] sm:$0xff]
        %v1911 = vld [vmem:[#allocation3 + $0x10] sm:$0xff]
        %v1912 = vld [vmem:[#allocation3 + $0x18] sm:$0xff]
        %v1913 = vld [vmem:[#allocation3 + $0x20] sm:$0xff]
        %v1914 = vld [vmem:[#allocation3 + $0x28] sm:$0xff]
        %v1915 = vld [vmem:[#allocation3 + $0x30] sm:$0xff]
        %v1916 = vld [vmem:[#allocation3 + $0x38] sm:$0xff]
        %v1917 = vld [vmem:[#allocation3 + $0x40] sm:$0xff]
        %v1918 = vld [vmem:[#allocation3 + $0x48] sm:$0xff]
        %v1919 = vld [vmem:[#allocation3 + $0x50] sm:$0xff]
        %v1920 = vld [vmem:[#allocation3 + $0x58] sm:$0xff]
        %v1921 = vld [vmem:[#allocation3 + $0x60] sm:$0xff]
        %v1922 = vld [vmem:[#allocation3 + $0x68] sm:$0xff]
        %v1923 = vld [vmem:[#allocation3 + $0x70] sm:$0xff]
        %v1924 = vld [vmem:[#allocation3 + $0x78] sm:$0xff]
        %v1925 = vld [vmem:[#allocation4] sm:$0xff]
        %v1926 = vld [vmem:[#allocation4 + $0x8] sm:$0xff]
        %v1927 = vld [vmem:[#allocation4 + $0x10] sm:$0xff]
        %v1928 = vld [vmem:[#allocation4 + $0x18] sm:$0xff]
        %v1929 = vld [vmem:[#allocation4 + $0x20] sm:$0xff]
        %v1930 = vld [vmem:[#allocation4 + $0x28] sm:$0xff]
        %v1931 = vld [vmem:[#allocation4 + $0x30] sm:$0xff]
        %v1932 = vld [vmem:[#allocation4 + $0x38] sm:$0xff]
        %v1933 = vld [vmem:[#allocation4 + $0x40] sm:$0xff]
        %v1934 = vld [vmem:[#allocation4 + $0x48] sm:$0xff]
        %v1935 = vld [vmem:[#allocation4 + $0x50] sm:$0xff]
        %v1936 = vld [vmem:[#allocation4 + $0x58] sm:$0xff]
        %v1937 = vld [vmem:[#allocation4 + $0x60] sm:$0xff]
        %v1938 = vld [vmem:[#allocation4 + $0x68] sm:$0xff]
        %v1939 = vld [vmem:[#allocation4 + $0x70] sm:$0xff]
        %v1940 = vld [vmem:[#allocation4 + $0x78] sm:$0xff]
        %v1941 = vadd.f32 %v1925, 1e-16
        %v1942 = vadd.f32 %v1926, 1e-16
        %v1943 = vadd.f32 %v1927, 1e-16
        %v1944 = vadd.f32 %v1928, 1e-16
        %v1945 = vadd.f32 %v1929, 1e-16
        %v1946 = vadd.f32 %v1930, 1e-16
        %v1947 = vadd.f32 %v1931, 1e-16
        %v1948 = vadd.f32 %v1932, 1e-16
        %v1949 = vadd.f32 %v1933, 1e-16
        %v1950 = vadd.f32 %v1934, 1e-16
        %v1951 = vadd.f32 %v1935, 1e-16
        %v1952 = vadd.f32 %v1936, 1e-16
        %v1953 = vadd.f32 %v1937, 1e-16
        %v1954 = vadd.f32 %v1938, 1e-16
        %v1955 = vadd.f32 %v1939, 1e-16
        %v1956 = vadd.f32 %v1940, 1e-16
        %v1957 = vrcp.pop %v1941
        %v1958 = vmul.f32 %v1941, %v1957
        %v1959 = vsub.f32 1.0, %v1958
        %v1960 = vmul.f32 %v1957, %v1959
        %v1961 = vadd.f32 %v1957, %v1960
        %vm1962 = vweird.f32 %v1941
        %vm1963 = vweird.f32 %v1957
        %vm1964 = vmor %vm1962, %vm1963
        %v1965 = vsel %vm1964, %v1957, %v1961
        %v1966 = vand.u32 2147483647, %v1941
        %vm1967 = vcmp.eq.f32.partialorder %v1966, 8.507059e+37
        %v1968 = vand.u32 %v1941, 2147483648
        %v1969 = vor.u32 1.1754944e-38, %v1968
        %v1970 = vsel %vm1967, %v1969, %v1965
        %v1971 = vmul.f32 %v1909, %v1970
        %v1972 = vrcp.pop %v1942
        %v1973 = vmul.f32 %v1942, %v1972
        %v1974 = vsub.f32 1.0, %v1973
        %v1975 = vmul.f32 %v1972, %v1974
        %v1976 = vadd.f32 %v1972, %v1975
        %vm1977 = vweird.f32 %v1942
        %vm1978 = vweird.f32 %v1972
        %vm1979 = vmor %vm1977, %vm1978
        %v1980 = vsel %vm1979, %v1972, %v1976
        %v1981 = vand.u32 2147483647, %v1942
        %vm1982 = vcmp.eq.f32.partialorder %v1981, 8.507059e+37
        %v1983 = vand.u32 %v1942, 2147483648
        %v1984 = vor.u32 1.1754944e-38, %v1983
        %v1985 = vsel %vm1982, %v1984, %v1980
        %v1986 = vmul.f32 %v1910, %v1985
        %v1987 = vrcp.pop %v1943
        %v1988 = vmul.f32 %v1943, %v1987
        %v1989 = vsub.f32 1.0, %v1988
        %v1990 = vmul.f32 %v1987, %v1989
        %v1991 = vadd.f32 %v1987, %v1990
        %vm1992 = vweird.f32 %v1943
        %vm1993 = vweird.f32 %v1987
        %vm1994 = vmor %vm1992, %vm1993
        %v1995 = vsel %vm1994, %v1987, %v1991
        %v1996 = vand.u32 2147483647, %v1943
        %vm1997 = vcmp.eq.f32.partialorder %v1996, 8.507059e+37
        %v1998 = vand.u32 %v1943, 2147483648
        %v1999 = vor.u32 1.1754944e-38, %v1998
        %v2000 = vsel %vm1997, %v1999, %v1995
        %v2001 = vmul.f32 %v1911, %v2000
        %v2002 = vrcp.pop %v1944
        %v2003 = vmul.f32 %v1944, %v2002
        %v2004 = vsub.f32 1.0, %v2003
        %v2005 = vmul.f32 %v2002, %v2004
        %v2006 = vadd.f32 %v2002, %v2005
        %vm2007 = vweird.f32 %v1944
        %vm2008 = vweird.f32 %v2002
        %vm2009 = vmor %vm2007, %vm2008
        %v2010 = vsel %vm2009, %v2002, %v2006
        %v2011 = vand.u32 2147483647, %v1944
        %vm2012 = vcmp.eq.f32.partialorder %v2011, 8.507059e+37
        %v2013 = vand.u32 %v1944, 2147483648
        %v2014 = vor.u32 1.1754944e-38, %v2013
        %v2015 = vsel %vm2012, %v2014, %v2010
        %v2016 = vmul.f32 %v1912, %v2015
        %v2017 = vrcp.pop %v1945
        %v2018 = vmul.f32 %v1945, %v2017
        %v2019 = vsub.f32 1.0, %v2018
        %v2020 = vmul.f32 %v2017, %v2019
        %v2021 = vadd.f32 %v2017, %v2020
        %vm2022 = vweird.f32 %v1945
        %vm2023 = vweird.f32 %v2017
        %vm2024 = vmor %vm2022, %vm2023
        %v2025 = vsel %vm2024, %v2017, %v2021
        %v2026 = vand.u32 2147483647, %v1945
        %vm2027 = vcmp.eq.f32.partialorder %v2026, 8.507059e+37
        %v2028 = vand.u32 %v1945, 2147483648
        %v2029 = vor.u32 1.1754944e-38, %v2028
        %v2030 = vsel %vm2027, %v2029, %v2025
        %v2031 = vmul.f32 %v1913, %v2030
        %v2032 = vrcp.pop %v1946
        %v2033 = vmul.f32 %v1946, %v2032
        %v2034 = vsub.f32 1.0, %v2033
        %v2035 = vmul.f32 %v2032, %v2034
        %v2036 = vadd.f32 %v2032, %v2035
        %vm2037 = vweird.f32 %v1946
        %vm2038 = vweird.f32 %v2032
        %vm2039 = vmor %vm2037, %vm2038
        %v2040 = vsel %vm2039, %v2032, %v2036
        %v2041 = vand.u32 2147483647, %v1946
        %vm2042 = vcmp.eq.f32.partialorder %v2041, 8.507059e+37
        %v2043 = vand.u32 %v1946, 2147483648
        %v2044 = vor.u32 1.1754944e-38, %v2043
        %v2045 = vsel %vm2042, %v2044, %v2040
        %v2046 = vmul.f32 %v1914, %v2045
        %v2047 = vrcp.pop %v1947
        %v2048 = vmul.f32 %v1947, %v2047
        %v2049 = vsub.f32 1.0, %v2048
        %v2050 = vmul.f32 %v2047, %v2049
        %v2051 = vadd.f32 %v2047, %v2050
        %vm2052 = vweird.f32 %v1947
        %vm2053 = vweird.f32 %v2047
        %vm2054 = vmor %vm2052, %vm2053
        %v2055 = vsel %vm2054, %v2047, %v2051
        %v2056 = vand.u32 2147483647, %v1947
        %vm2057 = vcmp.eq.f32.partialorder %v2056, 8.507059e+37
        %v2058 = vand.u32 %v1947, 2147483648
        %v2059 = vor.u32 1.1754944e-38, %v2058
        %v2060 = vsel %vm2057, %v2059, %v2055
        %v2061 = vmul.f32 %v1915, %v2060
        %v2062 = vrcp.pop %v1948
        %v2063 = vmul.f32 %v1948, %v2062
        %v2064 = vsub.f32 1.0, %v2063
        %v2065 = vmul.f32 %v2062, %v2064
        %v2066 = vadd.f32 %v2062, %v2065
        %vm2067 = vweird.f32 %v1948
        %vm2068 = vweird.f32 %v2062
        %vm2069 = vmor %vm2067, %vm2068
        %v2070 = vsel %vm2069, %v2062, %v2066
        %v2071 = vand.u32 2147483647, %v1948
        %vm2072 = vcmp.eq.f32.partialorder %v2071, 8.507059e+37
        %v2073 = vand.u32 %v1948, 2147483648
        %v2074 = vor.u32 1.1754944e-38, %v2073
        %v2075 = vsel %vm2072, %v2074, %v2070
        %v2076 = vmul.f32 %v1916, %v2075
        %v2077 = vrcp.pop %v1949
        %v2078 = vmul.f32 %v1949, %v2077
        %v2079 = vsub.f32 1.0, %v2078
        %v2080 = vmul.f32 %v2077, %v2079
        %v2081 = vadd.f32 %v2077, %v2080
        %vm2082 = vweird.f32 %v1949
        %vm2083 = vweird.f32 %v2077
        %vm2084 = vmor %vm2082, %vm2083
        %v2085 = vsel %vm2084, %v2077, %v2081
        %v2086 = vand.u32 2147483647, %v1949
        %vm2087 = vcmp.eq.f32.partialorder %v2086, 8.507059e+37
        %v2088 = vand.u32 %v1949, 2147483648
        %v2089 = vor.u32 1.1754944e-38, %v2088
        %v2090 = vsel %vm2087, %v2089, %v2085
        %v2091 = vmul.f32 %v1917, %v2090
        %v2092 = vrcp.pop %v1950
        %v2093 = vmul.f32 %v1950, %v2092
        %v2094 = vsub.f32 1.0, %v2093
        %v2095 = vmul.f32 %v2092, %v2094
        %v2096 = vadd.f32 %v2092, %v2095
        %vm2097 = vweird.f32 %v1950
        %vm2098 = vweird.f32 %v2092
        %vm2099 = vmor %vm2097, %vm2098
        %v2100 = vsel %vm2099, %v2092, %v2096
        %v2101 = vand.u32 2147483647, %v1950
        %vm2102 = vcmp.eq.f32.partialorder %v2101, 8.507059e+37
        %v2103 = vand.u32 %v1950, 2147483648
        %v2104 = vor.u32 1.1754944e-38, %v2103
        %v2105 = vsel %vm2102, %v2104, %v2100
        %v2106 = vmul.f32 %v1918, %v2105
        %v2107 = vrcp.pop %v1951
        %v2108 = vmul.f32 %v1951, %v2107
        %v2109 = vsub.f32 1.0, %v2108
        %v2110 = vmul.f32 %v2107, %v2109
        %v2111 = vadd.f32 %v2107, %v2110
        %vm2112 = vweird.f32 %v1951
        %vm2113 = vweird.f32 %v2107
        %vm2114 = vmor %vm2112, %vm2113
        %v2115 = vsel %vm2114, %v2107, %v2111
        %v2116 = vand.u32 2147483647, %v1951
        %vm2117 = vcmp.eq.f32.partialorder %v2116, 8.507059e+37
        %v2118 = vand.u32 %v1951, 2147483648
        %v2119 = vor.u32 1.1754944e-38, %v2118
        %v2120 = vsel %vm2117, %v2119, %v2115
        %v2121 = vmul.f32 %v1919, %v2120
        %v2122 = vrcp.pop %v1952
        %v2123 = vmul.f32 %v1952, %v2122
        %v2124 = vsub.f32 1.0, %v2123
        %v2125 = vmul.f32 %v2122, %v2124
        %v2126 = vadd.f32 %v2122, %v2125
        %vm2127 = vweird.f32 %v1952
        %vm2128 = vweird.f32 %v2122
        %vm2129 = vmor %vm2127, %vm2128
        %v2130 = vsel %vm2129, %v2122, %v2126
        %v2131 = vand.u32 2147483647, %v1952
        %vm2132 = vcmp.eq.f32.partialorder %v2131, 8.507059e+37
        %v2133 = vand.u32 %v1952, 2147483648
        %v2134 = vor.u32 1.1754944e-38, %v2133
        %v2135 = vsel %vm2132, %v2134, %v2130
        %v2136 = vmul.f32 %v1920, %v2135
        %v2137 = vrcp.pop %v1953
        %v2138 = vmul.f32 %v1953, %v2137
        %v2139 = vsub.f32 1.0, %v2138
        %v2140 = vmul.f32 %v2137, %v2139
        %v2141 = vadd.f32 %v2137, %v2140
        %vm2142 = vweird.f32 %v1953
        %vm2143 = vweird.f32 %v2137
        %vm2144 = vmor %vm2142, %vm2143
        %v2145 = vsel %vm2144, %v2137, %v2141
        %v2146 = vand.u32 2147483647, %v1953
        %vm2147 = vcmp.eq.f32.partialorder %v2146, 8.507059e+37
        %v2148 = vand.u32 %v1953, 2147483648
        %v2149 = vor.u32 1.1754944e-38, %v2148
        %v2150 = vsel %vm2147, %v2149, %v2145
        %v2151 = vmul.f32 %v1921, %v2150
        %v2152 = vrcp.pop %v1954
        %v2153 = vmul.f32 %v1954, %v2152
        %v2154 = vsub.f32 1.0, %v2153
        %v2155 = vmul.f32 %v2152, %v2154
        %v2156 = vadd.f32 %v2152, %v2155
        %vm2157 = vweird.f32 %v1954
        %vm2158 = vweird.f32 %v2152
        %vm2159 = vmor %vm2157, %vm2158
        %v2160 = vsel %vm2159, %v2152, %v2156
        %v2161 = vand.u32 2147483647, %v1954
        %vm2162 = vcmp.eq.f32.partialorder %v2161, 8.507059e+37
        %v2163 = vand.u32 %v1954, 2147483648
        %v2164 = vor.u32 1.1754944e-38, %v2163
        %v2165 = vsel %vm2162, %v2164, %v2160
        %v2166 = vmul.f32 %v1922, %v2165
        %v2167 = vrcp.pop %v1955
        %v2168 = vmul.f32 %v1955, %v2167
        %v2169 = vsub.f32 1.0, %v2168
        %v2170 = vmul.f32 %v2167, %v2169
        %v2171 = vadd.f32 %v2167, %v2170
        %vm2172 = vweird.f32 %v1955
        %vm2173 = vweird.f32 %v2167
        %vm2174 = vmor %vm2172, %vm2173
        %v2175 = vsel %vm2174, %v2167, %v2171
        %v2176 = vand.u32 2147483647, %v1955
        %vm2177 = vcmp.eq.f32.partialorder %v2176, 8.507059e+37
        %v2178 = vand.u32 %v1955, 2147483648
        %v2179 = vor.u32 1.1754944e-38, %v2178
        %v2180 = vsel %vm2177, %v2179, %v2175
        %v2181 = vmul.f32 %v1923, %v2180
        %v2182 = vrcp.pop %v1956
        %v2183 = vmul.f32 %v1956, %v2182
        %v2184 = vsub.f32 1.0, %v2183
        %v2185 = vmul.f32 %v2182, %v2184
        %v2186 = vadd.f32 %v2182, %v2185
        %vm2187 = vweird.f32 %v1956
        %vm2188 = vweird.f32 %v2182
        %vm2189 = vmor %vm2187, %vm2188
        %v2190 = vsel %vm2189, %v2182, %v2186
        %v2191 = vand.u32 2147483647, %v1956
        %vm2192 = vcmp.eq.f32.partialorder %v2191, 8.507059e+37
        %v2193 = vand.u32 %v1956, 2147483648
        %v2194 = vor.u32 1.1754944e-38, %v2193
        %v2195 = vsel %vm2192, %v2194, %v2190
        %v2196 = vmul.f32 %v1924, %v2195
        %v2197 = vadd.f32 %v1893, %v1971
        %v2198 = vadd.f32 %v1894, %v1986
        %v2199 = vadd.f32 %v1895, %v2001
        %v2200 = vadd.f32 %v1896, %v2016
        %v2201 = vadd.f32 %v1897, %v2031
        %v2202 = vadd.f32 %v1898, %v2046
        %v2203 = vadd.f32 %v1899, %v2061
        %v2204 = vadd.f32 %v1900, %v2076
        %v2205 = vadd.f32 %v1901, %v2091
        %v2206 = vadd.f32 %v1902, %v2106
        %v2207 = vadd.f32 %v1903, %v2121
        %v2208 = vadd.f32 %v1904, %v2136
        %v2209 = vadd.f32 %v1905, %v2151
        %v2210 = vadd.f32 %v1906, %v2166
        %v2211 = vadd.f32 %v1907, %v2181
        %v2212 = vadd.f32 %v1908, %v2196
        %v2213 = vld [vmem:[%s8] sm:$0xff]
        %v2214 = vld [vmem:[%s8 + $0x8] sm:$0xff]
        %v2215 = vld [vmem:[%s8 + $0x10] sm:$0xff]
        %v2216 = vld [vmem:[%s8 + $0x18] sm:$0xff]
        %v2217 = vld [vmem:[%s8 + $0x20] sm:$0xff]
        %v2218 = vld [vmem:[%s8 + $0x28] sm:$0xff]
        %v2219 = vld [vmem:[%s8 + $0x30] sm:$0xff]
        %v2220 = vld [vmem:[%s8 + $0x38] sm:$0xff]
        %v2221 = vld [vmem:[%s8 + $0x40] sm:$0xff]
        %v2222 = vld [vmem:[%s8 + $0x48] sm:$0xff]
        %v2223 = vld [vmem:[%s8 + $0x50] sm:$0xff]
        %v2224 = vld [vmem:[%s8 + $0x58] sm:$0xff]
        %v2225 = vld [vmem:[%s8 + $0x60] sm:$0xff]
        %v2226 = vld [vmem:[%s8 + $0x68] sm:$0xff]
        %v2227 = vld [vmem:[%s8 + $0x70] sm:$0xff]
        %v2228 = vld [vmem:[%s8 + $0x78] sm:$0xff]
        %vm2229 = vcmp.gt.f32.partialorder %v2213, 0.0
        %vm2230 = vcmp.gt.f32.partialorder %v2214, 0.0
        %vm2231 = vcmp.gt.f32.partialorder %v2215, 0.0
        %vm2232 = vcmp.gt.f32.partialorder %v2216, 0.0
        %vm2233 = vcmp.gt.f32.partialorder %v2217, 0.0
        %vm2234 = vcmp.gt.f32.partialorder %v2218, 0.0
        %vm2235 = vcmp.gt.f32.partialorder %v2219, 0.0
        %vm2236 = vcmp.gt.f32.partialorder %v2220, 0.0
        %vm2237 = vcmp.gt.f32.partialorder %v2221, 0.0
        %vm2238 = vcmp.gt.f32.partialorder %v2222, 0.0
        %vm2239 = vcmp.gt.f32.partialorder %v2223, 0.0
        %vm2240 = vcmp.gt.f32.partialorder %v2224, 0.0
        %vm2241 = vcmp.gt.f32.partialorder %v2225, 0.0
        %vm2242 = vcmp.gt.f32.partialorder %v2226, 0.0
        %vm2243 = vcmp.gt.f32.partialorder %v2227, 0.0
        %vm2244 = vcmp.gt.f32.partialorder %v2228, 0.0
        %v2245 = vsel %vm2229, 1, 0
        %v2246 = vsel %vm2230, 1, 0
        %v2247 = vsel %vm2231, 1, 0
        %v2248 = vsel %vm2232, 1, 0
        %v2249 = vsel %vm2233, 1, 0
        %v2250 = vsel %vm2234, 1, 0
        %v2251 = vsel %vm2235, 1, 0
        %v2252 = vsel %vm2236, 1, 0
        %v2253 = vsel %vm2237, 1, 0
        %v2254 = vsel %vm2238, 1, 0
        %v2255 = vsel %vm2239, 1, 0
        %v2256 = vsel %vm2240, 1, 0
        %v2257 = vsel %vm2241, 1, 0
        %v2258 = vsel %vm2242, 1, 0
        %v2259 = vsel %vm2243, 1, 0
        %v2260 = vsel %vm2244, 1, 0
        %2261 = vset.pattern.permute.xlu0 0
        %2262 = vperm.xlu0 %2261, %v2245
        %v2263 = vpop.permute.xlu0 %2262
        %2264 = vset.pattern.permute.xlu0 0
        %2265 = vperm.xlu0 %2264, %v2246
        %v2266 = vpop.permute.xlu0 %2265
        %2267 = vset.pattern.permute.xlu0 0
        %2268 = vperm.xlu0 %2267, %v2247
        %v2269 = vpop.permute.xlu0 %2268
        %2270 = vset.pattern.permute.xlu0 0
        %2271 = vperm.xlu0 %2270, %v2248
        %v2272 = vpop.permute.xlu0 %2271
        %2273 = vset.pattern.permute.xlu0 0
        %2274 = vperm.xlu0 %2273, %v2249
        %v2275 = vpop.permute.xlu0 %2274
        %2276 = vset.pattern.permute.xlu0 0
        %2277 = vperm.xlu0 %2276, %v2250
        %v2278 = vpop.permute.xlu0 %2277
        %2279 = vset.pattern.permute.xlu0 0
        %2280 = vperm.xlu0 %2279, %v2251
        %v2281 = vpop.permute.xlu0 %2280
        %2282 = vset.pattern.permute.xlu0 0
        %2283 = vperm.xlu0 %2282, %v2252
        %v2284 = vpop.permute.xlu0 %2283
        %2285 = vset.pattern.permute.xlu0 0
        %2286 = vperm.xlu0 %2285, %v2253
        %v2287 = vpop.permute.xlu0 %2286
        %2288 = vset.pattern.permute.xlu0 0
        %2289 = vperm.xlu0 %2288, %v2254
        %v2290 = vpop.permute.xlu0 %2289
        %2291 = vset.pattern.permute.xlu0 0
        %2292 = vperm.xlu0 %2291, %v2255
        %v2293 = vpop.permute.xlu0 %2292
        %2294 = vset.pattern.permute.xlu0 0
        %2295 = vperm.xlu0 %2294, %v2256
        %v2296 = vpop.permute.xlu0 %2295
        %2297 = vset.pattern.permute.xlu0 0
        %2298 = vperm.xlu0 %2297, %v2257
        %v2299 = vpop.permute.xlu0 %2298
        %2300 = vset.pattern.permute.xlu0 0
        %2301 = vperm.xlu0 %2300, %v2258
        %v2302 = vpop.permute.xlu0 %2301
        %2303 = vset.pattern.permute.xlu0 0
        %2304 = vperm.xlu0 %2303, %v2259
        %v2305 = vpop.permute.xlu0 %2304
        %2306 = vset.pattern.permute.xlu0 0
        %2307 = vperm.xlu0 %2306, %v2260
        %v2308 = vpop.permute.xlu0 %2307
        %vm2309 = vcmp.eq.s32.totalorder %v2263, 1
        %vm2310 = vcmp.eq.s32.totalorder %v2266, 1
        %vm2311 = vcmp.eq.s32.totalorder %v2269, 1
        %vm2312 = vcmp.eq.s32.totalorder %v2272, 1
        %vm2313 = vcmp.eq.s32.totalorder %v2275, 1
        %vm2314 = vcmp.eq.s32.totalorder %v2278, 1
        %vm2315 = vcmp.eq.s32.totalorder %v2281, 1
        %vm2316 = vcmp.eq.s32.totalorder %v2284, 1
        %vm2317 = vcmp.eq.s32.totalorder %v2287, 1
        %vm2318 = vcmp.eq.s32.totalorder %v2290, 1
        %vm2319 = vcmp.eq.s32.totalorder %v2293, 1
        %vm2320 = vcmp.eq.s32.totalorder %v2296, 1
        %vm2321 = vcmp.eq.s32.totalorder %v2299, 1
        %vm2322 = vcmp.eq.s32.totalorder %v2302, 1
        %vm2323 = vcmp.eq.s32.totalorder %v2305, 1
        %vm2324 = vcmp.eq.s32.totalorder %v2308, 1
        %v2325 = vsel %vm2309, %v2197, 0.0
        %v2326 = vsel %vm2310, %v2198, 0.0
        %v2327 = vsel %vm2311, %v2199, 0.0
        %v2328 = vsel %vm2312, %v2200, 0.0
        %v2329 = vsel %vm2313, %v2201, 0.0
        %v2330 = vsel %vm2314, %v2202, 0.0
        %v2331 = vsel %vm2315, %v2203, 0.0
        %v2332 = vsel %vm2316, %v2204, 0.0
        %v2333 = vsel %vm2317, %v2205, 0.0
        %v2334 = vsel %vm2318, %v2206, 0.0
        %v2335 = vsel %vm2319, %v2207, 0.0
        %v2336 = vsel %vm2320, %v2208, 0.0
        %v2337 = vsel %vm2321, %v2209, 0.0
        %v2338 = vsel %vm2322, %v2210, 0.0
        %v2339 = vsel %vm2323, %v2211, 0.0
        %v2340 = vsel %vm2324, %v2212, 0.0
        %v2341 = vmax.f32 %v2325, 0.0
        %v2342 = vmax.f32 %v2326, 0.0
        %v2343 = vmax.f32 %v2327, 0.0
        %v2344 = vmax.f32 %v2328, 0.0
        %v2345 = vmax.f32 %v2329, 0.0
        %v2346 = vmax.f32 %v2330, 0.0
        %v2347 = vmax.f32 %v2331, 0.0
        %v2348 = vmax.f32 %v2332, 0.0
        %v2349 = vmax.f32 %v2333, 0.0
        %v2350 = vmax.f32 %v2334, 0.0
        %v2351 = vmax.f32 %v2335, 0.0
        %v2352 = vmax.f32 %v2336, 0.0
        %v2353 = vmax.f32 %v2337, 0.0
        %v2354 = vmax.f32 %v2338, 0.0
        %v2355 = vmax.f32 %v2339, 0.0
        %v2356 = vmax.f32 %v2340, 0.0
        %2357 = vst [vmem:[%s10] sm:$0xff] %v2341
        %2358 = vst [vmem:[%s10 + $0x8] sm:$0xff] %v2342
        %2359 = vst [vmem:[%s10 + $0x10] sm:$0xff] %v2343
        %2360 = vst [vmem:[%s10 + $0x18] sm:$0xff] %v2344
        %2361 = vst [vmem:[%s10 + $0x20] sm:$0xff] %v2345
        %2362 = vst [vmem:[%s10 + $0x28] sm:$0xff] %v2346
        %2363 = vst [vmem:[%s10 + $0x30] sm:$0xff] %v2347
        %2364 = vst [vmem:[%s10 + $0x38] sm:$0xff] %v2348
        %2365 = vst [vmem:[%s10 + $0x40] sm:$0xff] %v2349
        %2366 = vst [vmem:[%s10 + $0x48] sm:$0xff] %v2350
        %2367 = vst [vmem:[%s10 + $0x50] sm:$0xff] %v2351
        %2368 = vst [vmem:[%s10 + $0x58] sm:$0xff] %v2352
        %2369 = vst [vmem:[%s10 + $0x60] sm:$0xff] %v2353
        %2370 = vst [vmem:[%s10 + $0x68] sm:$0xff] %v2354
        %2371 = vst [vmem:[%s10 + $0x70] sm:$0xff] %v2355
        %2372 = vst [vmem:[%s10 + $0x78] sm:$0xff] %v2356
      $region64: #{_lambda_.6} parent=55 // pred_fallthru
        _
      %s2373 = smul.u32 16, %s22
      %p2374 = scmp.lt.s32.totalorder %s2373, 31
      %s2375 = scalar_select %p2374, %s2373, 31
      %s2376 = smul.addr %s2375, 8
      %s2377 = scalar_lea.vmem %s9, %s2376
      // Predicated region
      $region65: #{_lambda_.6} parent=55 // pred_check
        %p2378 = pneg %p244
      $region66: #{_lambda_.6} parent=55 // pred_check_branch
        %2380 = sbr.rel (%p2378) target = $region68
      $region67: #{_lambda_.6} parent=55 // pred_region
        %s2381 = smul.u32 16, %s22
      $region68: #{_lambda_.6} parent=55 // pred_fallthru
        _
      // Predicated region
      $region69: #{_lambda_.6} parent=55 // pred_check
        %p2382 = pneg %p265
      $region70: #{_lambda_.6} parent=55 // pred_check_branch
        %2384 = sbr.rel (%p2382) target = $region72
      $region71: #{_lambda_.6} parent=55 // pred_region
        _
      $region72: #{_lambda_.6} parent=55 // pred_fallthru
        _
      // Predicated region
      $region73: #{_lambda_.6} parent=55 // pred_check
        %p2385 = pneg %p265
      $region74: #{_lambda_.6} parent=55 // pred_check_branch
        %2387 = sbr.rel (%p2385) target = $region76
      $region75: #{_lambda_.6} parent=55 // pred_region
        _
      $region76: #{_lambda_.6} parent=55 // pred_fallthru
        _
    $region56: #{_lambda_.6} parent=5 // pred_fallthru
      _
    %p2388 = scmp.le.s32.totalorder 2, %s17
    // Predicated region
    $region77: #{_lambda_.6} parent=5 // pred_check
      %p2389 = pneg %p2388
    $region78: #{_lambda_.6} parent=5 // pred_check_branch
      %2391 = sbr.rel (%p2389) target = $region80
    $region79: #{_lambda_.6} parent=5 // pred_region
      %s2392 = ssub.s32 %s17, 2
      // Predicated region
      $region81: #{_lambda_.6} parent=79 // pred_check
        %p2393 = pneg %p250
      $region82: #{_lambda_.6} parent=79 // pred_check_branch
        %2395 = sbr.rel (%p2393) target = $region84
      $region83: #{_lambda_.6} parent=79 // pred_region
        %s2396 = smul.u32 16, %s23
        %p2397 = scmp.lt.s32.totalorder %s2396, 31
        %s2398 = scalar_select %p2397, %s2396, 31
        %s2399 = smul.addr %s2398, 8
        %s2400 = scalar_lea.vmem %s9, %s2399
      $region84: #{_lambda_.6} parent=79 // pred_fallthru
        _
    $region80: #{_lambda_.6} parent=5 // pred_fallthru
      _
  $region6: #{_lambda_.6} parent=0 // loop_footer
    %s21 = sadd.s32 1, %s17
  $region7: #{_lambda_.6} parent=0 // loop_footer_branch
    %16 = sbr.rel target = $region3
  $region8: #{_lambda_.6} parent=0 // loop_exit
    _

// kernel: _lambda_.8
$region0: #{_lambda_.8}
  #allocation0 [shape = 'u32[]', space=smem, size = 0x4, offset = 0x4, fixed_abs, tag = 'smem constant byte address 0x4 - core index']
  #allocation1 [shape = 'u32[72,128]{1,0:T(1,128)}', space=vmem, size = 0x9000, scoped, tag = 'internal scratch']
  #allocation2 [shape = 'f32[128,512]{1,0:T(8,128)}', space=vmem, size = 0x40000, scoped, tag = 'scratch operand']
  #allocation3 [shape = 'f32[128,128]{1,0:T(8,128)}', space=vmem, size = 0x10000, scoped, tag = 'scratch operand']
  #allocation4 [shape = 'f32[128,128]{1,0:T(8,128)}', space=vmem, size = 0x10000, scoped, tag = 'scratch operand']
  %s0 = inlined_call_operand.vmem [shape: f32[128,128], index: 0, kind: input, shape index: {}]
  %s1 = inlined_call_operand.vmem [shape: f32[128,512], index: 1, kind: input, shape index: {}]
  %s2 = inlined_call_operand.vmem [shape: f32[1,512], index: 2, kind: input, shape index: {}]
  %s3 = inlined_call_operand.vmem [shape: bf16[256,128], index: 3, kind: input, shape index: {}]
  %s4 = inlined_call_operand.vmem [shape: bf16[256,128], index: 4, kind: input, shape index: {}]
  %s5 = inlined_call_operand.vmem [shape: f32[256,128], index: 5, kind: input, shape index: {}]
  %s6 = inlined_call_operand.vmem [shape: f32[128,128], index: 6, kind: input, shape index: {}]
  %s7 = inlined_call_operand.vmem [shape: f32[1,128], index: 7, kind: input, shape index: {}]
  %s8 = inlined_call_operand.vmem [shape: f32[128,1], index: 8, kind: input, shape index: {}]
  %s9 = inlined_call_operand.hbm [shape: f32[256,128], index: 9, kind: output, shape index: {0}]
  %s10 = inlined_call_operand.vmem [shape: f32[128,128], index: 10, kind: output, shape index: {1}]
  %11 = xla_tuple %s9, %s10
  %s12 = sld [smem:[#allocation0]]
  $region85: #{_lambda_.8} parent=0
    _
  %s14 = ssub.s32 1, %s12
  %s15 = scalar_select 0, %s14, %s12
  $region1: #{_lambda_.8} parent=0
    #allocation5 [shape = 'u8[131072]{0}', space=vmem, size = 0x20000, scoped, tag = 'output window, operand 0']
    #allocation6 [shape = 's32[2]{0}', space=sflag, size = 0x8, scoped, tag = 'scoped memory for _lambda_.8']
    %16 = vsyncpa [#allocation6], 0
    %s17 = scalar_lea.sflag [#allocation6], 1
    %18 = vsyncpa %s17, 0
    loop: start=0, step=1, limit=4
    $region2: #{_lambda_.8} parent=1 // loop_pre_header
      _
    $region3: #{_lambda_.8} parent=1 // loop_header
      %s20 = sphi 0, %s24
      %p21 = scmp.ge.s32.totalorder %s20, 4
      %s28 = sphi 0, %s28
      %s30 = sphi 0, %s28
      %s31 = sphi 0, %s30
      %s45 = sphi 0, %s31
      %s49 = sphi 0, %s49
      %s51 = sphi 0, %s49
      %s52 = sphi 0, %s51
      %s66 = sphi 0, %s52
      %s70 = sphi 0, %s70
      %s72 = sphi 0, %s70
      %s73 = sphi 0, %s72
      %s87 = sphi 0, %s73
      %s93 = sphi 0, %s95
      %s96 = sphi 0, %s93
      %s97 = sphi 0, %s96
      %s113 = sphi 0, %s97
      %s119 = sphi 0, %s121
      %s122 = sphi 0, %s119
      %s123 = sphi 0, %s122
      %s139 = sphi 0, %s123
      %s145 = sphi 0, %s147
      %s148 = sphi 0, %s145
      %s149 = sphi 0, %s148
      %s165 = sphi 0, %s149
      %s169 = sphi 0, %s169
      %s171 = sphi 0, %s169
      %s172 = sphi 0, %s171
      %s186 = sphi 0, %s172
      %s190 = sphi 0, %s190
      %s192 = sphi 0, %s190
      %s193 = sphi 0, %s192
      %s207 = sphi 0, %s193
      %s211 = sphi 0, %s211
      %s213 = sphi 0, %s211
      %s214 = sphi 0, %s213
      %s228 = sphi 0, %s214
      %s234 = sphi 0, %s236
      %s237 = sphi 0, %s234
      %s238 = sphi 0, %s237
      %s254 = sphi 0, %s238
      %s258 = sphi 0, %s258
      %s260 = sphi 0, %s258
      %s261 = sphi 0, %s260
      %s275 = sphi 0, %s261
    $region4: #{_lambda_.8} parent=1 // loop_header_branch
      %23 = sbr.rel (%p21) target = $region8
    $region5: #{_lambda_.8} parent=1 // loop_body
      %s25 = ssub.s32 %s20, 1
      %s26 = ssub.s32 %s20, 2
      %s27 = sadd.s32 %s20, 1
      %s29 = sadd.s32 %s28, 1
      %p32 = scmp.eq.s32.totalorder %s20, 1
      %p33 = scmp.ne.s32.totalorder %s28, %s30
      %p34 = scmp.eq.s32.totalorder %s20, 0
      %p35 = por %p33, %p34
      %p36 = scmp.ne.s32.totalorder %s28, %s30
      %p37 = scmp.eq.s32.totalorder %s25, 1
      %p38 = por %p36, %p37
      %p39 = scmp.ne.s32.totalorder %s30, %s31
      %p40 = scmp.eq.s32.totalorder %s25, 0
      %p41 = por %p39, %p40
      %p42 = scmp.ne.s32.totalorder %s30, %s31
      %p43 = scmp.eq.s32.totalorder %s26, 1
      %p44 = por %p42, %p43
      %p46 = scmp.ne.s32.totalorder %s31, %s45
      %p47 = scmp.eq.s32.totalorder %s26, 0
      %p48 = por %p46, %p47
      %s50 = sadd.s32 %s49, 1
      %p53 = scmp.eq.s32.totalorder %s20, 1
      %p54 = scmp.ne.s32.totalorder %s49, %s51
      %p55 = scmp.eq.s32.totalorder %s20, 0
      %p56 = por %p54, %p55
      %p57 = scmp.ne.s32.totalorder %s49, %s51
      %p58 = scmp.eq.s32.totalorder %s25, 1
      %p59 = por %p57, %p58
      %p60 = scmp.ne.s32.totalorder %s51, %s52
      %p61 = scmp.eq.s32.totalorder %s25, 0
      %p62 = por %p60, %p61
      %p63 = scmp.ne.s32.totalorder %s51, %s52
      %p64 = scmp.eq.s32.totalorder %s26, 1
      %p65 = por %p63, %p64
      %p67 = scmp.ne.s32.totalorder %s52, %s66
      %p68 = scmp.eq.s32.totalorder %s26, 0
      %p69 = por %p67, %p68
      %s71 = sadd.s32 %s70, 1
      %p74 = scmp.eq.s32.totalorder %s20, 1
      %p75 = scmp.ne.s32.totalorder %s70, %s72
      %p76 = scmp.eq.s32.totalorder %s20, 0
      %p77 = por %p75, %p76
      %p78 = scmp.ne.s32.totalorder %s70, %s72
      %p79 = scmp.eq.s32.totalorder %s25, 1
      %p80 = por %p78, %p79
      %p81 = scmp.ne.s32.totalorder %s72, %s73
      %p82 = scmp.eq.s32.totalorder %s25, 0
      %p83 = por %p81, %p82
      %p84 = scmp.ne.s32.totalorder %s72, %s73
      %p85 = scmp.eq.s32.totalorder %s26, 1
      %p86 = por %p84, %p85
      %p88 = scmp.ne.s32.totalorder %s73, %s87
      %p89 = scmp.eq.s32.totalorder %s26, 0
      %p90 = por %p88, %p89
      %s91 = ssub.s32 %s20, %s27
      %p92 = scmp.eq.s32.totalorder %s91, 0
      %s94 = sadd.s32 %s93, 1
      %s95 = scalar_select %p92, %s93, %s94
      %p98 = pneg %p92
      %p99 = scmp.eq.s32.totalorder %s20, 1
      %p100 = por %p98, %p99
      %p101 = scmp.ne.s32.totalorder %s93, %s96
      %p102 = scmp.eq.s32.totalorder %s20, 0
      %p103 = por %p101, %p102
      %p104 = scmp.ne.s32.totalorder %s93, %s96
      %p105 = scmp.eq.s32.totalorder %s25, 1
      %p106 = por %p104, %p105
      %p107 = scmp.ne.s32.totalorder %s96, %s97
      %p108 = scmp.eq.s32.totalorder %s25, 0
      %p109 = por %p107, %p108
      %p110 = scmp.ne.s32.totalorder %s96, %s97
      %p111 = scmp.eq.s32.totalorder %s26, 1
      %p112 = por %p110, %p111
      %p114 = scmp.ne.s32.totalorder %s97, %s113
      %p115 = scmp.eq.s32.totalorder %s26, 0
      %p116 = por %p114, %p115
      %s117 = ssub.s32 %s20, %s27
      %p118 = scmp.eq.s32.totalorder %s117, 0
      %s120 = sadd.s32 %s119, 1
      %s121 = scalar_select %p118, %s119, %s120
      %p124 = pneg %p118
      %p125 = scmp.eq.s32.totalorder %s20, 1
      %p126 = por %p124, %p125
      %p127 = scmp.ne.s32.totalorder %s119, %s122
      %p128 = scmp.eq.s32.totalorder %s20, 0
      %p129 = por %p127, %p128
      %p130 = scmp.ne.s32.totalorder %s119, %s122
      %p131 = scmp.eq.s32.totalorder %s25, 1
      %p132 = por %p130, %p131
      %p133 = scmp.ne.s32.totalorder %s122, %s123
      %p134 = scmp.eq.s32.totalorder %s25, 0
      %p135 = por %p133, %p134
      %p136 = scmp.ne.s32.totalorder %s122, %s123
      %p137 = scmp.eq.s32.totalorder %s26, 1
      %p138 = por %p136, %p137
      %p140 = scmp.ne.s32.totalorder %s123, %s139
      %p141 = scmp.eq.s32.totalorder %s26, 0
      %p142 = por %p140, %p141
      %s143 = ssub.s32 %s20, %s27
      %p144 = scmp.eq.s32.totalorder %s143, 0
      %s146 = sadd.s32 %s145, 1
      %s147 = scalar_select %p144, %s145, %s146
      %p150 = pneg %p144
      %p151 = scmp.eq.s32.totalorder %s20, 1
      %p152 = por %p150, %p151
      %p153 = scmp.ne.s32.totalorder %s145, %s148
      %p154 = scmp.eq.s32.totalorder %s20, 0
      %p155 = por %p153, %p154
      %p156 = scmp.ne.s32.totalorder %s145, %s148
      %p157 = scmp.eq.s32.totalorder %s25, 1
      %p158 = por %p156, %p157
      %p159 = scmp.ne.s32.totalorder %s148, %s149
      %p160 = scmp.eq.s32.totalorder %s25, 0
      %p161 = por %p159, %p160
      %p162 = scmp.ne.s32.totalorder %s148, %s149
      %p163 = scmp.eq.s32.totalorder %s26, 1
      %p164 = por %p162, %p163
      %p166 = scmp.ne.s32.totalorder %s149, %s165
      %p167 = scmp.eq.s32.totalorder %s26, 0
      %p168 = por %p166, %p167
      %s170 = sadd.s32 %s169, 1
      %p173 = scmp.eq.s32.totalorder %s20, 1
      %p174 = scmp.ne.s32.totalorder %s169, %s171
      %p175 = scmp.eq.s32.totalorder %s20, 0
      %p176 = por %p174, %p175
      %p177 = scmp.ne.s32.totalorder %s169, %s171
      %p178 = scmp.eq.s32.totalorder %s25, 1
      %p179 = por %p177, %p178
      %p180 = scmp.ne.s32.totalorder %s171, %s172
      %p181 = scmp.eq.s32.totalorder %s25, 0
      %p182 = por %p180, %p181
      %p183 = scmp.ne.s32.totalorder %s171, %s172
      %p184 = scmp.eq.s32.totalorder %s26, 1
      %p185 = por %p183, %p184
      %p187 = scmp.ne.s32.totalorder %s172, %s186
      %p188 = scmp.eq.s32.totalorder %s26, 0
      %p189 = por %p187, %p188
      %s191 = sadd.s32 %s190, 1
      %p194 = scmp.eq.s32.totalorder %s20, 1
      %p195 = scmp.ne.s32.totalorder %s190, %s192
      %p196 = scmp.eq.s32.totalorder %s20, 0
      %p197 = por %p195, %p196
      %p198 = scmp.ne.s32.totalorder %s190, %s192
      %p199 = scmp.eq.s32.totalorder %s25, 1
      %p200 = por %p198, %p199
      %p201 = scmp.ne.s32.totalorder %s192, %s193
      %p202 = scmp.eq.s32.totalorder %s25, 0
      %p203 = por %p201, %p202
      %p204 = scmp.ne.s32.totalorder %s192, %s193
      %p205 = scmp.eq.s32.totalorder %s26, 1
      %p206 = por %p204, %p205
      %p208 = scmp.ne.s32.totalorder %s193, %s207
      %p209 = scmp.eq.s32.totalorder %s26, 0
      %p210 = por %p208, %p209
      %s212 = sadd.s32 %s211, 1
      %p215 = scmp.eq.s32.totalorder %s20, 1
      %p216 = scmp.ne.s32.totalorder %s211, %s213
      %p217 = scmp.eq.s32.totalorder %s20, 0
      %p218 = por %p216, %p217
      %p219 = scmp.ne.s32.totalorder %s211, %s213
      %p220 = scmp.eq.s32.totalorder %s25, 1
      %p221 = por %p219, %p220
      %p222 = scmp.ne.s32.totalorder %s213, %s214
      %p223 = scmp.eq.s32.totalorder %s25, 0
      %p224 = por %p222, %p223
      %p225 = scmp.ne.s32.totalorder %s213, %s214
      %p226 = scmp.eq.s32.totalorder %s26, 1
      %p227 = por %p225, %p226
      %p229 = scmp.ne.s32.totalorder %s214, %s228
      %p230 = scmp.eq.s32.totalorder %s26, 0
      %p231 = por %p229, %p230
      %s232 = ssub.s32 %s20, %s27
      %p233 = scmp.eq.s32.totalorder %s232, 0
      %s235 = sadd.s32 %s234, 1
      %s236 = scalar_select %p233, %s234, %s235
      %p239 = pneg %p233
      %p240 = scmp.eq.s32.totalorder %s20, 1
      %p241 = por %p239, %p240
      %p242 = scmp.ne.s32.totalorder %s234, %s237
      %p243 = scmp.eq.s32.totalorder %s20, 0
      %p244 = por %p242, %p243
      %p245 = scmp.ne.s32.totalorder %s234, %s237
      %p246 = scmp.eq.s32.totalorder %s25, 1
      %p247 = por %p245, %p246
      %p248 = scmp.ne.s32.totalorder %s237, %s238
      %p249 = scmp.eq.s32.totalorder %s25, 0
      %p250 = por %p248, %p249
      %p251 = scmp.ne.s32.totalorder %s237, %s238
      %p252 = scmp.eq.s32.totalorder %s26, 1
      %p253 = por %p251, %p252
      %p255 = scmp.ne.s32.totalorder %s238, %s254
      %p256 = scmp.eq.s32.totalorder %s26, 0
      %p257 = por %p255, %p256
      %s259 = sadd.s32 %s258, 1
      %p262 = scmp.eq.s32.totalorder %s20, 1
      %p263 = scmp.ne.s32.totalorder %s258, %s260
      %p264 = scmp.eq.s32.totalorder %s20, 0
      %p265 = por %p263, %p264
      %p266 = scmp.ne.s32.totalorder %s258, %s260
      %p267 = scmp.eq.s32.totalorder %s25, 1
      %p268 = por %p266, %p267
      %p269 = scmp.ne.s32.totalorder %s260, %s261
      %p270 = scmp.eq.s32.totalorder %s25, 0
      %p271 = por %p269, %p270
      %p272 = scmp.ne.s32.totalorder %s260, %s261
      %p273 = scmp.eq.s32.totalorder %s26, 1
      %p274 = por %p272, %p273
      %p276 = scmp.ne.s32.totalorder %s261, %s275
      %p277 = scmp.eq.s32.totalorder %s26, 0
      %p278 = por %p276, %p277
      %p279 = scmp.le.s32.totalorder 1, %s20
      %p280 = scmp.lt.s32.totalorder %s20, 3
      %p281 = pnand %p279, %p280
      %p282 = pneg %p281
      // Predicated region
      $region9: #{_lambda_.8} parent=5 // pred_check
        _
      $region10: #{_lambda_.8} parent=5 // pred_check_branch
        %284 = sbr.rel (%p281) target = $region12
      $region11: #{_lambda_.8} parent=5 // pred_region
        %s285 = ssub.s32 %s20, 1
        // Predicated region
        $region13: #{_lambda_.8} parent=11 // pred_check
          %p286 = pneg %p41
        $region14: #{_lambda_.8} parent=11 // pred_check_branch
          %288 = sbr.rel (%p286) target = $region16
        $region15: #{_lambda_.8} parent=11 // pred_region
          _
        $region16: #{_lambda_.8} parent=11 // pred_fallthru
          _
        // Predicated region
        $region17: #{_lambda_.8} parent=11 // pred_check
          %p289 = pneg %p62
        $region18: #{_lambda_.8} parent=11 // pred_check_branch
          %291 = sbr.rel (%p289) target = $region20
        $region19: #{_lambda_.8} parent=11 // pred_region
          _
        $region20: #{_lambda_.8} parent=11 // pred_fallthru
          _
        // Predicated region
        $region21: #{_lambda_.8} parent=11 // pred_check
          %p292 = pneg %p83
        $region22: #{_lambda_.8} parent=11 // pred_check_branch
          %294 = sbr.rel (%p292) target = $region24
        $region23: #{_lambda_.8} parent=11 // pred_region
          _
        $region24: #{_lambda_.8} parent=11 // pred_fallthru
          _
        // Predicated region
        $region25: #{_lambda_.8} parent=11 // pred_check
          %p295 = pneg %p182
        $region26: #{_lambda_.8} parent=11 // pred_check_branch
          %297 = sbr.rel (%p295) target = $region28
        $region27: #{_lambda_.8} parent=11 // pred_region
          _
        $region28: #{_lambda_.8} parent=11 // pred_fallthru
          _
        // Predicated region
        $region29: #{_lambda_.8} parent=11 // pred_check
          %p298 = pneg %p203
        $region30: #{_lambda_.8} parent=11 // pred_check_branch
          %300 = sbr.rel (%p298) target = $region32
        $region31: #{_lambda_.8} parent=11 // pred_region
          _
        $region32: #{_lambda_.8} parent=11 // pred_fallthru
          _
        // Predicated region
        $region33: #{_lambda_.8} parent=11 // pred_check
          %p301 = pneg %p224
        $region34: #{_lambda_.8} parent=11 // pred_check_branch
          %303 = sbr.rel (%p301) target = $region36
        $region35: #{_lambda_.8} parent=11 // pred_region
          _
        $region36: #{_lambda_.8} parent=11 // pred_fallthru
          _
      $region12: #{_lambda_.8} parent=5 // pred_fallthru
        _
      %p304 = scmp.lt.s32.totalorder %s20, 2
      // Predicated region
      $region37: #{_lambda_.8} parent=5 // pred_check
        %p305 = pneg %p304
      $region38: #{_lambda_.8} parent=5 // pred_check_branch
        %307 = sbr.rel (%p305) target = $region40
      $region39: #{_lambda_.8} parent=5 // pred_region
        // Predicated region
        $region41: #{_lambda_.8} parent=39 // pred_check
          %p308 = pneg %p103
        $region42: #{_lambda_.8} parent=39 // pred_check_branch
          %310 = sbr.rel (%p308) target = $region44
        $region43: #{_lambda_.8} parent=39 // pred_region
          %s311 = smul.u32 16, %s20
          %p312 = scmp.lt.s32.totalorder %s311, 31
          %s313 = scalar_select %p312, %s311, 31
          %s314 = smul.addr %s313, 4
          %s315 = scalar_lea.vmem %s3, %s314
          %s316 = smul.u32 16, %s20
        $region44: #{_lambda_.8} parent=39 // pred_fallthru
          _
        // Predicated region
        $region45: #{_lambda_.8} parent=39 // pred_check
          %p317 = pneg %p129
        $region46: #{_lambda_.8} parent=39 // pred_check_branch
          %319 = sbr.rel (%p317) target = $region48
        $region47: #{_lambda_.8} parent=39 // pred_region
          %s320 = smul.u32 16, %s20
          %p321 = scmp.lt.s32.totalorder %s320, 31
          %s322 = scalar_select %p321, %s320, 31
          %s323 = smul.addr %s322, 4
          %s324 = scalar_lea.vmem %s4, %s323
          %s325 = smul.u32 16, %s20
        $region48: #{_lambda_.8} parent=39 // pred_fallthru
          _
        // Predicated region
        $region49: #{_lambda_.8} parent=39 // pred_check
          %p326 = pneg %p155
        $region50: #{_lambda_.8} parent=39 // pred_check_branch
          %328 = sbr.rel (%p326) target = $region52
        $region51: #{_lambda_.8} parent=39 // pred_region
          %s329 = smul.u32 16, %s20
          %p330 = scmp.lt.s32.totalorder %s329, 31
          %s331 = scalar_select %p330, %s329, 31
          %s332 = smul.addr %s331, 8
          %s333 = scalar_lea.vmem %s5, %s332
          %s334 = smul.u32 16, %s20
        $region52: #{_lambda_.8} parent=39 // pred_fallthru
          _
      $region40: #{_lambda_.8} parent=5 // pred_fallthru
        _
      %p335 = scmp.le.s32.totalorder 1, %s20
      %p336 = scmp.lt.s32.totalorder %s20, 3
      %p337 = pnand %p335, %p336
      %p338 = pneg %p337
      // Predicated region
      $region53: #{_lambda_.8} parent=5 // pred_check
        _
      $region54: #{_lambda_.8} parent=5 // pred_check_branch
        %340 = sbr.rel (%p337) target = $region56
      $region55: #{_lambda_.8} parent=5 // pred_region
        %s341 = ssub.s32 %s20, 1
        %p342 = pneg %p41
        %p343 = pneg %p38
        %p344 = pneg %p62
        %p345 = pneg %p59
        %p346 = pneg %p83
        %p347 = pneg %p80
        %s348 = smul.u32 16, %s25
        %p349 = scmp.lt.s32.totalorder %s348, 31
        %s350 = scalar_select %p349, %s348, 31
        %s351 = smul.addr %s350, 4
        %s352 = scalar_lea.vmem %s3, %s351
        %p353 = pneg %p109
        %p354 = pneg %p106
        %s355 = smul.u32 16, %s25
        %p356 = scmp.lt.s32.totalorder %s355, 31
        %s357 = scalar_select %p356, %s355, 31
        %s358 = smul.addr %s357, 4
        %s359 = scalar_lea.vmem %s4, %s358
        %p360 = pneg %p135
        %p361 = pneg %p132
        %s362 = smul.u32 16, %s25
        %p363 = scmp.lt.s32.totalorder %s362, 31
        %s364 = scalar_select %p363, %s362, 31
        %s365 = smul.addr %s364, 8
        %s366 = scalar_lea.vmem %s5, %s365
        %p367 = pneg %p161
        %p368 = pneg %p158
        %p369 = pneg %p182
        %p370 = pneg %p179
        %p371 = pneg %p203
        %p372 = pneg %p200
        %p373 = pneg %p224
        %p374 = pneg %p221
        %p375 = pneg %p250
        %p376 = pneg %p247
        %s377 = sand.u32 %s237, 1
        %s378 = scalar_lea.sflag [#allocation6], %s377
        %s379 = sand.u32 %s237, 1
        %s380 = smul.addr %s379, 128
        %s381 = scalar_lea.vmem [#allocation5], %s380
        %p382 = pneg %p271
        %p383 = pneg %p268
        %s384 = smul.u32 16, %s25
        %p385 = scmp.lt.s32.totalorder %s384, 31
        %s386 = scalar_select %p385, %s384, 31
        %s387 = smul.addr %s386, 4
        %s388 = scalar_lea.vmem %s3, %s387
        %s389 = smul.u32 16, %s25
        %s390 = smul.u32 16, %s25
        %p391 = scmp.lt.s32.totalorder %s390, 31
        %s392 = scalar_select %p391, %s390, 31
        %s393 = smul.addr %s392, 4
        %s394 = scalar_lea.vmem %s4, %s393
        %s395 = smul.u32 16, %s25
        %s396 = smul.u32 16, %s25
        %p397 = scmp.lt.s32.totalorder %s396, 31
        %s398 = scalar_select %p397, %s396, 31
        %s399 = smul.addr %s398, 8
        %s400 = scalar_lea.vmem %s5, %s399
        %s401 = smul.u32 16, %s25
        %s402 = smul.u32 16, %s25
        %p403 = scmp.eq.s32.totalorder %s25, 0
        // Predicated region
        $region57: #{_lambda_.8} parent=55 // pred_check
          %p404 = pneg %p403
        $region58: #{_lambda_.8} parent=55 // pred_check_branch
          %406 = sbr.rel (%p404) target = $region60
        $region59: #{_lambda_.8} parent=55 // pred_region
          %v407 = vld [vmem:[%s0] sm:$0xff]
          %v408 = vld [vmem:[%s0 + $0x8] sm:$0xff]
          %v409 = vld [vmem:[%s0 + $0x10] sm:$0xff]
          %v410 = vld [vmem:[%s0 + $0x18] sm:$0xff]
          %v411 = vld [vmem:[%s0 + $0x20] sm:$0xff]
          %v412 = vld [vmem:[%s0 + $0x28] sm:$0xff]
          %v413 = vld [vmem:[%s0 + $0x30] sm:$0xff]
          %v414 = vld [vmem:[%s0 + $0x38] sm:$0xff]
          %v415 = vld [vmem:[%s0 + $0x40] sm:$0xff]
          %v416 = vld [vmem:[%s0 + $0x48] sm:$0xff]
          %v417 = vld [vmem:[%s0 + $0x50] sm:$0xff]
          %v418 = vld [vmem:[%s0 + $0x58] sm:$0xff]
          %v419 = vld [vmem:[%s0 + $0x60] sm:$0xff]
          %v420 = vld [vmem:[%s0 + $0x68] sm:$0xff]
          %v421 = vld [vmem:[%s0 + $0x70] sm:$0xff]
          %v422 = vld [vmem:[%s0 + $0x78] sm:$0xff]
          %v423 = vld [vmem:[%s1] sm:$0xff]
          %v424 = vld [vmem:[%s1 + $0x8] sm:$0xff]
          %v425 = vld [vmem:[%s1 + $0x10] sm:$0xff]
          %v426 = vld [vmem:[%s1 + $0x18] sm:$0xff]
          %v427 = vld [vmem:[%s1 + $0x20] sm:$0xff]
          %v428 = vld [vmem:[%s1 + $0x28] sm:$0xff]
          %v429 = vld [vmem:[%s1 + $0x30] sm:$0xff]
          %v430 = vld [vmem:[%s1 + $0x38] sm:$0xff]
          %v431 = vld [vmem:[%s1 + $0x40] sm:$0xff]
          %v432 = vld [vmem:[%s1 + $0x48] sm:$0xff]
          %v433 = vld [vmem:[%s1 + $0x50] sm:$0xff]
          %v434 = vld [vmem:[%s1 + $0x58] sm:$0xff]
          %v435 = vld [vmem:[%s1 + $0x60] sm:$0xff]
          %v436 = vld [vmem:[%s1 + $0x68] sm:$0xff]
          %v437 = vld [vmem:[%s1 + $0x70] sm:$0xff]
          %v438 = vld [vmem:[%s1 + $0x78] sm:$0xff]
          %v439 = vld [vmem:[%s1 + $0x80] sm:$0xff]
          %v440 = vld [vmem:[%s1 + $0x88] sm:$0xff]
          %v441 = vld [vmem:[%s1 + $0x90] sm:$0xff]
          %v442 = vld [vmem:[%s1 + $0x98] sm:$0xff]
          %v443 = vld [vmem:[%s1 + $0xa0] sm:$0xff]
          %v444 = vld [vmem:[%s1 + $0xa8] sm:$0xff]
          %v445 = vld [vmem:[%s1 + $0xb0] sm:$0xff]
          %v446 = vld [vmem:[%s1 + $0xb8] sm:$0xff]
          %v447 = vld [vmem:[%s1 + $0xc0] sm:$0xff]
          %v448 = vld [vmem:[%s1 + $0xc8] sm:$0xff]
          %v449 = vld [vmem:[%s1 + $0xd0] sm:$0xff]
          %v450 = vld [vmem:[%s1 + $0xd8] sm:$0xff]
          %v451 = vld [vmem:[%s1 + $0xe0] sm:$0xff]
          %v452 = vld [vmem:[%s1 + $0xe8] sm:$0xff]
          %v453 = vld [vmem:[%s1 + $0xf0] sm:$0xff]
          %v454 = vld [vmem:[%s1 + $0xf8] sm:$0xff]
          %v455 = vld [vmem:[%s1 + $0x100] sm:$0xff]
          %v456 = vld [vmem:[%s1 + $0x108] sm:$0xff]
          %v457 = vld [vmem:[%s1 + $0x110] sm:$0xff]
          %v458 = vld [vmem:[%s1 + $0x118] sm:$0xff]
          %v459 = vld [vmem:[%s1 + $0x120] sm:$0xff]
          %v460 = vld [vmem:[%s1 + $0x128] sm:$0xff]
          %v461 = vld [vmem:[%s1 + $0x130] sm:$0xff]
          %v462 = vld [vmem:[%s1 + $0x138] sm:$0xff]
          %v463 = vld [vmem:[%s1 + $0x140] sm:$0xff]
          %v464 = vld [vmem:[%s1 + $0x148] sm:$0xff]
          %v465 = vld [vmem:[%s1 + $0x150] sm:$0xff]
          %v466 = vld [vmem:[%s1 + $0x158] sm:$0xff]
          %v467 = vld [vmem:[%s1 + $0x160] sm:$0xff]
          %v468 = vld [vmem:[%s1 + $0x168] sm:$0xff]
          %v469 = vld [vmem:[%s1 + $0x170] sm:$0xff]
          %v470 = vld [vmem:[%s1 + $0x178] sm:$0xff]
          %v471 = vld [vmem:[%s1 + $0x180] sm:$0xff]
          %v472 = vld [vmem:[%s1 + $0x188] sm:$0xff]
          %v473 = vld [vmem:[%s1 + $0x190] sm:$0xff]
          %v474 = vld [vmem:[%s1 + $0x198] sm:$0xff]
          %v475 = vld [vmem:[%s1 + $0x1a0] sm:$0xff]
          %v476 = vld [vmem:[%s1 + $0x1a8] sm:$0xff]
          %v477 = vld [vmem:[%s1 + $0x1b0] sm:$0xff]
          %v478 = vld [vmem:[%s1 + $0x1b8] sm:$0xff]
          %v479 = vld [vmem:[%s1 + $0x1c0] sm:$0xff]
          %v480 = vld [vmem:[%s1 + $0x1c8] sm:$0xff]
          %v481 = vld [vmem:[%s1 + $0x1d0] sm:$0xff]
          %v482 = vld [vmem:[%s1 + $0x1d8] sm:$0xff]
          %v483 = vld [vmem:[%s1 + $0x1e0] sm:$0xff]
          %v484 = vld [vmem:[%s1 + $0x1e8] sm:$0xff]
          %v485 = vld [vmem:[%s1 + $0x1f0] sm:$0xff]
          %v486 = vld [vmem:[%s1 + $0x1f8] sm:$0xff]
          %v487 = vld [vmem:[%s2] sm:$0xf]
          %v489 = vperm.slane %v487, 0
          %v490 = vperm.slane %v487, 1
          %v491 = vperm.slane %v487, 2
          %v492 = vperm.slane %v487, 3
          %497 = vmatpush.msra.mxu0 %v483
          %498 = vmatpush.msra.mxu0 %v479
          %499 = vmatpush.msra.mxu0 %v475
          %500 = vmatpush.msra.mxu0 %v471
          %501 = vmatpush.msra.mxu0 %v467
          %502 = vmatpush.msra.mxu0 %v463
          %503 = vmatpush.msra.mxu0 %v459
          %504 = vmatpush.msra.mxu0 %v455
          %505 = vmatpush.msra.mxu0 %v451
          %506 = vmatpush.msra.mxu0 %v447
          %507 = vmatpush.msra.mxu0 %v443
          %508 = vmatpush.msra.mxu0 %v439
          %509 = vmatpush.msra.mxu0 %v435
          %510 = vmatpush.msra.mxu0 %v431
          %511 = vmatpush.msra.mxu0 %v427
          %512 = vmatpush.msra.mxu0 %v423
          %513 = vmatmul.f32.gmra.mxu0 %v407
          %v514 = vpop.f32.mrf.mxu0
          %v515 = vadd.f32 %v489, %v514
          %516 = vmatmul.f32.gmra.mxu0 %v408
          %v517 = vpop.f32.mrf.mxu0
          %v518 = vadd.f32 %v489, %v517
          %519 = vmatmul.f32.gmra.mxu0 %v409
          %v520 = vpop.f32.mrf.mxu0
          %v521 = vadd.f32 %v489, %v520
          %522 = vmatmul.f32.gmra.mxu0 %v410
          %v523 = vpop.f32.mrf.mxu0
          %v524 = vadd.f32 %v489, %v523
          %525 = vmatmul.f32.gmra.mxu0 %v411
          %v526 = vpop.f32.mrf.mxu0
          %v527 = vadd.f32 %v489, %v526
          %528 = vmatmul.f32.gmra.mxu0 %v412
          %v529 = vpop.f32.mrf.mxu0
          %v530 = vadd.f32 %v489, %v529
          %531 = vmatmul.f32.gmra.mxu0 %v413
          %v532 = vpop.f32.mrf.mxu0
          %v533 = vadd.f32 %v489, %v532
          %534 = vmatmul.f32.gmra.mxu0 %v414
          %v535 = vpop.f32.mrf.mxu0
          %v536 = vadd.f32 %v489, %v535
          %537 = vmatmul.f32.gmra.mxu0 %v415
          %v538 = vpop.f32.mrf.mxu0
          %v539 = vadd.f32 %v489, %v538
          %540 = vmatmul.f32.gmra.mxu0 %v416
          %v541 = vpop.f32.mrf.mxu0
          %v542 = vadd.f32 %v489, %v541
          %543 = vmatmul.f32.gmra.mxu0 %v417
          %v544 = vpop.f32.mrf.mxu0
          %v545 = vadd.f32 %v489, %v544
          %546 = vmatmul.f32.gmra.mxu0 %v418
          %v547 = vpop.f32.mrf.mxu0
          %v548 = vadd.f32 %v489, %v547
          %549 = vmatmul.f32.gmra.mxu0 %v419
          %v550 = vpop.f32.mrf.mxu0
          %v551 = vadd.f32 %v489, %v550
          %552 = vmatmul.f32.gmra.mxu0 %v420
          %v553 = vpop.f32.mrf.mxu0
          %v554 = vadd.f32 %v489, %v553
          %555 = vmatmul.f32.gmra.mxu0 %v421
          %v556 = vpop.f32.mrf.mxu0
          %v557 = vadd.f32 %v489, %v556
          %558 = vmatmul.f32.gmra.mxu0 %v422
          %v559 = vpop.f32.mrf.mxu0
          %v560 = vadd.f32 %v489, %v559
          %561 = vdwg.mxu0
          %562 = vmatpush.msra.mxu0 %v484
          %563 = vmatpush.msra.mxu0 %v480
          %564 = vmatpush.msra.mxu0 %v476
          %565 = vmatpush.msra.mxu0 %v472
          %566 = vmatpush.msra.mxu0 %v468
          %567 = vmatpush.msra.mxu0 %v464
          %568 = vmatpush.msra.mxu0 %v460
          %569 = vmatpush.msra.mxu0 %v456
          %570 = vmatpush.msra.mxu0 %v452
          %571 = vmatpush.msra.mxu0 %v448
          %572 = vmatpush.msra.mxu0 %v444
          %573 = vmatpush.msra.mxu0 %v440
          %574 = vmatpush.msra.mxu0 %v436
          %575 = vmatpush.msra.mxu0 %v432
          %576 = vmatpush.msra.mxu0 %v428
          %577 = vmatpush.msra.mxu0 %v424
          %578 = vmatmul.f32.gmra.mxu0 %v407
          %v579 = vpop.f32.mrf.mxu0
          %v580 = vadd.f32 %v490, %v579
          %581 = vmatmul.f32.gmra.mxu0 %v408
          %v582 = vpop.f32.mrf.mxu0
          %v583 = vadd.f32 %v490, %v582
          %584 = vmatmul.f32.gmra.mxu0 %v409
          %v585 = vpop.f32.mrf.mxu0
          %v586 = vadd.f32 %v490, %v585
          %587 = vmatmul.f32.gmra.mxu0 %v410
          %v588 = vpop.f32.mrf.mxu0
          %v589 = vadd.f32 %v490, %v588
          %590 = vmatmul.f32.gmra.mxu0 %v411
          %v591 = vpop.f32.mrf.mxu0
          %v592 = vadd.f32 %v490, %v591
          %593 = vmatmul.f32.gmra.mxu0 %v412
          %v594 = vpop.f32.mrf.mxu0
          %v595 = vadd.f32 %v490, %v594
          %596 = vmatmul.f32.gmra.mxu0 %v413
          %v597 = vpop.f32.mrf.mxu0
          %v598 = vadd.f32 %v490, %v597
          %599 = vmatmul.f32.gmra.mxu0 %v414
          %v600 = vpop.f32.mrf.mxu0
          %v601 = vadd.f32 %v490, %v600
          %602 = vmatmul.f32.gmra.mxu0 %v415
          %v603 = vpop.f32.mrf.mxu0
          %v604 = vadd.f32 %v490, %v603
          %605 = vmatmul.f32.gmra.mxu0 %v416
          %v606 = vpop.f32.mrf.mxu0
          %v607 = vadd.f32 %v490, %v606
          %608 = vmatmul.f32.gmra.mxu0 %v417
          %v609 = vpop.f32.mrf.mxu0
          %v610 = vadd.f32 %v490, %v609
          %611 = vmatmul.f32.gmra.mxu0 %v418
          %v612 = vpop.f32.mrf.mxu0
          %v613 = vadd.f32 %v490, %v612
          %614 = vmatmul.f32.gmra.mxu0 %v419
          %v615 = vpop.f32.mrf.mxu0
          %v616 = vadd.f32 %v490, %v615
          %617 = vmatmul.f32.gmra.mxu0 %v420
          %v618 = vpop.f32.mrf.mxu0
          %v619 = vadd.f32 %v490, %v618
          %620 = vmatmul.f32.gmra.mxu0 %v421
          %v621 = vpop.f32.mrf.mxu0
          %v622 = vadd.f32 %v490, %v621
          %623 = vmatmul.f32.gmra.mxu0 %v422
          %v624 = vpop.f32.mrf.mxu0
          %v625 = vadd.f32 %v490, %v624
          %626 = vdwg.mxu0
          %627 = vmatpush.msra.mxu0 %v485
          %628 = vmatpush.msra.mxu0 %v481
          %629 = vmatpush.msra.mxu0 %v477
          %630 = vmatpush.msra.mxu0 %v473
          %631 = vmatpush.msra.mxu0 %v469
          %632 = vmatpush.msra.mxu0 %v465
          %633 = vmatpush.msra.mxu0 %v461
          %634 = vmatpush.msra.mxu0 %v457
          %635 = vmatpush.msra.mxu0 %v453
          %636 = vmatpush.msra.mxu0 %v449
          %637 = vmatpush.msra.mxu0 %v445
          %638 = vmatpush.msra.mxu0 %v441
          %639 = vmatpush.msra.mxu0 %v437
          %640 = vmatpush.msra.mxu0 %v433
          %641 = vmatpush.msra.mxu0 %v429
          %642 = vmatpush.msra.mxu0 %v425
          %643 = vmatmul.f32.gmra.mxu0 %v407
          %v644 = vpop.f32.mrf.mxu0
          %v645 = vadd.f32 %v491, %v644
          %646 = vmatmul.f32.gmra.mxu0 %v408
          %v647 = vpop.f32.mrf.mxu0
          %v648 = vadd.f32 %v491, %v647
          %649 = vmatmul.f32.gmra.mxu0 %v409
          %v650 = vpop.f32.mrf.mxu0
          %v651 = vadd.f32 %v491, %v650
          %652 = vmatmul.f32.gmra.mxu0 %v410
          %v653 = vpop.f32.mrf.mxu0
          %v654 = vadd.f32 %v491, %v653
          %655 = vmatmul.f32.gmra.mxu0 %v411
          %v656 = vpop.f32.mrf.mxu0
          %v657 = vadd.f32 %v491, %v656
          %658 = vmatmul.f32.gmra.mxu0 %v412
          %v659 = vpop.f32.mrf.mxu0
          %v660 = vadd.f32 %v491, %v659
          %661 = vmatmul.f32.gmra.mxu0 %v413
          %v662 = vpop.f32.mrf.mxu0
          %v663 = vadd.f32 %v491, %v662
          %664 = vmatmul.f32.gmra.mxu0 %v414
          %v665 = vpop.f32.mrf.mxu0
          %v666 = vadd.f32 %v491, %v665
          %667 = vmatmul.f32.gmra.mxu0 %v415
          %v668 = vpop.f32.mrf.mxu0
          %v669 = vadd.f32 %v491, %v668
          %670 = vmatmul.f32.gmra.mxu0 %v416
          %v671 = vpop.f32.mrf.mxu0
          %v672 = vadd.f32 %v491, %v671
          %673 = vmatmul.f32.gmra.mxu0 %v417
          %v674 = vpop.f32.mrf.mxu0
          %v675 = vadd.f32 %v491, %v674
          %676 = vmatmul.f32.gmra.mxu0 %v418
          %v677 = vpop.f32.mrf.mxu0
          %v678 = vadd.f32 %v491, %v677
          %679 = vmatmul.f32.gmra.mxu0 %v419
          %v680 = vpop.f32.mrf.mxu0
          %v681 = vadd.f32 %v491, %v680
          %682 = vmatmul.f32.gmra.mxu0 %v420
          %v683 = vpop.f32.mrf.mxu0
          %v684 = vadd.f32 %v491, %v683
          %685 = vmatmul.f32.gmra.mxu0 %v421
          %v686 = vpop.f32.mrf.mxu0
          %v687 = vadd.f32 %v491, %v686
          %688 = vmatmul.f32.gmra.mxu0 %v422
          %v689 = vpop.f32.mrf.mxu0
          %v690 = vadd.f32 %v491, %v689
          %691 = vdwg.mxu0
          %692 = vmatpush.msra.mxu0 %v486
          %693 = vmatpush.msra.mxu0 %v482
          %694 = vmatpush.msra.mxu0 %v478
          %695 = vmatpush.msra.mxu0 %v474
          %696 = vmatpush.msra.mxu0 %v470
          %697 = vmatpush.msra.mxu0 %v466
          %698 = vmatpush.msra.mxu0 %v462
          %699 = vmatpush.msra.mxu0 %v458
          %700 = vmatpush.msra.mxu0 %v454
          %701 = vmatpush.msra.mxu0 %v450
          %702 = vmatpush.msra.mxu0 %v446
          %703 = vmatpush.msra.mxu0 %v442
          %704 = vmatpush.msra.mxu0 %v438
          %705 = vmatpush.msra.mxu0 %v434
          %706 = vmatpush.msra.mxu0 %v430
          %707 = vmatpush.msra.mxu0 %v426
          %708 = vmatmul.f32.gmra.mxu0 %v407
          %v709 = vpop.f32.mrf.mxu0
          %v710 = vadd.f32 %v492, %v709
          %711 = vmatmul.f32.gmra.mxu0 %v408
          %v712 = vpop.f32.mrf.mxu0
          %v713 = vadd.f32 %v492, %v712
          %714 = vmatmul.f32.gmra.mxu0 %v409
          %v715 = vpop.f32.mrf.mxu0
          %v716 = vadd.f32 %v492, %v715
          %717 = vmatmul.f32.gmra.mxu0 %v410
          %v718 = vpop.f32.mrf.mxu0
          %v719 = vadd.f32 %v492, %v718
          %720 = vmatmul.f32.gmra.mxu0 %v411
          %v721 = vpop.f32.mrf.mxu0
          %v722 = vadd.f32 %v492, %v721
          %723 = vmatmul.f32.gmra.mxu0 %v412
          %v724 = vpop.f32.mrf.mxu0
          %v725 = vadd.f32 %v492, %v724
          %726 = vmatmul.f32.gmra.mxu0 %v413
          %v727 = vpop.f32.mrf.mxu0
          %v728 = vadd.f32 %v492, %v727
          %729 = vmatmul.f32.gmra.mxu0 %v414
          %v730 = vpop.f32.mrf.mxu0
          %v731 = vadd.f32 %v492, %v730
          %732 = vmatmul.f32.gmra.mxu0 %v415
          %v733 = vpop.f32.mrf.mxu0
          %v734 = vadd.f32 %v492, %v733
          %735 = vmatmul.f32.gmra.mxu0 %v416
          %v736 = vpop.f32.mrf.mxu0
          %v737 = vadd.f32 %v492, %v736
          %738 = vmatmul.f32.gmra.mxu0 %v417
          %v739 = vpop.f32.mrf.mxu0
          %v740 = vadd.f32 %v492, %v739
          %741 = vmatmul.f32.gmra.mxu0 %v418
          %v742 = vpop.f32.mrf.mxu0
          %v743 = vadd.f32 %v492, %v742
          %744 = vmatmul.f32.gmra.mxu0 %v419
          %v745 = vpop.f32.mrf.mxu0
          %v746 = vadd.f32 %v492, %v745
          %747 = vmatmul.f32.gmra.mxu0 %v420
          %v748 = vpop.f32.mrf.mxu0
          %v749 = vadd.f32 %v492, %v748
          %750 = vmatmul.f32.gmra.mxu0 %v421
          %v751 = vpop.f32.mrf.mxu0
          %v752 = vadd.f32 %v492, %v751
          %753 = vmatmul.f32.gmra.mxu0 %v422
          %v754 = vpop.f32.mrf.mxu0
          %v755 = vadd.f32 %v492, %v754
          %756 = vdwg.mxu0
          %757 = vst [vmem:[#allocation2] sm:$0xff] %v515
          %758 = vst [vmem:[#allocation2 + $0x8] sm:$0xff] %v580
          %759 = vst [vmem:[#allocation2 + $0x10] sm:$0xff] %v645
          %760 = vst [vmem:[#allocation2 + $0x18] sm:$0xff] %v710
          %761 = vst [vmem:[#allocation2 + $0x20] sm:$0xff] %v518
          %762 = vst [vmem:[#allocation2 + $0x28] sm:$0xff] %v583
          %763 = vst [vmem:[#allocation2 + $0x30] sm:$0xff] %v648
          %764 = vst [vmem:[#allocation2 + $0x38] sm:$0xff] %v713
          %765 = vst [vmem:[#allocation2 + $0x40] sm:$0xff] %v521
          %766 = vst [vmem:[#allocation2 + $0x48] sm:$0xff] %v586
          %767 = vst [vmem:[#allocation2 + $0x50] sm:$0xff] %v651
          %768 = vst [vmem:[#allocation2 + $0x58] sm:$0xff] %v716
          %769 = vst [vmem:[#allocation2 + $0x60] sm:$0xff] %v524
          %770 = vst [vmem:[#allocation2 + $0x68] sm:$0xff] %v589
          %771 = vst [vmem:[#allocation2 + $0x70] sm:$0xff] %v654
          %772 = vst [vmem:[#allocation2 + $0x78] sm:$0xff] %v719
          %773 = vst [vmem:[#allocation2 + $0x80] sm:$0xff] %v527
          %774 = vst [vmem:[#allocation2 + $0x88] sm:$0xff] %v592
          %775 = vst [vmem:[#allocation2 + $0x90] sm:$0xff] %v657
          %776 = vst [vmem:[#allocation2 + $0x98] sm:$0xff] %v722
          %777 = vst [vmem:[#allocation2 + $0xa0] sm:$0xff] %v530
          %778 = vst [vmem:[#allocation2 + $0xa8] sm:$0xff] %v595
          %779 = vst [vmem:[#allocation2 + $0xb0] sm:$0xff] %v660
          %780 = vst [vmem:[#allocation2 + $0xb8] sm:$0xff] %v725
          %781 = vst [vmem:[#allocation2 + $0xc0] sm:$0xff] %v533
          %782 = vst [vmem:[#allocation2 + $0xc8] sm:$0xff] %v598
          %783 = vst [vmem:[#allocation2 + $0xd0] sm:$0xff] %v663
          %784 = vst [vmem:[#allocation2 + $0xd8] sm:$0xff] %v728
          %785 = vst [vmem:[#allocation2 + $0xe0] sm:$0xff] %v536
          %786 = vst [vmem:[#allocation2 + $0xe8] sm:$0xff] %v601
          %787 = vst [vmem:[#allocation2 + $0xf0] sm:$0xff] %v666
          %788 = vst [vmem:[#allocation2 + $0xf8] sm:$0xff] %v731
          %789 = vst [vmem:[#allocation2 + $0x100] sm:$0xff] %v539
          %790 = vst [vmem:[#allocation2 + $0x108] sm:$0xff] %v604
          %791 = vst [vmem:[#allocation2 + $0x110] sm:$0xff] %v669
          %792 = vst [vmem:[#allocation2 + $0x118] sm:$0xff] %v734
          %793 = vst [vmem:[#allocation2 + $0x120] sm:$0xff] %v542
          %794 = vst [vmem:[#allocation2 + $0x128] sm:$0xff] %v607
          %795 = vst [vmem:[#allocation2 + $0x130] sm:$0xff] %v672
          %796 = vst [vmem:[#allocation2 + $0x138] sm:$0xff] %v737
          %797 = vst [vmem:[#allocation2 + $0x140] sm:$0xff] %v545
          %798 = vst [vmem:[#allocation2 + $0x148] sm:$0xff] %v610
          %799 = vst [vmem:[#allocation2 + $0x150] sm:$0xff] %v675
          %800 = vst [vmem:[#allocation2 + $0x158] sm:$0xff] %v740
          %801 = vst [vmem:[#allocation2 + $0x160] sm:$0xff] %v548
          %802 = vst [vmem:[#allocation2 + $0x168] sm:$0xff] %v613
          %803 = vst [vmem:[#allocation2 + $0x170] sm:$0xff] %v678
          %804 = vst [vmem:[#allocation2 + $0x178] sm:$0xff] %v743
          %805 = vst [vmem:[#allocation2 + $0x180] sm:$0xff] %v551
          %806 = vst [vmem:[#allocation2 + $0x188] sm:$0xff] %v616
          %807 = vst [vmem:[#allocation2 + $0x190] sm:$0xff] %v681
          %808 = vst [vmem:[#allocation2 + $0x198] sm:$0xff] %v746
          %809 = vst [vmem:[#allocation2 + $0x1a0] sm:$0xff] %v554
          %810 = vst [vmem:[#allocation2 + $0x1a8] sm:$0xff] %v619
          %811 = vst [vmem:[#allocation2 + $0x1b0] sm:$0xff] %v684
          %812 = vst [vmem:[#allocation2 + $0x1b8] sm:$0xff] %v749
          %813 = vst [vmem:[#allocation2 + $0x1c0] sm:$0xff] %v557
          %814 = vst [vmem:[#allocation2 + $0x1c8] sm:$0xff] %v622
          %815 = vst [vmem:[#allocation2 + $0x1d0] sm:$0xff] %v687
          %816 = vst [vmem:[#allocation2 + $0x1d8] sm:$0xff] %v752
          %817 = vst [vmem:[#allocation2 + $0x1e0] sm:$0xff] %v560
          %818 = vst [vmem:[#allocation2 + $0x1e8] sm:$0xff] %v625
          %819 = vst [vmem:[#allocation2 + $0x1f0] sm:$0xff] %v690
          %820 = vst [vmem:[#allocation2 + $0x1f8] sm:$0xff] %v755
          %821 = vst [vmem:[#allocation3] sm:$0xff] 0.0
          %822 = vst [vmem:[#allocation3 + $0x8] sm:$0xff] 0.0
          %823 = vst [vmem:[#allocation3 + $0x10] sm:$0xff] 0.0
          %824 = vst [vmem:[#allocation3 + $0x18] sm:$0xff] 0.0
          %825 = vst [vmem:[#allocation3 + $0x20] sm:$0xff] 0.0
          %826 = vst [vmem:[#allocation3 + $0x28] sm:$0xff] 0.0
          %827 = vst [vmem:[#allocation3 + $0x30] sm:$0xff] 0.0
          %828 = vst [vmem:[#allocation3 + $0x38] sm:$0xff] 0.0
          %829 = vst [vmem:[#allocation3 + $0x40] sm:$0xff] 0.0
          %830 = vst [vmem:[#allocation3 + $0x48] sm:$0xff] 0.0
          %831 = vst [vmem:[#allocation3 + $0x50] sm:$0xff] 0.0
          %832 = vst [vmem:[#allocation3 + $0x58] sm:$0xff] 0.0
          %833 = vst [vmem:[#allocation3 + $0x60] sm:$0xff] 0.0
          %834 = vst [vmem:[#allocation3 + $0x68] sm:$0xff] 0.0
          %835 = vst [vmem:[#allocation3 + $0x70] sm:$0xff] 0.0
          %836 = vst [vmem:[#allocation3 + $0x78] sm:$0xff] 0.0
          %837 = vst [vmem:[#allocation4] sm:$0xff] 0.0
          %838 = vst [vmem:[#allocation4 + $0x8] sm:$0xff] 0.0
          %839 = vst [vmem:[#allocation4 + $0x10] sm:$0xff] 0.0
          %840 = vst [vmem:[#allocation4 + $0x18] sm:$0xff] 0.0
          %841 = vst [vmem:[#allocation4 + $0x20] sm:$0xff] 0.0
          %842 = vst [vmem:[#allocation4 + $0x28] sm:$0xff] 0.0
          %843 = vst [vmem:[#allocation4 + $0x30] sm:$0xff] 0.0
          %844 = vst [vmem:[#allocation4 + $0x38] sm:$0xff] 0.0
          %845 = vst [vmem:[#allocation4 + $0x40] sm:$0xff] 0.0
          %846 = vst [vmem:[#allocation4 + $0x48] sm:$0xff] 0.0
          %847 = vst [vmem:[#allocation4 + $0x50] sm:$0xff] 0.0
          %848 = vst [vmem:[#allocation4 + $0x58] sm:$0xff] 0.0
          %849 = vst [vmem:[#allocation4 + $0x60] sm:$0xff] 0.0
          %850 = vst [vmem:[#allocation4 + $0x68] sm:$0xff] 0.0
          %851 = vst [vmem:[#allocation4 + $0x70] sm:$0xff] 0.0
          %852 = vst [vmem:[#allocation4 + $0x78] sm:$0xff] 0.0
        $region60: #{_lambda_.8} parent=55 // pred_fallthru
          _
        %v853 = vld [vmem:[%s400] sm:$0xff]
        %v854 = vld [vmem:[%s400 + $0x8] sm:$0xff]
        %v855 = vld [vmem:[%s400 + $0x10] sm:$0xff]
        %v856 = vld [vmem:[%s400 + $0x18] sm:$0xff]
        %v857 = vld [vmem:[%s400 + $0x20] sm:$0xff]
        %v858 = vld [vmem:[%s400 + $0x28] sm:$0xff]
        %v859 = vld [vmem:[%s400 + $0x30] sm:$0xff]
        %v860 = vld [vmem:[%s400 + $0x38] sm:$0xff]
        %v861 = vld [vmem:[%s400 + $0x40] sm:$0xff]
        %v862 = vld [vmem:[%s400 + $0x48] sm:$0xff]
        %v863 = vld [vmem:[%s400 + $0x50] sm:$0xff]
        %v864 = vld [vmem:[%s400 + $0x58] sm:$0xff]
        %v865 = vld [vmem:[%s400 + $0x60] sm:$0xff]
        %v866 = vld [vmem:[%s400 + $0x68] sm:$0xff]
        %v867 = vld [vmem:[%s400 + $0x70] sm:$0xff]
        %v868 = vld [vmem:[%s400 + $0x78] sm:$0xff]
        %v869 = vld [vmem:[%s6] sm:$0xff]
        %v870 = vld [vmem:[%s6 + $0x8] sm:$0xff]
        %v871 = vld [vmem:[%s6 + $0x10] sm:$0xff]
        %v872 = vld [vmem:[%s6 + $0x18] sm:$0xff]
        %v873 = vld [vmem:[%s6 + $0x20] sm:$0xff]
        %v874 = vld [vmem:[%s6 + $0x28] sm:$0xff]
        %v875 = vld [vmem:[%s6 + $0x30] sm:$0xff]
        %v876 = vld [vmem:[%s6 + $0x38] sm:$0xff]
        %v877 = vld [vmem:[%s6 + $0x40] sm:$0xff]
        %v878 = vld [vmem:[%s6 + $0x48] sm:$0xff]
        %v879 = vld [vmem:[%s6 + $0x50] sm:$0xff]
        %v880 = vld [vmem:[%s6 + $0x58] sm:$0xff]
        %v881 = vld [vmem:[%s6 + $0x60] sm:$0xff]
        %v882 = vld [vmem:[%s6 + $0x68] sm:$0xff]
        %v883 = vld [vmem:[%s6 + $0x70] sm:$0xff]
        %v884 = vld [vmem:[%s6 + $0x78] sm:$0xff]
        %v885 = vld [vmem:[%s7] sm:$0x1]
        %v887 = vperm.slane %v885, 0
        %889 = vmatpush.msra.mxu0 %v884
        %890 = vmatpush.msra.mxu0 %v883
        %891 = vmatpush.msra.mxu0 %v882
        %892 = vmatpush.msra.mxu0 %v881
        %893 = vmatpush.msra.mxu0 %v880
        %894 = vmatpush.msra.mxu0 %v879
        %895 = vmatpush.msra.mxu0 %v878
        %896 = vmatpush.msra.mxu0 %v877
        %897 = vmatpush.msra.mxu0 %v876
        %898 = vmatpush.msra.mxu0 %v875
        %899 = vmatpush.msra.mxu0 %v874
        %900 = vmatpush.msra.mxu0 %v873
        %901 = vmatpush.msra.mxu0 %v872
        %902 = vmatpush.msra.mxu0 %v871
        %903 = vmatpush.msra.mxu0 %v870
        %904 = vmatpush.msra.mxu0 %v869
        %905 = vmatmul.f32.gmra.mxu0 %v853
        %v906 = vpop.f32.mrf.mxu0
        %v907 = vadd.f32 %v887, %v906
        %908 = vmatmul.f32.gmra.mxu0 %v854
        %v909 = vpop.f32.mrf.mxu0
        %v910 = vadd.f32 %v887, %v909
        %911 = vmatmul.f32.gmra.mxu0 %v855
        %v912 = vpop.f32.mrf.mxu0
        %v913 = vadd.f32 %v887, %v912
        %914 = vmatmul.f32.gmra.mxu0 %v856
        %v915 = vpop.f32.mrf.mxu0
        %v916 = vadd.f32 %v887, %v915
        %917 = vmatmul.f32.gmra.mxu0 %v857
        %v918 = vpop.f32.mrf.mxu0
        %v919 = vadd.f32 %v887, %v918
        %920 = vmatmul.f32.gmra.mxu0 %v858
        %v921 = vpop.f32.mrf.mxu0
        %v922 = vadd.f32 %v887, %v921
        %923 = vmatmul.f32.gmra.mxu0 %v859
        %v924 = vpop.f32.mrf.mxu0
        %v925 = vadd.f32 %v887, %v924
        %926 = vmatmul.f32.gmra.mxu0 %v860
        %v927 = vpop.f32.mrf.mxu0
        %v928 = vadd.f32 %v887, %v927
        %929 = vmatmul.f32.gmra.mxu0 %v861
        %v930 = vpop.f32.mrf.mxu0
        %v931 = vadd.f32 %v887, %v930
        %932 = vmatmul.f32.gmra.mxu0 %v862
        %v933 = vpop.f32.mrf.mxu0
        %v934 = vadd.f32 %v887, %v933
        %935 = vmatmul.f32.gmra.mxu0 %v863
        %v936 = vpop.f32.mrf.mxu0
        %v937 = vadd.f32 %v887, %v936
        %938 = vmatmul.f32.gmra.mxu0 %v864
        %v939 = vpop.f32.mrf.mxu0
        %v940 = vadd.f32 %v887, %v939
        %941 = vmatmul.f32.gmra.mxu0 %v865
        %v942 = vpop.f32.mrf.mxu0
        %v943 = vadd.f32 %v887, %v942
        %944 = vmatmul.f32.gmra.mxu0 %v866
        %v945 = vpop.f32.mrf.mxu0
        %v946 = vadd.f32 %v887, %v945
        %947 = vmatmul.f32.gmra.mxu0 %v867
        %v948 = vpop.f32.mrf.mxu0
        %v949 = vadd.f32 %v887, %v948
        %950 = vmatmul.f32.gmra.mxu0 %v868
        %v951 = vpop.f32.mrf.mxu0
        %v952 = vadd.f32 %v887, %v951
        %953 = vdwg.mxu0
        %v954 = vld [vmem:[%s388] sm:$0xf]
        %v955 = vld [vmem:[%s388 + $0x4] sm:$0xf]
        %v956 = vld [vmem:[%s388 + $0x8] sm:$0xf]
        %v957 = vld [vmem:[%s388 + $0xc] sm:$0xf]
        %v958 = vld [vmem:[%s388 + $0x10] sm:$0xf]
        %v959 = vld [vmem:[%s388 + $0x14] sm:$0xf]
        %v960 = vld [vmem:[%s388 + $0x18] sm:$0xf]
        %v961 = vld [vmem:[%s388 + $0x1c] sm:$0xf]
        %v962 = vld [vmem:[%s388 + $0x20] sm:$0xf]
        %v963 = vld [vmem:[%s388 + $0x24] sm:$0xf]
        %v964 = vld [vmem:[%s388 + $0x28] sm:$0xf]
        %v965 = vld [vmem:[%s388 + $0x2c] sm:$0xf]
        %v966 = vld [vmem:[%s388 + $0x30] sm:$0xf]
        %v967 = vld [vmem:[%s388 + $0x34] sm:$0xf]
        %v968 = vld [vmem:[%s388 + $0x38] sm:$0xf]
        %v969 = vld [vmem:[%s388 + $0x3c] sm:$0xf]
        %v970 = vunpack.c.l.bf16 %v954
        %v971 = vunpack.c.l.bf16 %v955
        %v972 = vunpack.c.l.bf16 %v956
        %v973 = vunpack.c.l.bf16 %v957
        %v974 = vunpack.c.l.bf16 %v958
        %v975 = vunpack.c.l.bf16 %v959
        %v976 = vunpack.c.l.bf16 %v960
        %v977 = vunpack.c.l.bf16 %v961
        %v978 = vunpack.c.l.bf16 %v962
        %v979 = vunpack.c.l.bf16 %v963
        %v980 = vunpack.c.l.bf16 %v964
        %v981 = vunpack.c.l.bf16 %v965
        %v982 = vunpack.c.l.bf16 %v966
        %v983 = vunpack.c.l.bf16 %v967
        %v984 = vunpack.c.l.bf16 %v968
        %v985 = vunpack.c.l.bf16 %v969
        %v986 = vld [vmem:[%s394] sm:$0xf]
        %v987 = vld [vmem:[%s394 + $0x4] sm:$0xf]
        %v988 = vld [vmem:[%s394 + $0x8] sm:$0xf]
        %v989 = vld [vmem:[%s394 + $0xc] sm:$0xf]
        %v990 = vld [vmem:[%s394 + $0x10] sm:$0xf]
        %v991 = vld [vmem:[%s394 + $0x14] sm:$0xf]
        %v992 = vld [vmem:[%s394 + $0x18] sm:$0xf]
        %v993 = vld [vmem:[%s394 + $0x1c] sm:$0xf]
        %v994 = vld [vmem:[%s394 + $0x20] sm:$0xf]
        %v995 = vld [vmem:[%s394 + $0x24] sm:$0xf]
        %v996 = vld [vmem:[%s394 + $0x28] sm:$0xf]
        %v997 = vld [vmem:[%s394 + $0x2c] sm:$0xf]
        %v998 = vld [vmem:[%s394 + $0x30] sm:$0xf]
        %v999 = vld [vmem:[%s394 + $0x34] sm:$0xf]
        %v1000 = vld [vmem:[%s394 + $0x38] sm:$0xf]
        %v1001 = vld [vmem:[%s394 + $0x3c] sm:$0xf]
        %v1002 = vunpack.c.l.bf16 %v986
        %v1003 = vunpack.c.l.bf16 %v987
        %v1004 = vunpack.c.l.bf16 %v988
        %v1005 = vunpack.c.l.bf16 %v989
        %v1006 = vunpack.c.l.bf16 %v990
        %v1007 = vunpack.c.l.bf16 %v991
        %v1008 = vunpack.c.l.bf16 %v992
        %v1009 = vunpack.c.l.bf16 %v993
        %v1010 = vunpack.c.l.bf16 %v994
        %v1011 = vunpack.c.l.bf16 %v995
        %v1012 = vunpack.c.l.bf16 %v996
        %v1013 = vunpack.c.l.bf16 %v997
        %v1014 = vunpack.c.l.bf16 %v998
        %v1015 = vunpack.c.l.bf16 %v999
        %v1016 = vunpack.c.l.bf16 %v1000
        %v1017 = vunpack.c.l.bf16 %v1001
        %v1018 = vld [vmem:[#allocation2 + $0x8] sm:$0xff]
        %v1019 = vld [vmem:[#allocation2 + $0x28] sm:$0xff]
        %v1020 = vld [vmem:[#allocation2 + $0x48] sm:$0xff]
        %v1021 = vld [vmem:[#allocation2 + $0x68] sm:$0xff]
        %v1022 = vld [vmem:[#allocation2 + $0x88] sm:$0xff]
        %v1023 = vld [vmem:[#allocation2 + $0xa8] sm:$0xff]
        %v1024 = vld [vmem:[#allocation2 + $0xc8] sm:$0xff]
        %v1025 = vld [vmem:[#allocation2 + $0xe8] sm:$0xff]
        %v1026 = vld [vmem:[#allocation2 + $0x108] sm:$0xff]
        %v1027 = vld [vmem:[#allocation2 + $0x128] sm:$0xff]
        %v1028 = vld [vmem:[#allocation2 + $0x148] sm:$0xff]
        %v1029 = vld [vmem:[#allocation2 + $0x168] sm:$0xff]
        %v1030 = vld [vmem:[#allocation2 + $0x188] sm:$0xff]
        %v1031 = vld [vmem:[#allocation2 + $0x1a8] sm:$0xff]
        %v1032 = vld [vmem:[#allocation2 + $0x1c8] sm:$0xff]
        %v1033 = vld [vmem:[#allocation2 + $0x1e8] sm:$0xff]
        %v1034 = vld [vmem:[#allocation2 + $0x10] sm:$0xff]
        %v1035 = vld [vmem:[#allocation2 + $0x18] sm:$0xff]
        %v1036 = vld [vmem:[#allocation2 + $0x30] sm:$0xff]
        %v1037 = vld [vmem:[#allocation2 + $0x38] sm:$0xff]
        %v1038 = vld [vmem:[#allocation2 + $0x50] sm:$0xff]
        %v1039 = vld [vmem:[#allocation2 + $0x58] sm:$0xff]
        %v1040 = vld [vmem:[#allocation2 + $0x70] sm:$0xff]
        %v1041 = vld [vmem:[#allocation2 + $0x78] sm:$0xff]
        %v1042 = vld [vmem:[#allocation2 + $0x90] sm:$0xff]
        %v1043 = vld [vmem:[#allocation2 + $0x98] sm:$0xff]
        %v1044 = vld [vmem:[#allocation2 + $0xb0] sm:$0xff]
        %v1045 = vld [vmem:[#allocation2 + $0xb8] sm:$0xff]
        %v1046 = vld [vmem:[#allocation2 + $0xd0] sm:$0xff]
        %v1047 = vld [vmem:[#allocation2 + $0xd8] sm:$0xff]
        %v1048 = vld [vmem:[#allocation2 + $0xf0] sm:$0xff]
        %v1049 = vld [vmem:[#allocation2 + $0xf8] sm:$0xff]
        %v1050 = vld [vmem:[#allocation2 + $0x110] sm:$0xff]
        %v1051 = vld [vmem:[#allocation2 + $0x118] sm:$0xff]
        %v1052 = vld [vmem:[#allocation2 + $0x130] sm:$0xff]
        %v1053 = vld [vmem:[#allocation2 + $0x138] sm:$0xff]
        %v1054 = vld [vmem:[#allocation2 + $0x150] sm:$0xff]
        %v1055 = vld [vmem:[#allocation2 + $0x158] sm:$0xff]
        %v1056 = vld [vmem:[#allocation2 + $0x170] sm:$0xff]
        %v1057 = vld [vmem:[#allocation2 + $0x178] sm:$0xff]
        %v1058 = vld [vmem:[#allocation2 + $0x190] sm:$0xff]
        %v1059 = vld [vmem:[#allocation2 + $0x198] sm:$0xff]
        %v1060 = vld [vmem:[#allocation2 + $0x1b0] sm:$0xff]
        %v1061 = vld [vmem:[#allocation2 + $0x1b8] sm:$0xff]
        %v1062 = vld [vmem:[#allocation2 + $0x1d0] sm:$0xff]
        %v1063 = vld [vmem:[#allocation2 + $0x1d8] sm:$0xff]
        %v1064 = vld [vmem:[#allocation2 + $0x1f0] sm:$0xff]
        %v1065 = vld [vmem:[#allocation2 + $0x1f8] sm:$0xff]
        %1066 = vmatpush.msra.mxu0 %v1064
        %1067 = vmatpush.msra.mxu0 %v1062
        %1068 = vmatpush.msra.mxu0 %v1060
        %1069 = vmatpush.msra.mxu0 %v1058
        %1070 = vmatpush.msra.mxu0 %v1056
        %1071 = vmatpush.msra.mxu0 %v1054
        %1072 = vmatpush.msra.mxu0 %v1052
        %1073 = vmatpush.msra.mxu0 %v1050
        %1074 = vmatpush.msra.mxu0 %v1048
        %1075 = vmatpush.msra.mxu0 %v1046
        %1076 = vmatpush.msra.mxu0 %v1044
        %1077 = vmatpush.msra.mxu0 %v1042
        %1078 = vmatpush.msra.mxu0 %v1040
        %1079 = vmatpush.msra.mxu0 %v1038
        %1080 = vmatpush.msra.mxu0 %v1036
        %1081 = vmatpush.msra.mxu0 %v1034
        %1082 = vmatmul.f32.gmra.mxu0 %v1002
        %v1083 = vpop.f32.mrf.mxu0
        %v1084 = vadd.f32 0.0, %v1083
        %1085 = vmatmul.f32.gmra.mxu0 %v1003
        %v1086 = vpop.f32.mrf.mxu0
        %v1087 = vadd.f32 0.0, %v1086
        %1088 = vmatmul.f32.gmra.mxu0 %v1004
        %v1089 = vpop.f32.mrf.mxu0
        %v1090 = vadd.f32 0.0, %v1089
        %1091 = vmatmul.f32.gmra.mxu0 %v1005
        %v1092 = vpop.f32.mrf.mxu0
        %v1093 = vadd.f32 0.0, %v1092
        %1094 = vmatmul.f32.gmra.mxu0 %v1006
        %v1095 = vpop.f32.mrf.mxu0
        %v1096 = vadd.f32 0.0, %v1095
        %1097 = vmatmul.f32.gmra.mxu0 %v1007
        %v1098 = vpop.f32.mrf.mxu0
        %v1099 = vadd.f32 0.0, %v1098
        %1100 = vmatmul.f32.gmra.mxu0 %v1008
        %v1101 = vpop.f32.mrf.mxu0
        %v1102 = vadd.f32 0.0, %v1101
        %1103 = vmatmul.f32.gmra.mxu0 %v1009
        %v1104 = vpop.f32.mrf.mxu0
        %v1105 = vadd.f32 0.0, %v1104
        %1106 = vmatmul.f32.gmra.mxu0 %v1010
        %v1107 = vpop.f32.mrf.mxu0
        %v1108 = vadd.f32 0.0, %v1107
        %1109 = vmatmul.f32.gmra.mxu0 %v1011
        %v1110 = vpop.f32.mrf.mxu0
        %v1111 = vadd.f32 0.0, %v1110
        %1112 = vmatmul.f32.gmra.mxu0 %v1012
        %v1113 = vpop.f32.mrf.mxu0
        %v1114 = vadd.f32 0.0, %v1113
        %1115 = vmatmul.f32.gmra.mxu0 %v1013
        %v1116 = vpop.f32.mrf.mxu0
        %v1117 = vadd.f32 0.0, %v1116
        %1118 = vmatmul.f32.gmra.mxu0 %v1014
        %v1119 = vpop.f32.mrf.mxu0
        %v1120 = vadd.f32 0.0, %v1119
        %1121 = vmatmul.f32.gmra.mxu0 %v1015
        %v1122 = vpop.f32.mrf.mxu0
        %v1123 = vadd.f32 0.0, %v1122
        %1124 = vmatmul.f32.gmra.mxu0 %v1016
        %v1125 = vpop.f32.mrf.mxu0
        %v1126 = vadd.f32 0.0, %v1125
        %1127 = vmatmul.f32.gmra.mxu0 %v1017
        %v1128 = vpop.f32.mrf.mxu0
        %v1129 = vadd.f32 0.0, %v1128
        %1130 = vdwg.mxu0
        %1131 = vmatpush.msra.mxu0 %v1065
        %1132 = vmatpush.msra.mxu0 %v1063
        %1133 = vmatpush.msra.mxu0 %v1061
        %1134 = vmatpush.msra.mxu0 %v1059
        %1135 = vmatpush.msra.mxu0 %v1057
        %1136 = vmatpush.msra.mxu0 %v1055
        %1137 = vmatpush.msra.mxu0 %v1053
        %1138 = vmatpush.msra.mxu0 %v1051
        %1139 = vmatpush.msra.mxu0 %v1049
        %1140 = vmatpush.msra.mxu0 %v1047
        %1141 = vmatpush.msra.mxu0 %v1045
        %1142 = vmatpush.msra.mxu0 %v1043
        %1143 = vmatpush.msra.mxu0 %v1041
        %1144 = vmatpush.msra.mxu0 %v1039
        %1145 = vmatpush.msra.mxu0 %v1037
        %1146 = vmatpush.msra.mxu0 %v1035
        %1147 = vmatmul.f32.gmra.mxu0 %v1002
        %v1148 = vpop.f32.mrf.mxu0
        %v1149 = vadd.f32 0.0, %v1148
        %1150 = vmatmul.f32.gmra.mxu0 %v1003
        %v1151 = vpop.f32.mrf.mxu0
        %v1152 = vadd.f32 0.0, %v1151
        %1153 = vmatmul.f32.gmra.mxu0 %v1004
        %v1154 = vpop.f32.mrf.mxu0
        %v1155 = vadd.f32 0.0, %v1154
        %1156 = vmatmul.f32.gmra.mxu0 %v1005
        %v1157 = vpop.f32.mrf.mxu0
        %v1158 = vadd.f32 0.0, %v1157
        %1159 = vmatmul.f32.gmra.mxu0 %v1006
        %v1160 = vpop.f32.mrf.mxu0
        %v1161 = vadd.f32 0.0, %v1160
        %1162 = vmatmul.f32.gmra.mxu0 %v1007
        %v1163 = vpop.f32.mrf.mxu0
        %v1164 = vadd.f32 0.0, %v1163
        %1165 = vmatmul.f32.gmra.mxu0 %v1008
        %v1166 = vpop.f32.mrf.mxu0
        %v1167 = vadd.f32 0.0, %v1166
        %1168 = vmatmul.f32.gmra.mxu0 %v1009
        %v1169 = vpop.f32.mrf.mxu0
        %v1170 = vadd.f32 0.0, %v1169
        %1171 = vmatmul.f32.gmra.mxu0 %v1010
        %v1172 = vpop.f32.mrf.mxu0
        %v1173 = vadd.f32 0.0, %v1172
        %1174 = vmatmul.f32.gmra.mxu0 %v1011
        %v1175 = vpop.f32.mrf.mxu0
        %v1176 = vadd.f32 0.0, %v1175
        %1177 = vmatmul.f32.gmra.mxu0 %v1012
        %v1178 = vpop.f32.mrf.mxu0
        %v1179 = vadd.f32 0.0, %v1178
        %1180 = vmatmul.f32.gmra.mxu0 %v1013
        %v1181 = vpop.f32.mrf.mxu0
        %v1182 = vadd.f32 0.0, %v1181
        %1183 = vmatmul.f32.gmra.mxu0 %v1014
        %v1184 = vpop.f32.mrf.mxu0
        %v1185 = vadd.f32 0.0, %v1184
        %1186 = vmatmul.f32.gmra.mxu0 %v1015
        %v1187 = vpop.f32.mrf.mxu0
        %v1188 = vadd.f32 0.0, %v1187
        %1189 = vmatmul.f32.gmra.mxu0 %v1016
        %v1190 = vpop.f32.mrf.mxu0
        %v1191 = vadd.f32 0.0, %v1190
        %1192 = vmatmul.f32.gmra.mxu0 %v1017
        %v1193 = vpop.f32.mrf.mxu0
        %v1194 = vadd.f32 0.0, %v1193
        %1195 = vdwg.mxu0
        %1196 = vmatpush.msra.mxu0 %v1033
        %1197 = vmatpush.msra.mxu0 %v1032
        %1198 = vmatpush.msra.mxu0 %v1031
        %1199 = vmatpush.msra.mxu0 %v1030
        %1200 = vmatpush.msra.mxu0 %v1029
        %1201 = vmatpush.msra.mxu0 %v1028
        %1202 = vmatpush.msra.mxu0 %v1027
        %1203 = vmatpush.msra.mxu0 %v1026
        %1204 = vmatpush.msra.mxu0 %v1025
        %1205 = vmatpush.msra.mxu0 %v1024
        %1206 = vmatpush.msra.mxu0 %v1023
        %1207 = vmatpush.msra.mxu0 %v1022
        %1208 = vmatpush.msra.mxu0 %v1021
        %1209 = vmatpush.msra.mxu0 %v1020
        %1210 = vmatpush.msra.mxu0 %v1019
        %1211 = vmatpush.msra.mxu0 %v1018
        %1212 = vmatmul.f32.gmra.mxu0 %v970
        %v1213 = vpop.f32.mrf.mxu0
        %v1214 = vadd.f32 %v1149, %v1213
        %1215 = vmatmul.f32.gmra.mxu0 %v971
        %v1216 = vpop.f32.mrf.mxu0
        %v1217 = vadd.f32 %v1152, %v1216
        %1218 = vmatmul.f32.gmra.mxu0 %v972
        %v1219 = vpop.f32.mrf.mxu0
        %v1220 = vadd.f32 %v1155, %v1219
        %1221 = vmatmul.f32.gmra.mxu0 %v973
        %v1222 = vpop.f32.mrf.mxu0
        %v1223 = vadd.f32 %v1158, %v1222
        %1224 = vmatmul.f32.gmra.mxu0 %v974
        %v1225 = vpop.f32.mrf.mxu0
        %v1226 = vadd.f32 %v1161, %v1225
        %1227 = vmatmul.f32.gmra.mxu0 %v975
        %v1228 = vpop.f32.mrf.mxu0
        %v1229 = vadd.f32 %v1164, %v1228
        %1230 = vmatmul.f32.gmra.mxu0 %v976
        %v1231 = vpop.f32.mrf.mxu0
        %v1232 = vadd.f32 %v1167, %v1231
        %1233 = vmatmul.f32.gmra.mxu0 %v977
        %v1234 = vpop.f32.mrf.mxu0
        %v1235 = vadd.f32 %v1170, %v1234
        %1236 = vmatmul.f32.gmra.mxu0 %v978
        %v1237 = vpop.f32.mrf.mxu0
        %v1238 = vadd.f32 %v1173, %v1237
        %1239 = vmatmul.f32.gmra.mxu0 %v979
        %v1240 = vpop.f32.mrf.mxu0
        %v1241 = vadd.f32 %v1176, %v1240
        %1242 = vmatmul.f32.gmra.mxu0 %v980
        %v1243 = vpop.f32.mrf.mxu0
        %v1244 = vadd.f32 %v1179, %v1243
        %1245 = vmatmul.f32.gmra.mxu0 %v981
        %v1246 = vpop.f32.mrf.mxu0
        %v1247 = vadd.f32 %v1182, %v1246
        %1248 = vmatmul.f32.gmra.mxu0 %v982
        %v1249 = vpop.f32.mrf.mxu0
        %v1250 = vadd.f32 %v1185, %v1249
        %1251 = vmatmul.f32.gmra.mxu0 %v983
        %v1252 = vpop.f32.mrf.mxu0
        %v1253 = vadd.f32 %v1188, %v1252
        %1254 = vmatmul.f32.gmra.mxu0 %v984
        %v1255 = vpop.f32.mrf.mxu0
        %v1256 = vadd.f32 %v1191, %v1255
        %1257 = vmatmul.f32.gmra.mxu0 %v985
        %v1258 = vpop.f32.mrf.mxu0
        %v1259 = vadd.f32 %v1194, %v1258
        %1260 = vdwg.mxu0
        %v1261 = vadd.f32 %v1214, %v907
        %v1262 = vadd.f32 %v1217, %v910
        %v1263 = vadd.f32 %v1220, %v913
        %v1264 = vadd.f32 %v1223, %v916
        %v1265 = vadd.f32 %v1226, %v919
        %v1266 = vadd.f32 %v1229, %v922
        %v1267 = vadd.f32 %v1232, %v925
        %v1268 = vadd.f32 %v1235, %v928
        %v1269 = vadd.f32 %v1238, %v931
        %v1270 = vadd.f32 %v1241, %v934
        %v1271 = vadd.f32 %v1244, %v937
        %v1272 = vadd.f32 %v1247, %v940
        %v1273 = vadd.f32 %v1250, %v943
        %v1274 = vadd.f32 %v1253, %v946
        %v1275 = vadd.f32 %v1256, %v949
        %v1276 = vadd.f32 %v1259, %v952
        %v1277 = vsub.f32 0.0, %v1261
        %v1278 = vsub.f32 0.0, %v1262
        %v1279 = vsub.f32 0.0, %v1263
        %v1280 = vsub.f32 0.0, %v1264
        %v1281 = vsub.f32 0.0, %v1265
        %v1282 = vsub.f32 0.0, %v1266
        %v1283 = vsub.f32 0.0, %v1267
        %v1284 = vsub.f32 0.0, %v1268
        %v1285 = vsub.f32 0.0, %v1269
        %v1286 = vsub.f32 0.0, %v1270
        %v1287 = vsub.f32 0.0, %v1271
        %v1288 = vsub.f32 0.0, %v1272
        %v1289 = vsub.f32 0.0, %v1273
        %v1290 = vsub.f32 0.0, %v1274
        %v1291 = vsub.f32 0.0, %v1275
        %v1292 = vsub.f32 0.0, %v1276
        %v1293 = vmul.f32 %v1277, 1.442695
        %v1294 = vpow.pop %v1293
        %v1295 = vmul.f32 %v1278, 1.442695
        %v1296 = vpow.pop %v1295
        %v1297 = vmul.f32 %v1279, 1.442695
        %v1298 = vpow.pop %v1297
        %v1299 = vmul.f32 %v1280, 1.442695
        %v1300 = vpow.pop %v1299
        %v1301 = vmul.f32 %v1281, 1.442695
        %v1302 = vpow.pop %v1301
        %v1303 = vmul.f32 %v1282, 1.442695
        %v1304 = vpow.pop %v1303
        %v1305 = vmul.f32 %v1283, 1.442695
        %v1306 = vpow.pop %v1305
        %v1307 = vmul.f32 %v1284, 1.442695
        %v1308 = vpow.pop %v1307
        %v1309 = vmul.f32 %v1285, 1.442695
        %v1310 = vpow.pop %v1309
        %v1311 = vmul.f32 %v1286, 1.442695
        %v1312 = vpow.pop %v1311
        %v1313 = vmul.f32 %v1287, 1.442695
        %v1314 = vpow.pop %v1313
        %v1315 = vmul.f32 %v1288, 1.442695
        %v1316 = vpow.pop %v1315
        %v1317 = vmul.f32 %v1289, 1.442695
        %v1318 = vpow.pop %v1317
        %v1319 = vmul.f32 %v1290, 1.442695
        %v1320 = vpow.pop %v1319
        %v1321 = vmul.f32 %v1291, 1.442695
        %v1322 = vpow.pop %v1321
        %v1323 = vmul.f32 %v1292, 1.442695
        %v1324 = vpow.pop %v1323
        %v1325 = vadd.f32 %v1294, 1.0
        %v1326 = vadd.f32 %v1296, 1.0
        %v1327 = vadd.f32 %v1298, 1.0
        %v1328 = vadd.f32 %v1300, 1.0
        %v1329 = vadd.f32 %v1302, 1.0
        %v1330 = vadd.f32 %v1304, 1.0
        %v1331 = vadd.f32 %v1306, 1.0
        %v1332 = vadd.f32 %v1308, 1.0
        %v1333 = vadd.f32 %v1310, 1.0
        %v1334 = vadd.f32 %v1312, 1.0
        %v1335 = vadd.f32 %v1314, 1.0
        %v1336 = vadd.f32 %v1316, 1.0
        %v1337 = vadd.f32 %v1318, 1.0
        %v1338 = vadd.f32 %v1320, 1.0
        %v1339 = vadd.f32 %v1322, 1.0
        %v1340 = vadd.f32 %v1324, 1.0
        %v1341 = vrcp.pop %v1325
        %v1342 = vmul.f32 %v1325, %v1341
        %v1343 = vsub.f32 1.0, %v1342
        %v1344 = vmul.f32 %v1341, %v1343
        %v1345 = vadd.f32 %v1341, %v1344
        %vm1346 = vweird.f32 %v1325
        %vm1347 = vweird.f32 %v1341
        %vm1348 = vmor %vm1346, %vm1347
        %v1349 = vsel %vm1348, %v1341, %v1345
        %v1350 = vand.u32 2147483647, %v1325
        %vm1351 = vcmp.eq.f32.partialorder %v1350, 8.507059e+37
        %v1352 = vand.u32 %v1325, 2147483648
        %v1353 = vor.u32 1.1754944e-38, %v1352
        %v1354 = vsel %vm1351, %v1353, %v1349
        %v1355 = vmul.f32 1.0, %v1354
        %v1356 = vrcp.pop %v1326
        %v1357 = vmul.f32 %v1326, %v1356
        %v1358 = vsub.f32 1.0, %v1357
        %v1359 = vmul.f32 %v1356, %v1358
        %v1360 = vadd.f32 %v1356, %v1359
        %vm1361 = vweird.f32 %v1326
        %vm1362 = vweird.f32 %v1356
        %vm1363 = vmor %vm1361, %vm1362
        %v1364 = vsel %vm1363, %v1356, %v1360
        %v1365 = vand.u32 2147483647, %v1326
        %vm1366 = vcmp.eq.f32.partialorder %v1365, 8.507059e+37
        %v1367 = vand.u32 %v1326, 2147483648
        %v1368 = vor.u32 1.1754944e-38, %v1367
        %v1369 = vsel %vm1366, %v1368, %v1364
        %v1370 = vmul.f32 1.0, %v1369
        %v1371 = vrcp.pop %v1327
        %v1372 = vmul.f32 %v1327, %v1371
        %v1373 = vsub.f32 1.0, %v1372
        %v1374 = vmul.f32 %v1371, %v1373
        %v1375 = vadd.f32 %v1371, %v1374
        %vm1376 = vweird.f32 %v1327
        %vm1377 = vweird.f32 %v1371
        %vm1378 = vmor %vm1376, %vm1377
        %v1379 = vsel %vm1378, %v1371, %v1375
        %v1380 = vand.u32 2147483647, %v1327
        %vm1381 = vcmp.eq.f32.partialorder %v1380, 8.507059e+37
        %v1382 = vand.u32 %v1327, 2147483648
        %v1383 = vor.u32 1.1754944e-38, %v1382
        %v1384 = vsel %vm1381, %v1383, %v1379
        %v1385 = vmul.f32 1.0, %v1384
        %v1386 = vrcp.pop %v1328
        %v1387 = vmul.f32 %v1328, %v1386
        %v1388 = vsub.f32 1.0, %v1387
        %v1389 = vmul.f32 %v1386, %v1388
        %v1390 = vadd.f32 %v1386, %v1389
        %vm1391 = vweird.f32 %v1328
        %vm1392 = vweird.f32 %v1386
        %vm1393 = vmor %vm1391, %vm1392
        %v1394 = vsel %vm1393, %v1386, %v1390
        %v1395 = vand.u32 2147483647, %v1328
        %vm1396 = vcmp.eq.f32.partialorder %v1395, 8.507059e+37
        %v1397 = vand.u32 %v1328, 2147483648
        %v1398 = vor.u32 1.1754944e-38, %v1397
        %v1399 = vsel %vm1396, %v1398, %v1394
        %v1400 = vmul.f32 1.0, %v1399
        %v1401 = vrcp.pop %v1329
        %v1402 = vmul.f32 %v1329, %v1401
        %v1403 = vsub.f32 1.0, %v1402
        %v1404 = vmul.f32 %v1401, %v1403
        %v1405 = vadd.f32 %v1401, %v1404
        %vm1406 = vweird.f32 %v1329
        %vm1407 = vweird.f32 %v1401
        %vm1408 = vmor %vm1406, %vm1407
        %v1409 = vsel %vm1408, %v1401, %v1405
        %v1410 = vand.u32 2147483647, %v1329
        %vm1411 = vcmp.eq.f32.partialorder %v1410, 8.507059e+37
        %v1412 = vand.u32 %v1329, 2147483648
        %v1413 = vor.u32 1.1754944e-38, %v1412
        %v1414 = vsel %vm1411, %v1413, %v1409
        %v1415 = vmul.f32 1.0, %v1414
        %v1416 = vrcp.pop %v1330
        %v1417 = vmul.f32 %v1330, %v1416
        %v1418 = vsub.f32 1.0, %v1417
        %v1419 = vmul.f32 %v1416, %v1418
        %v1420 = vadd.f32 %v1416, %v1419
        %vm1421 = vweird.f32 %v1330
        %vm1422 = vweird.f32 %v1416
        %vm1423 = vmor %vm1421, %vm1422
        %v1424 = vsel %vm1423, %v1416, %v1420
        %v1425 = vand.u32 2147483647, %v1330
        %vm1426 = vcmp.eq.f32.partialorder %v1425, 8.507059e+37
        %v1427 = vand.u32 %v1330, 2147483648
        %v1428 = vor.u32 1.1754944e-38, %v1427
        %v1429 = vsel %vm1426, %v1428, %v1424
        %v1430 = vmul.f32 1.0, %v1429
        %v1431 = vrcp.pop %v1331
        %v1432 = vmul.f32 %v1331, %v1431
        %v1433 = vsub.f32 1.0, %v1432
        %v1434 = vmul.f32 %v1431, %v1433
        %v1435 = vadd.f32 %v1431, %v1434
        %vm1436 = vweird.f32 %v1331
        %vm1437 = vweird.f32 %v1431
        %vm1438 = vmor %vm1436, %vm1437
        %v1439 = vsel %vm1438, %v1431, %v1435
        %v1440 = vand.u32 2147483647, %v1331
        %vm1441 = vcmp.eq.f32.partialorder %v1440, 8.507059e+37
        %v1442 = vand.u32 %v1331, 2147483648
        %v1443 = vor.u32 1.1754944e-38, %v1442
        %v1444 = vsel %vm1441, %v1443, %v1439
        %v1445 = vmul.f32 1.0, %v1444
        %v1446 = vrcp.pop %v1332
        %v1447 = vmul.f32 %v1332, %v1446
        %v1448 = vsub.f32 1.0, %v1447
        %v1449 = vmul.f32 %v1446, %v1448
        %v1450 = vadd.f32 %v1446, %v1449
        %vm1451 = vweird.f32 %v1332
        %vm1452 = vweird.f32 %v1446
        %vm1453 = vmor %vm1451, %vm1452
        %v1454 = vsel %vm1453, %v1446, %v1450
        %v1455 = vand.u32 2147483647, %v1332
        %vm1456 = vcmp.eq.f32.partialorder %v1455, 8.507059e+37
        %v1457 = vand.u32 %v1332, 2147483648
        %v1458 = vor.u32 1.1754944e-38, %v1457
        %v1459 = vsel %vm1456, %v1458, %v1454
        %v1460 = vmul.f32 1.0, %v1459
        %v1461 = vrcp.pop %v1333
        %v1462 = vmul.f32 %v1333, %v1461
        %v1463 = vsub.f32 1.0, %v1462
        %v1464 = vmul.f32 %v1461, %v1463
        %v1465 = vadd.f32 %v1461, %v1464
        %vm1466 = vweird.f32 %v1333
        %vm1467 = vweird.f32 %v1461
        %vm1468 = vmor %vm1466, %vm1467
        %v1469 = vsel %vm1468, %v1461, %v1465
        %v1470 = vand.u32 2147483647, %v1333
        %vm1471 = vcmp.eq.f32.partialorder %v1470, 8.507059e+37
        %v1472 = vand.u32 %v1333, 2147483648
        %v1473 = vor.u32 1.1754944e-38, %v1472
        %v1474 = vsel %vm1471, %v1473, %v1469
        %v1475 = vmul.f32 1.0, %v1474
        %v1476 = vrcp.pop %v1334
        %v1477 = vmul.f32 %v1334, %v1476
        %v1478 = vsub.f32 1.0, %v1477
        %v1479 = vmul.f32 %v1476, %v1478
        %v1480 = vadd.f32 %v1476, %v1479
        %vm1481 = vweird.f32 %v1334
        %vm1482 = vweird.f32 %v1476
        %vm1483 = vmor %vm1481, %vm1482
        %v1484 = vsel %vm1483, %v1476, %v1480
        %v1485 = vand.u32 2147483647, %v1334
        %vm1486 = vcmp.eq.f32.partialorder %v1485, 8.507059e+37
        %v1487 = vand.u32 %v1334, 2147483648
        %v1488 = vor.u32 1.1754944e-38, %v1487
        %v1489 = vsel %vm1486, %v1488, %v1484
        %v1490 = vmul.f32 1.0, %v1489
        %v1491 = vrcp.pop %v1335
        %v1492 = vmul.f32 %v1335, %v1491
        %v1493 = vsub.f32 1.0, %v1492
        %v1494 = vmul.f32 %v1491, %v1493
        %v1495 = vadd.f32 %v1491, %v1494
        %vm1496 = vweird.f32 %v1335
        %vm1497 = vweird.f32 %v1491
        %vm1498 = vmor %vm1496, %vm1497
        %v1499 = vsel %vm1498, %v1491, %v1495
        %v1500 = vand.u32 2147483647, %v1335
        %vm1501 = vcmp.eq.f32.partialorder %v1500, 8.507059e+37
        %v1502 = vand.u32 %v1335, 2147483648
        %v1503 = vor.u32 1.1754944e-38, %v1502
        %v1504 = vsel %vm1501, %v1503, %v1499
        %v1505 = vmul.f32 1.0, %v1504
        %v1506 = vrcp.pop %v1336
        %v1507 = vmul.f32 %v1336, %v1506
        %v1508 = vsub.f32 1.0, %v1507
        %v1509 = vmul.f32 %v1506, %v1508
        %v1510 = vadd.f32 %v1506, %v1509
        %vm1511 = vweird.f32 %v1336
        %vm1512 = vweird.f32 %v1506
        %vm1513 = vmor %vm1511, %vm1512
        %v1514 = vsel %vm1513, %v1506, %v1510
        %v1515 = vand.u32 2147483647, %v1336
        %vm1516 = vcmp.eq.f32.partialorder %v1515, 8.507059e+37
        %v1517 = vand.u32 %v1336, 2147483648
        %v1518 = vor.u32 1.1754944e-38, %v1517
        %v1519 = vsel %vm1516, %v1518, %v1514
        %v1520 = vmul.f32 1.0, %v1519
        %v1521 = vrcp.pop %v1337
        %v1522 = vmul.f32 %v1337, %v1521
        %v1523 = vsub.f32 1.0, %v1522
        %v1524 = vmul.f32 %v1521, %v1523
        %v1525 = vadd.f32 %v1521, %v1524
        %vm1526 = vweird.f32 %v1337
        %vm1527 = vweird.f32 %v1521
        %vm1528 = vmor %vm1526, %vm1527
        %v1529 = vsel %vm1528, %v1521, %v1525
        %v1530 = vand.u32 2147483647, %v1337
        %vm1531 = vcmp.eq.f32.partialorder %v1530, 8.507059e+37
        %v1532 = vand.u32 %v1337, 2147483648
        %v1533 = vor.u32 1.1754944e-38, %v1532
        %v1534 = vsel %vm1531, %v1533, %v1529
        %v1535 = vmul.f32 1.0, %v1534
        %v1536 = vrcp.pop %v1338
        %v1537 = vmul.f32 %v1338, %v1536
        %v1538 = vsub.f32 1.0, %v1537
        %v1539 = vmul.f32 %v1536, %v1538
        %v1540 = vadd.f32 %v1536, %v1539
        %vm1541 = vweird.f32 %v1338
        %vm1542 = vweird.f32 %v1536
        %vm1543 = vmor %vm1541, %vm1542
        %v1544 = vsel %vm1543, %v1536, %v1540
        %v1545 = vand.u32 2147483647, %v1338
        %vm1546 = vcmp.eq.f32.partialorder %v1545, 8.507059e+37
        %v1547 = vand.u32 %v1338, 2147483648
        %v1548 = vor.u32 1.1754944e-38, %v1547
        %v1549 = vsel %vm1546, %v1548, %v1544
        %v1550 = vmul.f32 1.0, %v1549
        %v1551 = vrcp.pop %v1339
        %v1552 = vmul.f32 %v1339, %v1551
        %v1553 = vsub.f32 1.0, %v1552
        %v1554 = vmul.f32 %v1551, %v1553
        %v1555 = vadd.f32 %v1551, %v1554
        %vm1556 = vweird.f32 %v1339
        %vm1557 = vweird.f32 %v1551
        %vm1558 = vmor %vm1556, %vm1557
        %v1559 = vsel %vm1558, %v1551, %v1555
        %v1560 = vand.u32 2147483647, %v1339
        %vm1561 = vcmp.eq.f32.partialorder %v1560, 8.507059e+37
        %v1562 = vand.u32 %v1339, 2147483648
        %v1563 = vor.u32 1.1754944e-38, %v1562
        %v1564 = vsel %vm1561, %v1563, %v1559
        %v1565 = vmul.f32 1.0, %v1564
        %v1566 = vrcp.pop %v1340
        %v1567 = vmul.f32 %v1340, %v1566
        %v1568 = vsub.f32 1.0, %v1567
        %v1569 = vmul.f32 %v1566, %v1568
        %v1570 = vadd.f32 %v1566, %v1569
        %vm1571 = vweird.f32 %v1340
        %vm1572 = vweird.f32 %v1566
        %vm1573 = vmor %vm1571, %vm1572
        %v1574 = vsel %vm1573, %v1566, %v1570
        %v1575 = vand.u32 2147483647, %v1340
        %vm1576 = vcmp.eq.f32.partialorder %v1575, 8.507059e+37
        %v1577 = vand.u32 %v1340, 2147483648
        %v1578 = vor.u32 1.1754944e-38, %v1577
        %v1579 = vsel %vm1576, %v1578, %v1574
        %v1580 = vmul.f32 1.0, %v1579
        %v1581 = vmax.f32 %v1261, 0.0
        %v1582 = vmax.f32 %v1262, 0.0
        %v1583 = vmax.f32 %v1263, 0.0
        %v1584 = vmax.f32 %v1264, 0.0
        %v1585 = vmax.f32 %v1265, 0.0
        %v1586 = vmax.f32 %v1266, 0.0
        %v1587 = vmax.f32 %v1267, 0.0
        %v1588 = vmax.f32 %v1268, 0.0
        %v1589 = vmax.f32 %v1269, 0.0
        %v1590 = vmax.f32 %v1270, 0.0
        %v1591 = vmax.f32 %v1271, 0.0
        %v1592 = vmax.f32 %v1272, 0.0
        %v1593 = vmax.f32 %v1273, 0.0
        %v1594 = vmax.f32 %v1274, 0.0
        %v1595 = vmax.f32 %v1275, 0.0
        %v1596 = vmax.f32 %v1276, 0.0
        %1597 = vst [vmem:[%s381] sm:$0xff] %v1581
        %1598 = vst [vmem:[%s381 + $0x8] sm:$0xff] %v1582
        %1599 = vst [vmem:[%s381 + $0x10] sm:$0xff] %v1583
        %1600 = vst [vmem:[%s381 + $0x18] sm:$0xff] %v1584
        %1601 = vst [vmem:[%s381 + $0x20] sm:$0xff] %v1585
        %1602 = vst [vmem:[%s381 + $0x28] sm:$0xff] %v1586
        %1603 = vst [vmem:[%s381 + $0x30] sm:$0xff] %v1587
        %1604 = vst [vmem:[%s381 + $0x38] sm:$0xff] %v1588
        %1605 = vst [vmem:[%s381 + $0x40] sm:$0xff] %v1589
        %1606 = vst [vmem:[%s381 + $0x48] sm:$0xff] %v1590
        %1607 = vst [vmem:[%s381 + $0x50] sm:$0xff] %v1591
        %1608 = vst [vmem:[%s381 + $0x58] sm:$0xff] %v1592
        %1609 = vst [vmem:[%s381 + $0x60] sm:$0xff] %v1593
        %1610 = vst [vmem:[%s381 + $0x68] sm:$0xff] %v1594
        %1611 = vst [vmem:[%s381 + $0x70] sm:$0xff] %v1595
        %1612 = vst [vmem:[%s381 + $0x78] sm:$0xff] %v1596
        %v1613 = vld [vmem:[#allocation3] sm:$0xff]
        %v1614 = vld [vmem:[#allocation3 + $0x8] sm:$0xff]
        %v1615 = vld [vmem:[#allocation3 + $0x10] sm:$0xff]
        %v1616 = vld [vmem:[#allocation3 + $0x18] sm:$0xff]
        %v1617 = vld [vmem:[#allocation3 + $0x20] sm:$0xff]
        %v1618 = vld [vmem:[#allocation3 + $0x28] sm:$0xff]
        %v1619 = vld [vmem:[#allocation3 + $0x30] sm:$0xff]
        %v1620 = vld [vmem:[#allocation3 + $0x38] sm:$0xff]
        %v1621 = vld [vmem:[#allocation3 + $0x40] sm:$0xff]
        %v1622 = vld [vmem:[#allocation3 + $0x48] sm:$0xff]
        %v1623 = vld [vmem:[#allocation3 + $0x50] sm:$0xff]
        %v1624 = vld [vmem:[#allocation3 + $0x58] sm:$0xff]
        %v1625 = vld [vmem:[#allocation3 + $0x60] sm:$0xff]
        %v1626 = vld [vmem:[#allocation3 + $0x68] sm:$0xff]
        %v1627 = vld [vmem:[#allocation3 + $0x70] sm:$0xff]
        %v1628 = vld [vmem:[#allocation3 + $0x78] sm:$0xff]
        %v1629 = vmul.f32 %v1084, %v1355
        %v1630 = vmul.f32 %v1087, %v1370
        %v1631 = vmul.f32 %v1090, %v1385
        %v1632 = vmul.f32 %v1093, %v1400
        %v1633 = vmul.f32 %v1096, %v1415
        %v1634 = vmul.f32 %v1099, %v1430
        %v1635 = vmul.f32 %v1102, %v1445
        %v1636 = vmul.f32 %v1105, %v1460
        %v1637 = vmul.f32 %v1108, %v1475
        %v1638 = vmul.f32 %v1111, %v1490
        %v1639 = vmul.f32 %v1114, %v1505
        %v1640 = vmul.f32 %v1117, %v1520
        %v1641 = vmul.f32 %v1120, %v1535
        %v1642 = vmul.f32 %v1123, %v1550
        %v1643 = vmul.f32 %v1126, %v1565
        %v1644 = vmul.f32 %v1129, %v1580
        %1645 = vxpose.xlu0.b32.start [1/16] %v970, 128
        %1646 = vxpose.xlu0.b32.cont [2/16] %v971, 128
        %1647 = vxpose.xlu0.b32.cont [3/16] %v972, 128
        %1648 = vxpose.xlu0.b32.cont [4/16] %v973, 128
        %1649 = vxpose.xlu0.b32.cont [5/16] %v974, 128
        %1650 = vxpose.xlu0.b32.cont [6/16] %v975, 128
        %1651 = vxpose.xlu0.b32.cont [7/16] %v976, 128
        %1652 = vxpose.xlu0.b32.cont [8/16] %v977, 128
        %1653 = vxpose.xlu0.b32.cont [9/16] %v978, 128
        %1654 = vxpose.xlu0.b32.cont [10/16] %v979, 128
        %1655 = vxpose.xlu0.b32.cont [11/16] %v980, 128
        %1656 = vxpose.xlu0.b32.cont [12/16] %v981, 128
        %1657 = vxpose.xlu0.b32.cont [13/16] %v982, 128
        %1658 = vxpose.xlu0.b32.cont [14/16] %v983, 128
        %1659 = vxpose.xlu0.b32.cont [15/16] %v984, 128
        %1660 = vxpose.xlu0.b32.end [16/16] %v985, 128
        %v1661 = vpop.trf.xlu0
        %v1662 = vpop.trf.xlu0
        %v1663 = vpop.trf.xlu0
        %v1664 = vpop.trf.xlu0
        %v1665 = vpop.trf.xlu0
        %v1666 = vpop.trf.xlu0
        %v1667 = vpop.trf.xlu0
        %v1668 = vpop.trf.xlu0
        %v1669 = vpop.trf.xlu0
        %v1670 = vpop.trf.xlu0
        %v1671 = vpop.trf.xlu0
        %v1672 = vpop.trf.xlu0
        %v1673 = vpop.trf.xlu0
        %v1674 = vpop.trf.xlu0
        %v1675 = vpop.trf.xlu0
        %v1676 = vpop.trf.xlu0
        %1677 = vmatpush.msra.mxu0 %v1644
        %1678 = vmatpush.msra.mxu0 %v1643
        %1679 = vmatpush.msra.mxu0 %v1642
        %1680 = vmatpush.msra.mxu0 %v1641
        %1681 = vmatpush.msra.mxu0 %v1640
        %1682 = vmatpush.msra.mxu0 %v1639
        %1683 = vmatpush.msra.mxu0 %v1638
        %1684 = vmatpush.msra.mxu0 %v1637
        %1685 = vmatpush.msra.mxu0 %v1636
        %1686 = vmatpush.msra.mxu0 %v1635
        %1687 = vmatpush.msra.mxu0 %v1634
        %1688 = vmatpush.msra.mxu0 %v1633
        %1689 = vmatpush.msra.mxu0 %v1632
        %1690 = vmatpush.msra.mxu0 %v1631
        %1691 = vmatpush.msra.mxu0 %v1630
        %1692 = vmatpush.msra.mxu0 %v1629
        %1693 = vmatmul.f32.gmra.mxu0 %v1661
        %v1694 = vpop.f32.mrf.mxu0
        %v1695 = vadd.f32 0.0, %v1694
        %1696 = vmatmul.f32.gmra.mxu0 %v1662
        %v1697 = vpop.f32.mrf.mxu0
        %v1698 = vadd.f32 0.0, %v1697
        %1699 = vmatmul.f32.gmra.mxu0 %v1663
        %v1700 = vpop.f32.mrf.mxu0
        %v1701 = vadd.f32 0.0, %v1700
        %1702 = vmatmul.f32.gmra.mxu0 %v1664
        %v1703 = vpop.f32.mrf.mxu0
        %v1704 = vadd.f32 0.0, %v1703
        %1705 = vmatmul.f32.gmra.mxu0 %v1665
        %v1706 = vpop.f32.mrf.mxu0
        %v1707 = vadd.f32 0.0, %v1706
        %1708 = vmatmul.f32.gmra.mxu0 %v1666
        %v1709 = vpop.f32.mrf.mxu0
        %v1710 = vadd.f32 0.0, %v1709
        %1711 = vmatmul.f32.gmra.mxu0 %v1667
        %v1712 = vpop.f32.mrf.mxu0
        %v1713 = vadd.f32 0.0, %v1712
        %1714 = vmatmul.f32.gmra.mxu0 %v1668
        %v1715 = vpop.f32.mrf.mxu0
        %v1716 = vadd.f32 0.0, %v1715
        %1717 = vmatmul.f32.gmra.mxu0 %v1669
        %v1718 = vpop.f32.mrf.mxu0
        %v1719 = vadd.f32 0.0, %v1718
        %1720 = vmatmul.f32.gmra.mxu0 %v1670
        %v1721 = vpop.f32.mrf.mxu0
        %v1722 = vadd.f32 0.0, %v1721
        %1723 = vmatmul.f32.gmra.mxu0 %v1671
        %v1724 = vpop.f32.mrf.mxu0
        %v1725 = vadd.f32 0.0, %v1724
        %1726 = vmatmul.f32.gmra.mxu0 %v1672
        %v1727 = vpop.f32.mrf.mxu0
        %v1728 = vadd.f32 0.0, %v1727
        %1729 = vmatmul.f32.gmra.mxu0 %v1673
        %v1730 = vpop.f32.mrf.mxu0
        %v1731 = vadd.f32 0.0, %v1730
        %1732 = vmatmul.f32.gmra.mxu0 %v1674
        %v1733 = vpop.f32.mrf.mxu0
        %v1734 = vadd.f32 0.0, %v1733
        %1735 = vmatmul.f32.gmra.mxu0 %v1675
        %v1736 = vpop.f32.mrf.mxu0
        %v1737 = vadd.f32 0.0, %v1736
        %1738 = vmatmul.f32.gmra.mxu0 %v1676
        %v1739 = vpop.f32.mrf.mxu0
        %v1740 = vadd.f32 0.0, %v1739
        %1741 = vdwg.mxu0
        %v1742 = vadd.f32 %v1613, %v1695
        %v1743 = vadd.f32 %v1614, %v1698
        %v1744 = vadd.f32 %v1615, %v1701
        %v1745 = vadd.f32 %v1616, %v1704
        %v1746 = vadd.f32 %v1617, %v1707
        %v1747 = vadd.f32 %v1618, %v1710
        %v1748 = vadd.f32 %v1619, %v1713
        %v1749 = vadd.f32 %v1620, %v1716
        %v1750 = vadd.f32 %v1621, %v1719
        %v1751 = vadd.f32 %v1622, %v1722
        %v1752 = vadd.f32 %v1623, %v1725
        %v1753 = vadd.f32 %v1624, %v1728
        %v1754 = vadd.f32 %v1625, %v1731
        %v1755 = vadd.f32 %v1626, %v1734
        %v1756 = vadd.f32 %v1627, %v1737
        %v1757 = vadd.f32 %v1628, %v1740
        %1758 = vst [vmem:[#allocation3] sm:$0xff] %v1742
        %1759 = vst [vmem:[#allocation3 + $0x8] sm:$0xff] %v1743
        %1760 = vst [vmem:[#allocation3 + $0x10] sm:$0xff] %v1744
        %1761 = vst [vmem:[#allocation3 + $0x18] sm:$0xff] %v1745
        %1762 = vst [vmem:[#allocation3 + $0x20] sm:$0xff] %v1746
        %1763 = vst [vmem:[#allocation3 + $0x28] sm:$0xff] %v1747
        %1764 = vst [vmem:[#allocation3 + $0x30] sm:$0xff] %v1748
        %1765 = vst [vmem:[#allocation3 + $0x38] sm:$0xff] %v1749
        %1766 = vst [vmem:[#allocation3 + $0x40] sm:$0xff] %v1750
        %1767 = vst [vmem:[#allocation3 + $0x48] sm:$0xff] %v1751
        %1768 = vst [vmem:[#allocation3 + $0x50] sm:$0xff] %v1752
        %1769 = vst [vmem:[#allocation3 + $0x58] sm:$0xff] %v1753
        %1770 = vst [vmem:[#allocation3 + $0x60] sm:$0xff] %v1754
        %1771 = vst [vmem:[#allocation3 + $0x68] sm:$0xff] %v1755
        %1772 = vst [vmem:[#allocation3 + $0x70] sm:$0xff] %v1756
        %1773 = vst [vmem:[#allocation3 + $0x78] sm:$0xff] %v1757
        %v1774 = vld [vmem:[#allocation4] sm:$0xff]
        %v1775 = vld [vmem:[#allocation4 + $0x8] sm:$0xff]
        %v1776 = vld [vmem:[#allocation4 + $0x10] sm:$0xff]
        %v1777 = vld [vmem:[#allocation4 + $0x18] sm:$0xff]
        %v1778 = vld [vmem:[#allocation4 + $0x20] sm:$0xff]
        %v1779 = vld [vmem:[#allocation4 + $0x28] sm:$0xff]
        %v1780 = vld [vmem:[#allocation4 + $0x30] sm:$0xff]
        %v1781 = vld [vmem:[#allocation4 + $0x38] sm:$0xff]
        %v1782 = vld [vmem:[#allocation4 + $0x40] sm:$0xff]
        %v1783 = vld [vmem:[#allocation4 + $0x48] sm:$0xff]
        %v1784 = vld [vmem:[#allocation4 + $0x50] sm:$0xff]
        %v1785 = vld [vmem:[#allocation4 + $0x58] sm:$0xff]
        %v1786 = vld [vmem:[#allocation4 + $0x60] sm:$0xff]
        %v1787 = vld [vmem:[#allocation4 + $0x68] sm:$0xff]
        %v1788 = vld [vmem:[#allocation4 + $0x70] sm:$0xff]
        %v1789 = vld [vmem:[#allocation4 + $0x78] sm:$0xff]
        %1790 = vmatpush.msra.mxu0 %v1580
        %1791 = vmatpush.msra.mxu0 %v1565
        %1792 = vmatpush.msra.mxu0 %v1550
        %1793 = vmatpush.msra.mxu0 %v1535
        %1794 = vmatpush.msra.mxu0 %v1520
        %1795 = vmatpush.msra.mxu0 %v1505
        %1796 = vmatpush.msra.mxu0 %v1490
        %1797 = vmatpush.msra.mxu0 %v1475
        %1798 = vmatpush.msra.mxu0 %v1460
        %1799 = vmatpush.msra.mxu0 %v1445
        %1800 = vmatpush.msra.mxu0 %v1430
        %1801 = vmatpush.msra.mxu0 %v1415
        %1802 = vmatpush.msra.mxu0 %v1400
        %1803 = vmatpush.msra.mxu0 %v1385
        %1804 = vmatpush.msra.mxu0 %v1370
        %1805 = vmatpush.msra.mxu0 %v1355
        %1806 = vmatmul.f32.gmra.mxu0 %v1661
        %v1807 = vpop.f32.mrf.mxu0
        %v1808 = vadd.f32 0.0, %v1807
        %1809 = vmatmul.f32.gmra.mxu0 %v1662
        %v1810 = vpop.f32.mrf.mxu0
        %v1811 = vadd.f32 0.0, %v1810
        %1812 = vmatmul.f32.gmra.mxu0 %v1663
        %v1813 = vpop.f32.mrf.mxu0
        %v1814 = vadd.f32 0.0, %v1813
        %1815 = vmatmul.f32.gmra.mxu0 %v1664
        %v1816 = vpop.f32.mrf.mxu0
        %v1817 = vadd.f32 0.0, %v1816
        %1818 = vmatmul.f32.gmra.mxu0 %v1665
        %v1819 = vpop.f32.mrf.mxu0
        %v1820 = vadd.f32 0.0, %v1819
        %1821 = vmatmul.f32.gmra.mxu0 %v1666
        %v1822 = vpop.f32.mrf.mxu0
        %v1823 = vadd.f32 0.0, %v1822
        %1824 = vmatmul.f32.gmra.mxu0 %v1667
        %v1825 = vpop.f32.mrf.mxu0
        %v1826 = vadd.f32 0.0, %v1825
        %1827 = vmatmul.f32.gmra.mxu0 %v1668
        %v1828 = vpop.f32.mrf.mxu0
        %v1829 = vadd.f32 0.0, %v1828
        %1830 = vmatmul.f32.gmra.mxu0 %v1669
        %v1831 = vpop.f32.mrf.mxu0
        %v1832 = vadd.f32 0.0, %v1831
        %1833 = vmatmul.f32.gmra.mxu0 %v1670
        %v1834 = vpop.f32.mrf.mxu0
        %v1835 = vadd.f32 0.0, %v1834
        %1836 = vmatmul.f32.gmra.mxu0 %v1671
        %v1837 = vpop.f32.mrf.mxu0
        %v1838 = vadd.f32 0.0, %v1837
        %1839 = vmatmul.f32.gmra.mxu0 %v1672
        %v1840 = vpop.f32.mrf.mxu0
        %v1841 = vadd.f32 0.0, %v1840
        %1842 = vmatmul.f32.gmra.mxu0 %v1673
        %v1843 = vpop.f32.mrf.mxu0
        %v1844 = vadd.f32 0.0, %v1843
        %1845 = vmatmul.f32.gmra.mxu0 %v1674
        %v1846 = vpop.f32.mrf.mxu0
        %v1847 = vadd.f32 0.0, %v1846
        %1848 = vmatmul.f32.gmra.mxu0 %v1675
        %v1849 = vpop.f32.mrf.mxu0
        %v1850 = vadd.f32 0.0, %v1849
        %1851 = vmatmul.f32.gmra.mxu0 %v1676
        %v1852 = vpop.f32.mrf.mxu0
        %v1853 = vadd.f32 0.0, %v1852
        %1854 = vdwg.mxu0
        %v1855 = vadd.f32 %v1774, %v1808
        %v1856 = vadd.f32 %v1775, %v1811
        %v1857 = vadd.f32 %v1776, %v1814
        %v1858 = vadd.f32 %v1777, %v1817
        %v1859 = vadd.f32 %v1778, %v1820
        %v1860 = vadd.f32 %v1779, %v1823
        %v1861 = vadd.f32 %v1780, %v1826
        %v1862 = vadd.f32 %v1781, %v1829
        %v1863 = vadd.f32 %v1782, %v1832
        %v1864 = vadd.f32 %v1783, %v1835
        %v1865 = vadd.f32 %v1784, %v1838
        %v1866 = vadd.f32 %v1785, %v1841
        %v1867 = vadd.f32 %v1786, %v1844
        %v1868 = vadd.f32 %v1787, %v1847
        %v1869 = vadd.f32 %v1788, %v1850
        %v1870 = vadd.f32 %v1789, %v1853
        %1871 = vst [vmem:[#allocation4] sm:$0xff] %v1855
        %1872 = vst [vmem:[#allocation4 + $0x8] sm:$0xff] %v1856
        %1873 = vst [vmem:[#allocation4 + $0x10] sm:$0xff] %v1857
        %1874 = vst [vmem:[#allocation4 + $0x18] sm:$0xff] %v1858
        %1875 = vst [vmem:[#allocation4 + $0x20] sm:$0xff] %v1859
        %1876 = vst [vmem:[#allocation4 + $0x28] sm:$0xff] %v1860
        %1877 = vst [vmem:[#allocation4 + $0x30] sm:$0xff] %v1861
        %1878 = vst [vmem:[#allocation4 + $0x38] sm:$0xff] %v1862
        %1879 = vst [vmem:[#allocation4 + $0x40] sm:$0xff] %v1863
        %1880 = vst [vmem:[#allocation4 + $0x48] sm:$0xff] %v1864
        %1881 = vst [vmem:[#allocation4 + $0x50] sm:$0xff] %v1865
        %1882 = vst [vmem:[#allocation4 + $0x58] sm:$0xff] %v1866
        %1883 = vst [vmem:[#allocation4 + $0x60] sm:$0xff] %v1867
        %1884 = vst [vmem:[#allocation4 + $0x68] sm:$0xff] %v1868
        %1885 = vst [vmem:[#allocation4 + $0x70] sm:$0xff] %v1869
        %1886 = vst [vmem:[#allocation4 + $0x78] sm:$0xff] %v1870
        %p1887 = scmp.eq.s32.totalorder %s25, 1
        // Predicated region
        $region61: #{_lambda_.8} parent=55 // pred_check
          %p1888 = pneg %p1887
        $region62: #{_lambda_.8} parent=55 // pred_check_branch
          %1890 = sbr.rel (%p1888) target = $region64
        $region63: #{_lambda_.8} parent=55 // pred_region
          %v1891 = vld [vmem:[#allocation2] sm:$0xff]
          %v1892 = vld [vmem:[#allocation2 + $0x20] sm:$0xff]
          %v1893 = vld [vmem:[#allocation2 + $0x40] sm:$0xff]
          %v1894 = vld [vmem:[#allocation2 + $0x60] sm:$0xff]
          %v1895 = vld [vmem:[#allocation2 + $0x80] sm:$0xff]
          %v1896 = vld [vmem:[#allocation2 + $0xa0] sm:$0xff]
          %v1897 = vld [vmem:[#allocation2 + $0xc0] sm:$0xff]
          %v1898 = vld [vmem:[#allocation2 + $0xe0] sm:$0xff]
          %v1899 = vld [vmem:[#allocation2 + $0x100] sm:$0xff]
          %v1900 = vld [vmem:[#allocation2 + $0x120] sm:$0xff]
          %v1901 = vld [vmem:[#allocation2 + $0x140] sm:$0xff]
          %v1902 = vld [vmem:[#allocation2 + $0x160] sm:$0xff]
          %v1903 = vld [vmem:[#allocation2 + $0x180] sm:$0xff]
          %v1904 = vld [vmem:[#allocation2 + $0x1a0] sm:$0xff]
          %v1905 = vld [vmem:[#allocation2 + $0x1c0] sm:$0xff]
          %v1906 = vld [vmem:[#allocation2 + $0x1e0] sm:$0xff]
          %v1907 = vld [vmem:[#allocation3] sm:$0xff]
          %v1908 = vld [vmem:[#allocation3 + $0x8] sm:$0xff]
          %v1909 = vld [vmem:[#allocation3 + $0x10] sm:$0xff]
          %v1910 = vld [vmem:[#allocation3 + $0x18] sm:$0xff]
          %v1911 = vld [vmem:[#allocation3 + $0x20] sm:$0xff]
          %v1912 = vld [vmem:[#allocation3 + $0x28] sm:$0xff]
          %v1913 = vld [vmem:[#allocation3 + $0x30] sm:$0xff]
          %v1914 = vld [vmem:[#allocation3 + $0x38] sm:$0xff]
          %v1915 = vld [vmem:[#allocation3 + $0x40] sm:$0xff]
          %v1916 = vld [vmem:[#allocation3 + $0x48] sm:$0xff]
          %v1917 = vld [vmem:[#allocation3 + $0x50] sm:$0xff]
          %v1918 = vld [vmem:[#allocation3 + $0x58] sm:$0xff]
          %v1919 = vld [vmem:[#allocation3 + $0x60] sm:$0xff]
          %v1920 = vld [vmem:[#allocation3 + $0x68] sm:$0xff]
          %v1921 = vld [vmem:[#allocation3 + $0x70] sm:$0xff]
          %v1922 = vld [vmem:[#allocation3 + $0x78] sm:$0xff]
          %v1923 = vld [vmem:[#allocation4] sm:$0xff]
          %v1924 = vld [vmem:[#allocation4 + $0x8] sm:$0xff]
          %v1925 = vld [vmem:[#allocation4 + $0x10] sm:$0xff]
          %v1926 = vld [vmem:[#allocation4 + $0x18] sm:$0xff]
          %v1927 = vld [vmem:[#allocation4 + $0x20] sm:$0xff]
          %v1928 = vld [vmem:[#allocation4 + $0x28] sm:$0xff]
          %v1929 = vld [vmem:[#allocation4 + $0x30] sm:$0xff]
          %v1930 = vld [vmem:[#allocation4 + $0x38] sm:$0xff]
          %v1931 = vld [vmem:[#allocation4 + $0x40] sm:$0xff]
          %v1932 = vld [vmem:[#allocation4 + $0x48] sm:$0xff]
          %v1933 = vld [vmem:[#allocation4 + $0x50] sm:$0xff]
          %v1934 = vld [vmem:[#allocation4 + $0x58] sm:$0xff]
          %v1935 = vld [vmem:[#allocation4 + $0x60] sm:$0xff]
          %v1936 = vld [vmem:[#allocation4 + $0x68] sm:$0xff]
          %v1937 = vld [vmem:[#allocation4 + $0x70] sm:$0xff]
          %v1938 = vld [vmem:[#allocation4 + $0x78] sm:$0xff]
          %v1939 = vadd.f32 %v1923, 1e-16
          %v1940 = vadd.f32 %v1924, 1e-16
          %v1941 = vadd.f32 %v1925, 1e-16
          %v1942 = vadd.f32 %v1926, 1e-16
          %v1943 = vadd.f32 %v1927, 1e-16
          %v1944 = vadd.f32 %v1928, 1e-16
          %v1945 = vadd.f32 %v1929, 1e-16
          %v1946 = vadd.f32 %v1930, 1e-16
          %v1947 = vadd.f32 %v1931, 1e-16
          %v1948 = vadd.f32 %v1932, 1e-16
          %v1949 = vadd.f32 %v1933, 1e-16
          %v1950 = vadd.f32 %v1934, 1e-16
          %v1951 = vadd.f32 %v1935, 1e-16
          %v1952 = vadd.f32 %v1936, 1e-16
          %v1953 = vadd.f32 %v1937, 1e-16
          %v1954 = vadd.f32 %v1938, 1e-16
          %v1955 = vrcp.pop %v1939
          %v1956 = vmul.f32 %v1939, %v1955
          %v1957 = vsub.f32 1.0, %v1956
          %v1958 = vmul.f32 %v1955, %v1957
          %v1959 = vadd.f32 %v1955, %v1958
          %vm1960 = vweird.f32 %v1939
          %vm1961 = vweird.f32 %v1955
          %vm1962 = vmor %vm1960, %vm1961
          %v1963 = vsel %vm1962, %v1955, %v1959
          %v1964 = vand.u32 2147483647, %v1939
          %vm1965 = vcmp.eq.f32.partialorder %v1964, 8.507059e+37
          %v1966 = vand.u32 %v1939, 2147483648
          %v1967 = vor.u32 1.1754944e-38, %v1966
          %v1968 = vsel %vm1965, %v1967, %v1963
          %v1969 = vmul.f32 %v1907, %v1968
          %v1970 = vrcp.pop %v1940
          %v1971 = vmul.f32 %v1940, %v1970
          %v1972 = vsub.f32 1.0, %v1971
          %v1973 = vmul.f32 %v1970, %v1972
          %v1974 = vadd.f32 %v1970, %v1973
          %vm1975 = vweird.f32 %v1940
          %vm1976 = vweird.f32 %v1970
          %vm1977 = vmor %vm1975, %vm1976
          %v1978 = vsel %vm1977, %v1970, %v1974
          %v1979 = vand.u32 2147483647, %v1940
          %vm1980 = vcmp.eq.f32.partialorder %v1979, 8.507059e+37
          %v1981 = vand.u32 %v1940, 2147483648
          %v1982 = vor.u32 1.1754944e-38, %v1981
          %v1983 = vsel %vm1980, %v1982, %v1978
          %v1984 = vmul.f32 %v1908, %v1983
          %v1985 = vrcp.pop %v1941
          %v1986 = vmul.f32 %v1941, %v1985
          %v1987 = vsub.f32 1.0, %v1986
          %v1988 = vmul.f32 %v1985, %v1987
          %v1989 = vadd.f32 %v1985, %v1988
          %vm1990 = vweird.f32 %v1941
          %vm1991 = vweird.f32 %v1985
          %vm1992 = vmor %vm1990, %vm1991
          %v1993 = vsel %vm1992, %v1985, %v1989
          %v1994 = vand.u32 2147483647, %v1941
          %vm1995 = vcmp.eq.f32.partialorder %v1994, 8.507059e+37
          %v1996 = vand.u32 %v1941, 2147483648
          %v1997 = vor.u32 1.1754944e-38, %v1996
          %v1998 = vsel %vm1995, %v1997, %v1993
          %v1999 = vmul.f32 %v1909, %v1998
          %v2000 = vrcp.pop %v1942
          %v2001 = vmul.f32 %v1942, %v2000
          %v2002 = vsub.f32 1.0, %v2001
          %v2003 = vmul.f32 %v2000, %v2002
          %v2004 = vadd.f32 %v2000, %v2003
          %vm2005 = vweird.f32 %v1942
          %vm2006 = vweird.f32 %v2000
          %vm2007 = vmor %vm2005, %vm2006
          %v2008 = vsel %vm2007, %v2000, %v2004
          %v2009 = vand.u32 2147483647, %v1942
          %vm2010 = vcmp.eq.f32.partialorder %v2009, 8.507059e+37
          %v2011 = vand.u32 %v1942, 2147483648
          %v2012 = vor.u32 1.1754944e-38, %v2011
          %v2013 = vsel %vm2010, %v2012, %v2008
          %v2014 = vmul.f32 %v1910, %v2013
          %v2015 = vrcp.pop %v1943
          %v2016 = vmul.f32 %v1943, %v2015
          %v2017 = vsub.f32 1.0, %v2016
          %v2018 = vmul.f32 %v2015, %v2017
          %v2019 = vadd.f32 %v2015, %v2018
          %vm2020 = vweird.f32 %v1943
          %vm2021 = vweird.f32 %v2015
          %vm2022 = vmor %vm2020, %vm2021
          %v2023 = vsel %vm2022, %v2015, %v2019
          %v2024 = vand.u32 2147483647, %v1943
          %vm2025 = vcmp.eq.f32.partialorder %v2024, 8.507059e+37
          %v2026 = vand.u32 %v1943, 2147483648
          %v2027 = vor.u32 1.1754944e-38, %v2026
          %v2028 = vsel %vm2025, %v2027, %v2023
          %v2029 = vmul.f32 %v1911, %v2028
          %v2030 = vrcp.pop %v1944
          %v2031 = vmul.f32 %v1944, %v2030
          %v2032 = vsub.f32 1.0, %v2031
          %v2033 = vmul.f32 %v2030, %v2032
          %v2034 = vadd.f32 %v2030, %v2033
          %vm2035 = vweird.f32 %v1944
          %vm2036 = vweird.f32 %v2030
          %vm2037 = vmor %vm2035, %vm2036
          %v2038 = vsel %vm2037, %v2030, %v2034
          %v2039 = vand.u32 2147483647, %v1944
          %vm2040 = vcmp.eq.f32.partialorder %v2039, 8.507059e+37
          %v2041 = vand.u32 %v1944, 2147483648
          %v2042 = vor.u32 1.1754944e-38, %v2041
          %v2043 = vsel %vm2040, %v2042, %v2038
          %v2044 = vmul.f32 %v1912, %v2043
          %v2045 = vrcp.pop %v1945
          %v2046 = vmul.f32 %v1945, %v2045
          %v2047 = vsub.f32 1.0, %v2046
          %v2048 = vmul.f32 %v2045, %v2047
          %v2049 = vadd.f32 %v2045, %v2048
          %vm2050 = vweird.f32 %v1945
          %vm2051 = vweird.f32 %v2045
          %vm2052 = vmor %vm2050, %vm2051
          %v2053 = vsel %vm2052, %v2045, %v2049
          %v2054 = vand.u32 2147483647, %v1945
          %vm2055 = vcmp.eq.f32.partialorder %v2054, 8.507059e+37
          %v2056 = vand.u32 %v1945, 2147483648
          %v2057 = vor.u32 1.1754944e-38, %v2056
          %v2058 = vsel %vm2055, %v2057, %v2053
          %v2059 = vmul.f32 %v1913, %v2058
          %v2060 = vrcp.pop %v1946
          %v2061 = vmul.f32 %v1946, %v2060
          %v2062 = vsub.f32 1.0, %v2061
          %v2063 = vmul.f32 %v2060, %v2062
          %v2064 = vadd.f32 %v2060, %v2063
          %vm2065 = vweird.f32 %v1946
          %vm2066 = vweird.f32 %v2060
          %vm2067 = vmor %vm2065, %vm2066
          %v2068 = vsel %vm2067, %v2060, %v2064
          %v2069 = vand.u32 2147483647, %v1946
          %vm2070 = vcmp.eq.f32.partialorder %v2069, 8.507059e+37
          %v2071 = vand.u32 %v1946, 2147483648
          %v2072 = vor.u32 1.1754944e-38, %v2071
          %v2073 = vsel %vm2070, %v2072, %v2068
          %v2074 = vmul.f32 %v1914, %v2073
          %v2075 = vrcp.pop %v1947
          %v2076 = vmul.f32 %v1947, %v2075
          %v2077 = vsub.f32 1.0, %v2076
          %v2078 = vmul.f32 %v2075, %v2077
          %v2079 = vadd.f32 %v2075, %v2078
          %vm2080 = vweird.f32 %v1947
          %vm2081 = vweird.f32 %v2075
          %vm2082 = vmor %vm2080, %vm2081
          %v2083 = vsel %vm2082, %v2075, %v2079
          %v2084 = vand.u32 2147483647, %v1947
          %vm2085 = vcmp.eq.f32.partialorder %v2084, 8.507059e+37
          %v2086 = vand.u32 %v1947, 2147483648
          %v2087 = vor.u32 1.1754944e-38, %v2086
          %v2088 = vsel %vm2085, %v2087, %v2083
          %v2089 = vmul.f32 %v1915, %v2088
          %v2090 = vrcp.pop %v1948
          %v2091 = vmul.f32 %v1948, %v2090
          %v2092 = vsub.f32 1.0, %v2091
          %v2093 = vmul.f32 %v2090, %v2092
          %v2094 = vadd.f32 %v2090, %v2093
          %vm2095 = vweird.f32 %v1948
          %vm2096 = vweird.f32 %v2090
          %vm2097 = vmor %vm2095, %vm2096
          %v2098 = vsel %vm2097, %v2090, %v2094
          %v2099 = vand.u32 2147483647, %v1948
          %vm2100 = vcmp.eq.f32.partialorder %v2099, 8.507059e+37
          %v2101 = vand.u32 %v1948, 2147483648
          %v2102 = vor.u32 1.1754944e-38, %v2101
          %v2103 = vsel %vm2100, %v2102, %v2098
          %v2104 = vmul.f32 %v1916, %v2103
          %v2105 = vrcp.pop %v1949
          %v2106 = vmul.f32 %v1949, %v2105
          %v2107 = vsub.f32 1.0, %v2106
          %v2108 = vmul.f32 %v2105, %v2107
          %v2109 = vadd.f32 %v2105, %v2108
          %vm2110 = vweird.f32 %v1949
          %vm2111 = vweird.f32 %v2105
          %vm2112 = vmor %vm2110, %vm2111
          %v2113 = vsel %vm2112, %v2105, %v2109
          %v2114 = vand.u32 2147483647, %v1949
          %vm2115 = vcmp.eq.f32.partialorder %v2114, 8.507059e+37
          %v2116 = vand.u32 %v1949, 2147483648
          %v2117 = vor.u32 1.1754944e-38, %v2116
          %v2118 = vsel %vm2115, %v2117, %v2113
          %v2119 = vmul.f32 %v1917, %v2118
          %v2120 = vrcp.pop %v1950
          %v2121 = vmul.f32 %v1950, %v2120
          %v2122 = vsub.f32 1.0, %v2121
          %v2123 = vmul.f32 %v2120, %v2122
          %v2124 = vadd.f32 %v2120, %v2123
          %vm2125 = vweird.f32 %v1950
          %vm2126 = vweird.f32 %v2120
          %vm2127 = vmor %vm2125, %vm2126
          %v2128 = vsel %vm2127, %v2120, %v2124
          %v2129 = vand.u32 2147483647, %v1950
          %vm2130 = vcmp.eq.f32.partialorder %v2129, 8.507059e+37
          %v2131 = vand.u32 %v1950, 2147483648
          %v2132 = vor.u32 1.1754944e-38, %v2131
          %v2133 = vsel %vm2130, %v2132, %v2128
          %v2134 = vmul.f32 %v1918, %v2133
          %v2135 = vrcp.pop %v1951
          %v2136 = vmul.f32 %v1951, %v2135
          %v2137 = vsub.f32 1.0, %v2136
          %v2138 = vmul.f32 %v2135, %v2137
          %v2139 = vadd.f32 %v2135, %v2138
          %vm2140 = vweird.f32 %v1951
          %vm2141 = vweird.f32 %v2135
          %vm2142 = vmor %vm2140, %vm2141
          %v2143 = vsel %vm2142, %v2135, %v2139
          %v2144 = vand.u32 2147483647, %v1951
          %vm2145 = vcmp.eq.f32.partialorder %v2144, 8.507059e+37
          %v2146 = vand.u32 %v1951, 2147483648
          %v2147 = vor.u32 1.1754944e-38, %v2146
          %v2148 = vsel %vm2145, %v2147, %v2143
          %v2149 = vmul.f32 %v1919, %v2148
          %v2150 = vrcp.pop %v1952
          %v2151 = vmul.f32 %v1952, %v2150
          %v2152 = vsub.f32 1.0, %v2151
          %v2153 = vmul.f32 %v2150, %v2152
          %v2154 = vadd.f32 %v2150, %v2153
          %vm2155 = vweird.f32 %v1952
          %vm2156 = vweird.f32 %v2150
          %vm2157 = vmor %vm2155, %vm2156
          %v2158 = vsel %vm2157, %v2150, %v2154
          %v2159 = vand.u32 2147483647, %v1952
          %vm2160 = vcmp.eq.f32.partialorder %v2159, 8.507059e+37
          %v2161 = vand.u32 %v1952, 2147483648
          %v2162 = vor.u32 1.1754944e-38, %v2161
          %v2163 = vsel %vm2160, %v2162, %v2158
          %v2164 = vmul.f32 %v1920, %v2163
          %v2165 = vrcp.pop %v1953
          %v2166 = vmul.f32 %v1953, %v2165
          %v2167 = vsub.f32 1.0, %v2166
          %v2168 = vmul.f32 %v2165, %v2167
          %v2169 = vadd.f32 %v2165, %v2168
          %vm2170 = vweird.f32 %v1953
          %vm2171 = vweird.f32 %v2165
          %vm2172 = vmor %vm2170, %vm2171
          %v2173 = vsel %vm2172, %v2165, %v2169
          %v2174 = vand.u32 2147483647, %v1953
          %vm2175 = vcmp.eq.f32.partialorder %v2174, 8.507059e+37
          %v2176 = vand.u32 %v1953, 2147483648
          %v2177 = vor.u32 1.1754944e-38, %v2176
          %v2178 = vsel %vm2175, %v2177, %v2173
          %v2179 = vmul.f32 %v1921, %v2178
          %v2180 = vrcp.pop %v1954
          %v2181 = vmul.f32 %v1954, %v2180
          %v2182 = vsub.f32 1.0, %v2181
          %v2183 = vmul.f32 %v2180, %v2182
          %v2184 = vadd.f32 %v2180, %v2183
          %vm2185 = vweird.f32 %v1954
          %vm2186 = vweird.f32 %v2180
          %vm2187 = vmor %vm2185, %vm2186
          %v2188 = vsel %vm2187, %v2180, %v2184
          %v2189 = vand.u32 2147483647, %v1954
          %vm2190 = vcmp.eq.f32.partialorder %v2189, 8.507059e+37
          %v2191 = vand.u32 %v1954, 2147483648
          %v2192 = vor.u32 1.1754944e-38, %v2191
          %v2193 = vsel %vm2190, %v2192, %v2188
          %v2194 = vmul.f32 %v1922, %v2193
          %v2195 = vadd.f32 %v1891, %v1969
          %v2196 = vadd.f32 %v1892, %v1984
          %v2197 = vadd.f32 %v1893, %v1999
          %v2198 = vadd.f32 %v1894, %v2014
          %v2199 = vadd.f32 %v1895, %v2029
          %v2200 = vadd.f32 %v1896, %v2044
          %v2201 = vadd.f32 %v1897, %v2059
          %v2202 = vadd.f32 %v1898, %v2074
          %v2203 = vadd.f32 %v1899, %v2089
          %v2204 = vadd.f32 %v1900, %v2104
          %v2205 = vadd.f32 %v1901, %v2119
          %v2206 = vadd.f32 %v1902, %v2134
          %v2207 = vadd.f32 %v1903, %v2149
          %v2208 = vadd.f32 %v1904, %v2164
          %v2209 = vadd.f32 %v1905, %v2179
          %v2210 = vadd.f32 %v1906, %v2194
          %v2211 = vld [vmem:[%s8] sm:$0xff]
          %v2212 = vld [vmem:[%s8 + $0x8] sm:$0xff]
          %v2213 = vld [vmem:[%s8 + $0x10] sm:$0xff]
          %v2214 = vld [vmem:[%s8 + $0x18] sm:$0xff]
          %v2215 = vld [vmem:[%s8 + $0x20] sm:$0xff]
          %v2216 = vld [vmem:[%s8 + $0x28] sm:$0xff]
          %v2217 = vld [vmem:[%s8 + $0x30] sm:$0xff]
          %v2218 = vld [vmem:[%s8 + $0x38] sm:$0xff]
          %v2219 = vld [vmem:[%s8 + $0x40] sm:$0xff]
          %v2220 = vld [vmem:[%s8 + $0x48] sm:$0xff]
          %v2221 = vld [vmem:[%s8 + $0x50] sm:$0xff]
          %v2222 = vld [vmem:[%s8 + $0x58] sm:$0xff]
          %v2223 = vld [vmem:[%s8 + $0x60] sm:$0xff]
          %v2224 = vld [vmem:[%s8 + $0x68] sm:$0xff]
          %v2225 = vld [vmem:[%s8 + $0x70] sm:$0xff]
          %v2226 = vld [vmem:[%s8 + $0x78] sm:$0xff]
          %vm2227 = vcmp.gt.f32.partialorder %v2211, 0.0
          %vm2228 = vcmp.gt.f32.partialorder %v2212, 0.0
          %vm2229 = vcmp.gt.f32.partialorder %v2213, 0.0
          %vm2230 = vcmp.gt.f32.partialorder %v2214, 0.0
          %vm2231 = vcmp.gt.f32.partialorder %v2215, 0.0
          %vm2232 = vcmp.gt.f32.partialorder %v2216, 0.0
          %vm2233 = vcmp.gt.f32.partialorder %v2217, 0.0
          %vm2234 = vcmp.gt.f32.partialorder %v2218, 0.0
          %vm2235 = vcmp.gt.f32.partialorder %v2219, 0.0
          %vm2236 = vcmp.gt.f32.partialorder %v2220, 0.0
          %vm2237 = vcmp.gt.f32.partialorder %v2221, 0.0
          %vm2238 = vcmp.gt.f32.partialorder %v2222, 0.0
          %vm2239 = vcmp.gt.f32.partialorder %v2223, 0.0
          %vm2240 = vcmp.gt.f32.partialorder %v2224, 0.0
          %vm2241 = vcmp.gt.f32.partialorder %v2225, 0.0
          %vm2242 = vcmp.gt.f32.partialorder %v2226, 0.0
          %v2243 = vsel %vm2227, 1, 0
          %v2244 = vsel %vm2228, 1, 0
          %v2245 = vsel %vm2229, 1, 0
          %v2246 = vsel %vm2230, 1, 0
          %v2247 = vsel %vm2231, 1, 0
          %v2248 = vsel %vm2232, 1, 0
          %v2249 = vsel %vm2233, 1, 0
          %v2250 = vsel %vm2234, 1, 0
          %v2251 = vsel %vm2235, 1, 0
          %v2252 = vsel %vm2236, 1, 0
          %v2253 = vsel %vm2237, 1, 0
          %v2254 = vsel %vm2238, 1, 0
          %v2255 = vsel %vm2239, 1, 0
          %v2256 = vsel %vm2240, 1, 0
          %v2257 = vsel %vm2241, 1, 0
          %v2258 = vsel %vm2242, 1, 0
          %2259 = vset.pattern.permute.xlu0 0
          %2260 = vperm.xlu0 %2259, %v2243
          %v2261 = vpop.permute.xlu0 %2260
          %2262 = vset.pattern.permute.xlu0 0
          %2263 = vperm.xlu0 %2262, %v2244
          %v2264 = vpop.permute.xlu0 %2263
          %2265 = vset.pattern.permute.xlu0 0
          %2266 = vperm.xlu0 %2265, %v2245
          %v2267 = vpop.permute.xlu0 %2266
          %2268 = vset.pattern.permute.xlu0 0
          %2269 = vperm.xlu0 %2268, %v2246
          %v2270 = vpop.permute.xlu0 %2269
          %2271 = vset.pattern.permute.xlu0 0
          %2272 = vperm.xlu0 %2271, %v2247
          %v2273 = vpop.permute.xlu0 %2272
          %2274 = vset.pattern.permute.xlu0 0
          %2275 = vperm.xlu0 %2274, %v2248
          %v2276 = vpop.permute.xlu0 %2275
          %2277 = vset.pattern.permute.xlu0 0
          %2278 = vperm.xlu0 %2277, %v2249
          %v2279 = vpop.permute.xlu0 %2278
          %2280 = vset.pattern.permute.xlu0 0
          %2281 = vperm.xlu0 %2280, %v2250
          %v2282 = vpop.permute.xlu0 %2281
          %2283 = vset.pattern.permute.xlu0 0
          %2284 = vperm.xlu0 %2283, %v2251
          %v2285 = vpop.permute.xlu0 %2284
          %2286 = vset.pattern.permute.xlu0 0
          %2287 = vperm.xlu0 %2286, %v2252
          %v2288 = vpop.permute.xlu0 %2287
          %2289 = vset.pattern.permute.xlu0 0
          %2290 = vperm.xlu0 %2289, %v2253
          %v2291 = vpop.permute.xlu0 %2290
          %2292 = vset.pattern.permute.xlu0 0
          %2293 = vperm.xlu0 %2292, %v2254
          %v2294 = vpop.permute.xlu0 %2293
          %2295 = vset.pattern.permute.xlu0 0
          %2296 = vperm.xlu0 %2295, %v2255
          %v2297 = vpop.permute.xlu0 %2296
          %2298 = vset.pattern.permute.xlu0 0
          %2299 = vperm.xlu0 %2298, %v2256
          %v2300 = vpop.permute.xlu0 %2299
          %2301 = vset.pattern.permute.xlu0 0
          %2302 = vperm.xlu0 %2301, %v2257
          %v2303 = vpop.permute.xlu0 %2302
          %2304 = vset.pattern.permute.xlu0 0
          %2305 = vperm.xlu0 %2304, %v2258
          %v2306 = vpop.permute.xlu0 %2305
          %vm2307 = vcmp.eq.s32.totalorder %v2261, 1
          %vm2308 = vcmp.eq.s32.totalorder %v2264, 1
          %vm2309 = vcmp.eq.s32.totalorder %v2267, 1
          %vm2310 = vcmp.eq.s32.totalorder %v2270, 1
          %vm2311 = vcmp.eq.s32.totalorder %v2273, 1
          %vm2312 = vcmp.eq.s32.totalorder %v2276, 1
          %vm2313 = vcmp.eq.s32.totalorder %v2279, 1
          %vm2314 = vcmp.eq.s32.totalorder %v2282, 1
          %vm2315 = vcmp.eq.s32.totalorder %v2285, 1
          %vm2316 = vcmp.eq.s32.totalorder %v2288, 1
          %vm2317 = vcmp.eq.s32.totalorder %v2291, 1
          %vm2318 = vcmp.eq.s32.totalorder %v2294, 1
          %vm2319 = vcmp.eq.s32.totalorder %v2297, 1
          %vm2320 = vcmp.eq.s32.totalorder %v2300, 1
          %vm2321 = vcmp.eq.s32.totalorder %v2303, 1
          %vm2322 = vcmp.eq.s32.totalorder %v2306, 1
          %v2323 = vsel %vm2307, %v2195, 0.0
          %v2324 = vsel %vm2308, %v2196, 0.0
          %v2325 = vsel %vm2309, %v2197, 0.0
          %v2326 = vsel %vm2310, %v2198, 0.0
          %v2327 = vsel %vm2311, %v2199, 0.0
          %v2328 = vsel %vm2312, %v2200, 0.0
          %v2329 = vsel %vm2313, %v2201, 0.0
          %v2330 = vsel %vm2314, %v2202, 0.0
          %v2331 = vsel %vm2315, %v2203, 0.0
          %v2332 = vsel %vm2316, %v2204, 0.0
          %v2333 = vsel %vm2317, %v2205, 0.0
          %v2334 = vsel %vm2318, %v2206, 0.0
          %v2335 = vsel %vm2319, %v2207, 0.0
          %v2336 = vsel %vm2320, %v2208, 0.0
          %v2337 = vsel %vm2321, %v2209, 0.0
          %v2338 = vsel %vm2322, %v2210, 0.0
          %v2339 = vmax.f32 %v2323, 0.0
          %v2340 = vmax.f32 %v2324, 0.0
          %v2341 = vmax.f32 %v2325, 0.0
          %v2342 = vmax.f32 %v2326, 0.0
          %v2343 = vmax.f32 %v2327, 0.0
          %v2344 = vmax.f32 %v2328, 0.0
          %v2345 = vmax.f32 %v2329, 0.0
          %v2346 = vmax.f32 %v2330, 0.0
          %v2347 = vmax.f32 %v2331, 0.0
          %v2348 = vmax.f32 %v2332, 0.0
          %v2349 = vmax.f32 %v2333, 0.0
          %v2350 = vmax.f32 %v2334, 0.0
          %v2351 = vmax.f32 %v2335, 0.0
          %v2352 = vmax.f32 %v2336, 0.0
          %v2353 = vmax.f32 %v2337, 0.0
          %v2354 = vmax.f32 %v2338, 0.0
          %2355 = vst [vmem:[%s10] sm:$0xff] %v2339
          %2356 = vst [vmem:[%s10 + $0x8] sm:$0xff] %v2340
          %2357 = vst [vmem:[%s10 + $0x10] sm:$0xff] %v2341
          %2358 = vst [vmem:[%s10 + $0x18] sm:$0xff] %v2342
          %2359 = vst [vmem:[%s10 + $0x20] sm:$0xff] %v2343
          %2360 = vst [vmem:[%s10 + $0x28] sm:$0xff] %v2344
          %2361 = vst [vmem:[%s10 + $0x30] sm:$0xff] %v2345
          %2362 = vst [vmem:[%s10 + $0x38] sm:$0xff] %v2346
          %2363 = vst [vmem:[%s10 + $0x40] sm:$0xff] %v2347
          %2364 = vst [vmem:[%s10 + $0x48] sm:$0xff] %v2348
          %2365 = vst [vmem:[%s10 + $0x50] sm:$0xff] %v2349
          %2366 = vst [vmem:[%s10 + $0x58] sm:$0xff] %v2350
          %2367 = vst [vmem:[%s10 + $0x60] sm:$0xff] %v2351
          %2368 = vst [vmem:[%s10 + $0x68] sm:$0xff] %v2352
          %2369 = vst [vmem:[%s10 + $0x70] sm:$0xff] %v2353
          %2370 = vst [vmem:[%s10 + $0x78] sm:$0xff] %v2354
        $region64: #{_lambda_.8} parent=55 // pred_fallthru
          _
        %s2371 = sand.u32 %s237, 1
        %s2372 = scalar_lea.sflag [#allocation6], %s2371
        %s2373 = sand.u32 %s237, 1
        %s2374 = smul.addr %s2373, 128
        %s2375 = scalar_lea.vmem [#allocation5], %s2374
        // Predicated region
        $region65: #{_lambda_.8} parent=55 // pred_check
          %p2376 = pneg %p247
        $region66: #{_lambda_.8} parent=55 // pred_check_branch
          %2378 = sbr.rel (%p2376) target = $region68
        $region67: #{_lambda_.8} parent=55 // pred_region
          %s2379 = smul.u32 16, %s25
          %2381 = vsyncadd %s2372, 0
          %s2382 = smul.addr %s2379, 8
          %s2383 = scalar_lea.hbm %s9, %s2382
          %s2384 = sshll.u32 %s2375, 4
          %s2385 = int_to_ptr.vmem [resolvable:$true] %s2384
          %s2386 = sshll.u32 %s2383, 4
          %s2387 = int_to_ptr.hbm [resolvable:$true] %s2386
          %2392 = dma.vmem_to_hbm [thread:$0]  %s2385, 2048, %s2387, %s2372, 128, 128, 8
        $region68: #{_lambda_.8} parent=55 // pred_fallthru
          _
        // Predicated region
        $region69: #{_lambda_.8} parent=55 // pred_check
          %p2393 = pneg %p268
        $region70: #{_lambda_.8} parent=55 // pred_check_branch
          %2395 = sbr.rel (%p2393) target = $region72
        $region71: #{_lambda_.8} parent=55 // pred_region
          _
        $region72: #{_lambda_.8} parent=55 // pred_fallthru
          _
        // Predicated region
        $region73: #{_lambda_.8} parent=55 // pred_check
          %p2396 = pneg %p268
        $region74: #{_lambda_.8} parent=55 // pred_check_branch
          %2398 = sbr.rel (%p2396) target = $region76
        $region75: #{_lambda_.8} parent=55 // pred_region
          _
        $region76: #{_lambda_.8} parent=55 // pred_fallthru
          _
      $region56: #{_lambda_.8} parent=5 // pred_fallthru
        _
      %p2399 = scmp.le.s32.totalorder 2, %s20
      // Predicated region
      $region77: #{_lambda_.8} parent=5 // pred_check
        %p2400 = pneg %p2399
      $region78: #{_lambda_.8} parent=5 // pred_check_branch
        %2402 = sbr.rel (%p2400) target = $region80
      $region79: #{_lambda_.8} parent=5 // pred_region
        %s2403 = ssub.s32 %s20, 2
        // Predicated region
        $region81: #{_lambda_.8} parent=79 // pred_check
          %p2404 = pneg %p253
        $region82: #{_lambda_.8} parent=79 // pred_check_branch
          %2406 = sbr.rel (%p2404) target = $region84
        $region83: #{_lambda_.8} parent=79 // pred_region
          %s2407 = sand.u32 %s238, 1
          %s2408 = scalar_lea.sflag [#allocation6], %s2407
          %s2409 = sand.u32 %s238, 1
          %s2410 = smul.addr %s2409, 128
          %s2411 = scalar_lea.vmem [#allocation5], %s2410
          %2413 = dma.done %s2408, 2048
        $region84: #{_lambda_.8} parent=79 // pred_fallthru
          _
      $region80: #{_lambda_.8} parent=5 // pred_fallthru
        _
    $region6: #{_lambda_.8} parent=1 // loop_footer
      %s24 = sadd.s32 1, %s20
    $region7: #{_lambda_.8} parent=1 // loop_footer_branch
      %19 = sbr.rel target = $region3
    $region8: #{_lambda_.8} parent=1 // loop_exit
      _
    %2414 = vsyncpa [#allocation6], 1
    %s2415 = scalar_lea.sflag [#allocation6], 1
    %2416 = vsyncpa %s2415, 1

</llo_original>
